<compile_context>
chip_gen: v7x
topology: tpu7x:2x2x1
jax: 0.10.0
libtpu: 0.0.40
codegen_flags: <defaults>
</compile_context>

<pallas_src>
import functools

import numpy as np
import jax
import jax.numpy as jnp
from jax.experimental import pallas as pl
from jax.experimental.pallas import tpu as pltpu

C_IN = 4
C_IN_PAD = 8            # input channels zero-padded to a full sublane tile
C0, C1 = 8, 16          # channels_list
N_GROUPS = 4
EPS = 1e-5              # GroupNorm default eps
SLOPE = 0.1             # LeakyReLU negative slope

_TAPS = tuple((dy, dx) for dy in (-1, 0, 1) for dx in (-1, 0, 1))

# packed conv-weight slab: row offsets (16-aligned for clean bf16 tiles)
_W_ROWS, _W_COLS = 80, 9 * (C1 + C0)            # 80 x 216
_W_IN, _W_ENC, _W_MID, _W_DEC, _W_OUT = 0, 16, 32, 48, 64

# packed bias/gamma/beta column: row offsets (all multiples of 8)
_V_IN_B = 0
_V_ENC_B, _V_ENC_G, _V_ENC_BT = 8, 16, 24
_V_MID_B, _V_MID_G, _V_MID_BT = 32, 48, 64
_V_DEC_B, _V_DEC_G, _V_DEC_BT = 80, 88, 96
_V_OUT_B = 104


# ---------------------------------------------------------------------------
# Fused kernel: one batch tile per grid step, everything stays in VMEM.
# ---------------------------------------------------------------------------
def _unet_fused_kernel(x_ref, w_ref, vec_ref, mask_ref, pool_ref, up_ref,
                       gmat_ref, seg_ref, segt_ref, o_ref, *, H, W, b_tile):
    f32, bf16 = jnp.float32, jnp.bfloat16
    HW, H2, W2 = H * W, H // 2, W // 2
    HW2 = H2 * W2
    L, L2 = b_tile * HW, b_tile * HW2

    # ---- packed parameters / hoisted constants (tiny, loaded once per step) ----
    w_in = w_ref[_W_IN:_W_IN + C0, 0:9 * C_IN_PAD]            # bf16
    w_enc = w_ref[_W_ENC:_W_ENC + C0, 0:9 * C0]
    w_mid = w_ref[_W_MID:_W_MID + C1, 0:9 * C0]
    w_dec = w_ref[_W_DEC:_W_DEC + C0, 0:9 * (C1 + C0)]
    w_out = w_ref[_W_OUT:_W_OUT + C_IN, 0:C0]
    in_b = vec_ref[_V_IN_B:_V_IN_B + C0]
    enc_b = vec_ref[_V_ENC_B:_V_ENC_B + C0]
    enc_g = vec_ref[_V_ENC_G:_V_ENC_G + C0]
    enc_bt = vec_ref[_V_ENC_BT:_V_ENC_BT + C0]
    mid_b = vec_ref[_V_MID_B:_V_MID_B + C1]
    mid_g = vec_ref[_V_MID_G:_V_MID_G + C1]
    mid_bt = vec_ref[_V_MID_BT:_V_MID_BT + C1]
    dec_b = vec_ref[_V_DEC_B:_V_DEC_B + C0]
    dec_g = vec_ref[_V_DEC_G:_V_DEC_G + C0]
    dec_bt = vec_ref[_V_DEC_BT:_V_DEC_BT + C0]
    out_b = vec_ref[_V_OUT_B:_V_OUT_B + C_IN]
    g8 = gmat_ref[0:C0, 0:C0]
    g16 = gmat_ref[C0:C0 + C1, 0:C1]
    seg, seg2 = seg_ref[0:L, :], seg_ref[L:L + L2, :]          # (L,bt), (L2,bt)
    segt, seg2t = segt_ref[:, 0:L], segt_ref[:, L:L + L2]      # (bt,L), (bt,L2)
    tapmask = mask_ref[...]                                    # (9, L) 0/1

    def conv3x3(v, w_bf, b):
        """3x3 'same' conv: 8 lane rolls + hoisted boundary masks + 1 MXU matmul."""
        taps = []
        for t, (dy, dx) in enumerate(_TAPS):
            o = dy * W + dx
            if o == 0:
                taps.append(v)
            else:
                taps.append(pltpu.roll(v, (-o) % L, 1) * tapmask[t:t + 1, :])
        patches = jnp.concatenate(taps, axis=0).astype(bf16)    # (9*Cin, L)
        return jnp.dot(w_bf, patches, preferred_element_type=f32) + b

    def gn_lrelu(v, gmat, gamma, beta, sseg, ssegt, inv_cnt):
        """Per-sample GroupNorm(4) + affine + LeakyReLU(0.1); stats stay f32."""
        s1 = jnp.dot(v, sseg, preferred_element_type=f32)        # (C, b_tile)
        s2 = jnp.dot(v * v, sseg, preferred_element_type=f32)
        mean = jnp.dot(gmat, s1, preferred_element_type=f32) * inv_cnt
        ex2 = jnp.dot(gmat, s2, preferred_element_type=f32) * inv_cnt
        rstd = jax.lax.rsqrt(ex2 - mean * mean + EPS)            # biased var
        scale = gamma * rstd                                     # (C, b_tile)
        shift = beta - mean * scale
        y = (v * jnp.dot(scale, ssegt, preferred_element_type=f32)
             + jnp.dot(shift, ssegt, preferred_element_type=f32))
        return jnp.where(y >= 0.0, y, SLOPE * y)

    # ---------------- forward (one batch tile) ----------------
    x = x_ref[0].astype(f32)                                    # (8, L), ch 4..7 zero
    h0 = conv3x3(x, w_in, in_b)                                 # (C0, L)
    h1 = gn_lrelu(conv3x3(h0, w_enc, enc_b), g8, enc_g, enc_bt,
                  seg, segt, 1.0 / ((C0 // N_GROUPS) * HW))     # (C0, L)
    shortcut = h1

    # maxpool2x2 + pooled-res im2col fused into 9 precomputed 0/1 gather matmuls
    m = jnp.maximum(jnp.maximum(h1, pltpu.roll(h1, (-1) % L, 1)),
                    jnp.maximum(pltpu.roll(h1, (-W) % L, 1),
                                pltpu.roll(h1, (-(W + 1)) % L, 1)))
    m_bf = m.astype(bf16)
    pm = [jnp.dot(m_bf, pool_ref[t], preferred_element_type=f32)
          for t in range(9)]                                     # 9 x (C0, L2)
    patches_mid = jnp.concatenate(pm, axis=0).astype(bf16)       # (9*C0, L2)
    h2 = jnp.dot(w_mid, patches_mid, preferred_element_type=f32) + mid_b
    h2 = gn_lrelu(h2, g16, mid_g, mid_bt, seg2, seg2t,
                  1.0 / ((C1 // N_GROUPS) * HW2))                # (C1, L2)

    up = jnp.dot(h2.astype(bf16), up_ref[...],
                 preferred_element_type=f32)                     # (C1, L)
    cat = jnp.concatenate([up, shortcut], axis=0)                # (C1 + C0, L)
    h3 = gn_lrelu(conv3x3(cat, w_dec, dec_b), g8, dec_g, dec_bt,
                  seg, segt, 1.0 / ((C0 // N_GROUPS) * HW))      # (C0, L)

    out = jnp.dot(w_out, h3.astype(bf16),
                  preferred_element_type=f32) + out_b            # (C_IN, L)
    o_ref[0] = out.astype(o_ref.dtype)


# ---------------------------------------------------------------------------
# One-off parameter packing + precomputed constants (done in the wrapper).
# ---------------------------------------------------------------------------
def _pack_conv_w(w9, cin_pad=None):
    """(9, Cin, Cout) tap-major (tap = ky*3+kx) -> (Cout, 9*Cin[_pad])."""
    _, cin, cout = w9.shape
    if cin_pad is not None and cin_pad > cin:
        w9 = jnp.pad(w9, ((0, 0), (0, cin_pad - cin), (0, 0)))
    return jnp.transpose(w9, (2, 0, 1)).reshape(cout, -1).astype(jnp.float32)


def _pack_params(p):
    wpack = jnp.zeros((_W_ROWS, _W_COLS), jnp.float32)
    wpack = wpack.at[_W_IN:_W_IN + C0, 0:9 * C_IN_PAD].set(
        _pack_conv_w(p['in_w'], C_IN_PAD))
    wpack = wpack.at[_W_ENC:_W_ENC + C0, 0:9 * C0].set(_pack_conv_w(p['enc_w']))
    wpack = wpack.at[_W_MID:_W_MID + C1, 0:9 * C0].set(_pack_conv_w(p['mid_w']))
    wpack = wpack.at[_W_DEC:_W_DEC + C0, 0:9 * (C1 + C0)].set(
        _pack_conv_w(p['dec_w']))
    wpack = wpack.at[_W_OUT:_W_OUT + C_IN, 0:C0].set(
        jnp.transpose(p['out_w']).astype(jnp.float32))
    wpack = wpack.astype(jnp.bfloat16)
    vecs = [p['in_b'], p['enc_b'], p['enc_g'], p['enc_bt'],
            p['mid_b'], p['mid_g'], p['mid_bt'],
            p['dec_b'], p['dec_g'], p['dec_bt'], p['out_b']]
    vpack = jnp.concatenate([v.reshape(-1) for v in vecs]).reshape(-1, 1)
    return wpack, vpack.astype(jnp.float32)


def _build_constants(H, W, b_tile):
    """All compile-time-constant 0/1 matrices / masks (built once, numpy)."""
    HW, H2, W2 = H * W, H // 2, W // 2
    HW2 = H2 * W2
    L, L2 = b_tile * HW, b_tile * HW2
    p = np.arange(HW)
    pr, pc = p // W, p % W
    q = np.arange(HW2)
    qr, qc = q // W2, q % W2
    # (9, L): per-tap validity mask of the 3x3 'same' (zero-padded) conv
    tapmask = np.stack([((pr + dy >= 0) & (pr + dy < H) &
                         (pc + dx >= 0) & (pc + dx < W)) for dy, dx in _TAPS])
    tapmask = np.tile(tapmask.astype(np.float32), (1, b_tile))
    # (9, HW, HW2): fused maxpool2x2 window selection + pooled-res tap shift
    t9 = np.zeros((9, HW, HW2), np.float32)
    for t, (dy, dx) in enumerate(_TAPS):
        rr, cc = qr + dy, qc + dx
        valid = (rr >= 0) & (rr < H2) & (cc >= 0) & (cc < W2)
        src = 2 * rr * W + 2 * cc
        qv = np.nonzero(valid)[0]
        t9[t, src[qv], qv] = 1.0
    # (HW2, HW): nearest-neighbour x2 upsample gather
    u = np.zeros((HW2, HW), np.float32)
    u[(pr // 2) * W2 + pc // 2, p] = 1.0
    # block-diagonal expansion across the folded batch tile
    eye_b = np.eye(b_tile, dtype=np.float32)
    t9f = np.einsum('ab,tpq->tapbq', eye_b, t9).reshape(9, L, L2)
    uf = np.einsum('ab,qp->aqbp', eye_b, u).reshape(L2, L)
    # per-image lane-segment matrices (per-sample GroupNorm statistics)
    seg = np.repeat(eye_b, HW, axis=0)          # (L, b_tile)
    seg2 = np.repeat(eye_b, HW2, axis=0)        # (L2, b_tile)
    seg_pack = np.concatenate([seg, seg2], axis=0)
    # GroupNorm group-averaging 0/1 matrices
    def gmat(c):
        g = np.arange(c) // (c // N_GROUPS)
        return (g[:, None] == g[None, :]).astype(np.float32)
    gpack = np.zeros((C0 + C1, C1), np.float32)
    gpack[:C0, :C0] = gmat(C0)
    gpack[C0:, :C1] = gmat(C1)
    return (jnp.asarray(tapmask, jnp.float32),
            jnp.asarray(t9f, jnp.bfloat16),       # 0/1 -> exact in bf16
            jnp.asarray(uf, jnp.bfloat16),
            jnp.asarray(gpack, jnp.float32),
            jnp.asarray(seg_pack, jnp.float32),
            jnp.asarray(np.ascontiguousarray(seg_pack.T), jnp.float32))


def unet_forward(x, p):
    """x: (B, C_IN, H, W) float32 (NCHW, exactly like the PyTorch module)."""
    B, C, H, W = x.shape
    HW = H * W
    # Fold a batch tile onto the lane axis; keep >= 2 grid steps when possible
    # so both v7x TensorCores are busy (grid axis is "parallel").
    b_tile = 1
    for cand in (8, 4, 2):
        if B % cand == 0 and B // cand >= 2:
            b_tile = cand
            break
    n_steps = B // b_tile
    L = b_tile * HW
    # TODO(synk): if H*W is scaled up far beyond 16x16, tile the spatial (lane)
    # axis with halo handling so the (216, L) decoder im2col fits v7x's 64 MiB VMEM.
    xf = (x.astype(jnp.float32)
          .reshape(n_steps, b_tile, C, HW)
          .transpose(0, 2, 1, 3)
          .reshape(n_steps, C, L))
    xf = jnp.pad(xf, ((0, 0), (0, C_IN_PAD - C), (0, 0)))       # (n_steps, 8, L)
    wpack, vpack = _pack_params(p)
    consts = _build_constants(H, W, b_tile)
    args = (xf, wpack, vpack) + consts

    in_specs = [pl.BlockSpec((1, C_IN_PAD, L), lambda i: (i, 0, 0))]
    for a in args[1:]:
        in_specs.append(pl.BlockSpec(a.shape, lambda i, nd=a.ndim: (0,) * nd))

    out = pl.pallas_call(
        functools.partial(_unet_fused_kernel, H=H, W=W, b_tile=b_tile),
        out_shape=jax.ShapeDtypeStruct((n_steps, C_IN, L), x.dtype),
        grid=(n_steps,),
        in_specs=in_specs,
        out_specs=pl.BlockSpec((1, C_IN, L), lambda i: (i, 0, 0)),
        compiler_params=pltpu.CompilerParams(
            dimension_semantics=("parallel",)),
    )(*args)
    return (out.reshape(n_steps, C_IN, b_tile, HW)
            .transpose(0, 2, 1, 3)
            .reshape(B, C_IN, H, W))


# ---------------------------------------------------------------------------
# Pure-JAX (XLA) reference of the same forward pass (for self-checking).
# ---------------------------------------------------------------------------
def unet_reference(x, p):
    def conv3x3(v, w9, b):
        w = w9.reshape(3, 3, w9.shape[1], w9.shape[2])          # HWIO
        y = jax.lax.conv_general_dilated(
            v, w, window_strides=(1, 1), padding=((1, 1), (1, 1)),
            dimension_numbers=('NCHW', 'HWIO', 'NCHW'))
        return y + b.reshape(1, -1, 1, 1)

    def gn_lrelu(v, gamma, beta):
        B, C, Hh, Ww = v.shape
        g = v.reshape(B, N_GROUPS, C // N_GROUPS, Hh, Ww)
        mean = g.mean(axis=(2, 3, 4), keepdims=True)
        var = ((g - mean) ** 2).mean(axis=(2, 3, 4), keepdims=True)
        y = ((g - mean) / jnp.sqrt(var + EPS)).reshape(B, C, Hh, Ww)
        y = y * gamma.reshape(1, C, 1, 1) + beta.reshape(1, C, 1, 1)
        return jnp.where(y >= 0, y, SLOPE * y)

    h = conv3x3(x, p['in_w'], p['in_b'])
    h = gn_lrelu(conv3x3(h, p['enc_w'], p['enc_b']), p['enc_g'], p['enc_bt'])
    shortcut = h
    B, C, Hh, Ww = h.shape
    pooled = h.reshape(B, C, Hh // 2, 2, Ww // 2, 2).max(axis=(3, 5))
    m = gn_lrelu(conv3x3(pooled, p['mid_w'], p['mid_b']), p['mid_g'], p['mid_bt'])
    up = jnp.repeat(jnp.repeat(m, 2, axis=2), 2, axis=3)
    h = jnp.concatenate([up, shortcut], axis=1)
    h = gn_lrelu(conv3x3(h, p['dec_w'], p['dec_b']), p['dec_g'], p['dec_bt'])
    return (jnp.einsum('bchw,co->bohw', h, p['out_w'])
            + p['out_b'].reshape(1, -1, 1, 1))


# ---------------------------------------------------------------------------
# Deterministic parameter init (synthetic; mirrors module __init__ shapes)
# ---------------------------------------------------------------------------
def init_params(key):
    ks = jax.random.split(key, 9)

    def conv_w(k, cin, cout):
        return jax.random.normal(k, (9, cin, cout), jnp.float32) * 0.1

    def conv_b(k, cout):
        return jax.random.normal(k, (cout,), jnp.float32) * 0.05

    p = {}
    p['in_w'] = conv_w(ks[0], C_IN, C0)
    p['in_b'] = conv_b(ks[1], C0)
    p['enc_w'] = conv_w(ks[2], C0, C0)
    p['enc_b'] = conv_b(ks[3], C0)
    p['enc_g'] = jnp.ones((C0,), jnp.float32)      # GroupNorm default affine
    p['enc_bt'] = jnp.zeros((C0,), jnp.float32)
    p['mid_w'] = conv_w(ks[4], C0, C1)
    p['mid_b'] = conv_b(ks[5], C1)
    p['mid_g'] = jnp.ones((C1,), jnp.float32)
    p['mid_bt'] = jnp.zeros((C1,), jnp.float32)
    p['dec_w'] = conv_w(ks[6], C1 + C0, C0)
    p['dec_b'] = conv_b(ks[7], C0)
    p['dec_g'] = jnp.ones((C0,), jnp.float32)
    p['dec_bt'] = jnp.zeros((C0,), jnp.float32)
    # zero_weights: weight * 1e-6, bias = 0
    p['out_w'] = jax.random.normal(ks[8], (C0, C_IN), jnp.float32) * 0.1 * 1e-6
    p['out_b'] = jnp.zeros((C_IN,), jnp.float32)
    return p


if __name__ == "__main__":
    key = jax.random.PRNGKey(0)
    kx, kp = jax.random.split(key)
    # NCHW input: batch 4 -> b_tile=2 folded on lanes, grid=(2,) ("parallel").
    x = jax.random.normal(kx, (4, C_IN, 16, 16), jnp.float32)
    params = init_params(kp)

    out = jax.block_until_ready(jax.jit(unet_forward)(x, params))
    assert out.shape == x.shape, out.shape
    assert bool(jnp.all(jnp.isfinite(out)))

    # Self-check against a pure-JAX reference of the same forward pass.
    ref = jax.block_until_ready(jax.jit(unet_reference)(x, params))
    scale = float(jnp.max(jnp.abs(ref)))
    max_err = float(jnp.max(jnp.abs(out - ref)))
    rms_err = float(jnp.sqrt(jnp.mean((out - ref) ** 2)))
    rms_ref = float(jnp.sqrt(jnp.mean(ref ** 2)))
    # bf16 MXU operands through 4 conv + 3 GN layers: expect ~1% relative error
    # (GroupNorm stats and all elementwise math stay f32; 0/1 matrices exact).
    assert rms_err <= 2.5e-2 * rms_ref + 1e-10, (rms_err, rms_ref)
    assert max_err <= 5e-2 * scale + 1e-9, (max_err, scale)

    print("KERNEL_OK")
</pallas_src>

<mosaic_0001>
module attributes {stable_mosaic.version = 11 : i64} {
  func.func @_unet_fused_kernel(%arg0: i32, %arg1: memref<1x8x512xf32, #tpu.memory_space<vmem>>, %arg2: memref<80x216xbf16, #tpu.memory_space<vmem>>, %arg3: memref<108x1xf32, #tpu.memory_space<vmem>>, %arg4: memref<9x512xf32, #tpu.memory_space<vmem>>, %arg5: memref<9x512x128xbf16, #tpu.memory_space<vmem>>, %arg6: memref<128x512xbf16, #tpu.memory_space<vmem>>, %arg7: memref<24x16xf32, #tpu.memory_space<vmem>>, %arg8: memref<640x2xf32, #tpu.memory_space<vmem>>, %arg9: memref<2x640xf32, #tpu.memory_space<vmem>>, %arg10: memref<1x4x512xf32, #tpu.memory_space<vmem>>) attributes {dimension_semantics = [#tpu.dimension_semantics<parallel>], iteration_bounds = array<i64: 2>, scalar_prefetch = 0 : i64, scratch_operands = 0 : i64, tpu.core_type = #tpu.core_type<tc>, window_params = [{transform_indices = @transform_0, window_bounds = array<i64: 1, 8, 512>}, {pipeline_mode = #tpu.pipeline_mode<synchronous>, transform_indices = @transform_1, window_bounds = array<i64: 80, 216>}, {pipeline_mode = #tpu.pipeline_mode<synchronous>, transform_indices = @transform_2, window_bounds = array<i64: 108, 1>}, {pipeline_mode = #tpu.pipeline_mode<synchronous>, transform_indices = @transform_3, window_bounds = array<i64: 9, 512>}, {pipeline_mode = #tpu.pipeline_mode<synchronous>, transform_indices = @transform_4, window_bounds = array<i64: 9, 512, 128>}, {pipeline_mode = #tpu.pipeline_mode<synchronous>, transform_indices = @transform_5, window_bounds = array<i64: 128, 512>}, {pipeline_mode = #tpu.pipeline_mode<synchronous>, transform_indices = @transform_6, window_bounds = array<i64: 24, 16>}, {pipeline_mode = #tpu.pipeline_mode<synchronous>, transform_indices = @transform_7, window_bounds = array<i64: 640, 2>}, {pipeline_mode = #tpu.pipeline_mode<synchronous>, transform_indices = @transform_8, window_bounds = array<i64: 2, 640>}, {transform_indices = @transform_9, window_bounds = array<i64: 1, 4, 512>}]} {
    %c0 = arith.constant 0 : index
    %c0_0 = arith.constant 0 : index
    %0 = vector.load %arg2[%c0, %c0_0] : memref<80x216xbf16, #tpu.memory_space<vmem>>, vector<8x72xbf16>
    %c16 = arith.constant 16 : index
    %c0_1 = arith.constant 0 : index
    %1 = vector.load %arg2[%c16, %c0_1] : memref<80x216xbf16, #tpu.memory_space<vmem>>, vector<8x72xbf16>
    %c32 = arith.constant 32 : index
    %c0_2 = arith.constant 0 : index
    %2 = vector.load %arg2[%c32, %c0_2] : memref<80x216xbf16, #tpu.memory_space<vmem>>, vector<16x72xbf16>
    %c48 = arith.constant 48 : index
    %c0_3 = arith.constant 0 : index
    %3 = vector.load %arg2[%c48, %c0_3] : memref<80x216xbf16, #tpu.memory_space<vmem>>, vector<8x216xbf16>
    %c64 = arith.constant 64 : index
    %c0_4 = arith.constant 0 : index
    %4 = vector.load %arg2[%c64, %c0_4] : memref<80x216xbf16, #tpu.memory_space<vmem>>, vector<4x8xbf16>
    %c0_5 = arith.constant 0 : index
    %c0_6 = arith.constant 0 : index
    %5 = vector.load %arg3[%c0_5, %c0_6] : memref<108x1xf32, #tpu.memory_space<vmem>>, vector<8x1xf32>
    %c8 = arith.constant 8 : index
    %c0_7 = arith.constant 0 : index
    %6 = vector.load %arg3[%c8, %c0_7] : memref<108x1xf32, #tpu.memory_space<vmem>>, vector<8x1xf32>
    %c16_8 = arith.constant 16 : index
    %c0_9 = arith.constant 0 : index
    %7 = vector.load %arg3[%c16_8, %c0_9] : memref<108x1xf32, #tpu.memory_space<vmem>>, vector<8x1xf32>
    %c24 = arith.constant 24 : index
    %c0_10 = arith.constant 0 : index
    %8 = vector.load %arg3[%c24, %c0_10] : memref<108x1xf32, #tpu.memory_space<vmem>>, vector<8x1xf32>
    %c32_11 = arith.constant 32 : index
    %c0_12 = arith.constant 0 : index
    %9 = vector.load %arg3[%c32_11, %c0_12] : memref<108x1xf32, #tpu.memory_space<vmem>>, vector<16x1xf32>
    %c48_13 = arith.constant 48 : index
    %c0_14 = arith.constant 0 : index
    %10 = vector.load %arg3[%c48_13, %c0_14] : memref<108x1xf32, #tpu.memory_space<vmem>>, vector<16x1xf32>
    %c64_15 = arith.constant 64 : index
    %c0_16 = arith.constant 0 : index
    %11 = vector.load %arg3[%c64_15, %c0_16] : memref<108x1xf32, #tpu.memory_space<vmem>>, vector<16x1xf32>
    %c80 = arith.constant 80 : index
    %c0_17 = arith.constant 0 : index
    %12 = vector.load %arg3[%c80, %c0_17] : memref<108x1xf32, #tpu.memory_space<vmem>>, vector<8x1xf32>
    %c88 = arith.constant 88 : index
    %c0_18 = arith.constant 0 : index
    %13 = vector.load %arg3[%c88, %c0_18] : memref<108x1xf32, #tpu.memory_space<vmem>>, vector<8x1xf32>
    %c96 = arith.constant 96 : index
    %c0_19 = arith.constant 0 : index
    %14 = vector.load %arg3[%c96, %c0_19] : memref<108x1xf32, #tpu.memory_space<vmem>>, vector<8x1xf32>
    %c104 = arith.constant 104 : index
    %c0_20 = arith.constant 0 : index
    %15 = vector.load %arg3[%c104, %c0_20] : memref<108x1xf32, #tpu.memory_space<vmem>>, vector<4x1xf32>
    %c0_21 = arith.constant 0 : index
    %c0_22 = arith.constant 0 : index
    %16 = vector.load %arg7[%c0_21, %c0_22] : memref<24x16xf32, #tpu.memory_space<vmem>>, vector<8x8xf32>
    %c8_23 = arith.constant 8 : index
    %c0_24 = arith.constant 0 : index
    %17 = vector.load %arg7[%c8_23, %c0_24] : memref<24x16xf32, #tpu.memory_space<vmem>>, vector<16x16xf32>
    %c0_25 = arith.constant 0 : index
    %c0_26 = arith.constant 0 : index
    %18 = vector.load %arg8[%c0_25, %c0_26] : memref<640x2xf32, #tpu.memory_space<vmem>>, vector<512x2xf32>
    %c512 = arith.constant 512 : index
    %c0_27 = arith.constant 0 : index
    %19 = vector.load %arg8[%c512, %c0_27] : memref<640x2xf32, #tpu.memory_space<vmem>>, vector<128x2xf32>
    %c0_28 = arith.constant 0 : index
    %c0_29 = arith.constant 0 : index
    %20 = vector.load %arg9[%c0_28, %c0_29] : memref<2x640xf32, #tpu.memory_space<vmem>>, vector<2x512xf32>
    %c0_30 = arith.constant 0 : index
    %c512_31 = arith.constant 512 : index
    %21 = vector.load %arg9[%c0_30, %c512_31] : memref<2x640xf32, #tpu.memory_space<vmem>>, vector<2x128xf32>
    %c0_32 = arith.constant 0 : index
    %c0_33 = arith.constant 0 : index
    %22 = vector.load %arg4[%c0_32, %c0_33] : memref<9x512xf32, #tpu.memory_space<vmem>>, vector<9x512xf32>
    %c0_34 = arith.constant 0 : index
    %c0_35 = arith.constant 0 : index
    %c0_36 = arith.constant 0 : index
    %23 = vector.load %arg1[%c0_34, %c0_35, %c0_36] : memref<1x8x512xf32, #tpu.memory_space<vmem>>, vector<1x8x512xf32>
    %24 = vector.shape_cast %23 : vector<1x8x512xf32> to vector<8x512xf32>
    %c17_i32 = arith.constant 17 : i32
    %25 = tpu.dynamic_rotate %24 by %c17_i32 dim 1 : vector<8x512xf32>, i32 -> vector<8x512xf32>
    %26 = vector.extract_strided_slice %22 {offsets = [0, 0], sizes = [1, 512], strides = [1, 1]} : vector<9x512xf32> to vector<1x512xf32>
    %27 = vector.broadcast %26 : vector<1x512xf32> to vector<8x512xf32>
    %28 = arith.mulf %25, %27 : vector<8x512xf32>
    %c16_i32 = arith.constant 16 : i32
    %29 = tpu.dynamic_rotate %24 by %c16_i32 dim 1 : vector<8x512xf32>, i32 -> vector<8x512xf32>
    %30 = vector.extract_strided_slice %22 {offsets = [1, 0], sizes = [1, 512], strides = [1, 1]} : vector<9x512xf32> to vector<1x512xf32>
    %31 = vector.broadcast %30 : vector<1x512xf32> to vector<8x512xf32>
    %32 = arith.mulf %29, %31 : vector<8x512xf32>
    %c15_i32 = arith.constant 15 : i32
    %33 = tpu.dynamic_rotate %24 by %c15_i32 dim 1 : vector<8x512xf32>, i32 -> vector<8x512xf32>
    %34 = vector.extract_strided_slice %22 {offsets = [2, 0], sizes = [1, 512], strides = [1, 1]} : vector<9x512xf32> to vector<1x512xf32>
    %35 = vector.broadcast %34 : vector<1x512xf32> to vector<8x512xf32>
    %36 = arith.mulf %33, %35 : vector<8x512xf32>
    %c1_i32 = arith.constant 1 : i32
    %37 = tpu.dynamic_rotate %24 by %c1_i32 dim 1 : vector<8x512xf32>, i32 -> vector<8x512xf32>
    %38 = vector.extract_strided_slice %22 {offsets = [3, 0], sizes = [1, 512], strides = [1, 1]} : vector<9x512xf32> to vector<1x512xf32>
    %39 = vector.broadcast %38 : vector<1x512xf32> to vector<8x512xf32>
    %40 = arith.mulf %37, %39 : vector<8x512xf32>
    %c511_i32 = arith.constant 511 : i32
    %41 = tpu.dynamic_rotate %24 by %c511_i32 dim 1 : vector<8x512xf32>, i32 -> vector<8x512xf32>
    %42 = vector.extract_strided_slice %22 {offsets = [5, 0], sizes = [1, 512], strides = [1, 1]} : vector<9x512xf32> to vector<1x512xf32>
    %43 = vector.broadcast %42 : vector<1x512xf32> to vector<8x512xf32>
    %44 = arith.mulf %41, %43 : vector<8x512xf32>
    %c497_i32 = arith.constant 497 : i32
    %45 = tpu.dynamic_rotate %24 by %c497_i32 dim 1 : vector<8x512xf32>, i32 -> vector<8x512xf32>
    %46 = vector.extract_strided_slice %22 {offsets = [6, 0], sizes = [1, 512], strides = [1, 1]} : vector<9x512xf32> to vector<1x512xf32>
    %47 = vector.broadcast %46 : vector<1x512xf32> to vector<8x512xf32>
    %48 = arith.mulf %45, %47 : vector<8x512xf32>
    %c496_i32 = arith.constant 496 : i32
    %49 = tpu.dynamic_rotate %24 by %c496_i32 dim 1 : vector<8x512xf32>, i32 -> vector<8x512xf32>
    %50 = vector.extract_strided_slice %22 {offsets = [7, 0], sizes = [1, 512], strides = [1, 1]} : vector<9x512xf32> to vector<1x512xf32>
    %51 = vector.broadcast %50 : vector<1x512xf32> to vector<8x512xf32>
    %52 = arith.mulf %49, %51 : vector<8x512xf32>
    %c495_i32 = arith.constant 495 : i32
    %53 = tpu.dynamic_rotate %24 by %c495_i32 dim 1 : vector<8x512xf32>, i32 -> vector<8x512xf32>
    %54 = vector.extract_strided_slice %22 {offsets = [8, 0], sizes = [1, 512], strides = [1, 1]} : vector<9x512xf32> to vector<1x512xf32>
    %55 = vector.broadcast %54 : vector<1x512xf32> to vector<8x512xf32>
    %56 = arith.mulf %53, %55 : vector<8x512xf32>
    %57 = tpu.concatenate %28, %32, %36, %40, %24, %44, %48, %52, %56 in 0 : vector<8x512xf32>, vector<8x512xf32>, vector<8x512xf32>, vector<8x512xf32>, vector<8x512xf32>, vector<8x512xf32>, vector<8x512xf32>, vector<8x512xf32>, vector<8x512xf32> -> vector<72x512xf32>
    %58 = arith.truncf %57 : vector<72x512xf32> to vector<72x512xbf16>
    %cst = arith.constant dense<0.000000e+00> : vector<8x512xf32>
    %59 = tpu.matmul %0, %58, %cst {dimension_numbers = #tpu.dot_dimension_numbers<[1], [0], [0], [1], [0, 0, 1, 1], [], []>} : vector<8x72xbf16>, vector<72x512xbf16>, vector<8x512xf32> -> vector<8x512xf32>
    %60 = vector.broadcast %5 : vector<8x1xf32> to vector<8x512xf32>
    %61 = arith.addf %59, %60 : vector<8x512xf32>
    %c17_i32_37 = arith.constant 17 : i32
    %62 = tpu.dynamic_rotate %61 by %c17_i32_37 dim 1 : vector<8x512xf32>, i32 -> vector<8x512xf32>
    %63 = vector.extract_strided_slice %22 {offsets = [0, 0], sizes = [1, 512], strides = [1, 1]} : vector<9x512xf32> to vector<1x512xf32>
    %64 = vector.broadcast %63 : vector<1x512xf32> to vector<8x512xf32>
    %65 = arith.mulf %62, %64 : vector<8x512xf32>
    %c16_i32_38 = arith.constant 16 : i32
    %66 = tpu.dynamic_rotate %61 by %c16_i32_38 dim 1 : vector<8x512xf32>, i32 -> vector<8x512xf32>
    %67 = vector.extract_strided_slice %22 {offsets = [1, 0], sizes = [1, 512], strides = [1, 1]} : vector<9x512xf32> to vector<1x512xf32>
    %68 = vector.broadcast %67 : vector<1x512xf32> to vector<8x512xf32>
    %69 = arith.mulf %66, %68 : vector<8x512xf32>
    %c15_i32_39 = arith.constant 15 : i32
    %70 = tpu.dynamic_rotate %61 by %c15_i32_39 dim 1 : vector<8x512xf32>, i32 -> vector<8x512xf32>
    %71 = vector.extract_strided_slice %22 {offsets = [2, 0], sizes = [1, 512], strides = [1, 1]} : vector<9x512xf32> to vector<1x512xf32>
    %72 = vector.broadcast %71 : vector<1x512xf32> to vector<8x512xf32>
    %73 = arith.mulf %70, %72 : vector<8x512xf32>
    %c1_i32_40 = arith.constant 1 : i32
    %74 = tpu.dynamic_rotate %61 by %c1_i32_40 dim 1 : vector<8x512xf32>, i32 -> vector<8x512xf32>
    %75 = vector.extract_strided_slice %22 {offsets = [3, 0], sizes = [1, 512], strides = [1, 1]} : vector<9x512xf32> to vector<1x512xf32>
    %76 = vector.broadcast %75 : vector<1x512xf32> to vector<8x512xf32>
    %77 = arith.mulf %74, %76 : vector<8x512xf32>
    %c511_i32_41 = arith.constant 511 : i32
    %78 = tpu.dynamic_rotate %61 by %c511_i32_41 dim 1 : vector<8x512xf32>, i32 -> vector<8x512xf32>
    %79 = vector.extract_strided_slice %22 {offsets = [5, 0], sizes = [1, 512], strides = [1, 1]} : vector<9x512xf32> to vector<1x512xf32>
    %80 = vector.broadcast %79 : vector<1x512xf32> to vector<8x512xf32>
    %81 = arith.mulf %78, %80 : vector<8x512xf32>
    %c497_i32_42 = arith.constant 497 : i32
    %82 = tpu.dynamic_rotate %61 by %c497_i32_42 dim 1 : vector<8x512xf32>, i32 -> vector<8x512xf32>
    %83 = vector.extract_strided_slice %22 {offsets = [6, 0], sizes = [1, 512], strides = [1, 1]} : vector<9x512xf32> to vector<1x512xf32>
    %84 = vector.broadcast %83 : vector<1x512xf32> to vector<8x512xf32>
    %85 = arith.mulf %82, %84 : vector<8x512xf32>
    %c496_i32_43 = arith.constant 496 : i32
    %86 = tpu.dynamic_rotate %61 by %c496_i32_43 dim 1 : vector<8x512xf32>, i32 -> vector<8x512xf32>
    %87 = vector.extract_strided_slice %22 {offsets = [7, 0], sizes = [1, 512], strides = [1, 1]} : vector<9x512xf32> to vector<1x512xf32>
    %88 = vector.broadcast %87 : vector<1x512xf32> to vector<8x512xf32>
    %89 = arith.mulf %86, %88 : vector<8x512xf32>
    %c495_i32_44 = arith.constant 495 : i32
    %90 = tpu.dynamic_rotate %61 by %c495_i32_44 dim 1 : vector<8x512xf32>, i32 -> vector<8x512xf32>
    %91 = vector.extract_strided_slice %22 {offsets = [8, 0], sizes = [1, 512], strides = [1, 1]} : vector<9x512xf32> to vector<1x512xf32>
    %92 = vector.broadcast %91 : vector<1x512xf32> to vector<8x512xf32>
    %93 = arith.mulf %90, %92 : vector<8x512xf32>
    %94 = tpu.concatenate %65, %69, %73, %77, %61, %81, %85, %89, %93 in 0 : vector<8x512xf32>, vector<8x512xf32>, vector<8x512xf32>, vector<8x512xf32>, vector<8x512xf32>, vector<8x512xf32>, vector<8x512xf32>, vector<8x512xf32>, vector<8x512xf32> -> vector<72x512xf32>
    %95 = arith.truncf %94 : vector<72x512xf32> to vector<72x512xbf16>
    %cst_45 = arith.constant dense<0.000000e+00> : vector<8x512xf32>
    %96 = tpu.matmul %1, %95, %cst_45 {dimension_numbers = #tpu.dot_dimension_numbers<[1], [0], [0], [1], [0, 0, 1, 1], [], []>} : vector<8x72xbf16>, vector<72x512xbf16>, vector<8x512xf32> -> vector<8x512xf32>
    %97 = vector.broadcast %6 : vector<8x1xf32> to vector<8x512xf32>
    %98 = arith.addf %96, %97 : vector<8x512xf32>
    %cst_46 = arith.constant dense<0.000000e+00> : vector<8x2xf32>
    %99 = tpu.matmul %98, %18, %cst_46 {dimension_numbers = #tpu.dot_dimension_numbers<[1], [0], [0], [1], [0, 0, 1, 1], [], []>} : vector<8x512xf32>, vector<512x2xf32>, vector<8x2xf32> -> vector<8x2xf32>
    %100 = arith.mulf %98, %98 : vector<8x512xf32>
    %cst_47 = arith.constant dense<0.000000e+00> : vector<8x2xf32>
    %101 = tpu.matmul %100, %18, %cst_47 {dimension_numbers = #tpu.dot_dimension_numbers<[1], [0], [0], [1], [0, 0, 1, 1], [], []>} : vector<8x512xf32>, vector<512x2xf32>, vector<8x2xf32> -> vector<8x2xf32>
    %cst_48 = arith.constant dense<0.000000e+00> : vector<8x2xf32>
    %102 = tpu.matmul %16, %99, %cst_48 {dimension_numbers = #tpu.dot_dimension_numbers<[1], [0], [0], [1], [0, 0, 1, 1], [], []>} : vector<8x8xf32>, vector<8x2xf32>, vector<8x2xf32> -> vector<8x2xf32>
    %cst_49 = arith.constant 0.001953125 : f32
    %103 = vector.broadcast %cst_49 : f32 to vector<8x2xf32>
    %104 = arith.mulf %102, %103 : vector<8x2xf32>
    %cst_50 = arith.constant dense<0.000000e+00> : vector<8x2xf32>
    %105 = tpu.matmul %16, %101, %cst_50 {dimension_numbers = #tpu.dot_dimension_numbers<[1], [0], [0], [1], [0, 0, 1, 1], [], []>} : vector<8x8xf32>, vector<8x2xf32>, vector<8x2xf32> -> vector<8x2xf32>
    %cst_51 = arith.constant 0.001953125 : f32
    %106 = vector.broadcast %cst_51 : f32 to vector<8x2xf32>
    %107 = arith.mulf %105, %106 : vector<8x2xf32>
    %108 = arith.mulf %104, %104 : vector<8x2xf32>
    %109 = arith.subf %107, %108 : vector<8x2xf32>
    %cst_52 = arith.constant 9.99999974E-6 : f32
    %110 = vector.broadcast %cst_52 : f32 to vector<8x2xf32>
    %111 = arith.addf %109, %110 : vector<8x2xf32>
    %112 = math.rsqrt %111 : vector<8x2xf32>
    %113 = vector.broadcast %7 : vector<8x1xf32> to vector<8x2xf32>
    %114 = arith.mulf %113, %112 : vector<8x2xf32>
    %115 = arith.mulf %104, %114 : vector<8x2xf32>
    %116 = vector.broadcast %8 : vector<8x1xf32> to vector<8x2xf32>
    %117 = arith.subf %116, %115 : vector<8x2xf32>
    %cst_53 = arith.constant dense<0.000000e+00> : vector<8x512xf32>
    %118 = tpu.matmul %114, %20, %cst_53 {dimension_numbers = #tpu.dot_dimension_numbers<[1], [0], [0], [1], [0, 0, 1, 1], [], []>} : vector<8x2xf32>, vector<2x512xf32>, vector<8x512xf32> -> vector<8x512xf32>
    %119 = arith.mulf %98, %118 : vector<8x512xf32>
    %cst_54 = arith.constant dense<0.000000e+00> : vector<8x512xf32>
    %120 = tpu.matmul %117, %20, %cst_54 {dimension_numbers = #tpu.dot_dimension_numbers<[1], [0], [0], [1], [0, 0, 1, 1], [], []>} : vector<8x2xf32>, vector<2x512xf32>, vector<8x512xf32> -> vector<8x512xf32>
    %121 = arith.addf %119, %120 : vector<8x512xf32>
    %cst_55 = arith.constant 0.000000e+00 : f32
    %122 = vector.broadcast %cst_55 : f32 to vector<8x512xf32>
    %123 = arith.cmpf oge, %121, %122 : vector<8x512xf32>
    %cst_56 = arith.constant 1.000000e-01 : f32
    %124 = vector.broadcast %cst_56 : f32 to vector<8x512xf32>
    %125 = arith.mulf %124, %121 : vector<8x512xf32>
    %126 = arith.select %123, %121, %125 : vector<8x512xi1>, vector<8x512xf32>
    %c511_i32_57 = arith.constant 511 : i32
    %127 = tpu.dynamic_rotate %126 by %c511_i32_57 dim 1 : vector<8x512xf32>, i32 -> vector<8x512xf32>
    %128 = arith.maximumf %126, %127 : vector<8x512xf32>
    %c496_i32_58 = arith.constant 496 : i32
    %129 = tpu.dynamic_rotate %126 by %c496_i32_58 dim 1 : vector<8x512xf32>, i32 -> vector<8x512xf32>
    %c495_i32_59 = arith.constant 495 : i32
    %130 = tpu.dynamic_rotate %126 by %c495_i32_59 dim 1 : vector<8x512xf32>, i32 -> vector<8x512xf32>
    %131 = arith.maximumf %129, %130 : vector<8x512xf32>
    %132 = arith.maximumf %128, %131 : vector<8x512xf32>
    %133 = arith.truncf %132 : vector<8x512xf32> to vector<8x512xbf16>
    %c0_60 = arith.constant 0 : index
    %c0_61 = arith.constant 0 : index
    %c0_62 = arith.constant 0 : index
    %134 = vector.load %arg5[%c0_60, %c0_61, %c0_62] : memref<9x512x128xbf16, #tpu.memory_space<vmem>>, vector<1x512x128xbf16>
    %135 = vector.shape_cast %134 : vector<1x512x128xbf16> to vector<512x128xbf16>
    %cst_63 = arith.constant dense<0.000000e+00> : vector<8x128xf32>
    %136 = tpu.matmul %133, %135, %cst_63 {dimension_numbers = #tpu.dot_dimension_numbers<[1], [0], [0], [1], [0, 0, 1, 1], [], []>} : vector<8x512xbf16>, vector<512x128xbf16>, vector<8x128xf32> -> vector<8x128xf32>
    %c1 = arith.constant 1 : index
    %c0_64 = arith.constant 0 : index
    %c0_65 = arith.constant 0 : index
    %137 = vector.load %arg5[%c1, %c0_64, %c0_65] : memref<9x512x128xbf16, #tpu.memory_space<vmem>>, vector<1x512x128xbf16>
    %138 = vector.shape_cast %137 : vector<1x512x128xbf16> to vector<512x128xbf16>
    %cst_66 = arith.constant dense<0.000000e+00> : vector<8x128xf32>
    %139 = tpu.matmul %133, %138, %cst_66 {dimension_numbers = #tpu.dot_dimension_numbers<[1], [0], [0], [1], [0, 0, 1, 1], [], []>} : vector<8x512xbf16>, vector<512x128xbf16>, vector<8x128xf32> -> vector<8x128xf32>
    %c2 = arith.constant 2 : index
    %c0_67 = arith.constant 0 : index
    %c0_68 = arith.constant 0 : index
    %140 = vector.load %arg5[%c2, %c0_67, %c0_68] : memref<9x512x128xbf16, #tpu.memory_space<vmem>>, vector<1x512x128xbf16>
    %141 = vector.shape_cast %140 : vector<1x512x128xbf16> to vector<512x128xbf16>
    %cst_69 = arith.constant dense<0.000000e+00> : vector<8x128xf32>
    %142 = tpu.matmul %133, %141, %cst_69 {dimension_numbers = #tpu.dot_dimension_numbers<[1], [0], [0], [1], [0, 0, 1, 1], [], []>} : vector<8x512xbf16>, vector<512x128xbf16>, vector<8x128xf32> -> vector<8x128xf32>
    %c3 = arith.constant 3 : index
    %c0_70 = arith.constant 0 : index
    %c0_71 = arith.constant 0 : index
    %143 = vector.load %arg5[%c3, %c0_70, %c0_71] : memref<9x512x128xbf16, #tpu.memory_space<vmem>>, vector<1x512x128xbf16>
    %144 = vector.shape_cast %143 : vector<1x512x128xbf16> to vector<512x128xbf16>
    %cst_72 = arith.constant dense<0.000000e+00> : vector<8x128xf32>
    %145 = tpu.matmul %133, %144, %cst_72 {dimension_numbers = #tpu.dot_dimension_numbers<[1], [0], [0], [1], [0, 0, 1, 1], [], []>} : vector<8x512xbf16>, vector<512x128xbf16>, vector<8x128xf32> -> vector<8x128xf32>
    %c4 = arith.constant 4 : index
    %c0_73 = arith.constant 0 : index
    %c0_74 = arith.constant 0 : index
    %146 = vector.load %arg5[%c4, %c0_73, %c0_74] : memref<9x512x128xbf16, #tpu.memory_space<vmem>>, vector<1x512x128xbf16>
    %147 = vector.shape_cast %146 : vector<1x512x128xbf16> to vector<512x128xbf16>
    %cst_75 = arith.constant dense<0.000000e+00> : vector<8x128xf32>
    %148 = tpu.matmul %133, %147, %cst_75 {dimension_numbers = #tpu.dot_dimension_numbers<[1], [0], [0], [1], [0, 0, 1, 1], [], []>} : vector<8x512xbf16>, vector<512x128xbf16>, vector<8x128xf32> -> vector<8x128xf32>
    %c5 = arith.constant 5 : index
    %c0_76 = arith.constant 0 : index
    %c0_77 = arith.constant 0 : index
    %149 = vector.load %arg5[%c5, %c0_76, %c0_77] : memref<9x512x128xbf16, #tpu.memory_space<vmem>>, vector<1x512x128xbf16>
    %150 = vector.shape_cast %149 : vector<1x512x128xbf16> to vector<512x128xbf16>
    %cst_78 = arith.constant dense<0.000000e+00> : vector<8x128xf32>
    %151 = tpu.matmul %133, %150, %cst_78 {dimension_numbers = #tpu.dot_dimension_numbers<[1], [0], [0], [1], [0, 0, 1, 1], [], []>} : vector<8x512xbf16>, vector<512x128xbf16>, vector<8x128xf32> -> vector<8x128xf32>
    %c6 = arith.constant 6 : index
    %c0_79 = arith.constant 0 : index
    %c0_80 = arith.constant 0 : index
    %152 = vector.load %arg5[%c6, %c0_79, %c0_80] : memref<9x512x128xbf16, #tpu.memory_space<vmem>>, vector<1x512x128xbf16>
    %153 = vector.shape_cast %152 : vector<1x512x128xbf16> to vector<512x128xbf16>
    %cst_81 = arith.constant dense<0.000000e+00> : vector<8x128xf32>
    %154 = tpu.matmul %133, %153, %cst_81 {dimension_numbers = #tpu.dot_dimension_numbers<[1], [0], [0], [1], [0, 0, 1, 1], [], []>} : vector<8x512xbf16>, vector<512x128xbf16>, vector<8x128xf32> -> vector<8x128xf32>
    %c7 = arith.constant 7 : index
    %c0_82 = arith.constant 0 : index
    %c0_83 = arith.constant 0 : index
    %155 = vector.load %arg5[%c7, %c0_82, %c0_83] : memref<9x512x128xbf16, #tpu.memory_space<vmem>>, vector<1x512x128xbf16>
    %156 = vector.shape_cast %155 : vector<1x512x128xbf16> to vector<512x128xbf16>
    %cst_84 = arith.constant dense<0.000000e+00> : vector<8x128xf32>
    %157 = tpu.matmul %133, %156, %cst_84 {dimension_numbers = #tpu.dot_dimension_numbers<[1], [0], [0], [1], [0, 0, 1, 1], [], []>} : vector<8x512xbf16>, vector<512x128xbf16>, vector<8x128xf32> -> vector<8x128xf32>
    %c8_85 = arith.constant 8 : index
    %c0_86 = arith.constant 0 : index
    %c0_87 = arith.constant 0 : index
    %158 = vector.load %arg5[%c8_85, %c0_86, %c0_87] : memref<9x512x128xbf16, #tpu.memory_space<vmem>>, vector<1x512x128xbf16>
    %159 = vector.shape_cast %158 : vector<1x512x128xbf16> to vector<512x128xbf16>
    %cst_88 = arith.constant dense<0.000000e+00> : vector<8x128xf32>
    %160 = tpu.matmul %133, %159, %cst_88 {dimension_numbers = #tpu.dot_dimension_numbers<[1], [0], [0], [1], [0, 0, 1, 1], [], []>} : vector<8x512xbf16>, vector<512x128xbf16>, vector<8x128xf32> -> vector<8x128xf32>
    %161 = tpu.concatenate %136, %139, %142, %145, %148, %151, %154, %157, %160 in 0 : vector<8x128xf32>, vector<8x128xf32>, vector<8x128xf32>, vector<8x128xf32>, vector<8x128xf32>, vector<8x128xf32>, vector<8x128xf32>, vector<8x128xf32>, vector<8x128xf32> -> vector<72x128xf32>
    %162 = arith.truncf %161 : vector<72x128xf32> to vector<72x128xbf16>
    %cst_89 = arith.constant dense<0.000000e+00> : vector<16x128xf32>
    %163 = tpu.matmul %2, %162, %cst_89 {dimension_numbers = #tpu.dot_dimension_numbers<[1], [0], [0], [1], [0, 0, 1, 1], [], []>} : vector<16x72xbf16>, vector<72x128xbf16>, vector<16x128xf32> -> vector<16x128xf32>
    %164 = vector.broadcast %9 : vector<16x1xf32> to vector<16x128xf32>
    %165 = arith.addf %163, %164 : vector<16x128xf32>
    %cst_90 = arith.constant dense<0.000000e+00> : vector<16x2xf32>
    %166 = tpu.matmul %165, %19, %cst_90 {dimension_numbers = #tpu.dot_dimension_numbers<[1], [0], [0], [1], [0, 0, 1, 1], [], []>} : vector<16x128xf32>, vector<128x2xf32>, vector<16x2xf32> -> vector<16x2xf32>
    %167 = arith.mulf %165, %165 : vector<16x128xf32>
    %cst_91 = arith.constant dense<0.000000e+00> : vector<16x2xf32>
    %168 = tpu.matmul %167, %19, %cst_91 {dimension_numbers = #tpu.dot_dimension_numbers<[1], [0], [0], [1], [0, 0, 1, 1], [], []>} : vector<16x128xf32>, vector<128x2xf32>, vector<16x2xf32> -> vector<16x2xf32>
    %cst_92 = arith.constant dense<0.000000e+00> : vector<16x2xf32>
    %169 = tpu.matmul %17, %166, %cst_92 {dimension_numbers = #tpu.dot_dimension_numbers<[1], [0], [0], [1], [0, 0, 1, 1], [], []>} : vector<16x16xf32>, vector<16x2xf32>, vector<16x2xf32> -> vector<16x2xf32>
    %cst_93 = arith.constant 3.906250e-03 : f32
    %170 = vector.broadcast %cst_93 : f32 to vector<16x2xf32>
    %171 = arith.mulf %169, %170 : vector<16x2xf32>
    %cst_94 = arith.constant dense<0.000000e+00> : vector<16x2xf32>
    %172 = tpu.matmul %17, %168, %cst_94 {dimension_numbers = #tpu.dot_dimension_numbers<[1], [0], [0], [1], [0, 0, 1, 1], [], []>} : vector<16x16xf32>, vector<16x2xf32>, vector<16x2xf32> -> vector<16x2xf32>
    %cst_95 = arith.constant 3.906250e-03 : f32
    %173 = vector.broadcast %cst_95 : f32 to vector<16x2xf32>
    %174 = arith.mulf %172, %173 : vector<16x2xf32>
    %175 = arith.mulf %171, %171 : vector<16x2xf32>
    %176 = arith.subf %174, %175 : vector<16x2xf32>
    %cst_96 = arith.constant 9.99999974E-6 : f32
    %177 = vector.broadcast %cst_96 : f32 to vector<16x2xf32>
    %178 = arith.addf %176, %177 : vector<16x2xf32>
    %179 = math.rsqrt %178 : vector<16x2xf32>
    %180 = vector.broadcast %10 : vector<16x1xf32> to vector<16x2xf32>
    %181 = arith.mulf %180, %179 : vector<16x2xf32>
    %182 = arith.mulf %171, %181 : vector<16x2xf32>
    %183 = vector.broadcast %11 : vector<16x1xf32> to vector<16x2xf32>
    %184 = arith.subf %183, %182 : vector<16x2xf32>
    %cst_97 = arith.constant dense<0.000000e+00> : vector<16x128xf32>
    %185 = tpu.matmul %181, %21, %cst_97 {dimension_numbers = #tpu.dot_dimension_numbers<[1], [0], [0], [1], [0, 0, 1, 1], [], []>} : vector<16x2xf32>, vector<2x128xf32>, vector<16x128xf32> -> vector<16x128xf32>
    %186 = arith.mulf %165, %185 : vector<16x128xf32>
    %cst_98 = arith.constant dense<0.000000e+00> : vector<16x128xf32>
    %187 = tpu.matmul %184, %21, %cst_98 {dimension_numbers = #tpu.dot_dimension_numbers<[1], [0], [0], [1], [0, 0, 1, 1], [], []>} : vector<16x2xf32>, vector<2x128xf32>, vector<16x128xf32> -> vector<16x128xf32>
    %188 = arith.addf %186, %187 : vector<16x128xf32>
    %cst_99 = arith.constant 0.000000e+00 : f32
    %189 = vector.broadcast %cst_99 : f32 to vector<16x128xf32>
    %190 = arith.cmpf oge, %188, %189 : vector<16x128xf32>
    %cst_100 = arith.constant 1.000000e-01 : f32
    %191 = vector.broadcast %cst_100 : f32 to vector<16x128xf32>
    %192 = arith.mulf %191, %188 : vector<16x128xf32>
    %193 = arith.select %190, %188, %192 : vector<16x128xi1>, vector<16x128xf32>
    %194 = arith.truncf %193 : vector<16x128xf32> to vector<16x128xbf16>
    %c0_101 = arith.constant 0 : index
    %c0_102 = arith.constant 0 : index
    %195 = vector.load %arg6[%c0_101, %c0_102] : memref<128x512xbf16, #tpu.memory_space<vmem>>, vector<128x512xbf16>
    %cst_103 = arith.constant dense<0.000000e+00> : vector<16x512xf32>
    %196 = tpu.matmul %194, %195, %cst_103 {dimension_numbers = #tpu.dot_dimension_numbers<[1], [0], [0], [1], [0, 0, 1, 1], [], []>} : vector<16x128xbf16>, vector<128x512xbf16>, vector<16x512xf32> -> vector<16x512xf32>
    %197 = tpu.concatenate %196, %126 in 0 : vector<16x512xf32>, vector<8x512xf32> -> vector<24x512xf32>
    %c17_i32_104 = arith.constant 17 : i32
    %198 = tpu.dynamic_rotate %197 by %c17_i32_104 dim 1 : vector<24x512xf32>, i32 -> vector<24x512xf32>
    %199 = vector.extract_strided_slice %22 {offsets = [0, 0], sizes = [1, 512], strides = [1, 1]} : vector<9x512xf32> to vector<1x512xf32>
    %200 = vector.broadcast %199 : vector<1x512xf32> to vector<24x512xf32>
    %201 = arith.mulf %198, %200 : vector<24x512xf32>
    %c16_i32_105 = arith.constant 16 : i32
    %202 = tpu.dynamic_rotate %197 by %c16_i32_105 dim 1 : vector<24x512xf32>, i32 -> vector<24x512xf32>
    %203 = vector.extract_strided_slice %22 {offsets = [1, 0], sizes = [1, 512], strides = [1, 1]} : vector<9x512xf32> to vector<1x512xf32>
    %204 = vector.broadcast %203 : vector<1x512xf32> to vector<24x512xf32>
    %205 = arith.mulf %202, %204 : vector<24x512xf32>
    %c15_i32_106 = arith.constant 15 : i32
    %206 = tpu.dynamic_rotate %197 by %c15_i32_106 dim 1 : vector<24x512xf32>, i32 -> vector<24x512xf32>
    %207 = vector.extract_strided_slice %22 {offsets = [2, 0], sizes = [1, 512], strides = [1, 1]} : vector<9x512xf32> to vector<1x512xf32>
    %208 = vector.broadcast %207 : vector<1x512xf32> to vector<24x512xf32>
    %209 = arith.mulf %206, %208 : vector<24x512xf32>
    %c1_i32_107 = arith.constant 1 : i32
    %210 = tpu.dynamic_rotate %197 by %c1_i32_107 dim 1 : vector<24x512xf32>, i32 -> vector<24x512xf32>
    %211 = vector.extract_strided_slice %22 {offsets = [3, 0], sizes = [1, 512], strides = [1, 1]} : vector<9x512xf32> to vector<1x512xf32>
    %212 = vector.broadcast %211 : vector<1x512xf32> to vector<24x512xf32>
    %213 = arith.mulf %210, %212 : vector<24x512xf32>
    %c511_i32_108 = arith.constant 511 : i32
    %214 = tpu.dynamic_rotate %197 by %c511_i32_108 dim 1 : vector<24x512xf32>, i32 -> vector<24x512xf32>
    %215 = vector.extract_strided_slice %22 {offsets = [5, 0], sizes = [1, 512], strides = [1, 1]} : vector<9x512xf32> to vector<1x512xf32>
    %216 = vector.broadcast %215 : vector<1x512xf32> to vector<24x512xf32>
    %217 = arith.mulf %214, %216 : vector<24x512xf32>
    %c497_i32_109 = arith.constant 497 : i32
    %218 = tpu.dynamic_rotate %197 by %c497_i32_109 dim 1 : vector<24x512xf32>, i32 -> vector<24x512xf32>
    %219 = vector.extract_strided_slice %22 {offsets = [6, 0], sizes = [1, 512], strides = [1, 1]} : vector<9x512xf32> to vector<1x512xf32>
    %220 = vector.broadcast %219 : vector<1x512xf32> to vector<24x512xf32>
    %221 = arith.mulf %218, %220 : vector<24x512xf32>
    %c496_i32_110 = arith.constant 496 : i32
    %222 = tpu.dynamic_rotate %197 by %c496_i32_110 dim 1 : vector<24x512xf32>, i32 -> vector<24x512xf32>
    %223 = vector.extract_strided_slice %22 {offsets = [7, 0], sizes = [1, 512], strides = [1, 1]} : vector<9x512xf32> to vector<1x512xf32>
    %224 = vector.broadcast %223 : vector<1x512xf32> to vector<24x512xf32>
    %225 = arith.mulf %222, %224 : vector<24x512xf32>
    %c495_i32_111 = arith.constant 495 : i32
    %226 = tpu.dynamic_rotate %197 by %c495_i32_111 dim 1 : vector<24x512xf32>, i32 -> vector<24x512xf32>
    %227 = vector.extract_strided_slice %22 {offsets = [8, 0], sizes = [1, 512], strides = [1, 1]} : vector<9x512xf32> to vector<1x512xf32>
    %228 = vector.broadcast %227 : vector<1x512xf32> to vector<24x512xf32>
    %229 = arith.mulf %226, %228 : vector<24x512xf32>
    %230 = tpu.concatenate %201, %205, %209, %213, %197, %217, %221, %225, %229 in 0 : vector<24x512xf32>, vector<24x512xf32>, vector<24x512xf32>, vector<24x512xf32>, vector<24x512xf32>, vector<24x512xf32>, vector<24x512xf32>, vector<24x512xf32>, vector<24x512xf32> -> vector<216x512xf32>
    %231 = arith.truncf %230 : vector<216x512xf32> to vector<216x512xbf16>
    %cst_112 = arith.constant dense<0.000000e+00> : vector<8x512xf32>
    %232 = tpu.matmul %3, %231, %cst_112 {dimension_numbers = #tpu.dot_dimension_numbers<[1], [0], [0], [1], [0, 0, 1, 1], [], []>} : vector<8x216xbf16>, vector<216x512xbf16>, vector<8x512xf32> -> vector<8x512xf32>
    %233 = vector.broadcast %12 : vector<8x1xf32> to vector<8x512xf32>
    %234 = arith.addf %232, %233 : vector<8x512xf32>
    %cst_113 = arith.constant dense<0.000000e+00> : vector<8x2xf32>
    %235 = tpu.matmul %234, %18, %cst_113 {dimension_numbers = #tpu.dot_dimension_numbers<[1], [0], [0], [1], [0, 0, 1, 1], [], []>} : vector<8x512xf32>, vector<512x2xf32>, vector<8x2xf32> -> vector<8x2xf32>
    %236 = arith.mulf %234, %234 : vector<8x512xf32>
    %cst_114 = arith.constant dense<0.000000e+00> : vector<8x2xf32>
    %237 = tpu.matmul %236, %18, %cst_114 {dimension_numbers = #tpu.dot_dimension_numbers<[1], [0], [0], [1], [0, 0, 1, 1], [], []>} : vector<8x512xf32>, vector<512x2xf32>, vector<8x2xf32> -> vector<8x2xf32>
    %cst_115 = arith.constant dense<0.000000e+00> : vector<8x2xf32>
    %238 = tpu.matmul %16, %235, %cst_115 {dimension_numbers = #tpu.dot_dimension_numbers<[1], [0], [0], [1], [0, 0, 1, 1], [], []>} : vector<8x8xf32>, vector<8x2xf32>, vector<8x2xf32> -> vector<8x2xf32>
    %cst_116 = arith.constant 0.001953125 : f32
    %239 = vector.broadcast %cst_116 : f32 to vector<8x2xf32>
    %240 = arith.mulf %238, %239 : vector<8x2xf32>
    %cst_117 = arith.constant dense<0.000000e+00> : vector<8x2xf32>
    %241 = tpu.matmul %16, %237, %cst_117 {dimension_numbers = #tpu.dot_dimension_numbers<[1], [0], [0], [1], [0, 0, 1, 1], [], []>} : vector<8x8xf32>, vector<8x2xf32>, vector<8x2xf32> -> vector<8x2xf32>
    %cst_118 = arith.constant 0.001953125 : f32
    %242 = vector.broadcast %cst_118 : f32 to vector<8x2xf32>
    %243 = arith.mulf %241, %242 : vector<8x2xf32>
    %244 = arith.mulf %240, %240 : vector<8x2xf32>
    %245 = arith.subf %243, %244 : vector<8x2xf32>
    %cst_119 = arith.constant 9.99999974E-6 : f32
    %246 = vector.broadcast %cst_119 : f32 to vector<8x2xf32>
    %247 = arith.addf %245, %246 : vector<8x2xf32>
    %248 = math.rsqrt %247 : vector<8x2xf32>
    %249 = vector.broadcast %13 : vector<8x1xf32> to vector<8x2xf32>
    %250 = arith.mulf %249, %248 : vector<8x2xf32>
    %251 = arith.mulf %240, %250 : vector<8x2xf32>
    %252 = vector.broadcast %14 : vector<8x1xf32> to vector<8x2xf32>
    %253 = arith.subf %252, %251 : vector<8x2xf32>
    %cst_120 = arith.constant dense<0.000000e+00> : vector<8x512xf32>
    %254 = tpu.matmul %250, %20, %cst_120 {dimension_numbers = #tpu.dot_dimension_numbers<[1], [0], [0], [1], [0, 0, 1, 1], [], []>} : vector<8x2xf32>, vector<2x512xf32>, vector<8x512xf32> -> vector<8x512xf32>
    %255 = arith.mulf %234, %254 : vector<8x512xf32>
    %cst_121 = arith.constant dense<0.000000e+00> : vector<8x512xf32>
    %256 = tpu.matmul %253, %20, %cst_121 {dimension_numbers = #tpu.dot_dimension_numbers<[1], [0], [0], [1], [0, 0, 1, 1], [], []>} : vector<8x2xf32>, vector<2x512xf32>, vector<8x512xf32> -> vector<8x512xf32>
    %257 = arith.addf %255, %256 : vector<8x512xf32>
    %cst_122 = arith.constant 0.000000e+00 : f32
    %258 = vector.broadcast %cst_122 : f32 to vector<8x512xf32>
    %259 = arith.cmpf oge, %257, %258 : vector<8x512xf32>
    %cst_123 = arith.constant 1.000000e-01 : f32
    %260 = vector.broadcast %cst_123 : f32 to vector<8x512xf32>
    %261 = arith.mulf %260, %257 : vector<8x512xf32>
    %262 = arith.select %259, %257, %261 : vector<8x512xi1>, vector<8x512xf32>
    %263 = arith.truncf %262 : vector<8x512xf32> to vector<8x512xbf16>
    %cst_124 = arith.constant dense<0.000000e+00> : vector<4x512xf32>
    %264 = tpu.matmul %4, %263, %cst_124 {dimension_numbers = #tpu.dot_dimension_numbers<[1], [0], [0], [1], [0, 0, 1, 1], [], []>} : vector<4x8xbf16>, vector<8x512xbf16>, vector<4x512xf32> -> vector<4x512xf32>
    %265 = vector.broadcast %15 : vector<4x1xf32> to vector<4x512xf32>
    %266 = arith.addf %264, %265 : vector<4x512xf32>
    %c0_125 = arith.constant 0 : index
    %c0_126 = arith.constant 0 : index
    %c0_127 = arith.constant 0 : index
    %267 = vector.load %arg10[%c0_125, %c0_126, %c0_127] : memref<1x4x512xf32, #tpu.memory_space<vmem>>, vector<1x4x512xf32>
    %268 = vector.shape_cast %267 : vector<1x4x512xf32> to vector<4x512xf32>
    %269 = vector.shape_cast %266 : vector<4x512xf32> to vector<1x4x512xf32>
    tpu.vector_store %arg10[%c0_125, %c0_126, %c0_127], %269 {strides = array<i32>} : memref<1x4x512xf32, #tpu.memory_space<vmem>>, vector<1x4x512xf32>,
    return
  }
  func.func @transform_0(%arg0: i32) -> (i32, i32, i32) {
    %c0_i32 = arith.constant 0 : i32
    %c0_i32_0 = arith.constant 0 : i32
    %c0_i32_1 = arith.constant 0 : i32
    return %arg0, %c0_i32, %c0_i32_0 : i32, i32, i32
  }
  func.func @transform_1(%arg0: i32) -> (i32, i32) {
    %c0_i32 = arith.constant 0 : i32
    %c0_i32_0 = arith.constant 0 : i32
    %c0_i32_1 = arith.constant 0 : i32
    return %c0_i32, %c0_i32_0 : i32, i32
  }
  func.func @transform_2(%arg0: i32) -> (i32, i32) {
    %c0_i32 = arith.constant 0 : i32
    %c0_i32_0 = arith.constant 0 : i32
    %c0_i32_1 = arith.constant 0 : i32
    return %c0_i32, %c0_i32_0 : i32, i32
  }
  func.func @transform_3(%arg0: i32) -> (i32, i32) {
    %c0_i32 = arith.constant 0 : i32
    %c0_i32_0 = arith.constant 0 : i32
    %c0_i32_1 = arith.constant 0 : i32
    return %c0_i32, %c0_i32_0 : i32, i32
  }
  func.func @transform_4(%arg0: i32) -> (i32, i32, i32) {
    %c0_i32 = arith.constant 0 : i32
    %c0_i32_0 = arith.constant 0 : i32
    %c0_i32_1 = arith.constant 0 : i32
    %c0_i32_2 = arith.constant 0 : i32
    return %c0_i32, %c0_i32_0, %c0_i32_1 : i32, i32, i32
  }
  func.func @transform_5(%arg0: i32) -> (i32, i32) {
    %c0_i32 = arith.constant 0 : i32
    %c0_i32_0 = arith.constant 0 : i32
    %c0_i32_1 = arith.constant 0 : i32
    return %c0_i32, %c0_i32_0 : i32, i32
  }
  func.func @transform_6(%arg0: i32) -> (i32, i32) {
    %c0_i32 = arith.constant 0 : i32
    %c0_i32_0 = arith.constant 0 : i32
    %c0_i32_1 = arith.constant 0 : i32
    return %c0_i32, %c0_i32_0 : i32, i32
  }
  func.func @transform_7(%arg0: i32) -> (i32, i32) {
    %c0_i32 = arith.constant 0 : i32
    %c0_i32_0 = arith.constant 0 : i32
    %c0_i32_1 = arith.constant 0 : i32
    return %c0_i32, %c0_i32_0 : i32, i32
  }
  func.func @transform_8(%arg0: i32) -> (i32, i32) {
    %c0_i32 = arith.constant 0 : i32
    %c0_i32_0 = arith.constant 0 : i32
    %c0_i32_1 = arith.constant 0 : i32
    return %c0_i32, %c0_i32_0 : i32, i32
  }
  func.func @transform_9(%arg0: i32) -> (i32, i32, i32) {
    %c0_i32 = arith.constant 0 : i32
    %c0_i32_0 = arith.constant 0 : i32
    %c0_i32_1 = arith.constant 0 : i32
    return %arg0, %c0_i32, %c0_i32_0 : i32, i32, i32
  }
}

</mosaic_0001>

<llo_original>
// kernel: unet_forward.1
$region0: #{unet_forward.1}
  #allocation0 [shape = 'u32[]', space=smem, size = 0x4, offset = 0x4, fixed_abs, tag = 'smem constant byte address 0x4 - core index']
  #allocation1 [shape = 'u32[144,128]{1,0:T(1,128)}', space=vmem, size = 0x12000, scoped, tag = 'internal scratch']
  %s0 = inlined_call_operand.vmem [shape: f32[2,8,512], index: 0, kind: input, shape index: {}]
  %s1 = inlined_call_operand.vmem [shape: bf16[80,216], index: 1, kind: input, shape index: {}]
  %s2 = inlined_call_operand.vmem [shape: f32[108,1], index: 2, kind: input, shape index: {}]
  %s3 = inlined_call_operand.hbm [shape: f32[9,512], index: 3, kind: input, shape index: {}]
  %s4 = inlined_call_operand.hbm [shape: bf16[9,512,128], index: 4, kind: input, shape index: {}]
  %s5 = inlined_call_operand.vmem [shape: bf16[128,512], index: 5, kind: input, shape index: {}]
  %s6 = inlined_call_operand.hbm [shape: f32[24,16], index: 6, kind: input, shape index: {}]
  %s7 = inlined_call_operand.vmem [shape: f32[640,2], index: 7, kind: input, shape index: {}]
  %s8 = inlined_call_operand.hbm [shape: f32[2,640], index: 8, kind: input, shape index: {}]
  %s9 = inlined_call_operand.vmem [shape: f32[2,4,512], index: 9, kind: output, shape index: {}]
  %s10 = sld [smem:[#allocation0]]
  $region85: #{unet_forward.1} parent=0
    _
  %s12 = ssub.s32 1, %s10
  %s13 = scalar_select 0, %s12, %s10
  $region1: #{unet_forward.1} parent=0
    #allocation2 [shape = 'u8[32768]{0}', space=vmem, size = 0x8000, scoped, tag = 'input window, operand 3, single buffered']
    #allocation3 [shape = 's32[2]{0}', space=sflag, size = 0x8, scoped, tag = 'scoped memory for unet_forward.1']
    #allocation4 [shape = 'u8[1179648]{0}', space=vmem, size = 0x120000, scoped, tag = 'input window, operand 4, single buffered']
    #allocation5 [shape = 's32[1]{0}', space=sflag, size = 0x4, scoped, tag = 'scoped memory for unet_forward.1']
    #allocation6 [shape = 'u8[12288]{0}', space=vmem, size = 0x3000, scoped, tag = 'input window, operand 6, single buffered']
    #allocation7 [shape = 'u8[5120]{0}', space=vmem, size = 0x1400, scoped, tag = 'input window, operand 8, single buffered']
    #allocation8 [shape = 's32[1]{0}', space=sflag, size = 0x4, scoped, tag = 'scoped memory for unet_forward.1']
    %14 = vsyncpa [#allocation3], 0
    %15 = vsyncpa [#allocation5], 0
    %16 = vsyncpa [#allocation8], 0
    loop: start=0, step=1, limit=4
    $region2: #{unet_forward.1} parent=1 // loop_pre_header
      _
    $region3: #{unet_forward.1} parent=1 // loop_header
      %s18 = sphi 0, %s22
      %p19 = scmp.ge.s32.totalorder %s18, 4
      %s28 = sphi 0, %s30
      %s31 = sphi 0, %s28
      %s32 = sphi 0, %s31
      %s48 = sphi 0, %s32
      %s52 = sphi 0, %s52
      %s54 = sphi 0, %s52
      %s55 = sphi 0, %s54
      %s69 = sphi 0, %s55
      %s73 = sphi 0, %s73
      %s75 = sphi 0, %s73
      %s76 = sphi 0, %s75
      %s90 = sphi 0, %s76
      %s94 = sphi 0, %s94
      %s96 = sphi 0, %s94
      %s97 = sphi 0, %s96
      %s111 = sphi 0, %s97
      %s115 = sphi 0, %s115
      %s117 = sphi 0, %s115
      %s118 = sphi 0, %s117
      %s132 = sphi 0, %s118
      %s136 = sphi 0, %s136
      %s138 = sphi 0, %s136
      %s139 = sphi 0, %s138
      %s153 = sphi 0, %s139
      %s157 = sphi 0, %s157
      %s159 = sphi 0, %s157
      %s160 = sphi 0, %s159
      %s174 = sphi 0, %s160
      %s178 = sphi 0, %s178
      %s180 = sphi 0, %s178
      %s181 = sphi 0, %s180
      %s195 = sphi 0, %s181
      %s199 = sphi 0, %s199
      %s201 = sphi 0, %s199
      %s202 = sphi 0, %s201
      %s216 = sphi 0, %s202
      %s222 = sphi 0, %s224
      %s225 = sphi 0, %s222
      %s226 = sphi 0, %s225
      %s242 = sphi 0, %s226
    $region4: #{unet_forward.1} parent=1 // loop_header_branch
      %21 = sbr.rel (%p19) target = $region8
    $region5: #{unet_forward.1} parent=1 // loop_body
      %s23 = ssub.s32 %s18, 1
      %s24 = ssub.s32 %s18, 2
      %s25 = sadd.s32 %s18, 1
      %s26 = ssub.s32 %s18, %s25
      %p27 = scmp.eq.s32.totalorder %s26, 0
      %s29 = sadd.s32 %s28, 1
      %s30 = scalar_select %p27, %s28, %s29
      %p33 = pneg %p27
      %p34 = scmp.eq.s32.totalorder %s18, 1
      %p35 = por %p33, %p34
      %p36 = scmp.ne.s32.totalorder %s28, %s31
      %p37 = scmp.eq.s32.totalorder %s18, 0
      %p38 = por %p36, %p37
      %p39 = scmp.ne.s32.totalorder %s28, %s31
      %p40 = scmp.eq.s32.totalorder %s23, 1
      %p41 = por %p39, %p40
      %p42 = scmp.ne.s32.totalorder %s31, %s32
      %p43 = scmp.eq.s32.totalorder %s23, 0
      %p44 = por %p42, %p43
      %p45 = scmp.ne.s32.totalorder %s31, %s32
      %p46 = scmp.eq.s32.totalorder %s24, 1
      %p47 = por %p45, %p46
      %p49 = scmp.ne.s32.totalorder %s32, %s48
      %p50 = scmp.eq.s32.totalorder %s24, 0
      %p51 = por %p49, %p50
      %s53 = sadd.s32 %s52, 1
      %p56 = scmp.eq.s32.totalorder %s18, 1
      %p57 = scmp.ne.s32.totalorder %s52, %s54
      %p58 = scmp.eq.s32.totalorder %s18, 0
      %p59 = por %p57, %p58
      %p60 = scmp.ne.s32.totalorder %s52, %s54
      %p61 = scmp.eq.s32.totalorder %s23, 1
      %p62 = por %p60, %p61
      %p63 = scmp.ne.s32.totalorder %s54, %s55
      %p64 = scmp.eq.s32.totalorder %s23, 0
      %p65 = por %p63, %p64
      %p66 = scmp.ne.s32.totalorder %s54, %s55
      %p67 = scmp.eq.s32.totalorder %s24, 1
      %p68 = por %p66, %p67
      %p70 = scmp.ne.s32.totalorder %s55, %s69
      %p71 = scmp.eq.s32.totalorder %s24, 0
      %p72 = por %p70, %p71
      %s74 = sadd.s32 %s73, 1
      %p77 = scmp.eq.s32.totalorder %s18, 1
      %p78 = scmp.ne.s32.totalorder %s73, %s75
      %p79 = scmp.eq.s32.totalorder %s18, 0
      %p80 = por %p78, %p79
      %p81 = scmp.ne.s32.totalorder %s73, %s75
      %p82 = scmp.eq.s32.totalorder %s23, 1
      %p83 = por %p81, %p82
      %p84 = scmp.ne.s32.totalorder %s75, %s76
      %p85 = scmp.eq.s32.totalorder %s23, 0
      %p86 = por %p84, %p85
      %p87 = scmp.ne.s32.totalorder %s75, %s76
      %p88 = scmp.eq.s32.totalorder %s24, 1
      %p89 = por %p87, %p88
      %p91 = scmp.ne.s32.totalorder %s76, %s90
      %p92 = scmp.eq.s32.totalorder %s24, 0
      %p93 = por %p91, %p92
      %s95 = sadd.s32 %s94, 1
      %p98 = scmp.eq.s32.totalorder %s18, 1
      %p99 = scmp.ne.s32.totalorder %s94, %s96
      %p100 = scmp.eq.s32.totalorder %s18, 0
      %p101 = por %p99, %p100
      %p102 = scmp.ne.s32.totalorder %s94, %s96
      %p103 = scmp.eq.s32.totalorder %s23, 1
      %p104 = por %p102, %p103
      %p105 = scmp.ne.s32.totalorder %s96, %s97
      %p106 = scmp.eq.s32.totalorder %s23, 0
      %p107 = por %p105, %p106
      %p108 = scmp.ne.s32.totalorder %s96, %s97
      %p109 = scmp.eq.s32.totalorder %s24, 1
      %p110 = por %p108, %p109
      %p112 = scmp.ne.s32.totalorder %s97, %s111
      %p113 = scmp.eq.s32.totalorder %s24, 0
      %p114 = por %p112, %p113
      %s116 = sadd.s32 %s115, 1
      %p119 = scmp.eq.s32.totalorder %s18, 1
      %p120 = scmp.ne.s32.totalorder %s115, %s117
      %p121 = scmp.eq.s32.totalorder %s18, 0
      %p122 = por %p120, %p121
      %p123 = scmp.ne.s32.totalorder %s115, %s117
      %p124 = scmp.eq.s32.totalorder %s23, 1
      %p125 = por %p123, %p124
      %p126 = scmp.ne.s32.totalorder %s117, %s118
      %p127 = scmp.eq.s32.totalorder %s23, 0
      %p128 = por %p126, %p127
      %p129 = scmp.ne.s32.totalorder %s117, %s118
      %p130 = scmp.eq.s32.totalorder %s24, 1
      %p131 = por %p129, %p130
      %p133 = scmp.ne.s32.totalorder %s118, %s132
      %p134 = scmp.eq.s32.totalorder %s24, 0
      %p135 = por %p133, %p134
      %s137 = sadd.s32 %s136, 1
      %p140 = scmp.eq.s32.totalorder %s18, 1
      %p141 = scmp.ne.s32.totalorder %s136, %s138
      %p142 = scmp.eq.s32.totalorder %s18, 0
      %p143 = por %p141, %p142
      %p144 = scmp.ne.s32.totalorder %s136, %s138
      %p145 = scmp.eq.s32.totalorder %s23, 1
      %p146 = por %p144, %p145
      %p147 = scmp.ne.s32.totalorder %s138, %s139
      %p148 = scmp.eq.s32.totalorder %s23, 0
      %p149 = por %p147, %p148
      %p150 = scmp.ne.s32.totalorder %s138, %s139
      %p151 = scmp.eq.s32.totalorder %s24, 1
      %p152 = por %p150, %p151
      %p154 = scmp.ne.s32.totalorder %s139, %s153
      %p155 = scmp.eq.s32.totalorder %s24, 0
      %p156 = por %p154, %p155
      %s158 = sadd.s32 %s157, 1
      %p161 = scmp.eq.s32.totalorder %s18, 1
      %p162 = scmp.ne.s32.totalorder %s157, %s159
      %p163 = scmp.eq.s32.totalorder %s18, 0
      %p164 = por %p162, %p163
      %p165 = scmp.ne.s32.totalorder %s157, %s159
      %p166 = scmp.eq.s32.totalorder %s23, 1
      %p167 = por %p165, %p166
      %p168 = scmp.ne.s32.totalorder %s159, %s160
      %p169 = scmp.eq.s32.totalorder %s23, 0
      %p170 = por %p168, %p169
      %p171 = scmp.ne.s32.totalorder %s159, %s160
      %p172 = scmp.eq.s32.totalorder %s24, 1
      %p173 = por %p171, %p172
      %p175 = scmp.ne.s32.totalorder %s160, %s174
      %p176 = scmp.eq.s32.totalorder %s24, 0
      %p177 = por %p175, %p176
      %s179 = sadd.s32 %s178, 1
      %p182 = scmp.eq.s32.totalorder %s18, 1
      %p183 = scmp.ne.s32.totalorder %s178, %s180
      %p184 = scmp.eq.s32.totalorder %s18, 0
      %p185 = por %p183, %p184
      %p186 = scmp.ne.s32.totalorder %s178, %s180
      %p187 = scmp.eq.s32.totalorder %s23, 1
      %p188 = por %p186, %p187
      %p189 = scmp.ne.s32.totalorder %s180, %s181
      %p190 = scmp.eq.s32.totalorder %s23, 0
      %p191 = por %p189, %p190
      %p192 = scmp.ne.s32.totalorder %s180, %s181
      %p193 = scmp.eq.s32.totalorder %s24, 1
      %p194 = por %p192, %p193
      %p196 = scmp.ne.s32.totalorder %s181, %s195
      %p197 = scmp.eq.s32.totalorder %s24, 0
      %p198 = por %p196, %p197
      %s200 = sadd.s32 %s199, 1
      %p203 = scmp.eq.s32.totalorder %s18, 1
      %p204 = scmp.ne.s32.totalorder %s199, %s201
      %p205 = scmp.eq.s32.totalorder %s18, 0
      %p206 = por %p204, %p205
      %p207 = scmp.ne.s32.totalorder %s199, %s201
      %p208 = scmp.eq.s32.totalorder %s23, 1
      %p209 = por %p207, %p208
      %p210 = scmp.ne.s32.totalorder %s201, %s202
      %p211 = scmp.eq.s32.totalorder %s23, 0
      %p212 = por %p210, %p211
      %p213 = scmp.ne.s32.totalorder %s201, %s202
      %p214 = scmp.eq.s32.totalorder %s24, 1
      %p215 = por %p213, %p214
      %p217 = scmp.ne.s32.totalorder %s202, %s216
      %p218 = scmp.eq.s32.totalorder %s24, 0
      %p219 = por %p217, %p218
      %s220 = ssub.s32 %s18, %s25
      %p221 = scmp.eq.s32.totalorder %s220, 0
      %s223 = sadd.s32 %s222, 1
      %s224 = scalar_select %p221, %s222, %s223
      %p227 = pneg %p221
      %p228 = scmp.eq.s32.totalorder %s18, 1
      %p229 = por %p227, %p228
      %p230 = scmp.ne.s32.totalorder %s222, %s225
      %p231 = scmp.eq.s32.totalorder %s18, 0
      %p232 = por %p230, %p231
      %p233 = scmp.ne.s32.totalorder %s222, %s225
      %p234 = scmp.eq.s32.totalorder %s23, 1
      %p235 = por %p233, %p234
      %p236 = scmp.ne.s32.totalorder %s225, %s226
      %p237 = scmp.eq.s32.totalorder %s23, 0
      %p238 = por %p236, %p237
      %p239 = scmp.ne.s32.totalorder %s225, %s226
      %p240 = scmp.eq.s32.totalorder %s24, 1
      %p241 = por %p239, %p240
      %p243 = scmp.ne.s32.totalorder %s226, %s242
      %p244 = scmp.eq.s32.totalorder %s24, 0
      %p245 = por %p243, %p244
      %p246 = scmp.le.s32.totalorder 1, %s18
      %p247 = scmp.lt.s32.totalorder %s18, 3
      %p248 = pnand %p246, %p247
      %p249 = pneg %p248
      // Predicated region
      $region9: #{unet_forward.1} parent=5 // pred_check
        _
      $region10: #{unet_forward.1} parent=5 // pred_check_branch
        %251 = sbr.rel (%p248) target = $region12
      $region11: #{unet_forward.1} parent=5 // pred_region
        %s252 = ssub.s32 %s18, 1
        // Predicated region
        $region13: #{unet_forward.1} parent=11 // pred_check
          %p253 = pneg %p65
        $region14: #{unet_forward.1} parent=11 // pred_check_branch
          %255 = sbr.rel (%p253) target = $region16
        $region15: #{unet_forward.1} parent=11 // pred_region
          _
        $region16: #{unet_forward.1} parent=11 // pred_fallthru
          _
        // Predicated region
        $region17: #{unet_forward.1} parent=11 // pred_check
          %p256 = pneg %p86
        $region18: #{unet_forward.1} parent=11 // pred_check_branch
          %258 = sbr.rel (%p256) target = $region20
        $region19: #{unet_forward.1} parent=11 // pred_region
          _
        $region20: #{unet_forward.1} parent=11 // pred_fallthru
          _
        // Predicated region
        $region21: #{unet_forward.1} parent=11 // pred_check
          %p259 = pneg %p107
        $region22: #{unet_forward.1} parent=11 // pred_check_branch
          %261 = sbr.rel (%p259) target = $region24
        $region23: #{unet_forward.1} parent=11 // pred_region
          %s263 = ssub.s32 1024, 1024
          %264 = vsyncadd [#allocation3], %s263
          %s265 = sshll.u32 [#allocation2], 4
          %s266 = int_to_ptr.vmem [resolvable:$true] %s265
          %271 = dma.hbm_to_vmem [thread:$0]  %s3, 1024, %s266, [#allocation3], 512, 512, 32
        $region24: #{unet_forward.1} parent=11 // pred_fallthru
          _
        // Predicated region
        $region25: #{unet_forward.1} parent=11 // pred_check
          %p272 = pneg %p128
        $region26: #{unet_forward.1} parent=11 // pred_check_branch
          %274 = sbr.rel (%p272) target = $region28
        $region27: #{unet_forward.1} parent=11 // pred_region
          %s276 = ssub.s32 36864, 36864
          %277 = vsyncadd [#allocation5], %s276
          %s278 = sshll.u32 [#allocation4], 4
          %s279 = int_to_ptr.vmem [resolvable:$true] %s278
          %284 = dma.hbm_to_vmem [thread:$0]  %s4, 36864, %s279, [#allocation5], 64, 64, 4
        $region28: #{unet_forward.1} parent=11 // pred_fallthru
          _
        // Predicated region
        $region29: #{unet_forward.1} parent=11 // pred_check
          %p285 = pneg %p149
        $region30: #{unet_forward.1} parent=11 // pred_check_branch
          %287 = sbr.rel (%p285) target = $region32
        $region31: #{unet_forward.1} parent=11 // pred_region
          _
        $region32: #{unet_forward.1} parent=11 // pred_fallthru
          _
        // Predicated region
        $region33: #{unet_forward.1} parent=11 // pred_check
          %p288 = pneg %p170
        $region34: #{unet_forward.1} parent=11 // pred_check_branch
          %290 = sbr.rel (%p288) target = $region36
        $region35: #{unet_forward.1} parent=11 // pred_region
          %s292 = ssub.s32 384, 384
          %293 = vsyncadd [#allocation5], %s292
          %s294 = sshll.u32 [#allocation6], 4
          %s295 = int_to_ptr.vmem [resolvable:$true] %s294
          %300 = dma.hbm_to_vmem [thread:$0]  %s6, 384, %s295, [#allocation5], 128, 128, 8
        $region36: #{unet_forward.1} parent=11 // pred_fallthru
          _
        // Predicated region
        $region37: #{unet_forward.1} parent=11 // pred_check
          %p301 = pneg %p191
        $region38: #{unet_forward.1} parent=11 // pred_check_branch
          %303 = sbr.rel (%p301) target = $region40
        $region39: #{unet_forward.1} parent=11 // pred_region
          _
        $region40: #{unet_forward.1} parent=11 // pred_fallthru
          _
        // Predicated region
        $region41: #{unet_forward.1} parent=11 // pred_check
          %p304 = pneg %p212
        $region42: #{unet_forward.1} parent=11 // pred_check_branch
          %306 = sbr.rel (%p304) target = $region44
        $region43: #{unet_forward.1} parent=11 // pred_region
          %s308 = ssub.s32 160, 160
          %309 = vsyncadd [#allocation8], %s308
          %s311 = sshll.u32 [#allocation7], 4
          %s312 = int_to_ptr.vmem [resolvable:$true] %s311
          %314 = dma.hbm_to_vmem [thread:$0]  %s8, 160, %s312, [#allocation8]
        $region44: #{unet_forward.1} parent=11 // pred_fallthru
          _
      $region12: #{unet_forward.1} parent=5 // pred_fallthru
        _
      %p315 = scmp.lt.s32.totalorder %s18, 2
      // Predicated region
      $region45: #{unet_forward.1} parent=5 // pred_check
        %p316 = pneg %p315
      $region46: #{unet_forward.1} parent=5 // pred_check_branch
        %318 = sbr.rel (%p316) target = $region48
      $region47: #{unet_forward.1} parent=5 // pred_region
        // Predicated region
        $region49: #{unet_forward.1} parent=47 // pred_check
          %p319 = pneg %p38
        $region50: #{unet_forward.1} parent=47 // pred_check_branch
          %321 = sbr.rel (%p319) target = $region52
        $region51: #{unet_forward.1} parent=47 // pred_region
          %p322 = scmp.lt.s32.totalorder %s18, 1
          %s323 = scalar_select %p322, %s18, 1
          %s324 = smul.addr %s323, 4
          %s325 = smul.addr %s324, 8
          %s326 = scalar_lea.vmem %s0, %s325
        $region52: #{unet_forward.1} parent=47 // pred_fallthru
          _
      $region48: #{unet_forward.1} parent=5 // pred_fallthru
        _
      %p327 = scmp.le.s32.totalorder 1, %s18
      %p328 = scmp.lt.s32.totalorder %s18, 3
      %p329 = pnand %p327, %p328
      %p330 = pneg %p329
      // Predicated region
      $region53: #{unet_forward.1} parent=5 // pred_check
        _
      $region54: #{unet_forward.1} parent=5 // pred_check_branch
        %332 = sbr.rel (%p329) target = $region56
      $region55: #{unet_forward.1} parent=5 // pred_region
        %s333 = ssub.s32 %s18, 1
        // Predicated region
        $region57: #{unet_forward.1} parent=55 // pred_check
          %p334 = pneg %p107
        $region58: #{unet_forward.1} parent=55 // pred_check_branch
          %336 = sbr.rel (%p334) target = $region60
        $region59: #{unet_forward.1} parent=55 // pred_region
          %337 = dma.done [#allocation3], 1024
        $region60: #{unet_forward.1} parent=55 // pred_fallthru
          _
        // Predicated region
        $region61: #{unet_forward.1} parent=55 // pred_check
          %p338 = pneg %p128
        $region62: #{unet_forward.1} parent=55 // pred_check_branch
          %340 = sbr.rel (%p338) target = $region64
        $region63: #{unet_forward.1} parent=55 // pred_region
          %341 = dma.done [#allocation5], 36864
        $region64: #{unet_forward.1} parent=55 // pred_fallthru
          _
        // Predicated region
        $region65: #{unet_forward.1} parent=55 // pred_check
          %p342 = pneg %p170
        $region66: #{unet_forward.1} parent=55 // pred_check_branch
          %344 = sbr.rel (%p342) target = $region68
        $region67: #{unet_forward.1} parent=55 // pred_region
          %345 = dma.done [#allocation5], 384
        $region68: #{unet_forward.1} parent=55 // pred_fallthru
          _
        // Predicated region
        $region69: #{unet_forward.1} parent=55 // pred_check
          %p346 = pneg %p212
        $region70: #{unet_forward.1} parent=55 // pred_check_branch
          %348 = sbr.rel (%p346) target = $region72
        $region71: #{unet_forward.1} parent=55 // pred_region
          %349 = dma.done [#allocation8], 160
        $region72: #{unet_forward.1} parent=55 // pred_fallthru
          _
        %p350 = scmp.lt.s32.totalorder %s23, 1
        %s351 = scalar_select %p350, %s23, 1
        %s352 = smul.addr %s351, 4
        %s353 = smul.addr %s352, 8
        %s354 = scalar_lea.vmem %s0, %s353
        %p355 = pneg %p44
        %p356 = pneg %p41
        %p357 = pneg %p65
        %p358 = pneg %p62
        %p359 = pneg %p86
        %p360 = pneg %p83
        %p361 = pneg %p107
        %p362 = pneg %p104
        %p363 = pneg %p128
        %p364 = pneg %p125
        %p365 = pneg %p149
        %p366 = pneg %p146
        %p367 = pneg %p170
        %p368 = pneg %p167
        %p369 = pneg %p191
        %p370 = pneg %p188
        %p371 = pneg %p212
        %p372 = pneg %p209
        %p373 = pneg %p238
        %p374 = pneg %p235
        %p375 = scmp.lt.s32.totalorder %s23, 1
        %s376 = scalar_select %p375, %s23, 1
        %s377 = smul.addr %s376, 4
        %s378 = smul.addr %s377, 4
        %s379 = scalar_lea.vmem %s9, %s378
        %p380 = scmp.lt.s32.totalorder %s23, 1
        %s381 = scalar_select %p380, %s23, 1
        %s382 = smul.addr %s381, 4
        %s383 = smul.addr %s382, 8
        %s384 = scalar_lea.vmem %s0, %s383
        %p385 = scmp.lt.s32.totalorder %s23, 1
        %s386 = scalar_select %p385, %s23, 1
        %s387 = smul.addr %s386, 4
        %s388 = smul.addr %s387, 4
        %s389 = scalar_lea.vmem %s9, %s388
        %v391 = vld [vmem:[%s1] sm:$0xf]
        %v392 = vld [vmem:[%s1 + $0x10] sm:$0xf]
        %v393 = vld [vmem:[%s1 + $0x20] sm:$0xf]
        %v394 = vld [vmem:[%s1 + $0x28] sm:$0xf]
        %v395 = vld [vmem:[%s1 + $0x30] sm:$0xff]
        %v396 = vld [vmem:[%s1 + $0x40] sm:$0x3]
        %v397 = vld [vmem:[%s2] sm:$0xff]
        %v398 = vld [vmem:[%s2 + $0x8] sm:$0xff]
        %v399 = vld [vmem:[%s2 + $0x10] sm:$0xff]
        %v400 = vld [vmem:[%s2 + $0x18] sm:$0xff]
        %v401 = vld [vmem:[%s2 + $0x20] sm:$0xff]
        %v402 = vld [vmem:[%s2 + $0x28] sm:$0xff]
        %v403 = vld [vmem:[%s2 + $0x30] sm:$0xff]
        %v404 = vld [vmem:[%s2 + $0x38] sm:$0xff]
        %v405 = vld [vmem:[%s2 + $0x40] sm:$0xff]
        %v406 = vld [vmem:[%s2 + $0x48] sm:$0xff]
        %v407 = vld [vmem:[%s2 + $0x50] sm:$0xff]
        %v408 = vld [vmem:[%s2 + $0x58] sm:$0xff]
        %v409 = vld [vmem:[%s2 + $0x60] sm:$0xff]
        %v410 = vld [vmem:[%s2 + $0x68] sm:$0xf]
        %v411 = vld [vmem:[#allocation6] sm:$0xff]
        %v412 = vld [vmem:[#allocation6 + $0x8] sm:$0xff]
        %v413 = vld [vmem:[#allocation6 + $0x10] sm:$0xff]
        %v414 = vld [vmem:[%s7] sm:$0xff]
        %v415 = vld [vmem:[%s7 + $0x8] sm:$0xff]
        %v416 = vld [vmem:[%s7 + $0x10] sm:$0xff]
        %v417 = vld [vmem:[%s7 + $0x18] sm:$0xff]
        %v418 = vld [vmem:[%s7 + $0x20] sm:$0xff]
        %v419 = vld [vmem:[%s7 + $0x28] sm:$0xff]
        %v420 = vld [vmem:[%s7 + $0x30] sm:$0xff]
        %v421 = vld [vmem:[%s7 + $0x38] sm:$0xff]
        %v422 = vld [vmem:[%s7 + $0x40] sm:$0xff]
        %v423 = vld [vmem:[%s7 + $0x48] sm:$0xff]
        %v424 = vld [vmem:[%s7 + $0x50] sm:$0xff]
        %v425 = vld [vmem:[%s7 + $0x58] sm:$0xff]
        %v426 = vld [vmem:[%s7 + $0x60] sm:$0xff]
        %v427 = vld [vmem:[%s7 + $0x68] sm:$0xff]
        %v428 = vld [vmem:[%s7 + $0x70] sm:$0xff]
        %v429 = vld [vmem:[%s7 + $0x78] sm:$0xff]
        %v430 = vld [vmem:[%s7 + $0x80] sm:$0xff]
        %v431 = vld [vmem:[%s7 + $0x88] sm:$0xff]
        %v432 = vld [vmem:[%s7 + $0x90] sm:$0xff]
        %v433 = vld [vmem:[%s7 + $0x98] sm:$0xff]
        %v434 = vld [vmem:[%s7 + $0xa0] sm:$0xff]
        %v435 = vld [vmem:[%s7 + $0xa8] sm:$0xff]
        %v436 = vld [vmem:[%s7 + $0xb0] sm:$0xff]
        %v437 = vld [vmem:[%s7 + $0xb8] sm:$0xff]
        %v438 = vld [vmem:[%s7 + $0xc0] sm:$0xff]
        %v439 = vld [vmem:[%s7 + $0xc8] sm:$0xff]
        %v440 = vld [vmem:[%s7 + $0xd0] sm:$0xff]
        %v441 = vld [vmem:[%s7 + $0xd8] sm:$0xff]
        %v442 = vld [vmem:[%s7 + $0xe0] sm:$0xff]
        %v443 = vld [vmem:[%s7 + $0xe8] sm:$0xff]
        %v444 = vld [vmem:[%s7 + $0xf0] sm:$0xff]
        %v445 = vld [vmem:[%s7 + $0xf8] sm:$0xff]
        %v446 = vld [vmem:[%s7 + $0x100] sm:$0xff]
        %v447 = vld [vmem:[%s7 + $0x108] sm:$0xff]
        %v448 = vld [vmem:[%s7 + $0x110] sm:$0xff]
        %v449 = vld [vmem:[%s7 + $0x118] sm:$0xff]
        %v450 = vld [vmem:[%s7 + $0x120] sm:$0xff]
        %v451 = vld [vmem:[%s7 + $0x128] sm:$0xff]
        %v452 = vld [vmem:[%s7 + $0x130] sm:$0xff]
        %v453 = vld [vmem:[%s7 + $0x138] sm:$0xff]
        %v454 = vld [vmem:[%s7 + $0x140] sm:$0xff]
        %v455 = vld [vmem:[%s7 + $0x148] sm:$0xff]
        %v456 = vld [vmem:[%s7 + $0x150] sm:$0xff]
        %v457 = vld [vmem:[%s7 + $0x158] sm:$0xff]
        %v458 = vld [vmem:[%s7 + $0x160] sm:$0xff]
        %v459 = vld [vmem:[%s7 + $0x168] sm:$0xff]
        %v460 = vld [vmem:[%s7 + $0x170] sm:$0xff]
        %v461 = vld [vmem:[%s7 + $0x178] sm:$0xff]
        %v462 = vld [vmem:[%s7 + $0x180] sm:$0xff]
        %v463 = vld [vmem:[%s7 + $0x188] sm:$0xff]
        %v464 = vld [vmem:[%s7 + $0x190] sm:$0xff]
        %v465 = vld [vmem:[%s7 + $0x198] sm:$0xff]
        %v466 = vld [vmem:[%s7 + $0x1a0] sm:$0xff]
        %v467 = vld [vmem:[%s7 + $0x1a8] sm:$0xff]
        %v468 = vld [vmem:[%s7 + $0x1b0] sm:$0xff]
        %v469 = vld [vmem:[%s7 + $0x1b8] sm:$0xff]
        %v470 = vld [vmem:[%s7 + $0x1c0] sm:$0xff]
        %v471 = vld [vmem:[%s7 + $0x1c8] sm:$0xff]
        %v472 = vld [vmem:[%s7 + $0x1d0] sm:$0xff]
        %v473 = vld [vmem:[%s7 + $0x1d8] sm:$0xff]
        %v474 = vld [vmem:[%s7 + $0x1e0] sm:$0xff]
        %v475 = vld [vmem:[%s7 + $0x1e8] sm:$0xff]
        %v476 = vld [vmem:[%s7 + $0x1f0] sm:$0xff]
        %v477 = vld [vmem:[%s7 + $0x1f8] sm:$0xff]
        %v478 = vld [vmem:[%s7 + $0x200] sm:$0xff]
        %v479 = vld [vmem:[%s7 + $0x208] sm:$0xff]
        %v480 = vld [vmem:[%s7 + $0x210] sm:$0xff]
        %v481 = vld [vmem:[%s7 + $0x218] sm:$0xff]
        %v482 = vld [vmem:[%s7 + $0x220] sm:$0xff]
        %v483 = vld [vmem:[%s7 + $0x228] sm:$0xff]
        %v484 = vld [vmem:[%s7 + $0x230] sm:$0xff]
        %v485 = vld [vmem:[%s7 + $0x238] sm:$0xff]
        %v486 = vld [vmem:[%s7 + $0x240] sm:$0xff]
        %v487 = vld [vmem:[%s7 + $0x248] sm:$0xff]
        %v488 = vld [vmem:[%s7 + $0x250] sm:$0xff]
        %v489 = vld [vmem:[%s7 + $0x258] sm:$0xff]
        %v490 = vld [vmem:[%s7 + $0x260] sm:$0xff]
        %v491 = vld [vmem:[%s7 + $0x268] sm:$0xff]
        %v492 = vld [vmem:[%s7 + $0x270] sm:$0xff]
        %v493 = vld [vmem:[%s7 + $0x278] sm:$0xff]
        %v494 = vld [vmem:[#allocation7] sm:$0xff]
        %v495 = vld [vmem:[#allocation7 + $0x8] sm:$0x3]
        %v496 = vld [vmem:[#allocation2] sm:$0xff]
        %v497 = vld [vmem:[#allocation2 + $0x8] sm:$0xff]
        %v498 = vld [vmem:[#allocation2 + $0x10] sm:$0xff]
        %v499 = vld [vmem:[#allocation2 + $0x18] sm:$0xff]
        %v500 = vld [vmem:[#allocation2 + $0x20] sm:$0x1]
        %v501 = vld [vmem:[#allocation2 + $0x28] sm:$0x1]
        %v502 = vld [vmem:[#allocation2 + $0x30] sm:$0x1]
        %v503 = vld [vmem:[#allocation2 + $0x38] sm:$0x1]
        %v504 = vld [vmem:[%s384] sm:$0xff]
        %v505 = vld [vmem:[%s384 + $0x8] sm:$0xff]
        %v506 = vld [vmem:[%s384 + $0x10] sm:$0xff]
        %v507 = vld [vmem:[%s384 + $0x18] sm:$0xff]
        %508 = vrot.lane.b32.xlu0 %v504, 17
        %v509 = vpop.permute.xlu0 %508
        %510 = vrot.lane.b32.xlu0 %v505, 17
        %v511 = vpop.permute.xlu0 %510
        %512 = vrot.lane.b32.xlu0 %v506, 17
        %v513 = vpop.permute.xlu0 %512
        %514 = vrot.lane.b32.xlu0 %v507, 17
        %v515 = vpop.permute.xlu0 %514
        %v516 = vlaneseq
        %v517 = vand.u32 %v516, 127
        %vm518 = vcmp.lt.s32.totalorder %v517, 17
        %v519 = vsel %vm518, %v513, %v515
        %v520 = vsel %vm518, %v511, %v513
        %v521 = vsel %vm518, %v509, %v511
        %v522 = vsel %vm518, %v515, %v509
        %v523 = vlaneseq
        %v524 = vshrl.u32 %v523, 7
        %v525 = vsub.s32 0, %v524
        %v526 = vrot.slane %v496, %v525
        %v527 = vlaneseq
        %v528 = vshrl.u32 %v527, 7
        %v529 = vsub.s32 0, %v528
        %v530 = vrot.slane %v497, %v529
        %v531 = vlaneseq
        %v532 = vshrl.u32 %v531, 7
        %v533 = vsub.s32 0, %v532
        %v534 = vrot.slane %v498, %v533
        %v535 = vlaneseq
        %v536 = vshrl.u32 %v535, 7
        %v537 = vsub.s32 0, %v536
        %v538 = vrot.slane %v499, %v537
        %v539 = vmul.f32 %v522, %v526
        %v540 = vmul.f32 %v521, %v530
        %v541 = vmul.f32 %v520, %v534
        %v542 = vmul.f32 %v519, %v538
        %543 = vrot.lane.b32.xlu0 %v504, 16
        %v544 = vpop.permute.xlu0 %543
        %545 = vrot.lane.b32.xlu0 %v505, 16
        %v546 = vpop.permute.xlu0 %545
        %547 = vrot.lane.b32.xlu0 %v506, 16
        %v548 = vpop.permute.xlu0 %547
        %549 = vrot.lane.b32.xlu0 %v507, 16
        %v550 = vpop.permute.xlu0 %549
        %vm551 = vcmp.lt.s32.totalorder %v517, 16
        %v552 = vsel %vm551, %v548, %v550
        %v553 = vsel %vm551, %v546, %v548
        %v554 = vsel %vm551, %v544, %v546
        %v555 = vsel %vm551, %v550, %v544
        %v556 = vlaneseq
        %v557 = vshrl.u32 %v556, 7
        %v558 = vsub.s32 1, %v557
        %v559 = vrot.slane %v496, %v558
        %v560 = vlaneseq
        %v561 = vshrl.u32 %v560, 7
        %v562 = vsub.s32 1, %v561
        %v563 = vrot.slane %v497, %v562
        %v564 = vlaneseq
        %v565 = vshrl.u32 %v564, 7
        %v566 = vsub.s32 1, %v565
        %v567 = vrot.slane %v498, %v566
        %v568 = vlaneseq
        %v569 = vshrl.u32 %v568, 7
        %v570 = vsub.s32 1, %v569
        %v571 = vrot.slane %v499, %v570
        %v572 = vmul.f32 %v555, %v559
        %v573 = vmul.f32 %v554, %v563
        %v574 = vmul.f32 %v553, %v567
        %v575 = vmul.f32 %v552, %v571
        %576 = vrot.lane.b32.xlu0 %v504, 15
        %v577 = vpop.permute.xlu0 %576
        %578 = vrot.lane.b32.xlu0 %v505, 15
        %v579 = vpop.permute.xlu0 %578
        %580 = vrot.lane.b32.xlu0 %v506, 15
        %v581 = vpop.permute.xlu0 %580
        %582 = vrot.lane.b32.xlu0 %v507, 15
        %v583 = vpop.permute.xlu0 %582
        %vm584 = vcmp.lt.s32.totalorder %v517, 15
        %v585 = vsel %vm584, %v581, %v583
        %v586 = vsel %vm584, %v579, %v581
        %v587 = vsel %vm584, %v577, %v579
        %v588 = vsel %vm584, %v583, %v577
        %v589 = vlaneseq
        %v590 = vshrl.u32 %v589, 7
        %v591 = vsub.s32 2, %v590
        %v592 = vrot.slane %v496, %v591
        %v593 = vlaneseq
        %v594 = vshrl.u32 %v593, 7
        %v595 = vsub.s32 2, %v594
        %v596 = vrot.slane %v497, %v595
        %v597 = vlaneseq
        %v598 = vshrl.u32 %v597, 7
        %v599 = vsub.s32 2, %v598
        %v600 = vrot.slane %v498, %v599
        %v601 = vlaneseq
        %v602 = vshrl.u32 %v601, 7
        %v603 = vsub.s32 2, %v602
        %v604 = vrot.slane %v499, %v603
        %v605 = vmul.f32 %v588, %v592
        %v606 = vmul.f32 %v587, %v596
        %v607 = vmul.f32 %v586, %v600
        %v608 = vmul.f32 %v585, %v604
        %609 = vrot.lane.b32.xlu0 %v504, 1
        %v610 = vpop.permute.xlu0 %609
        %611 = vrot.lane.b32.xlu0 %v505, 1
        %v612 = vpop.permute.xlu0 %611
        %613 = vrot.lane.b32.xlu0 %v506, 1
        %v614 = vpop.permute.xlu0 %613
        %615 = vrot.lane.b32.xlu0 %v507, 1
        %v616 = vpop.permute.xlu0 %615
        %vm617 = vcmp.lt.s32.totalorder %v517, 1
        %v618 = vsel %vm617, %v614, %v616
        %v619 = vsel %vm617, %v612, %v614
        %v620 = vsel %vm617, %v610, %v612
        %v621 = vsel %vm617, %v616, %v610
        %v622 = vlaneseq
        %v623 = vshrl.u32 %v622, 7
        %v624 = vsub.s32 3, %v623
        %v625 = vrot.slane %v496, %v624
        %v626 = vlaneseq
        %v627 = vshrl.u32 %v626, 7
        %v628 = vsub.s32 3, %v627
        %v629 = vrot.slane %v497, %v628
        %v630 = vlaneseq
        %v631 = vshrl.u32 %v630, 7
        %v632 = vsub.s32 3, %v631
        %v633 = vrot.slane %v498, %v632
        %v634 = vlaneseq
        %v635 = vshrl.u32 %v634, 7
        %v636 = vsub.s32 3, %v635
        %v637 = vrot.slane %v499, %v636
        %v638 = vmul.f32 %v621, %v625
        %v639 = vmul.f32 %v620, %v629
        %v640 = vmul.f32 %v619, %v633
        %v641 = vmul.f32 %v618, %v637
        %642 = vrot.lane.b32.xlu0 %v504, 127
        %v643 = vpop.permute.xlu0 %642
        %644 = vrot.lane.b32.xlu0 %v505, 127
        %v645 = vpop.permute.xlu0 %644
        %646 = vrot.lane.b32.xlu0 %v506, 127
        %v647 = vpop.permute.xlu0 %646
        %648 = vrot.lane.b32.xlu0 %v507, 127
        %v649 = vpop.permute.xlu0 %648
        %vm650 = vcmp.lt.s32.totalorder %v517, 127
        %v651 = vsel %vm650, %v647, %v649
        %v652 = vsel %vm650, %v645, %v647
        %v653 = vsel %vm650, %v643, %v645
        %v654 = vsel %vm650, %v649, %v643
        %v655 = vlaneseq
        %v656 = vshrl.u32 %v655, 7
        %v657 = vsub.s32 5, %v656
        %v658 = vrot.slane %v496, %v657
        %v659 = vlaneseq
        %v660 = vshrl.u32 %v659, 7
        %v661 = vsub.s32 5, %v660
        %v662 = vrot.slane %v497, %v661
        %v663 = vlaneseq
        %v664 = vshrl.u32 %v663, 7
        %v665 = vsub.s32 5, %v664
        %v666 = vrot.slane %v498, %v665
        %v667 = vlaneseq
        %v668 = vshrl.u32 %v667, 7
        %v669 = vsub.s32 5, %v668
        %v670 = vrot.slane %v499, %v669
        %v671 = vmul.f32 %v653, %v658
        %v672 = vmul.f32 %v652, %v662
        %v673 = vmul.f32 %v651, %v666
        %v674 = vmul.f32 %v654, %v670
        %675 = vrot.lane.b32.xlu0 %v504, 113
        %v676 = vpop.permute.xlu0 %675
        %677 = vrot.lane.b32.xlu0 %v505, 113
        %v678 = vpop.permute.xlu0 %677
        %679 = vrot.lane.b32.xlu0 %v506, 113
        %v680 = vpop.permute.xlu0 %679
        %681 = vrot.lane.b32.xlu0 %v507, 113
        %v682 = vpop.permute.xlu0 %681
        %vm683 = vcmp.lt.s32.totalorder %v517, 113
        %v684 = vsel %vm683, %v680, %v682
        %v685 = vsel %vm683, %v678, %v680
        %v686 = vsel %vm683, %v676, %v678
        %v687 = vsel %vm683, %v682, %v676
        %v688 = vlaneseq
        %v689 = vshrl.u32 %v688, 7
        %v690 = vsub.s32 6, %v689
        %v691 = vrot.slane %v496, %v690
        %v692 = vlaneseq
        %v693 = vshrl.u32 %v692, 7
        %v694 = vsub.s32 6, %v693
        %v695 = vrot.slane %v497, %v694
        %v696 = vlaneseq
        %v697 = vshrl.u32 %v696, 7
        %v698 = vsub.s32 6, %v697
        %v699 = vrot.slane %v498, %v698
        %v700 = vlaneseq
        %v701 = vshrl.u32 %v700, 7
        %v702 = vsub.s32 6, %v701
        %v703 = vrot.slane %v499, %v702
        %v704 = vmul.f32 %v686, %v691
        %v705 = vmul.f32 %v685, %v695
        %v706 = vmul.f32 %v684, %v699
        %v707 = vmul.f32 %v687, %v703
        %708 = vrot.lane.b32.xlu0 %v504, 112
        %v709 = vpop.permute.xlu0 %708
        %710 = vrot.lane.b32.xlu0 %v505, 112
        %v711 = vpop.permute.xlu0 %710
        %712 = vrot.lane.b32.xlu0 %v506, 112
        %v713 = vpop.permute.xlu0 %712
        %714 = vrot.lane.b32.xlu0 %v507, 112
        %v715 = vpop.permute.xlu0 %714
        %vm716 = vcmp.lt.s32.totalorder %v517, 112
        %v717 = vsel %vm716, %v713, %v715
        %v718 = vsel %vm716, %v711, %v713
        %v719 = vsel %vm716, %v709, %v711
        %v720 = vsel %vm716, %v715, %v709
        %v721 = vlaneseq
        %v722 = vshrl.u32 %v721, 7
        %v723 = vsub.s32 7, %v722
        %v724 = vrot.slane %v496, %v723
        %v725 = vlaneseq
        %v726 = vshrl.u32 %v725, 7
        %v727 = vsub.s32 7, %v726
        %v728 = vrot.slane %v497, %v727
        %v729 = vlaneseq
        %v730 = vshrl.u32 %v729, 7
        %v731 = vsub.s32 7, %v730
        %v732 = vrot.slane %v498, %v731
        %v733 = vlaneseq
        %v734 = vshrl.u32 %v733, 7
        %v735 = vsub.s32 7, %v734
        %v736 = vrot.slane %v499, %v735
        %v737 = vmul.f32 %v719, %v724
        %v738 = vmul.f32 %v718, %v728
        %v739 = vmul.f32 %v717, %v732
        %v740 = vmul.f32 %v720, %v736
        %741 = vrot.lane.b32.xlu0 %v504, 111
        %v742 = vpop.permute.xlu0 %741
        %743 = vrot.lane.b32.xlu0 %v505, 111
        %v744 = vpop.permute.xlu0 %743
        %745 = vrot.lane.b32.xlu0 %v506, 111
        %v746 = vpop.permute.xlu0 %745
        %747 = vrot.lane.b32.xlu0 %v507, 111
        %v748 = vpop.permute.xlu0 %747
        %vm749 = vcmp.lt.s32.totalorder %v517, 111
        %v750 = vsel %vm749, %v746, %v748
        %v751 = vsel %vm749, %v744, %v746
        %v752 = vsel %vm749, %v742, %v744
        %v753 = vsel %vm749, %v748, %v742
        %v754 = vlaneseq
        %v755 = vshrl.u32 %v754, 7
        %v756 = vsub.s32 0, %v755
        %v757 = vrot.slane %v500, %v756
        %v758 = vlaneseq
        %v759 = vshrl.u32 %v758, 7
        %v760 = vsub.s32 0, %v759
        %v761 = vrot.slane %v501, %v760
        %v762 = vlaneseq
        %v763 = vshrl.u32 %v762, 7
        %v764 = vsub.s32 0, %v763
        %v765 = vrot.slane %v502, %v764
        %v766 = vlaneseq
        %v767 = vshrl.u32 %v766, 7
        %v768 = vsub.s32 0, %v767
        %v769 = vrot.slane %v503, %v768
        %v770 = vmul.f32 %v752, %v757
        %v771 = vmul.f32 %v751, %v761
        %v772 = vmul.f32 %v750, %v765
        %v773 = vmul.f32 %v753, %v769
        %v774 = vpack.c.bf16 %v572, %v539
        %v775 = vpack.c.bf16 %v573, %v540
        %v776 = vpack.c.bf16 %v574, %v541
        %v777 = vpack.c.bf16 %v575, %v542
        %v778 = vpack.c.bf16 %v638, %v605
        %v779 = vpack.c.bf16 %v639, %v606
        %v780 = vpack.c.bf16 %v640, %v607
        %v781 = vpack.c.bf16 %v641, %v608
        %v782 = vpack.c.bf16 %v671, %v504
        %v783 = vpack.c.bf16 %v672, %v505
        %v784 = vpack.c.bf16 %v673, %v506
        %v785 = vpack.c.bf16 %v674, %v507
        %v786 = vpack.c.bf16 %v737, %v704
        %v787 = vpack.c.bf16 %v738, %v705
        %v788 = vpack.c.bf16 %v739, %v706
        %v789 = vpack.c.bf16 %v740, %v707
        %v790 = vpack.c.bf16 %v770, %v770
        %v791 = vpack.c.bf16 %v771, %v771
        %v792 = vpack.c.bf16 %v772, %v772
        %v793 = vpack.c.bf16 %v773, %v773
        %795 = vset.pattern.permute.xlu0 0
        %796 = vperm.xlu0 %795, %v397
        %v797 = vpop.permute.xlu0 %796
        %vm799 = vcmask 588800
        %v801 = vsel %vm799, %v391, 0
        %vm803 = vcmask 1043456
        %v805 = vsel %vm803, %v790, 0
        %v808 = vsel %vm803, %v791, 0
        %v811 = vsel %vm803, %v792, 0
        %v814 = vsel %vm803, %v793, 0
        %816 = vmatprep.subr.bf16.mxu0 %v775
        %817 = vmatpush1.bf16.msra.mxu0 %v774
        %818 = vmatprep.subr.bf16.mxu0 %v779
        %819 = vmatpush1.bf16.msra.mxu0 %v778
        %820 = vmatprep.subr.bf16.mxu0 %v783
        %821 = vmatpush1.bf16.msra.mxu0 %v782
        %822 = vmatprep.subr.bf16.mxu0 %v787
        %823 = vmatpush1.bf16.msra.mxu0 %v786
        %824 = vmatprep.subr.bf16.mxu0 %v808
        %825 = vmatpush1.bf16.msra.mxu0 %v805
        %826 = vmatprep.subr.bf16.mxu0 0
        %827 = vmatpush1.bf16.msra.mxu0 0
        %828 = vmatprep.subr.bf16.mxu0 0
        %829 = vmatpush1.bf16.msra.mxu0 0
        %830 = vmatprep.subr.bf16.mxu0 0
        %831 = vmatpush1.bf16.msra.mxu0 0
        %832 = vmatprep.subr.bf16.mxu0 0
        %833 = vmatpush1.bf16.msra.mxu0 0
        %834 = vmatprep.subr.bf16.mxu0 0
        %835 = vmatpush1.bf16.msra.mxu0 0
        %836 = vmatprep.subr.bf16.mxu0 0
        %837 = vmatpush1.bf16.msra.mxu0 0
        %838 = vmatprep.subr.bf16.mxu0 0
        %839 = vmatpush1.bf16.msra.mxu0 0
        %840 = vmatprep.subr.bf16.mxu0 0
        %841 = vmatpush1.bf16.msra.mxu0 0
        %842 = vmatprep.subr.bf16.mxu0 0
        %843 = vmatpush1.bf16.msra.mxu0 0
        %844 = vmatprep.subr.bf16.mxu0 0
        %845 = vmatpush1.bf16.msra.mxu0 0
        %846 = vmatprep.subr.bf16.mxu0 0
        %847 = vmatpush1.bf16.msra.mxu0 0
        %848 = vmatprep.mubr.bf16.mxu0 0
        %849 = vmatmul.mubr.bf16.gmra.mrb[0].mxu0 %v801
        %v850 = vpop.f32.mrb[0].mxu0
        %v851 = vadd.f32 %v797, %v850
        %v852 = vpop.f32.mrb[0].mxu0
        %v853 = vadd.f32 %v797, %v852
        %v854 = vpop.f32.mrb[0].mxu0
        %v855 = vpop.f32.mrb[0].mxu0
        %856 = vdwg.mxu0
        %857 = vmatprep.subr.bf16.mxu0 %v777
        %858 = vmatpush1.bf16.msra.mxu0 %v776
        %859 = vmatprep.subr.bf16.mxu0 %v781
        %860 = vmatpush1.bf16.msra.mxu0 %v780
        %861 = vmatprep.subr.bf16.mxu0 %v785
        %862 = vmatpush1.bf16.msra.mxu0 %v784
        %863 = vmatprep.subr.bf16.mxu0 %v789
        %864 = vmatpush1.bf16.msra.mxu0 %v788
        %865 = vmatprep.subr.bf16.mxu0 %v814
        %866 = vmatpush1.bf16.msra.mxu0 %v811
        %867 = vmatprep.subr.bf16.mxu0 0
        %868 = vmatpush1.bf16.msra.mxu0 0
        %869 = vmatprep.subr.bf16.mxu0 0
        %870 = vmatpush1.bf16.msra.mxu0 0
        %871 = vmatprep.subr.bf16.mxu0 0
        %872 = vmatpush1.bf16.msra.mxu0 0
        %873 = vmatprep.subr.bf16.mxu0 0
        %874 = vmatpush1.bf16.msra.mxu0 0
        %875 = vmatprep.subr.bf16.mxu0 0
        %876 = vmatpush1.bf16.msra.mxu0 0
        %877 = vmatprep.subr.bf16.mxu0 0
        %878 = vmatpush1.bf16.msra.mxu0 0
        %879 = vmatprep.subr.bf16.mxu0 0
        %880 = vmatpush1.bf16.msra.mxu0 0
        %881 = vmatprep.subr.bf16.mxu0 0
        %882 = vmatpush1.bf16.msra.mxu0 0
        %883 = vmatprep.subr.bf16.mxu0 0
        %884 = vmatpush1.bf16.msra.mxu0 0
        %885 = vmatprep.subr.bf16.mxu0 0
        %886 = vmatpush1.bf16.msra.mxu0 0
        %887 = vmatprep.subr.bf16.mxu0 0
        %888 = vmatpush1.bf16.msra.mxu0 0
        %889 = vmatprep.mubr.bf16.mxu0 0
        %890 = vmatmul.mubr.bf16.gmra.mrb[0].mxu0 %v801
        %v891 = vpop.f32.mrb[0].mxu0
        %v892 = vadd.f32 %v797, %v891
        %v893 = vpop.f32.mrb[0].mxu0
        %v894 = vadd.f32 %v797, %v893
        %v895 = vpop.f32.mrb[0].mxu0
        %v896 = vpop.f32.mrb[0].mxu0
        %897 = vdwg.mxu0
        %898 = vrot.lane.b32.xlu0 %v851, 17
        %v899 = vpop.permute.xlu0 %898
        %900 = vrot.lane.b32.xlu0 %v853, 17
        %v901 = vpop.permute.xlu0 %900
        %902 = vrot.lane.b32.xlu0 %v892, 17
        %v903 = vpop.permute.xlu0 %902
        %904 = vrot.lane.b32.xlu0 %v894, 17
        %v905 = vpop.permute.xlu0 %904
        %v906 = vsel %vm518, %v903, %v905
        %v907 = vsel %vm518, %v901, %v903
        %v908 = vsel %vm518, %v899, %v901
        %v909 = vsel %vm518, %v905, %v899
        %v910 = vmul.f32 %v909, %v526
        %v911 = vmul.f32 %v908, %v530
        %v912 = vmul.f32 %v907, %v534
        %v913 = vmul.f32 %v906, %v538
        %914 = vrot.lane.b32.xlu0 %v851, 16
        %v915 = vpop.permute.xlu0 %914
        %916 = vrot.lane.b32.xlu0 %v853, 16
        %v917 = vpop.permute.xlu0 %916
        %918 = vrot.lane.b32.xlu0 %v892, 16
        %v919 = vpop.permute.xlu0 %918
        %920 = vrot.lane.b32.xlu0 %v894, 16
        %v921 = vpop.permute.xlu0 %920
        %v922 = vsel %vm551, %v919, %v921
        %v923 = vsel %vm551, %v917, %v919
        %v924 = vsel %vm551, %v915, %v917
        %v925 = vsel %vm551, %v921, %v915
        %v926 = vmul.f32 %v925, %v559
        %v927 = vmul.f32 %v924, %v563
        %v928 = vmul.f32 %v923, %v567
        %v929 = vmul.f32 %v922, %v571
        %930 = vrot.lane.b32.xlu0 %v851, 15
        %v931 = vpop.permute.xlu0 %930
        %932 = vrot.lane.b32.xlu0 %v853, 15
        %v933 = vpop.permute.xlu0 %932
        %934 = vrot.lane.b32.xlu0 %v892, 15
        %v935 = vpop.permute.xlu0 %934
        %936 = vrot.lane.b32.xlu0 %v894, 15
        %v937 = vpop.permute.xlu0 %936
        %v938 = vsel %vm584, %v935, %v937
        %v939 = vsel %vm584, %v933, %v935
        %v940 = vsel %vm584, %v931, %v933
        %v941 = vsel %vm584, %v937, %v931
        %v942 = vmul.f32 %v941, %v592
        %v943 = vmul.f32 %v940, %v596
        %v944 = vmul.f32 %v939, %v600
        %v945 = vmul.f32 %v938, %v604
        %946 = vrot.lane.b32.xlu0 %v851, 1
        %v947 = vpop.permute.xlu0 %946
        %948 = vrot.lane.b32.xlu0 %v853, 1
        %v949 = vpop.permute.xlu0 %948
        %950 = vrot.lane.b32.xlu0 %v892, 1
        %v951 = vpop.permute.xlu0 %950
        %952 = vrot.lane.b32.xlu0 %v894, 1
        %v953 = vpop.permute.xlu0 %952
        %v954 = vsel %vm617, %v951, %v953
        %v955 = vsel %vm617, %v949, %v951
        %v956 = vsel %vm617, %v947, %v949
        %v957 = vsel %vm617, %v953, %v947
        %v958 = vmul.f32 %v957, %v625
        %v959 = vmul.f32 %v956, %v629
        %v960 = vmul.f32 %v955, %v633
        %v961 = vmul.f32 %v954, %v637
        %962 = vrot.lane.b32.xlu0 %v851, 127
        %v963 = vpop.permute.xlu0 %962
        %964 = vrot.lane.b32.xlu0 %v853, 127
        %v965 = vpop.permute.xlu0 %964
        %966 = vrot.lane.b32.xlu0 %v892, 127
        %v967 = vpop.permute.xlu0 %966
        %968 = vrot.lane.b32.xlu0 %v894, 127
        %v969 = vpop.permute.xlu0 %968
        %v970 = vsel %vm650, %v967, %v969
        %v971 = vsel %vm650, %v965, %v967
        %v972 = vsel %vm650, %v963, %v965
        %v973 = vsel %vm650, %v969, %v963
        %v974 = vmul.f32 %v972, %v658
        %v975 = vmul.f32 %v971, %v662
        %v976 = vmul.f32 %v970, %v666
        %v977 = vmul.f32 %v973, %v670
        %978 = vrot.lane.b32.xlu0 %v851, 113
        %v979 = vpop.permute.xlu0 %978
        %980 = vrot.lane.b32.xlu0 %v853, 113
        %v981 = vpop.permute.xlu0 %980
        %982 = vrot.lane.b32.xlu0 %v892, 113
        %v983 = vpop.permute.xlu0 %982
        %984 = vrot.lane.b32.xlu0 %v894, 113
        %v985 = vpop.permute.xlu0 %984
        %v986 = vsel %vm683, %v983, %v985
        %v987 = vsel %vm683, %v981, %v983
        %v988 = vsel %vm683, %v979, %v981
        %v989 = vsel %vm683, %v985, %v979
        %v990 = vmul.f32 %v988, %v691
        %v991 = vmul.f32 %v987, %v695
        %v992 = vmul.f32 %v986, %v699
        %v993 = vmul.f32 %v989, %v703
        %994 = vrot.lane.b32.xlu0 %v851, 112
        %v995 = vpop.permute.xlu0 %994
        %996 = vrot.lane.b32.xlu0 %v853, 112
        %v997 = vpop.permute.xlu0 %996
        %998 = vrot.lane.b32.xlu0 %v892, 112
        %v999 = vpop.permute.xlu0 %998
        %1000 = vrot.lane.b32.xlu0 %v894, 112
        %v1001 = vpop.permute.xlu0 %1000
        %v1002 = vsel %vm716, %v999, %v1001
        %v1003 = vsel %vm716, %v997, %v999
        %v1004 = vsel %vm716, %v995, %v997
        %v1005 = vsel %vm716, %v1001, %v995
        %v1006 = vmul.f32 %v1004, %v724
        %v1007 = vmul.f32 %v1003, %v728
        %v1008 = vmul.f32 %v1002, %v732
        %v1009 = vmul.f32 %v1005, %v736
        %1010 = vrot.lane.b32.xlu0 %v851, 111
        %v1011 = vpop.permute.xlu0 %1010
        %1012 = vrot.lane.b32.xlu0 %v853, 111
        %v1013 = vpop.permute.xlu0 %1012
        %1014 = vrot.lane.b32.xlu0 %v892, 111
        %v1015 = vpop.permute.xlu0 %1014
        %1016 = vrot.lane.b32.xlu0 %v894, 111
        %v1017 = vpop.permute.xlu0 %1016
        %v1018 = vsel %vm749, %v1015, %v1017
        %v1019 = vsel %vm749, %v1013, %v1015
        %v1020 = vsel %vm749, %v1011, %v1013
        %v1021 = vsel %vm749, %v1017, %v1011
        %v1022 = vmul.f32 %v1020, %v757
        %v1023 = vmul.f32 %v1019, %v761
        %v1024 = vmul.f32 %v1018, %v765
        %v1025 = vmul.f32 %v1021, %v769
        %v1026 = vpack.c.bf16 %v926, %v910
        %v1027 = vpack.c.bf16 %v927, %v911
        %v1028 = vpack.c.bf16 %v928, %v912
        %v1029 = vpack.c.bf16 %v929, %v913
        %v1030 = vpack.c.bf16 %v958, %v942
        %v1031 = vpack.c.bf16 %v959, %v943
        %v1032 = vpack.c.bf16 %v960, %v944
        %v1033 = vpack.c.bf16 %v961, %v945
        %v1034 = vpack.c.bf16 %v974, %v851
        %v1035 = vpack.c.bf16 %v975, %v853
        %v1036 = vpack.c.bf16 %v976, %v892
        %v1037 = vpack.c.bf16 %v977, %v894
        %v1038 = vpack.c.bf16 %v1006, %v990
        %v1039 = vpack.c.bf16 %v1007, %v991
        %v1040 = vpack.c.bf16 %v1008, %v992
        %v1041 = vpack.c.bf16 %v1009, %v993
        %v1042 = vpack.c.bf16 %v1022, %v1022
        %v1043 = vpack.c.bf16 %v1023, %v1023
        %v1044 = vpack.c.bf16 %v1024, %v1024
        %v1045 = vpack.c.bf16 %v1025, %v1025
        %1047 = vset.pattern.permute.xlu0 0
        %1048 = vperm.xlu0 %1047, %v398
        %v1049 = vpop.permute.xlu0 %1048
        %v1052 = vsel %vm799, %v392, 0
        %v1055 = vsel %vm803, %v1042, 0
        %v1058 = vsel %vm803, %v1043, 0
        %v1061 = vsel %vm803, %v1044, 0
        %v1064 = vsel %vm803, %v1045, 0
        %1066 = vmatprep.subr.bf16.mxu0 %v1027
        %1067 = vmatpush1.bf16.msra.mxu0 %v1026
        %1068 = vmatprep.subr.bf16.mxu0 %v1031
        %1069 = vmatpush1.bf16.msra.mxu0 %v1030
        %1070 = vmatprep.subr.bf16.mxu0 %v1035
        %1071 = vmatpush1.bf16.msra.mxu0 %v1034
        %1072 = vmatprep.subr.bf16.mxu0 %v1039
        %1073 = vmatpush1.bf16.msra.mxu0 %v1038
        %1074 = vmatprep.subr.bf16.mxu0 %v1058
        %1075 = vmatpush1.bf16.msra.mxu0 %v1055
        %1076 = vmatprep.subr.bf16.mxu0 0
        %1077 = vmatpush1.bf16.msra.mxu0 0
        %1078 = vmatprep.subr.bf16.mxu0 0
        %1079 = vmatpush1.bf16.msra.mxu0 0
        %1080 = vmatprep.subr.bf16.mxu0 0
        %1081 = vmatpush1.bf16.msra.mxu0 0
        %1082 = vmatprep.subr.bf16.mxu0 0
        %1083 = vmatpush1.bf16.msra.mxu0 0
        %1084 = vmatprep.subr.bf16.mxu0 0
        %1085 = vmatpush1.bf16.msra.mxu0 0
        %1086 = vmatprep.subr.bf16.mxu0 0
        %1087 = vmatpush1.bf16.msra.mxu0 0
        %1088 = vmatprep.subr.bf16.mxu0 0
        %1089 = vmatpush1.bf16.msra.mxu0 0
        %1090 = vmatprep.subr.bf16.mxu0 0
        %1091 = vmatpush1.bf16.msra.mxu0 0
        %1092 = vmatprep.subr.bf16.mxu0 0
        %1093 = vmatpush1.bf16.msra.mxu0 0
        %1094 = vmatprep.subr.bf16.mxu0 0
        %1095 = vmatpush1.bf16.msra.mxu0 0
        %1096 = vmatprep.subr.bf16.mxu0 0
        %1097 = vmatpush1.bf16.msra.mxu0 0
        %1098 = vmatprep.mubr.bf16.mxu0 0
        %1099 = vmatmul.mubr.bf16.gmra.mrb[0].mxu0 %v1052
        %v1100 = vpop.f32.mrb[0].mxu0
        %v1101 = vadd.f32 %v1049, %v1100
        %v1102 = vpop.f32.mrb[0].mxu0
        %v1103 = vadd.f32 %v1049, %v1102
        %v1104 = vpop.f32.mrb[0].mxu0
        %v1105 = vpop.f32.mrb[0].mxu0
        %1106 = vdwg.mxu0
        %1107 = vmatprep.subr.bf16.mxu0 %v1029
        %1108 = vmatpush1.bf16.msra.mxu0 %v1028
        %1109 = vmatprep.subr.bf16.mxu0 %v1033
        %1110 = vmatpush1.bf16.msra.mxu0 %v1032
        %1111 = vmatprep.subr.bf16.mxu0 %v1037
        %1112 = vmatpush1.bf16.msra.mxu0 %v1036
        %1113 = vmatprep.subr.bf16.mxu0 %v1041
        %1114 = vmatpush1.bf16.msra.mxu0 %v1040
        %1115 = vmatprep.subr.bf16.mxu0 %v1064
        %1116 = vmatpush1.bf16.msra.mxu0 %v1061
        %1117 = vmatprep.subr.bf16.mxu0 0
        %1118 = vmatpush1.bf16.msra.mxu0 0
        %1119 = vmatprep.subr.bf16.mxu0 0
        %1120 = vmatpush1.bf16.msra.mxu0 0
        %1121 = vmatprep.subr.bf16.mxu0 0
        %1122 = vmatpush1.bf16.msra.mxu0 0
        %1123 = vmatprep.subr.bf16.mxu0 0
        %1124 = vmatpush1.bf16.msra.mxu0 0
        %1125 = vmatprep.subr.bf16.mxu0 0
        %1126 = vmatpush1.bf16.msra.mxu0 0
        %1127 = vmatprep.subr.bf16.mxu0 0
        %1128 = vmatpush1.bf16.msra.mxu0 0
        %1129 = vmatprep.subr.bf16.mxu0 0
        %1130 = vmatpush1.bf16.msra.mxu0 0
        %1131 = vmatprep.subr.bf16.mxu0 0
        %1132 = vmatpush1.bf16.msra.mxu0 0
        %1133 = vmatprep.subr.bf16.mxu0 0
        %1134 = vmatpush1.bf16.msra.mxu0 0
        %1135 = vmatprep.subr.bf16.mxu0 0
        %1136 = vmatpush1.bf16.msra.mxu0 0
        %1137 = vmatprep.subr.bf16.mxu0 0
        %1138 = vmatpush1.bf16.msra.mxu0 0
        %1139 = vmatprep.mubr.bf16.mxu0 0
        %1140 = vmatmul.mubr.bf16.gmra.mrb[0].mxu0 %v1052
        %v1141 = vpop.f32.mrb[0].mxu0
        %v1142 = vadd.f32 %v1049, %v1141
        %v1143 = vpop.f32.mrb[0].mxu0
        %v1144 = vadd.f32 %v1049, %v1143
        %v1145 = vpop.f32.mrb[0].mxu0
        %v1146 = vpop.f32.mrb[0].mxu0
        %1147 = vdwg.mxu0
        %1148 = vmatprep.subr.mxu0 0.0
        %1149 = vmatpush1.msra.mxu0 %v414
        %1150 = vmatprep.subr.mxu0 0.0
        %1151 = vmatpush1.msra.mxu0 %v415
        %1152 = vmatprep.subr.mxu0 0.0
        %1153 = vmatpush1.msra.mxu0 %v416
        %1154 = vmatprep.subr.mxu0 0.0
        %1155 = vmatpush1.msra.mxu0 %v417
        %1156 = vmatprep.subr.mxu0 0.0
        %1157 = vmatpush1.msra.mxu0 %v418
        %1158 = vmatprep.subr.mxu0 0.0
        %1159 = vmatpush1.msra.mxu0 %v419
        %1160 = vmatprep.subr.mxu0 0.0
        %1161 = vmatpush1.msra.mxu0 %v420
        %1162 = vmatprep.subr.mxu0 0.0
        %1163 = vmatpush1.msra.mxu0 %v421
        %1164 = vmatprep.subr.mxu0 0.0
        %1165 = vmatpush1.msra.mxu0 %v422
        %1166 = vmatprep.subr.mxu0 0.0
        %1167 = vmatpush1.msra.mxu0 %v423
        %1168 = vmatprep.subr.mxu0 0.0
        %1169 = vmatpush1.msra.mxu0 %v424
        %1170 = vmatprep.subr.mxu0 0.0
        %1171 = vmatpush1.msra.mxu0 %v425
        %1172 = vmatprep.subr.mxu0 0.0
        %1173 = vmatpush1.msra.mxu0 %v426
        %1174 = vmatprep.subr.mxu0 0.0
        %1175 = vmatpush1.msra.mxu0 %v427
        %1176 = vmatprep.subr.mxu0 0.0
        %1177 = vmatpush1.msra.mxu0 %v428
        %1178 = vmatprep.subr.mxu0 0.0
        %1179 = vmatpush1.msra.mxu0 %v429
        %1180 = vmatprep.subr.mxu0 0.0
        %1181 = vmatpush1.msra.mxu0 %v430
        %1182 = vmatprep.subr.mxu0 0.0
        %1183 = vmatpush1.msra.mxu0 %v431
        %1184 = vmatprep.subr.mxu0 0.0
        %1185 = vmatpush1.msra.mxu0 %v432
        %1186 = vmatprep.subr.mxu0 0.0
        %1187 = vmatpush1.msra.mxu0 %v433
        %1188 = vmatprep.subr.mxu0 0.0
        %1189 = vmatpush1.msra.mxu0 %v434
        %1190 = vmatprep.subr.mxu0 0.0
        %1191 = vmatpush1.msra.mxu0 %v435
        %1192 = vmatprep.subr.mxu0 0.0
        %1193 = vmatpush1.msra.mxu0 %v436
        %1194 = vmatprep.subr.mxu0 0.0
        %1195 = vmatpush1.msra.mxu0 %v437
        %1196 = vmatprep.subr.mxu0 0.0
        %1197 = vmatpush1.msra.mxu0 %v438
        %1198 = vmatprep.subr.mxu0 0.0
        %1199 = vmatpush1.msra.mxu0 %v439
        %1200 = vmatprep.subr.mxu0 0.0
        %1201 = vmatpush1.msra.mxu0 %v440
        %1202 = vmatprep.subr.mxu0 0.0
        %1203 = vmatpush1.msra.mxu0 %v441
        %1204 = vmatprep.subr.mxu0 0.0
        %1205 = vmatpush1.msra.mxu0 %v442
        %1206 = vmatprep.subr.mxu0 0.0
        %1207 = vmatpush1.msra.mxu0 %v443
        %1208 = vmatprep.subr.mxu0 0.0
        %1209 = vmatpush1.msra.mxu0 %v444
        %1210 = vmatprep.subr.mxu0 0.0
        %1211 = vmatpush1.msra.mxu0 %v445
        %1212 = vmatprep.mubr.f32.mxu0 %v1103
        %1213 = vmatmul.mubr.f32.gmra.mrb[0].mxu0 %v1101
        %v1214 = vpop.f32.mrb[0].mxu0
        %v1215 = vadd.f32 0.0, %v1214
        %v1216 = vpop.f32.mrb[0].mxu0
        %1217 = vdwg.mxu0
        %1218 = vmatprep.subr.mxu0 0.0
        %1219 = vmatpush1.msra.mxu0 %v446
        %1220 = vmatprep.subr.mxu0 0.0
        %1221 = vmatpush1.msra.mxu0 %v447
        %1222 = vmatprep.subr.mxu0 0.0
        %1223 = vmatpush1.msra.mxu0 %v448
        %1224 = vmatprep.subr.mxu0 0.0
        %1225 = vmatpush1.msra.mxu0 %v449
        %1226 = vmatprep.subr.mxu0 0.0
        %1227 = vmatpush1.msra.mxu0 %v450
        %1228 = vmatprep.subr.mxu0 0.0
        %1229 = vmatpush1.msra.mxu0 %v451
        %1230 = vmatprep.subr.mxu0 0.0
        %1231 = vmatpush1.msra.mxu0 %v452
        %1232 = vmatprep.subr.mxu0 0.0
        %1233 = vmatpush1.msra.mxu0 %v453
        %1234 = vmatprep.subr.mxu0 0.0
        %1235 = vmatpush1.msra.mxu0 %v454
        %1236 = vmatprep.subr.mxu0 0.0
        %1237 = vmatpush1.msra.mxu0 %v455
        %1238 = vmatprep.subr.mxu0 0.0
        %1239 = vmatpush1.msra.mxu0 %v456
        %1240 = vmatprep.subr.mxu0 0.0
        %1241 = vmatpush1.msra.mxu0 %v457
        %1242 = vmatprep.subr.mxu0 0.0
        %1243 = vmatpush1.msra.mxu0 %v458
        %1244 = vmatprep.subr.mxu0 0.0
        %1245 = vmatpush1.msra.mxu0 %v459
        %1246 = vmatprep.subr.mxu0 0.0
        %1247 = vmatpush1.msra.mxu0 %v460
        %1248 = vmatprep.subr.mxu0 0.0
        %1249 = vmatpush1.msra.mxu0 %v461
        %1250 = vmatprep.subr.mxu0 0.0
        %1251 = vmatpush1.msra.mxu0 %v462
        %1252 = vmatprep.subr.mxu0 0.0
        %1253 = vmatpush1.msra.mxu0 %v463
        %1254 = vmatprep.subr.mxu0 0.0
        %1255 = vmatpush1.msra.mxu0 %v464
        %1256 = vmatprep.subr.mxu0 0.0
        %1257 = vmatpush1.msra.mxu0 %v465
        %1258 = vmatprep.subr.mxu0 0.0
        %1259 = vmatpush1.msra.mxu0 %v466
        %1260 = vmatprep.subr.mxu0 0.0
        %1261 = vmatpush1.msra.mxu0 %v467
        %1262 = vmatprep.subr.mxu0 0.0
        %1263 = vmatpush1.msra.mxu0 %v468
        %1264 = vmatprep.subr.mxu0 0.0
        %1265 = vmatpush1.msra.mxu0 %v469
        %1266 = vmatprep.subr.mxu0 0.0
        %1267 = vmatpush1.msra.mxu0 %v470
        %1268 = vmatprep.subr.mxu0 0.0
        %1269 = vmatpush1.msra.mxu0 %v471
        %1270 = vmatprep.subr.mxu0 0.0
        %1271 = vmatpush1.msra.mxu0 %v472
        %1272 = vmatprep.subr.mxu0 0.0
        %1273 = vmatpush1.msra.mxu0 %v473
        %1274 = vmatprep.subr.mxu0 0.0
        %1275 = vmatpush1.msra.mxu0 %v474
        %1276 = vmatprep.subr.mxu0 0.0
        %1277 = vmatpush1.msra.mxu0 %v475
        %1278 = vmatprep.subr.mxu0 0.0
        %1279 = vmatpush1.msra.mxu0 %v476
        %1280 = vmatprep.subr.mxu0 0.0
        %1281 = vmatpush1.msra.mxu0 %v477
        %1282 = vmatprep.mubr.f32.mxu0 %v1144
        %1283 = vmatmul.mubr.f32.gmra.mrb[0].mxu0 %v1142
        %v1284 = vpop.f32.mrb[0].mxu0
        %v1285 = vadd.f32 %v1215, %v1284
        %v1286 = vpop.f32.mrb[0].mxu0
        %1287 = vdwg.mxu0
        %v1288 = vmul.f32 %v1101, %v1101
        %v1289 = vmul.f32 %v1103, %v1103
        %v1290 = vmul.f32 %v1142, %v1142
        %v1291 = vmul.f32 %v1144, %v1144
        %1292 = vmatprep.subr.mxu0 0.0
        %1293 = vmatpush1.msra.mxu0 %v414
        %1294 = vmatprep.subr.mxu0 0.0
        %1295 = vmatpush1.msra.mxu0 %v415
        %1296 = vmatprep.subr.mxu0 0.0
        %1297 = vmatpush1.msra.mxu0 %v416
        %1298 = vmatprep.subr.mxu0 0.0
        %1299 = vmatpush1.msra.mxu0 %v417
        %1300 = vmatprep.subr.mxu0 0.0
        %1301 = vmatpush1.msra.mxu0 %v418
        %1302 = vmatprep.subr.mxu0 0.0
        %1303 = vmatpush1.msra.mxu0 %v419
        %1304 = vmatprep.subr.mxu0 0.0
        %1305 = vmatpush1.msra.mxu0 %v420
        %1306 = vmatprep.subr.mxu0 0.0
        %1307 = vmatpush1.msra.mxu0 %v421
        %1308 = vmatprep.subr.mxu0 0.0
        %1309 = vmatpush1.msra.mxu0 %v422
        %1310 = vmatprep.subr.mxu0 0.0
        %1311 = vmatpush1.msra.mxu0 %v423
        %1312 = vmatprep.subr.mxu0 0.0
        %1313 = vmatpush1.msra.mxu0 %v424
        %1314 = vmatprep.subr.mxu0 0.0
        %1315 = vmatpush1.msra.mxu0 %v425
        %1316 = vmatprep.subr.mxu0 0.0
        %1317 = vmatpush1.msra.mxu0 %v426
        %1318 = vmatprep.subr.mxu0 0.0
        %1319 = vmatpush1.msra.mxu0 %v427
        %1320 = vmatprep.subr.mxu0 0.0
        %1321 = vmatpush1.msra.mxu0 %v428
        %1322 = vmatprep.subr.mxu0 0.0
        %1323 = vmatpush1.msra.mxu0 %v429
        %1324 = vmatprep.subr.mxu0 0.0
        %1325 = vmatpush1.msra.mxu0 %v430
        %1326 = vmatprep.subr.mxu0 0.0
        %1327 = vmatpush1.msra.mxu0 %v431
        %1328 = vmatprep.subr.mxu0 0.0
        %1329 = vmatpush1.msra.mxu0 %v432
        %1330 = vmatprep.subr.mxu0 0.0
        %1331 = vmatpush1.msra.mxu0 %v433
        %1332 = vmatprep.subr.mxu0 0.0
        %1333 = vmatpush1.msra.mxu0 %v434
        %1334 = vmatprep.subr.mxu0 0.0
        %1335 = vmatpush1.msra.mxu0 %v435
        %1336 = vmatprep.subr.mxu0 0.0
        %1337 = vmatpush1.msra.mxu0 %v436
        %1338 = vmatprep.subr.mxu0 0.0
        %1339 = vmatpush1.msra.mxu0 %v437
        %1340 = vmatprep.subr.mxu0 0.0
        %1341 = vmatpush1.msra.mxu0 %v438
        %1342 = vmatprep.subr.mxu0 0.0
        %1343 = vmatpush1.msra.mxu0 %v439
        %1344 = vmatprep.subr.mxu0 0.0
        %1345 = vmatpush1.msra.mxu0 %v440
        %1346 = vmatprep.subr.mxu0 0.0
        %1347 = vmatpush1.msra.mxu0 %v441
        %1348 = vmatprep.subr.mxu0 0.0
        %1349 = vmatpush1.msra.mxu0 %v442
        %1350 = vmatprep.subr.mxu0 0.0
        %1351 = vmatpush1.msra.mxu0 %v443
        %1352 = vmatprep.subr.mxu0 0.0
        %1353 = vmatpush1.msra.mxu0 %v444
        %1354 = vmatprep.subr.mxu0 0.0
        %1355 = vmatpush1.msra.mxu0 %v445
        %1356 = vmatprep.mubr.f32.mxu0 %v1289
        %1357 = vmatmul.mubr.f32.gmra.mrb[0].mxu0 %v1288
        %v1358 = vpop.f32.mrb[0].mxu0
        %v1359 = vadd.f32 0.0, %v1358
        %v1360 = vpop.f32.mrb[0].mxu0
        %1361 = vdwg.mxu0
        %1362 = vmatprep.subr.mxu0 0.0
        %1363 = vmatpush1.msra.mxu0 %v446
        %1364 = vmatprep.subr.mxu0 0.0
        %1365 = vmatpush1.msra.mxu0 %v447
        %1366 = vmatprep.subr.mxu0 0.0
        %1367 = vmatpush1.msra.mxu0 %v448
        %1368 = vmatprep.subr.mxu0 0.0
        %1369 = vmatpush1.msra.mxu0 %v449
        %1370 = vmatprep.subr.mxu0 0.0
        %1371 = vmatpush1.msra.mxu0 %v450
        %1372 = vmatprep.subr.mxu0 0.0
        %1373 = vmatpush1.msra.mxu0 %v451
        %1374 = vmatprep.subr.mxu0 0.0
        %1375 = vmatpush1.msra.mxu0 %v452
        %1376 = vmatprep.subr.mxu0 0.0
        %1377 = vmatpush1.msra.mxu0 %v453
        %1378 = vmatprep.subr.mxu0 0.0
        %1379 = vmatpush1.msra.mxu0 %v454
        %1380 = vmatprep.subr.mxu0 0.0
        %1381 = vmatpush1.msra.mxu0 %v455
        %1382 = vmatprep.subr.mxu0 0.0
        %1383 = vmatpush1.msra.mxu0 %v456
        %1384 = vmatprep.subr.mxu0 0.0
        %1385 = vmatpush1.msra.mxu0 %v457
        %1386 = vmatprep.subr.mxu0 0.0
        %1387 = vmatpush1.msra.mxu0 %v458
        %1388 = vmatprep.subr.mxu0 0.0
        %1389 = vmatpush1.msra.mxu0 %v459
        %1390 = vmatprep.subr.mxu0 0.0
        %1391 = vmatpush1.msra.mxu0 %v460
        %1392 = vmatprep.subr.mxu0 0.0
        %1393 = vmatpush1.msra.mxu0 %v461
        %1394 = vmatprep.subr.mxu0 0.0
        %1395 = vmatpush1.msra.mxu0 %v462
        %1396 = vmatprep.subr.mxu0 0.0
        %1397 = vmatpush1.msra.mxu0 %v463
        %1398 = vmatprep.subr.mxu0 0.0
        %1399 = vmatpush1.msra.mxu0 %v464
        %1400 = vmatprep.subr.mxu0 0.0
        %1401 = vmatpush1.msra.mxu0 %v465
        %1402 = vmatprep.subr.mxu0 0.0
        %1403 = vmatpush1.msra.mxu0 %v466
        %1404 = vmatprep.subr.mxu0 0.0
        %1405 = vmatpush1.msra.mxu0 %v467
        %1406 = vmatprep.subr.mxu0 0.0
        %1407 = vmatpush1.msra.mxu0 %v468
        %1408 = vmatprep.subr.mxu0 0.0
        %1409 = vmatpush1.msra.mxu0 %v469
        %1410 = vmatprep.subr.mxu0 0.0
        %1411 = vmatpush1.msra.mxu0 %v470
        %1412 = vmatprep.subr.mxu0 0.0
        %1413 = vmatpush1.msra.mxu0 %v471
        %1414 = vmatprep.subr.mxu0 0.0
        %1415 = vmatpush1.msra.mxu0 %v472
        %1416 = vmatprep.subr.mxu0 0.0
        %1417 = vmatpush1.msra.mxu0 %v473
        %1418 = vmatprep.subr.mxu0 0.0
        %1419 = vmatpush1.msra.mxu0 %v474
        %1420 = vmatprep.subr.mxu0 0.0
        %1421 = vmatpush1.msra.mxu0 %v475
        %1422 = vmatprep.subr.mxu0 0.0
        %1423 = vmatpush1.msra.mxu0 %v476
        %1424 = vmatprep.subr.mxu0 0.0
        %1425 = vmatpush1.msra.mxu0 %v477
        %1426 = vmatprep.mubr.f32.mxu0 %v1291
        %1427 = vmatmul.mubr.f32.gmra.mrb[0].mxu0 %v1290
        %v1428 = vpop.f32.mrb[0].mxu0
        %v1429 = vadd.f32 %v1359, %v1428
        %v1430 = vpop.f32.mrb[0].mxu0
        %1431 = vdwg.mxu0
        %vm1432 = vcmask 64512
        %v1434 = vsel %vm1432, %v411, 0
        %1436 = vmatprep.subr.mxu0 0.0
        %1437 = vmatpush1.msra.mxu0 %v1285
        %1438 = vmatprep.subr.mxu0 0.0
        %1439 = vmatpush1.msra.mxu0 0.0
        %1440 = vmatprep.subr.mxu0 0.0
        %1441 = vmatpush1.msra.mxu0 0.0
        %1442 = vmatprep.subr.mxu0 0.0
        %1443 = vmatpush1.msra.mxu0 0.0
        %1444 = vmatprep.subr.mxu0 0.0
        %1445 = vmatpush1.msra.mxu0 0.0
        %1446 = vmatprep.subr.mxu0 0.0
        %1447 = vmatpush1.msra.mxu0 0.0
        %1448 = vmatprep.subr.mxu0 0.0
        %1449 = vmatpush1.msra.mxu0 0.0
        %1450 = vmatprep.subr.mxu0 0.0
        %1451 = vmatpush1.msra.mxu0 0.0
        %1452 = vmatprep.subr.mxu0 0.0
        %1453 = vmatpush1.msra.mxu0 0.0
        %1454 = vmatprep.subr.mxu0 0.0
        %1455 = vmatpush1.msra.mxu0 0.0
        %1456 = vmatprep.subr.mxu0 0.0
        %1457 = vmatpush1.msra.mxu0 0.0
        %1458 = vmatprep.subr.mxu0 0.0
        %1459 = vmatpush1.msra.mxu0 0.0
        %1460 = vmatprep.subr.mxu0 0.0
        %1461 = vmatpush1.msra.mxu0 0.0
        %1462 = vmatprep.subr.mxu0 0.0
        %1463 = vmatpush1.msra.mxu0 0.0
        %1464 = vmatprep.subr.mxu0 0.0
        %1465 = vmatpush1.msra.mxu0 0.0
        %1466 = vmatprep.subr.mxu0 0.0
        %1467 = vmatpush1.msra.mxu0 0.0
        %1468 = vmatprep.subr.mxu0 0.0
        %1469 = vmatpush1.msra.mxu0 0.0
        %1470 = vmatprep.subr.mxu0 0.0
        %1471 = vmatpush1.msra.mxu0 0.0
        %1472 = vmatprep.subr.mxu0 0.0
        %1473 = vmatpush1.msra.mxu0 0.0
        %1474 = vmatprep.subr.mxu0 0.0
        %1475 = vmatpush1.msra.mxu0 0.0
        %1476 = vmatprep.subr.mxu0 0.0
        %1477 = vmatpush1.msra.mxu0 0.0
        %1478 = vmatprep.subr.mxu0 0.0
        %1479 = vmatpush1.msra.mxu0 0.0
        %1480 = vmatprep.subr.mxu0 0.0
        %1481 = vmatpush1.msra.mxu0 0.0
        %1482 = vmatprep.subr.mxu0 0.0
        %1483 = vmatpush1.msra.mxu0 0.0
        %1484 = vmatprep.subr.mxu0 0.0
        %1485 = vmatpush1.msra.mxu0 0.0
        %1486 = vmatprep.subr.mxu0 0.0
        %1487 = vmatpush1.msra.mxu0 0.0
        %1488 = vmatprep.subr.mxu0 0.0
        %1489 = vmatpush1.msra.mxu0 0.0
        %1490 = vmatprep.subr.mxu0 0.0
        %1491 = vmatpush1.msra.mxu0 0.0
        %1492 = vmatprep.subr.mxu0 0.0
        %1493 = vmatpush1.msra.mxu0 0.0
        %1494 = vmatprep.subr.mxu0 0.0
        %1495 = vmatpush1.msra.mxu0 0.0
        %1496 = vmatprep.subr.mxu0 0.0
        %1497 = vmatpush1.msra.mxu0 0.0
        %1498 = vmatprep.subr.mxu0 0.0
        %1499 = vmatpush1.msra.mxu0 0.0
        %1500 = vmatprep.mubr.f32.mxu0 0.0
        %1501 = vmatmul.mubr.f32.gmra.mrb[0].mxu0 %v1434
        %v1502 = vpop.f32.mrb[0].mxu0
        %v1503 = vadd.f32 0.0, %v1502
        %v1504 = vpop.f32.mrb[0].mxu0
        %1505 = vdwg.mxu0
        %v1506 = vmul.f32 %v1503, 0.001953125
        %1507 = vmatprep.subr.mxu0 0.0
        %1508 = vmatpush1.msra.mxu0 %v1429
        %1509 = vmatprep.subr.mxu0 0.0
        %1510 = vmatpush1.msra.mxu0 0.0
        %1511 = vmatprep.subr.mxu0 0.0
        %1512 = vmatpush1.msra.mxu0 0.0
        %1513 = vmatprep.subr.mxu0 0.0
        %1514 = vmatpush1.msra.mxu0 0.0
        %1515 = vmatprep.subr.mxu0 0.0
        %1516 = vmatpush1.msra.mxu0 0.0
        %1517 = vmatprep.subr.mxu0 0.0
        %1518 = vmatpush1.msra.mxu0 0.0
        %1519 = vmatprep.subr.mxu0 0.0
        %1520 = vmatpush1.msra.mxu0 0.0
        %1521 = vmatprep.subr.mxu0 0.0
        %1522 = vmatpush1.msra.mxu0 0.0
        %1523 = vmatprep.subr.mxu0 0.0
        %1524 = vmatpush1.msra.mxu0 0.0
        %1525 = vmatprep.subr.mxu0 0.0
        %1526 = vmatpush1.msra.mxu0 0.0
        %1527 = vmatprep.subr.mxu0 0.0
        %1528 = vmatpush1.msra.mxu0 0.0
        %1529 = vmatprep.subr.mxu0 0.0
        %1530 = vmatpush1.msra.mxu0 0.0
        %1531 = vmatprep.subr.mxu0 0.0
        %1532 = vmatpush1.msra.mxu0 0.0
        %1533 = vmatprep.subr.mxu0 0.0
        %1534 = vmatpush1.msra.mxu0 0.0
        %1535 = vmatprep.subr.mxu0 0.0
        %1536 = vmatpush1.msra.mxu0 0.0
        %1537 = vmatprep.subr.mxu0 0.0
        %1538 = vmatpush1.msra.mxu0 0.0
        %1539 = vmatprep.subr.mxu0 0.0
        %1540 = vmatpush1.msra.mxu0 0.0
        %1541 = vmatprep.subr.mxu0 0.0
        %1542 = vmatpush1.msra.mxu0 0.0
        %1543 = vmatprep.subr.mxu0 0.0
        %1544 = vmatpush1.msra.mxu0 0.0
        %1545 = vmatprep.subr.mxu0 0.0
        %1546 = vmatpush1.msra.mxu0 0.0
        %1547 = vmatprep.subr.mxu0 0.0
        %1548 = vmatpush1.msra.mxu0 0.0
        %1549 = vmatprep.subr.mxu0 0.0
        %1550 = vmatpush1.msra.mxu0 0.0
        %1551 = vmatprep.subr.mxu0 0.0
        %1552 = vmatpush1.msra.mxu0 0.0
        %1553 = vmatprep.subr.mxu0 0.0
        %1554 = vmatpush1.msra.mxu0 0.0
        %1555 = vmatprep.subr.mxu0 0.0
        %1556 = vmatpush1.msra.mxu0 0.0
        %1557 = vmatprep.subr.mxu0 0.0
        %1558 = vmatpush1.msra.mxu0 0.0
        %1559 = vmatprep.subr.mxu0 0.0
        %1560 = vmatpush1.msra.mxu0 0.0
        %1561 = vmatprep.subr.mxu0 0.0
        %1562 = vmatpush1.msra.mxu0 0.0
        %1563 = vmatprep.subr.mxu0 0.0
        %1564 = vmatpush1.msra.mxu0 0.0
        %1565 = vmatprep.subr.mxu0 0.0
        %1566 = vmatpush1.msra.mxu0 0.0
        %1567 = vmatprep.subr.mxu0 0.0
        %1568 = vmatpush1.msra.mxu0 0.0
        %1569 = vmatprep.subr.mxu0 0.0
        %1570 = vmatpush1.msra.mxu0 0.0
        %1571 = vmatprep.mubr.f32.mxu0 0.0
        %1572 = vmatmul.mubr.f32.gmra.mrb[0].mxu0 %v1434
        %v1573 = vpop.f32.mrb[0].mxu0
        %v1574 = vadd.f32 0.0, %v1573
        %v1575 = vpop.f32.mrb[0].mxu0
        %1576 = vdwg.mxu0
        %v1577 = vmul.f32 %v1574, 0.001953125
        %v1578 = vmul.f32 %v1506, %v1506
        %v1579 = vsub.f32 %v1577, %v1578
        %v1580 = vadd.f32 %v1579, 1e-05
        %v1581 = vrsqrt.pop %v1580
        %1583 = vset.pattern.permute.xlu0 0
        %1584 = vperm.xlu0 %1583, %v399
        %v1585 = vpop.permute.xlu0 %1584
        %v1587 = vmul.f32 %v1585, %v1581
        %v1588 = vmul.f32 %v1506, %v1587
        %1590 = vset.pattern.permute.xlu0 0
        %1591 = vperm.xlu0 %1590, %v400
        %v1592 = vpop.permute.xlu0 %1591
        %v1594 = vsub.f32 %v1592, %v1588
        %v1596 = vcombine.high %v494, %v494
        %v1598 = vunpack.c.l.s4 1983009808
        %v1599 = vunpack.c.0.s8 %v1598
        %v1600 = vlaneseq
        %v1601 = vshrl.u32 %v1600, 7
        %v1602 = vsub.s32 %v1599, %v1601
        %v1603 = vrot.slane %v494, %v1602
        %v1605 = vunpack.c.l.s4 1983009808
        %v1606 = vunpack.c.0.s8 %v1605
        %v1607 = vlaneseq
        %v1608 = vshrl.u32 %v1607, 7
        %v1609 = vsub.s32 %v1606, %v1608
        %v1610 = vrot.slane %v1596, %v1609
        %v1611 = vcombine.high %v1603, %v1603
        %v1612 = vcombine.high %v1610, %v1610
        %vm1613 = vcmask 15360
        %v1615 = vsel %vm1613, %v1587, 0
        %vm1617 = vcmask 1041408
        %v1618 = vsel %vm1617, %v1603, 0
        %v1620 = vsel %vm1617, %v1611, 0
        %v1622 = vsel %vm1617, %v1610, 0
        %v1624 = vsel %vm1617, %v1612, 0
        %1626 = vmatprep.subr.mxu0 %v1620
        %1627 = vmatpush1.msra.mxu0 %v1618
        %1628 = vmatprep.subr.mxu0 0.0
        %1629 = vmatpush1.msra.mxu0 0.0
        %1630 = vmatprep.subr.mxu0 0.0
        %1631 = vmatpush1.msra.mxu0 0.0
        %1632 = vmatprep.subr.mxu0 0.0
        %1633 = vmatpush1.msra.mxu0 0.0
        %1634 = vmatprep.subr.mxu0 0.0
        %1635 = vmatpush1.msra.mxu0 0.0
        %1636 = vmatprep.subr.mxu0 0.0
        %1637 = vmatpush1.msra.mxu0 0.0
        %1638 = vmatprep.subr.mxu0 0.0
        %1639 = vmatpush1.msra.mxu0 0.0
        %1640 = vmatprep.subr.mxu0 0.0
        %1641 = vmatpush1.msra.mxu0 0.0
        %1642 = vmatprep.subr.mxu0 0.0
        %1643 = vmatpush1.msra.mxu0 0.0
        %1644 = vmatprep.subr.mxu0 0.0
        %1645 = vmatpush1.msra.mxu0 0.0
        %1646 = vmatprep.subr.mxu0 0.0
        %1647 = vmatpush1.msra.mxu0 0.0
        %1648 = vmatprep.subr.mxu0 0.0
        %1649 = vmatpush1.msra.mxu0 0.0
        %1650 = vmatprep.subr.mxu0 0.0
        %1651 = vmatpush1.msra.mxu0 0.0
        %1652 = vmatprep.subr.mxu0 0.0
        %1653 = vmatpush1.msra.mxu0 0.0
        %1654 = vmatprep.subr.mxu0 0.0
        %1655 = vmatpush1.msra.mxu0 0.0
        %1656 = vmatprep.subr.mxu0 0.0
        %1657 = vmatpush1.msra.mxu0 0.0
        %1658 = vmatprep.subr.mxu0 0.0
        %1659 = vmatpush1.msra.mxu0 0.0
        %1660 = vmatprep.subr.mxu0 0.0
        %1661 = vmatpush1.msra.mxu0 0.0
        %1662 = vmatprep.subr.mxu0 0.0
        %1663 = vmatpush1.msra.mxu0 0.0
        %1664 = vmatprep.subr.mxu0 0.0
        %1665 = vmatpush1.msra.mxu0 0.0
        %1666 = vmatprep.subr.mxu0 0.0
        %1667 = vmatpush1.msra.mxu0 0.0
        %1668 = vmatprep.subr.mxu0 0.0
        %1669 = vmatpush1.msra.mxu0 0.0
        %1670 = vmatprep.subr.mxu0 0.0
        %1671 = vmatpush1.msra.mxu0 0.0
        %1672 = vmatprep.subr.mxu0 0.0
        %1673 = vmatpush1.msra.mxu0 0.0
        %1674 = vmatprep.subr.mxu0 0.0
        %1675 = vmatpush1.msra.mxu0 0.0
        %1676 = vmatprep.subr.mxu0 0.0
        %1677 = vmatpush1.msra.mxu0 0.0
        %1678 = vmatprep.subr.mxu0 0.0
        %1679 = vmatpush1.msra.mxu0 0.0
        %1680 = vmatprep.subr.mxu0 0.0
        %1681 = vmatpush1.msra.mxu0 0.0
        %1682 = vmatprep.subr.mxu0 0.0
        %1683 = vmatpush1.msra.mxu0 0.0
        %1684 = vmatprep.subr.mxu0 0.0
        %1685 = vmatpush1.msra.mxu0 0.0
        %1686 = vmatprep.subr.mxu0 0.0
        %1687 = vmatpush1.msra.mxu0 0.0
        %1688 = vmatprep.subr.mxu0 0.0
        %1689 = vmatpush1.msra.mxu0 0.0
        %1690 = vmatprep.mubr.f32.mxu0 0.0
        %1691 = vmatmul.mubr.f32.gmra.mrb[0].mxu0 %v1615
        %v1692 = vpop.f32.mrb[0].mxu0
        %v1693 = vadd.f32 0.0, %v1692
        %v1694 = vpop.f32.mrb[0].mxu0
        %v1695 = vadd.f32 0.0, %v1694
        %1696 = vdwg.mxu0
        %1697 = vmatprep.subr.mxu0 %v1624
        %1698 = vmatpush1.msra.mxu0 %v1622
        %1699 = vmatprep.subr.mxu0 0.0
        %1700 = vmatpush1.msra.mxu0 0.0
        %1701 = vmatprep.subr.mxu0 0.0
        %1702 = vmatpush1.msra.mxu0 0.0
        %1703 = vmatprep.subr.mxu0 0.0
        %1704 = vmatpush1.msra.mxu0 0.0
        %1705 = vmatprep.subr.mxu0 0.0
        %1706 = vmatpush1.msra.mxu0 0.0
        %1707 = vmatprep.subr.mxu0 0.0
        %1708 = vmatpush1.msra.mxu0 0.0
        %1709 = vmatprep.subr.mxu0 0.0
        %1710 = vmatpush1.msra.mxu0 0.0
        %1711 = vmatprep.subr.mxu0 0.0
        %1712 = vmatpush1.msra.mxu0 0.0
        %1713 = vmatprep.subr.mxu0 0.0
        %1714 = vmatpush1.msra.mxu0 0.0
        %1715 = vmatprep.subr.mxu0 0.0
        %1716 = vmatpush1.msra.mxu0 0.0
        %1717 = vmatprep.subr.mxu0 0.0
        %1718 = vmatpush1.msra.mxu0 0.0
        %1719 = vmatprep.subr.mxu0 0.0
        %1720 = vmatpush1.msra.mxu0 0.0
        %1721 = vmatprep.subr.mxu0 0.0
        %1722 = vmatpush1.msra.mxu0 0.0
        %1723 = vmatprep.subr.mxu0 0.0
        %1724 = vmatpush1.msra.mxu0 0.0
        %1725 = vmatprep.subr.mxu0 0.0
        %1726 = vmatpush1.msra.mxu0 0.0
        %1727 = vmatprep.subr.mxu0 0.0
        %1728 = vmatpush1.msra.mxu0 0.0
        %1729 = vmatprep.subr.mxu0 0.0
        %1730 = vmatpush1.msra.mxu0 0.0
        %1731 = vmatprep.subr.mxu0 0.0
        %1732 = vmatpush1.msra.mxu0 0.0
        %1733 = vmatprep.subr.mxu0 0.0
        %1734 = vmatpush1.msra.mxu0 0.0
        %1735 = vmatprep.subr.mxu0 0.0
        %1736 = vmatpush1.msra.mxu0 0.0
        %1737 = vmatprep.subr.mxu0 0.0
        %1738 = vmatpush1.msra.mxu0 0.0
        %1739 = vmatprep.subr.mxu0 0.0
        %1740 = vmatpush1.msra.mxu0 0.0
        %1741 = vmatprep.subr.mxu0 0.0
        %1742 = vmatpush1.msra.mxu0 0.0
        %1743 = vmatprep.subr.mxu0 0.0
        %1744 = vmatpush1.msra.mxu0 0.0
        %1745 = vmatprep.subr.mxu0 0.0
        %1746 = vmatpush1.msra.mxu0 0.0
        %1747 = vmatprep.subr.mxu0 0.0
        %1748 = vmatpush1.msra.mxu0 0.0
        %1749 = vmatprep.subr.mxu0 0.0
        %1750 = vmatpush1.msra.mxu0 0.0
        %1751 = vmatprep.subr.mxu0 0.0
        %1752 = vmatpush1.msra.mxu0 0.0
        %1753 = vmatprep.subr.mxu0 0.0
        %1754 = vmatpush1.msra.mxu0 0.0
        %1755 = vmatprep.subr.mxu0 0.0
        %1756 = vmatpush1.msra.mxu0 0.0
        %1757 = vmatprep.subr.mxu0 0.0
        %1758 = vmatpush1.msra.mxu0 0.0
        %1759 = vmatprep.subr.mxu0 0.0
        %1760 = vmatpush1.msra.mxu0 0.0
        %1761 = vmatprep.mubr.f32.mxu0 0.0
        %1762 = vmatmul.mubr.f32.gmra.mrb[0].mxu0 %v1615
        %v1763 = vpop.f32.mrb[0].mxu0
        %v1764 = vadd.f32 0.0, %v1763
        %v1765 = vpop.f32.mrb[0].mxu0
        %v1766 = vadd.f32 0.0, %v1765
        %1767 = vdwg.mxu0
        %v1768 = vmul.f32 %v1101, %v1693
        %v1769 = vmul.f32 %v1103, %v1695
        %v1770 = vmul.f32 %v1142, %v1764
        %v1771 = vmul.f32 %v1144, %v1766
        %v1773 = vsel %vm1613, %v1594, 0
        %1775 = vmatprep.subr.mxu0 %v1620
        %1776 = vmatpush1.msra.mxu0 %v1618
        %1777 = vmatprep.subr.mxu0 0.0
        %1778 = vmatpush1.msra.mxu0 0.0
        %1779 = vmatprep.subr.mxu0 0.0
        %1780 = vmatpush1.msra.mxu0 0.0
        %1781 = vmatprep.subr.mxu0 0.0
        %1782 = vmatpush1.msra.mxu0 0.0
        %1783 = vmatprep.subr.mxu0 0.0
        %1784 = vmatpush1.msra.mxu0 0.0
        %1785 = vmatprep.subr.mxu0 0.0
        %1786 = vmatpush1.msra.mxu0 0.0
        %1787 = vmatprep.subr.mxu0 0.0
        %1788 = vmatpush1.msra.mxu0 0.0
        %1789 = vmatprep.subr.mxu0 0.0
        %1790 = vmatpush1.msra.mxu0 0.0
        %1791 = vmatprep.subr.mxu0 0.0
        %1792 = vmatpush1.msra.mxu0 0.0
        %1793 = vmatprep.subr.mxu0 0.0
        %1794 = vmatpush1.msra.mxu0 0.0
        %1795 = vmatprep.subr.mxu0 0.0
        %1796 = vmatpush1.msra.mxu0 0.0
        %1797 = vmatprep.subr.mxu0 0.0
        %1798 = vmatpush1.msra.mxu0 0.0
        %1799 = vmatprep.subr.mxu0 0.0
        %1800 = vmatpush1.msra.mxu0 0.0
        %1801 = vmatprep.subr.mxu0 0.0
        %1802 = vmatpush1.msra.mxu0 0.0
        %1803 = vmatprep.subr.mxu0 0.0
        %1804 = vmatpush1.msra.mxu0 0.0
        %1805 = vmatprep.subr.mxu0 0.0
        %1806 = vmatpush1.msra.mxu0 0.0
        %1807 = vmatprep.subr.mxu0 0.0
        %1808 = vmatpush1.msra.mxu0 0.0
        %1809 = vmatprep.subr.mxu0 0.0
        %1810 = vmatpush1.msra.mxu0 0.0
        %1811 = vmatprep.subr.mxu0 0.0
        %1812 = vmatpush1.msra.mxu0 0.0
        %1813 = vmatprep.subr.mxu0 0.0
        %1814 = vmatpush1.msra.mxu0 0.0
        %1815 = vmatprep.subr.mxu0 0.0
        %1816 = vmatpush1.msra.mxu0 0.0
        %1817 = vmatprep.subr.mxu0 0.0
        %1818 = vmatpush1.msra.mxu0 0.0
        %1819 = vmatprep.subr.mxu0 0.0
        %1820 = vmatpush1.msra.mxu0 0.0
        %1821 = vmatprep.subr.mxu0 0.0
        %1822 = vmatpush1.msra.mxu0 0.0
        %1823 = vmatprep.subr.mxu0 0.0
        %1824 = vmatpush1.msra.mxu0 0.0
        %1825 = vmatprep.subr.mxu0 0.0
        %1826 = vmatpush1.msra.mxu0 0.0
        %1827 = vmatprep.subr.mxu0 0.0
        %1828 = vmatpush1.msra.mxu0 0.0
        %1829 = vmatprep.subr.mxu0 0.0
        %1830 = vmatpush1.msra.mxu0 0.0
        %1831 = vmatprep.subr.mxu0 0.0
        %1832 = vmatpush1.msra.mxu0 0.0
        %1833 = vmatprep.subr.mxu0 0.0
        %1834 = vmatpush1.msra.mxu0 0.0
        %1835 = vmatprep.subr.mxu0 0.0
        %1836 = vmatpush1.msra.mxu0 0.0
        %1837 = vmatprep.subr.mxu0 0.0
        %1838 = vmatpush1.msra.mxu0 0.0
        %1839 = vmatprep.mubr.f32.mxu0 0.0
        %1840 = vmatmul.mubr.f32.gmra.mrb[0].mxu0 %v1773
        %v1841 = vpop.f32.mrb[0].mxu0
        %v1842 = vadd.f32 0.0, %v1841
        %v1843 = vpop.f32.mrb[0].mxu0
        %v1844 = vadd.f32 0.0, %v1843
        %1845 = vdwg.mxu0
        %1846 = vmatprep.subr.mxu0 %v1624
        %1847 = vmatpush1.msra.mxu0 %v1622
        %1848 = vmatprep.subr.mxu0 0.0
        %1849 = vmatpush1.msra.mxu0 0.0
        %1850 = vmatprep.subr.mxu0 0.0
        %1851 = vmatpush1.msra.mxu0 0.0
        %1852 = vmatprep.subr.mxu0 0.0
        %1853 = vmatpush1.msra.mxu0 0.0
        %1854 = vmatprep.subr.mxu0 0.0
        %1855 = vmatpush1.msra.mxu0 0.0
        %1856 = vmatprep.subr.mxu0 0.0
        %1857 = vmatpush1.msra.mxu0 0.0
        %1858 = vmatprep.subr.mxu0 0.0
        %1859 = vmatpush1.msra.mxu0 0.0
        %1860 = vmatprep.subr.mxu0 0.0
        %1861 = vmatpush1.msra.mxu0 0.0
        %1862 = vmatprep.subr.mxu0 0.0
        %1863 = vmatpush1.msra.mxu0 0.0
        %1864 = vmatprep.subr.mxu0 0.0
        %1865 = vmatpush1.msra.mxu0 0.0
        %1866 = vmatprep.subr.mxu0 0.0
        %1867 = vmatpush1.msra.mxu0 0.0
        %1868 = vmatprep.subr.mxu0 0.0
        %1869 = vmatpush1.msra.mxu0 0.0
        %1870 = vmatprep.subr.mxu0 0.0
        %1871 = vmatpush1.msra.mxu0 0.0
        %1872 = vmatprep.subr.mxu0 0.0
        %1873 = vmatpush1.msra.mxu0 0.0
        %1874 = vmatprep.subr.mxu0 0.0
        %1875 = vmatpush1.msra.mxu0 0.0
        %1876 = vmatprep.subr.mxu0 0.0
        %1877 = vmatpush1.msra.mxu0 0.0
        %1878 = vmatprep.subr.mxu0 0.0
        %1879 = vmatpush1.msra.mxu0 0.0
        %1880 = vmatprep.subr.mxu0 0.0
        %1881 = vmatpush1.msra.mxu0 0.0
        %1882 = vmatprep.subr.mxu0 0.0
        %1883 = vmatpush1.msra.mxu0 0.0
        %1884 = vmatprep.subr.mxu0 0.0
        %1885 = vmatpush1.msra.mxu0 0.0
        %1886 = vmatprep.subr.mxu0 0.0
        %1887 = vmatpush1.msra.mxu0 0.0
        %1888 = vmatprep.subr.mxu0 0.0
        %1889 = vmatpush1.msra.mxu0 0.0
        %1890 = vmatprep.subr.mxu0 0.0
        %1891 = vmatpush1.msra.mxu0 0.0
        %1892 = vmatprep.subr.mxu0 0.0
        %1893 = vmatpush1.msra.mxu0 0.0
        %1894 = vmatprep.subr.mxu0 0.0
        %1895 = vmatpush1.msra.mxu0 0.0
        %1896 = vmatprep.subr.mxu0 0.0
        %1897 = vmatpush1.msra.mxu0 0.0
        %1898 = vmatprep.subr.mxu0 0.0
        %1899 = vmatpush1.msra.mxu0 0.0
        %1900 = vmatprep.subr.mxu0 0.0
        %1901 = vmatpush1.msra.mxu0 0.0
        %1902 = vmatprep.subr.mxu0 0.0
        %1903 = vmatpush1.msra.mxu0 0.0
        %1904 = vmatprep.subr.mxu0 0.0
        %1905 = vmatpush1.msra.mxu0 0.0
        %1906 = vmatprep.subr.mxu0 0.0
        %1907 = vmatpush1.msra.mxu0 0.0
        %1908 = vmatprep.subr.mxu0 0.0
        %1909 = vmatpush1.msra.mxu0 0.0
        %1910 = vmatprep.mubr.f32.mxu0 0.0
        %1911 = vmatmul.mubr.f32.gmra.mrb[0].mxu0 %v1773
        %v1912 = vpop.f32.mrb[0].mxu0
        %v1913 = vadd.f32 0.0, %v1912
        %v1914 = vpop.f32.mrb[0].mxu0
        %v1915 = vadd.f32 0.0, %v1914
        %1916 = vdwg.mxu0
        %v1917 = vadd.f32 %v1768, %v1842
        %v1918 = vadd.f32 %v1769, %v1844
        %v1919 = vadd.f32 %v1770, %v1913
        %v1920 = vadd.f32 %v1771, %v1915
        %vm1921 = vcmp.ge.f32.partialorder %v1917, 0.0
        %vm1922 = vcmp.ge.f32.partialorder %v1918, 0.0
        %vm1923 = vcmp.ge.f32.partialorder %v1919, 0.0
        %vm1924 = vcmp.ge.f32.partialorder %v1920, 0.0
        %v1925 = vmul.f32 %v1917, 0.1
        %v1926 = vmul.f32 %v1918, 0.1
        %v1927 = vmul.f32 %v1919, 0.1
        %v1928 = vmul.f32 %v1920, 0.1
        %v1929 = vsel %vm1921, %v1917, %v1925
        %v1930 = vsel %vm1922, %v1918, %v1926
        %v1931 = vsel %vm1923, %v1919, %v1927
        %v1932 = vsel %vm1924, %v1920, %v1928
        %1933 = vrot.lane.b32.xlu0 %v1929, 127
        %v1934 = vpop.permute.xlu0 %1933
        %1935 = vrot.lane.b32.xlu0 %v1930, 127
        %v1936 = vpop.permute.xlu0 %1935
        %1937 = vrot.lane.b32.xlu0 %v1931, 127
        %v1938 = vpop.permute.xlu0 %1937
        %1939 = vrot.lane.b32.xlu0 %v1932, 127
        %v1940 = vpop.permute.xlu0 %1939
        %v1941 = vsel %vm650, %v1938, %v1940
        %v1942 = vsel %vm650, %v1936, %v1938
        %v1943 = vsel %vm650, %v1934, %v1936
        %v1944 = vsel %vm650, %v1940, %v1934
        %v1945 = vmax.f32 %v1929, %v1943
        %v1946 = vmax.f32 %v1930, %v1942
        %v1947 = vmax.f32 %v1931, %v1941
        %v1948 = vmax.f32 %v1932, %v1944
        %1949 = vrot.lane.b32.xlu0 %v1929, 112
        %v1950 = vpop.permute.xlu0 %1949
        %1951 = vrot.lane.b32.xlu0 %v1930, 112
        %v1952 = vpop.permute.xlu0 %1951
        %1953 = vrot.lane.b32.xlu0 %v1931, 112
        %v1954 = vpop.permute.xlu0 %1953
        %1955 = vrot.lane.b32.xlu0 %v1932, 112
        %v1956 = vpop.permute.xlu0 %1955
        %v1957 = vsel %vm716, %v1954, %v1956
        %v1958 = vsel %vm716, %v1952, %v1954
        %v1959 = vsel %vm716, %v1950, %v1952
        %v1960 = vsel %vm716, %v1956, %v1950
        %1961 = vrot.lane.b32.xlu0 %v1929, 111
        %v1962 = vpop.permute.xlu0 %1961
        %1963 = vrot.lane.b32.xlu0 %v1930, 111
        %v1964 = vpop.permute.xlu0 %1963
        %1965 = vrot.lane.b32.xlu0 %v1931, 111
        %v1966 = vpop.permute.xlu0 %1965
        %1967 = vrot.lane.b32.xlu0 %v1932, 111
        %v1968 = vpop.permute.xlu0 %1967
        %v1969 = vsel %vm749, %v1966, %v1968
        %v1970 = vsel %vm749, %v1964, %v1966
        %v1971 = vsel %vm749, %v1962, %v1964
        %v1972 = vsel %vm749, %v1968, %v1962
        %v1973 = vmax.f32 %v1959, %v1971
        %v1974 = vmax.f32 %v1958, %v1970
        %v1975 = vmax.f32 %v1957, %v1969
        %v1976 = vmax.f32 %v1960, %v1972
        %v1977 = vmax.f32 %v1945, %v1973
        %v1978 = vmax.f32 %v1946, %v1974
        %v1979 = vmax.f32 %v1947, %v1975
        %v1980 = vmax.f32 %v1948, %v1976
        %v1981 = vpack.c.bf16 %v1977, %v1977
        %v1982 = vpack.c.bf16 %v1978, %v1978
        %v1983 = vpack.c.bf16 %v1979, %v1979
        %v1984 = vpack.c.bf16 %v1980, %v1980
        %v1985 = vld [vmem:[#allocation4] sm:$0xf]
        %v1986 = vld [vmem:[#allocation4 + $0x4] sm:$0xf]
        %v1987 = vld [vmem:[#allocation4 + $0x8] sm:$0xf]
        %v1988 = vld [vmem:[#allocation4 + $0xc] sm:$0xf]
        %v1989 = vld [vmem:[#allocation4 + $0x10] sm:$0xf]
        %v1990 = vld [vmem:[#allocation4 + $0x14] sm:$0xf]
        %v1991 = vld [vmem:[#allocation4 + $0x18] sm:$0xf]
        %v1992 = vld [vmem:[#allocation4 + $0x1c] sm:$0xf]
        %v1993 = vld [vmem:[#allocation4 + $0x20] sm:$0xf]
        %v1994 = vld [vmem:[#allocation4 + $0x24] sm:$0xf]
        %v1995 = vld [vmem:[#allocation4 + $0x28] sm:$0xf]
        %v1996 = vld [vmem:[#allocation4 + $0x2c] sm:$0xf]
        %v1997 = vld [vmem:[#allocation4 + $0x30] sm:$0xf]
        %v1998 = vld [vmem:[#allocation4 + $0x34] sm:$0xf]
        %v1999 = vld [vmem:[#allocation4 + $0x38] sm:$0xf]
        %v2000 = vld [vmem:[#allocation4 + $0x3c] sm:$0xf]
        %v2001 = vld [vmem:[#allocation4 + $0x40] sm:$0xf]
        %v2002 = vld [vmem:[#allocation4 + $0x44] sm:$0xf]
        %v2003 = vld [vmem:[#allocation4 + $0x48] sm:$0xf]
        %v2004 = vld [vmem:[#allocation4 + $0x4c] sm:$0xf]
        %v2005 = vld [vmem:[#allocation4 + $0x50] sm:$0xf]
        %v2006 = vld [vmem:[#allocation4 + $0x54] sm:$0xf]
        %v2007 = vld [vmem:[#allocation4 + $0x58] sm:$0xf]
        %v2008 = vld [vmem:[#allocation4 + $0x5c] sm:$0xf]
        %v2009 = vld [vmem:[#allocation4 + $0x60] sm:$0xf]
        %v2010 = vld [vmem:[#allocation4 + $0x64] sm:$0xf]
        %v2011 = vld [vmem:[#allocation4 + $0x68] sm:$0xf]
        %v2012 = vld [vmem:[#allocation4 + $0x6c] sm:$0xf]
        %v2013 = vld [vmem:[#allocation4 + $0x70] sm:$0xf]
        %v2014 = vld [vmem:[#allocation4 + $0x74] sm:$0xf]
        %v2015 = vld [vmem:[#allocation4 + $0x78] sm:$0xf]
        %v2016 = vld [vmem:[#allocation4 + $0x7c] sm:$0xf]
        %v2017 = vld [vmem:[#allocation4 + $0x80] sm:$0xf]
        %v2018 = vld [vmem:[#allocation4 + $0x84] sm:$0xf]
        %v2019 = vld [vmem:[#allocation4 + $0x88] sm:$0xf]
        %v2020 = vld [vmem:[#allocation4 + $0x8c] sm:$0xf]
        %v2021 = vld [vmem:[#allocation4 + $0x90] sm:$0xf]
        %v2022 = vld [vmem:[#allocation4 + $0x94] sm:$0xf]
        %v2023 = vld [vmem:[#allocation4 + $0x98] sm:$0xf]
        %v2024 = vld [vmem:[#allocation4 + $0x9c] sm:$0xf]
        %v2025 = vld [vmem:[#allocation4 + $0xa0] sm:$0xf]
        %v2026 = vld [vmem:[#allocation4 + $0xa4] sm:$0xf]
        %v2027 = vld [vmem:[#allocation4 + $0xa8] sm:$0xf]
        %v2028 = vld [vmem:[#allocation4 + $0xac] sm:$0xf]
        %v2029 = vld [vmem:[#allocation4 + $0xb0] sm:$0xf]
        %v2030 = vld [vmem:[#allocation4 + $0xb4] sm:$0xf]
        %v2031 = vld [vmem:[#allocation4 + $0xb8] sm:$0xf]
        %v2032 = vld [vmem:[#allocation4 + $0xbc] sm:$0xf]
        %v2033 = vld [vmem:[#allocation4 + $0xc0] sm:$0xf]
        %v2034 = vld [vmem:[#allocation4 + $0xc4] sm:$0xf]
        %v2035 = vld [vmem:[#allocation4 + $0xc8] sm:$0xf]
        %v2036 = vld [vmem:[#allocation4 + $0xcc] sm:$0xf]
        %v2037 = vld [vmem:[#allocation4 + $0xd0] sm:$0xf]
        %v2038 = vld [vmem:[#allocation4 + $0xd4] sm:$0xf]
        %v2039 = vld [vmem:[#allocation4 + $0xd8] sm:$0xf]
        %v2040 = vld [vmem:[#allocation4 + $0xdc] sm:$0xf]
        %v2041 = vld [vmem:[#allocation4 + $0xe0] sm:$0xf]
        %v2042 = vld [vmem:[#allocation4 + $0xe4] sm:$0xf]
        %v2043 = vld [vmem:[#allocation4 + $0xe8] sm:$0xf]
        %v2044 = vld [vmem:[#allocation4 + $0xec] sm:$0xf]
        %v2045 = vld [vmem:[#allocation4 + $0xf0] sm:$0xf]
        %v2046 = vld [vmem:[#allocation4 + $0xf4] sm:$0xf]
        %v2047 = vld [vmem:[#allocation4 + $0xf8] sm:$0xf]
        %v2048 = vld [vmem:[#allocation4 + $0xfc] sm:$0xf]
        %v2113 = vunpack.c.l.b16 %v1985
        %v2114 = vunpack.c.l.b16 %v1986
        %v2115 = vunpack.c.l.b16 %v1987
        %v2116 = vunpack.c.l.b16 %v1988
        %v2117 = vunpack.c.l.b16 %v1989
        %v2118 = vunpack.c.l.b16 %v1990
        %v2119 = vunpack.c.l.b16 %v1991
        %v2120 = vunpack.c.l.b16 %v1992
        %v2121 = vunpack.c.l.b16 %v1993
        %v2122 = vunpack.c.l.b16 %v1994
        %v2123 = vunpack.c.l.b16 %v1995
        %v2124 = vunpack.c.l.b16 %v1996
        %v2125 = vunpack.c.l.b16 %v1997
        %v2126 = vunpack.c.l.b16 %v1998
        %v2127 = vunpack.c.l.b16 %v1999
        %v2128 = vunpack.c.l.b16 %v2000
        %v2129 = vunpack.c.l.b16 %v2001
        %v2130 = vunpack.c.l.b16 %v2002
        %v2131 = vunpack.c.l.b16 %v2003
        %v2132 = vunpack.c.l.b16 %v2004
        %v2133 = vunpack.c.l.b16 %v2005
        %v2134 = vunpack.c.l.b16 %v2006
        %v2135 = vunpack.c.l.b16 %v2007
        %v2136 = vunpack.c.l.b16 %v2008
        %v2137 = vunpack.c.l.b16 %v2009
        %v2138 = vunpack.c.l.b16 %v2010
        %v2139 = vunpack.c.l.b16 %v2011
        %v2140 = vunpack.c.l.b16 %v2012
        %v2141 = vunpack.c.l.b16 %v2013
        %v2142 = vunpack.c.l.b16 %v2014
        %v2143 = vunpack.c.l.b16 %v2015
        %v2144 = vunpack.c.l.b16 %v2016
        %v2145 = vunpack.c.l.b16 %v2017
        %v2146 = vunpack.c.l.b16 %v2018
        %v2147 = vunpack.c.l.b16 %v2019
        %v2148 = vunpack.c.l.b16 %v2020
        %v2149 = vunpack.c.l.b16 %v2021
        %v2150 = vunpack.c.l.b16 %v2022
        %v2151 = vunpack.c.l.b16 %v2023
        %v2152 = vunpack.c.l.b16 %v2024
        %v2153 = vunpack.c.l.b16 %v2025
        %v2154 = vunpack.c.l.b16 %v2026
        %v2155 = vunpack.c.l.b16 %v2027
        %v2156 = vunpack.c.l.b16 %v2028
        %v2157 = vunpack.c.l.b16 %v2029
        %v2158 = vunpack.c.l.b16 %v2030
        %v2159 = vunpack.c.l.b16 %v2031
        %v2160 = vunpack.c.l.b16 %v2032
        %v2161 = vunpack.c.l.b16 %v2033
        %v2162 = vunpack.c.l.b16 %v2034
        %v2163 = vunpack.c.l.b16 %v2035
        %v2164 = vunpack.c.l.b16 %v2036
        %v2165 = vunpack.c.l.b16 %v2037
        %v2166 = vunpack.c.l.b16 %v2038
        %v2167 = vunpack.c.l.b16 %v2039
        %v2168 = vunpack.c.l.b16 %v2040
        %v2169 = vunpack.c.l.b16 %v2041
        %v2170 = vunpack.c.l.b16 %v2042
        %v2171 = vunpack.c.l.b16 %v2043
        %v2172 = vunpack.c.l.b16 %v2044
        %v2173 = vunpack.c.l.b16 %v2045
        %v2174 = vunpack.c.l.b16 %v2046
        %v2175 = vunpack.c.l.b16 %v2047
        %v2176 = vunpack.c.l.b16 %v2048
        %v2177 = vpack.c.b16 %v2114, %v2113
        %v2178 = vpack.c.b16 %v2116, %v2115
        %v2179 = vpack.c.b16 %v2118, %v2117
        %v2180 = vpack.c.b16 %v2120, %v2119
        %v2181 = vpack.c.b16 %v2122, %v2121
        %v2182 = vpack.c.b16 %v2124, %v2123
        %v2183 = vpack.c.b16 %v2126, %v2125
        %v2184 = vpack.c.b16 %v2128, %v2127
        %v2185 = vpack.c.b16 %v2130, %v2129
        %v2186 = vpack.c.b16 %v2132, %v2131
        %v2187 = vpack.c.b16 %v2134, %v2133
        %v2188 = vpack.c.b16 %v2136, %v2135
        %v2189 = vpack.c.b16 %v2138, %v2137
        %v2190 = vpack.c.b16 %v2140, %v2139
        %v2191 = vpack.c.b16 %v2142, %v2141
        %v2192 = vpack.c.b16 %v2144, %v2143
        %v2193 = vpack.c.b16 %v2146, %v2145
        %v2194 = vpack.c.b16 %v2148, %v2147
        %v2195 = vpack.c.b16 %v2150, %v2149
        %v2196 = vpack.c.b16 %v2152, %v2151
        %v2197 = vpack.c.b16 %v2154, %v2153
        %v2198 = vpack.c.b16 %v2156, %v2155
        %v2199 = vpack.c.b16 %v2158, %v2157
        %v2200 = vpack.c.b16 %v2160, %v2159
        %v2201 = vpack.c.b16 %v2162, %v2161
        %v2202 = vpack.c.b16 %v2164, %v2163
        %v2203 = vpack.c.b16 %v2166, %v2165
        %v2204 = vpack.c.b16 %v2168, %v2167
        %v2205 = vpack.c.b16 %v2170, %v2169
        %v2206 = vpack.c.b16 %v2172, %v2171
        %v2207 = vpack.c.b16 %v2174, %v2173
        %v2208 = vpack.c.b16 %v2176, %v2175
        %2241 = vmatprep.subr.bf16.mxu0 0
        %2242 = vmatpush1.bf16.msra.mxu0 %v2177
        %2243 = vmatprep.subr.bf16.mxu0 0
        %2244 = vmatpush1.bf16.msra.mxu0 %v2178
        %2245 = vmatprep.subr.bf16.mxu0 0
        %2246 = vmatpush1.bf16.msra.mxu0 %v2179
        %2247 = vmatprep.subr.bf16.mxu0 0
        %2248 = vmatpush1.bf16.msra.mxu0 %v2180
        %2249 = vmatprep.subr.bf16.mxu0 0
        %2250 = vmatpush1.bf16.msra.mxu0 %v2181
        %2251 = vmatprep.subr.bf16.mxu0 0
        %2252 = vmatpush1.bf16.msra.mxu0 %v2182
        %2253 = vmatprep.subr.bf16.mxu0 0
        %2254 = vmatpush1.bf16.msra.mxu0 %v2183
        %2255 = vmatprep.subr.bf16.mxu0 0
        %2256 = vmatpush1.bf16.msra.mxu0 %v2184
        %2257 = vmatprep.subr.bf16.mxu0 0
        %2258 = vmatpush1.bf16.msra.mxu0 %v2185
        %2259 = vmatprep.subr.bf16.mxu0 0
        %2260 = vmatpush1.bf16.msra.mxu0 %v2186
        %2261 = vmatprep.subr.bf16.mxu0 0
        %2262 = vmatpush1.bf16.msra.mxu0 %v2187
        %2263 = vmatprep.subr.bf16.mxu0 0
        %2264 = vmatpush1.bf16.msra.mxu0 %v2188
        %2265 = vmatprep.subr.bf16.mxu0 0
        %2266 = vmatpush1.bf16.msra.mxu0 %v2189
        %2267 = vmatprep.subr.bf16.mxu0 0
        %2268 = vmatpush1.bf16.msra.mxu0 %v2190
        %2269 = vmatprep.subr.bf16.mxu0 0
        %2270 = vmatpush1.bf16.msra.mxu0 %v2191
        %2271 = vmatprep.subr.bf16.mxu0 0
        %2272 = vmatpush1.bf16.msra.mxu0 %v2192
        %2273 = vmatprep.mubr.bf16.mxu0 %v1982
        %2274 = vmatmul.mubr.bf16.gmra.mrb[0].mxu0 %v1981
        %v2275 = vpop.f32.mrb[0].mxu0
        %v2276 = vadd.f32 0.0, %v2275
        %v2277 = vpop.f32.mrb[0].mxu0
        %v2278 = vpop.f32.mrb[0].mxu0
        %v2279 = vpop.f32.mrb[0].mxu0
        %2280 = vdwg.mxu0
        %2281 = vmatprep.subr.bf16.mxu0 0
        %2282 = vmatpush1.bf16.msra.mxu0 %v2193
        %2283 = vmatprep.subr.bf16.mxu0 0
        %2284 = vmatpush1.bf16.msra.mxu0 %v2194
        %2285 = vmatprep.subr.bf16.mxu0 0
        %2286 = vmatpush1.bf16.msra.mxu0 %v2195
        %2287 = vmatprep.subr.bf16.mxu0 0
        %2288 = vmatpush1.bf16.msra.mxu0 %v2196
        %2289 = vmatprep.subr.bf16.mxu0 0
        %2290 = vmatpush1.bf16.msra.mxu0 %v2197
        %2291 = vmatprep.subr.bf16.mxu0 0
        %2292 = vmatpush1.bf16.msra.mxu0 %v2198
        %2293 = vmatprep.subr.bf16.mxu0 0
        %2294 = vmatpush1.bf16.msra.mxu0 %v2199
        %2295 = vmatprep.subr.bf16.mxu0 0
        %2296 = vmatpush1.bf16.msra.mxu0 %v2200
        %2297 = vmatprep.subr.bf16.mxu0 0
        %2298 = vmatpush1.bf16.msra.mxu0 %v2201
        %2299 = vmatprep.subr.bf16.mxu0 0
        %2300 = vmatpush1.bf16.msra.mxu0 %v2202
        %2301 = vmatprep.subr.bf16.mxu0 0
        %2302 = vmatpush1.bf16.msra.mxu0 %v2203
        %2303 = vmatprep.subr.bf16.mxu0 0
        %2304 = vmatpush1.bf16.msra.mxu0 %v2204
        %2305 = vmatprep.subr.bf16.mxu0 0
        %2306 = vmatpush1.bf16.msra.mxu0 %v2205
        %2307 = vmatprep.subr.bf16.mxu0 0
        %2308 = vmatpush1.bf16.msra.mxu0 %v2206
        %2309 = vmatprep.subr.bf16.mxu0 0
        %2310 = vmatpush1.bf16.msra.mxu0 %v2207
        %2311 = vmatprep.subr.bf16.mxu0 0
        %2312 = vmatpush1.bf16.msra.mxu0 %v2208
        %2313 = vmatprep.mubr.bf16.mxu0 %v1984
        %2314 = vmatmul.mubr.bf16.gmra.mrb[0].mxu0 %v1983
        %v2315 = vpop.f32.mrb[0].mxu0
        %v2316 = vadd.f32 %v2276, %v2315
        %v2317 = vpop.f32.mrb[0].mxu0
        %v2318 = vpop.f32.mrb[0].mxu0
        %v2319 = vpop.f32.mrb[0].mxu0
        %2320 = vdwg.mxu0
        %s2321 = scalar_lea.vmem [#allocation4], 256
        %v2322 = vld [vmem:[%s2321] sm:$0xf]
        %v2323 = vld [vmem:[%s2321 + $0x4] sm:$0xf]
        %v2324 = vld [vmem:[%s2321 + $0x8] sm:$0xf]
        %v2325 = vld [vmem:[%s2321 + $0xc] sm:$0xf]
        %v2326 = vld [vmem:[%s2321 + $0x10] sm:$0xf]
        %v2327 = vld [vmem:[%s2321 + $0x14] sm:$0xf]
        %v2328 = vld [vmem:[%s2321 + $0x18] sm:$0xf]
        %v2329 = vld [vmem:[%s2321 + $0x1c] sm:$0xf]
        %v2330 = vld [vmem:[%s2321 + $0x20] sm:$0xf]
        %v2331 = vld [vmem:[%s2321 + $0x24] sm:$0xf]
        %v2332 = vld [vmem:[%s2321 + $0x28] sm:$0xf]
        %v2333 = vld [vmem:[%s2321 + $0x2c] sm:$0xf]
        %v2334 = vld [vmem:[%s2321 + $0x30] sm:$0xf]
        %v2335 = vld [vmem:[%s2321 + $0x34] sm:$0xf]
        %v2336 = vld [vmem:[%s2321 + $0x38] sm:$0xf]
        %v2337 = vld [vmem:[%s2321 + $0x3c] sm:$0xf]
        %v2338 = vld [vmem:[%s2321 + $0x40] sm:$0xf]
        %v2339 = vld [vmem:[%s2321 + $0x44] sm:$0xf]
        %v2340 = vld [vmem:[%s2321 + $0x48] sm:$0xf]
        %v2341 = vld [vmem:[%s2321 + $0x4c] sm:$0xf]
        %v2342 = vld [vmem:[%s2321 + $0x50] sm:$0xf]
        %v2343 = vld [vmem:[%s2321 + $0x54] sm:$0xf]
        %v2344 = vld [vmem:[%s2321 + $0x58] sm:$0xf]
        %v2345 = vld [vmem:[%s2321 + $0x5c] sm:$0xf]
        %v2346 = vld [vmem:[%s2321 + $0x60] sm:$0xf]
        %v2347 = vld [vmem:[%s2321 + $0x64] sm:$0xf]
        %v2348 = vld [vmem:[%s2321 + $0x68] sm:$0xf]
        %v2349 = vld [vmem:[%s2321 + $0x6c] sm:$0xf]
        %v2350 = vld [vmem:[%s2321 + $0x70] sm:$0xf]
        %v2351 = vld [vmem:[%s2321 + $0x74] sm:$0xf]
        %v2352 = vld [vmem:[%s2321 + $0x78] sm:$0xf]
        %v2353 = vld [vmem:[%s2321 + $0x7c] sm:$0xf]
        %v2354 = vld [vmem:[%s2321 + $0x80] sm:$0xf]
        %v2355 = vld [vmem:[%s2321 + $0x84] sm:$0xf]
        %v2356 = vld [vmem:[%s2321 + $0x88] sm:$0xf]
        %v2357 = vld [vmem:[%s2321 + $0x8c] sm:$0xf]
        %v2358 = vld [vmem:[%s2321 + $0x90] sm:$0xf]
        %v2359 = vld [vmem:[%s2321 + $0x94] sm:$0xf]
        %v2360 = vld [vmem:[%s2321 + $0x98] sm:$0xf]
        %v2361 = vld [vmem:[%s2321 + $0x9c] sm:$0xf]
        %v2362 = vld [vmem:[%s2321 + $0xa0] sm:$0xf]
        %v2363 = vld [vmem:[%s2321 + $0xa4] sm:$0xf]
        %v2364 = vld [vmem:[%s2321 + $0xa8] sm:$0xf]
        %v2365 = vld [vmem:[%s2321 + $0xac] sm:$0xf]
        %v2366 = vld [vmem:[%s2321 + $0xb0] sm:$0xf]
        %v2367 = vld [vmem:[%s2321 + $0xb4] sm:$0xf]
        %v2368 = vld [vmem:[%s2321 + $0xb8] sm:$0xf]
        %v2369 = vld [vmem:[%s2321 + $0xbc] sm:$0xf]
        %v2370 = vld [vmem:[%s2321 + $0xc0] sm:$0xf]
        %v2371 = vld [vmem:[%s2321 + $0xc4] sm:$0xf]
        %v2372 = vld [vmem:[%s2321 + $0xc8] sm:$0xf]
        %v2373 = vld [vmem:[%s2321 + $0xcc] sm:$0xf]
        %v2374 = vld [vmem:[%s2321 + $0xd0] sm:$0xf]
        %v2375 = vld [vmem:[%s2321 + $0xd4] sm:$0xf]
        %v2376 = vld [vmem:[%s2321 + $0xd8] sm:$0xf]
        %v2377 = vld [vmem:[%s2321 + $0xdc] sm:$0xf]
        %v2378 = vld [vmem:[%s2321 + $0xe0] sm:$0xf]
        %v2379 = vld [vmem:[%s2321 + $0xe4] sm:$0xf]
        %v2380 = vld [vmem:[%s2321 + $0xe8] sm:$0xf]
        %v2381 = vld [vmem:[%s2321 + $0xec] sm:$0xf]
        %v2382 = vld [vmem:[%s2321 + $0xf0] sm:$0xf]
        %v2383 = vld [vmem:[%s2321 + $0xf4] sm:$0xf]
        %v2384 = vld [vmem:[%s2321 + $0xf8] sm:$0xf]
        %v2385 = vld [vmem:[%s2321 + $0xfc] sm:$0xf]
        %v2450 = vunpack.c.l.b16 %v2322
        %v2451 = vunpack.c.l.b16 %v2323
        %v2452 = vunpack.c.l.b16 %v2324
        %v2453 = vunpack.c.l.b16 %v2325
        %v2454 = vunpack.c.l.b16 %v2326
        %v2455 = vunpack.c.l.b16 %v2327
        %v2456 = vunpack.c.l.b16 %v2328
        %v2457 = vunpack.c.l.b16 %v2329
        %v2458 = vunpack.c.l.b16 %v2330
        %v2459 = vunpack.c.l.b16 %v2331
        %v2460 = vunpack.c.l.b16 %v2332
        %v2461 = vunpack.c.l.b16 %v2333
        %v2462 = vunpack.c.l.b16 %v2334
        %v2463 = vunpack.c.l.b16 %v2335
        %v2464 = vunpack.c.l.b16 %v2336
        %v2465 = vunpack.c.l.b16 %v2337
        %v2466 = vunpack.c.l.b16 %v2338
        %v2467 = vunpack.c.l.b16 %v2339
        %v2468 = vunpack.c.l.b16 %v2340
        %v2469 = vunpack.c.l.b16 %v2341
        %v2470 = vunpack.c.l.b16 %v2342
        %v2471 = vunpack.c.l.b16 %v2343
        %v2472 = vunpack.c.l.b16 %v2344
        %v2473 = vunpack.c.l.b16 %v2345
        %v2474 = vunpack.c.l.b16 %v2346
        %v2475 = vunpack.c.l.b16 %v2347
        %v2476 = vunpack.c.l.b16 %v2348
        %v2477 = vunpack.c.l.b16 %v2349
        %v2478 = vunpack.c.l.b16 %v2350
        %v2479 = vunpack.c.l.b16 %v2351
        %v2480 = vunpack.c.l.b16 %v2352
        %v2481 = vunpack.c.l.b16 %v2353
        %v2482 = vunpack.c.l.b16 %v2354
        %v2483 = vunpack.c.l.b16 %v2355
        %v2484 = vunpack.c.l.b16 %v2356
        %v2485 = vunpack.c.l.b16 %v2357
        %v2486 = vunpack.c.l.b16 %v2358
        %v2487 = vunpack.c.l.b16 %v2359
        %v2488 = vunpack.c.l.b16 %v2360
        %v2489 = vunpack.c.l.b16 %v2361
        %v2490 = vunpack.c.l.b16 %v2362
        %v2491 = vunpack.c.l.b16 %v2363
        %v2492 = vunpack.c.l.b16 %v2364
        %v2493 = vunpack.c.l.b16 %v2365
        %v2494 = vunpack.c.l.b16 %v2366
        %v2495 = vunpack.c.l.b16 %v2367
        %v2496 = vunpack.c.l.b16 %v2368
        %v2497 = vunpack.c.l.b16 %v2369
        %v2498 = vunpack.c.l.b16 %v2370
        %v2499 = vunpack.c.l.b16 %v2371
        %v2500 = vunpack.c.l.b16 %v2372
        %v2501 = vunpack.c.l.b16 %v2373
        %v2502 = vunpack.c.l.b16 %v2374
        %v2503 = vunpack.c.l.b16 %v2375
        %v2504 = vunpack.c.l.b16 %v2376
        %v2505 = vunpack.c.l.b16 %v2377
        %v2506 = vunpack.c.l.b16 %v2378
        %v2507 = vunpack.c.l.b16 %v2379
        %v2508 = vunpack.c.l.b16 %v2380
        %v2509 = vunpack.c.l.b16 %v2381
        %v2510 = vunpack.c.l.b16 %v2382
        %v2511 = vunpack.c.l.b16 %v2383
        %v2512 = vunpack.c.l.b16 %v2384
        %v2513 = vunpack.c.l.b16 %v2385
        %v2514 = vpack.c.b16 %v2451, %v2450
        %v2515 = vpack.c.b16 %v2453, %v2452
        %v2516 = vpack.c.b16 %v2455, %v2454
        %v2517 = vpack.c.b16 %v2457, %v2456
        %v2518 = vpack.c.b16 %v2459, %v2458
        %v2519 = vpack.c.b16 %v2461, %v2460
        %v2520 = vpack.c.b16 %v2463, %v2462
        %v2521 = vpack.c.b16 %v2465, %v2464
        %v2522 = vpack.c.b16 %v2467, %v2466
        %v2523 = vpack.c.b16 %v2469, %v2468
        %v2524 = vpack.c.b16 %v2471, %v2470
        %v2525 = vpack.c.b16 %v2473, %v2472
        %v2526 = vpack.c.b16 %v2475, %v2474
        %v2527 = vpack.c.b16 %v2477, %v2476
        %v2528 = vpack.c.b16 %v2479, %v2478
        %v2529 = vpack.c.b16 %v2481, %v2480
        %v2530 = vpack.c.b16 %v2483, %v2482
        %v2531 = vpack.c.b16 %v2485, %v2484
        %v2532 = vpack.c.b16 %v2487, %v2486
        %v2533 = vpack.c.b16 %v2489, %v2488
        %v2534 = vpack.c.b16 %v2491, %v2490
        %v2535 = vpack.c.b16 %v2493, %v2492
        %v2536 = vpack.c.b16 %v2495, %v2494
        %v2537 = vpack.c.b16 %v2497, %v2496
        %v2538 = vpack.c.b16 %v2499, %v2498
        %v2539 = vpack.c.b16 %v2501, %v2500
        %v2540 = vpack.c.b16 %v2503, %v2502
        %v2541 = vpack.c.b16 %v2505, %v2504
        %v2542 = vpack.c.b16 %v2507, %v2506
        %v2543 = vpack.c.b16 %v2509, %v2508
        %v2544 = vpack.c.b16 %v2511, %v2510
        %v2545 = vpack.c.b16 %v2513, %v2512
        %2578 = vmatprep.subr.bf16.mxu0 0
        %2579 = vmatpush1.bf16.msra.mxu0 %v2514
        %2580 = vmatprep.subr.bf16.mxu0 0
        %2581 = vmatpush1.bf16.msra.mxu0 %v2515
        %2582 = vmatprep.subr.bf16.mxu0 0
        %2583 = vmatpush1.bf16.msra.mxu0 %v2516
        %2584 = vmatprep.subr.bf16.mxu0 0
        %2585 = vmatpush1.bf16.msra.mxu0 %v2517
        %2586 = vmatprep.subr.bf16.mxu0 0
        %2587 = vmatpush1.bf16.msra.mxu0 %v2518
        %2588 = vmatprep.subr.bf16.mxu0 0
        %2589 = vmatpush1.bf16.msra.mxu0 %v2519
        %2590 = vmatprep.subr.bf16.mxu0 0
        %2591 = vmatpush1.bf16.msra.mxu0 %v2520
        %2592 = vmatprep.subr.bf16.mxu0 0
        %2593 = vmatpush1.bf16.msra.mxu0 %v2521
        %2594 = vmatprep.subr.bf16.mxu0 0
        %2595 = vmatpush1.bf16.msra.mxu0 %v2522
        %2596 = vmatprep.subr.bf16.mxu0 0
        %2597 = vmatpush1.bf16.msra.mxu0 %v2523
        %2598 = vmatprep.subr.bf16.mxu0 0
        %2599 = vmatpush1.bf16.msra.mxu0 %v2524
        %2600 = vmatprep.subr.bf16.mxu0 0
        %2601 = vmatpush1.bf16.msra.mxu0 %v2525
        %2602 = vmatprep.subr.bf16.mxu0 0
        %2603 = vmatpush1.bf16.msra.mxu0 %v2526
        %2604 = vmatprep.subr.bf16.mxu0 0
        %2605 = vmatpush1.bf16.msra.mxu0 %v2527
        %2606 = vmatprep.subr.bf16.mxu0 0
        %2607 = vmatpush1.bf16.msra.mxu0 %v2528
        %2608 = vmatprep.subr.bf16.mxu0 0
        %2609 = vmatpush1.bf16.msra.mxu0 %v2529
        %2610 = vmatprep.mubr.bf16.mxu0 %v1982
        %2611 = vmatmul.mubr.bf16.gmra.mrb[0].mxu0 %v1981
        %v2612 = vpop.f32.mrb[0].mxu0
        %v2613 = vadd.f32 0.0, %v2612
        %v2614 = vpop.f32.mrb[0].mxu0
        %v2615 = vpop.f32.mrb[0].mxu0
        %v2616 = vpop.f32.mrb[0].mxu0
        %2617 = vdwg.mxu0
        %2618 = vmatprep.subr.bf16.mxu0 0
        %2619 = vmatpush1.bf16.msra.mxu0 %v2530
        %2620 = vmatprep.subr.bf16.mxu0 0
        %2621 = vmatpush1.bf16.msra.mxu0 %v2531
        %2622 = vmatprep.subr.bf16.mxu0 0
        %2623 = vmatpush1.bf16.msra.mxu0 %v2532
        %2624 = vmatprep.subr.bf16.mxu0 0
        %2625 = vmatpush1.bf16.msra.mxu0 %v2533
        %2626 = vmatprep.subr.bf16.mxu0 0
        %2627 = vmatpush1.bf16.msra.mxu0 %v2534
        %2628 = vmatprep.subr.bf16.mxu0 0
        %2629 = vmatpush1.bf16.msra.mxu0 %v2535
        %2630 = vmatprep.subr.bf16.mxu0 0
        %2631 = vmatpush1.bf16.msra.mxu0 %v2536
        %2632 = vmatprep.subr.bf16.mxu0 0
        %2633 = vmatpush1.bf16.msra.mxu0 %v2537
        %2634 = vmatprep.subr.bf16.mxu0 0
        %2635 = vmatpush1.bf16.msra.mxu0 %v2538
        %2636 = vmatprep.subr.bf16.mxu0 0
        %2637 = vmatpush1.bf16.msra.mxu0 %v2539
        %2638 = vmatprep.subr.bf16.mxu0 0
        %2639 = vmatpush1.bf16.msra.mxu0 %v2540
        %2640 = vmatprep.subr.bf16.mxu0 0
        %2641 = vmatpush1.bf16.msra.mxu0 %v2541
        %2642 = vmatprep.subr.bf16.mxu0 0
        %2643 = vmatpush1.bf16.msra.mxu0 %v2542
        %2644 = vmatprep.subr.bf16.mxu0 0
        %2645 = vmatpush1.bf16.msra.mxu0 %v2543
        %2646 = vmatprep.subr.bf16.mxu0 0
        %2647 = vmatpush1.bf16.msra.mxu0 %v2544
        %2648 = vmatprep.subr.bf16.mxu0 0
        %2649 = vmatpush1.bf16.msra.mxu0 %v2545
        %2650 = vmatprep.mubr.bf16.mxu0 %v1984
        %2651 = vmatmul.mubr.bf16.gmra.mrb[0].mxu0 %v1983
        %v2652 = vpop.f32.mrb[0].mxu0
        %v2653 = vadd.f32 %v2613, %v2652
        %v2654 = vpop.f32.mrb[0].mxu0
        %v2655 = vpop.f32.mrb[0].mxu0
        %v2656 = vpop.f32.mrb[0].mxu0
        %2657 = vdwg.mxu0
        %s2658 = scalar_lea.vmem [#allocation4], 512
        %v2659 = vld [vmem:[%s2658] sm:$0xf]
        %v2660 = vld [vmem:[%s2658 + $0x4] sm:$0xf]
        %v2661 = vld [vmem:[%s2658 + $0x8] sm:$0xf]
        %v2662 = vld [vmem:[%s2658 + $0xc] sm:$0xf]
        %v2663 = vld [vmem:[%s2658 + $0x10] sm:$0xf]
        %v2664 = vld [vmem:[%s2658 + $0x14] sm:$0xf]
        %v2665 = vld [vmem:[%s2658 + $0x18] sm:$0xf]
        %v2666 = vld [vmem:[%s2658 + $0x1c] sm:$0xf]
        %v2667 = vld [vmem:[%s2658 + $0x20] sm:$0xf]
        %v2668 = vld [vmem:[%s2658 + $0x24] sm:$0xf]
        %v2669 = vld [vmem:[%s2658 + $0x28] sm:$0xf]
        %v2670 = vld [vmem:[%s2658 + $0x2c] sm:$0xf]
        %v2671 = vld [vmem:[%s2658 + $0x30] sm:$0xf]
        %v2672 = vld [vmem:[%s2658 + $0x34] sm:$0xf]
        %v2673 = vld [vmem:[%s2658 + $0x38] sm:$0xf]
        %v2674 = vld [vmem:[%s2658 + $0x3c] sm:$0xf]
        %v2675 = vld [vmem:[%s2658 + $0x40] sm:$0xf]
        %v2676 = vld [vmem:[%s2658 + $0x44] sm:$0xf]
        %v2677 = vld [vmem:[%s2658 + $0x48] sm:$0xf]
        %v2678 = vld [vmem:[%s2658 + $0x4c] sm:$0xf]
        %v2679 = vld [vmem:[%s2658 + $0x50] sm:$0xf]
        %v2680 = vld [vmem:[%s2658 + $0x54] sm:$0xf]
        %v2681 = vld [vmem:[%s2658 + $0x58] sm:$0xf]
        %v2682 = vld [vmem:[%s2658 + $0x5c] sm:$0xf]
        %v2683 = vld [vmem:[%s2658 + $0x60] sm:$0xf]
        %v2684 = vld [vmem:[%s2658 + $0x64] sm:$0xf]
        %v2685 = vld [vmem:[%s2658 + $0x68] sm:$0xf]
        %v2686 = vld [vmem:[%s2658 + $0x6c] sm:$0xf]
        %v2687 = vld [vmem:[%s2658 + $0x70] sm:$0xf]
        %v2688 = vld [vmem:[%s2658 + $0x74] sm:$0xf]
        %v2689 = vld [vmem:[%s2658 + $0x78] sm:$0xf]
        %v2690 = vld [vmem:[%s2658 + $0x7c] sm:$0xf]
        %v2691 = vld [vmem:[%s2658 + $0x80] sm:$0xf]
        %v2692 = vld [vmem:[%s2658 + $0x84] sm:$0xf]
        %v2693 = vld [vmem:[%s2658 + $0x88] sm:$0xf]
        %v2694 = vld [vmem:[%s2658 + $0x8c] sm:$0xf]
        %v2695 = vld [vmem:[%s2658 + $0x90] sm:$0xf]
        %v2696 = vld [vmem:[%s2658 + $0x94] sm:$0xf]
        %v2697 = vld [vmem:[%s2658 + $0x98] sm:$0xf]
        %v2698 = vld [vmem:[%s2658 + $0x9c] sm:$0xf]
        %v2699 = vld [vmem:[%s2658 + $0xa0] sm:$0xf]
        %v2700 = vld [vmem:[%s2658 + $0xa4] sm:$0xf]
        %v2701 = vld [vmem:[%s2658 + $0xa8] sm:$0xf]
        %v2702 = vld [vmem:[%s2658 + $0xac] sm:$0xf]
        %v2703 = vld [vmem:[%s2658 + $0xb0] sm:$0xf]
        %v2704 = vld [vmem:[%s2658 + $0xb4] sm:$0xf]
        %v2705 = vld [vmem:[%s2658 + $0xb8] sm:$0xf]
        %v2706 = vld [vmem:[%s2658 + $0xbc] sm:$0xf]
        %v2707 = vld [vmem:[%s2658 + $0xc0] sm:$0xf]
        %v2708 = vld [vmem:[%s2658 + $0xc4] sm:$0xf]
        %v2709 = vld [vmem:[%s2658 + $0xc8] sm:$0xf]
        %v2710 = vld [vmem:[%s2658 + $0xcc] sm:$0xf]
        %v2711 = vld [vmem:[%s2658 + $0xd0] sm:$0xf]
        %v2712 = vld [vmem:[%s2658 + $0xd4] sm:$0xf]
        %v2713 = vld [vmem:[%s2658 + $0xd8] sm:$0xf]
        %v2714 = vld [vmem:[%s2658 + $0xdc] sm:$0xf]
        %v2715 = vld [vmem:[%s2658 + $0xe0] sm:$0xf]
        %v2716 = vld [vmem:[%s2658 + $0xe4] sm:$0xf]
        %v2717 = vld [vmem:[%s2658 + $0xe8] sm:$0xf]
        %v2718 = vld [vmem:[%s2658 + $0xec] sm:$0xf]
        %v2719 = vld [vmem:[%s2658 + $0xf0] sm:$0xf]
        %v2720 = vld [vmem:[%s2658 + $0xf4] sm:$0xf]
        %v2721 = vld [vmem:[%s2658 + $0xf8] sm:$0xf]
        %v2722 = vld [vmem:[%s2658 + $0xfc] sm:$0xf]
        %v2787 = vunpack.c.l.b16 %v2659
        %v2788 = vunpack.c.l.b16 %v2660
        %v2789 = vunpack.c.l.b16 %v2661
        %v2790 = vunpack.c.l.b16 %v2662
        %v2791 = vunpack.c.l.b16 %v2663
        %v2792 = vunpack.c.l.b16 %v2664
        %v2793 = vunpack.c.l.b16 %v2665
        %v2794 = vunpack.c.l.b16 %v2666
        %v2795 = vunpack.c.l.b16 %v2667
        %v2796 = vunpack.c.l.b16 %v2668
        %v2797 = vunpack.c.l.b16 %v2669
        %v2798 = vunpack.c.l.b16 %v2670
        %v2799 = vunpack.c.l.b16 %v2671
        %v2800 = vunpack.c.l.b16 %v2672
        %v2801 = vunpack.c.l.b16 %v2673
        %v2802 = vunpack.c.l.b16 %v2674
        %v2803 = vunpack.c.l.b16 %v2675
        %v2804 = vunpack.c.l.b16 %v2676
        %v2805 = vunpack.c.l.b16 %v2677
        %v2806 = vunpack.c.l.b16 %v2678
        %v2807 = vunpack.c.l.b16 %v2679
        %v2808 = vunpack.c.l.b16 %v2680
        %v2809 = vunpack.c.l.b16 %v2681
        %v2810 = vunpack.c.l.b16 %v2682
        %v2811 = vunpack.c.l.b16 %v2683
        %v2812 = vunpack.c.l.b16 %v2684
        %v2813 = vunpack.c.l.b16 %v2685
        %v2814 = vunpack.c.l.b16 %v2686
        %v2815 = vunpack.c.l.b16 %v2687
        %v2816 = vunpack.c.l.b16 %v2688
        %v2817 = vunpack.c.l.b16 %v2689
        %v2818 = vunpack.c.l.b16 %v2690
        %v2819 = vunpack.c.l.b16 %v2691
        %v2820 = vunpack.c.l.b16 %v2692
        %v2821 = vunpack.c.l.b16 %v2693
        %v2822 = vunpack.c.l.b16 %v2694
        %v2823 = vunpack.c.l.b16 %v2695
        %v2824 = vunpack.c.l.b16 %v2696
        %v2825 = vunpack.c.l.b16 %v2697
        %v2826 = vunpack.c.l.b16 %v2698
        %v2827 = vunpack.c.l.b16 %v2699
        %v2828 = vunpack.c.l.b16 %v2700
        %v2829 = vunpack.c.l.b16 %v2701
        %v2830 = vunpack.c.l.b16 %v2702
        %v2831 = vunpack.c.l.b16 %v2703
        %v2832 = vunpack.c.l.b16 %v2704
        %v2833 = vunpack.c.l.b16 %v2705
        %v2834 = vunpack.c.l.b16 %v2706
        %v2835 = vunpack.c.l.b16 %v2707
        %v2836 = vunpack.c.l.b16 %v2708
        %v2837 = vunpack.c.l.b16 %v2709
        %v2838 = vunpack.c.l.b16 %v2710
        %v2839 = vunpack.c.l.b16 %v2711
        %v2840 = vunpack.c.l.b16 %v2712
        %v2841 = vunpack.c.l.b16 %v2713
        %v2842 = vunpack.c.l.b16 %v2714
        %v2843 = vunpack.c.l.b16 %v2715
        %v2844 = vunpack.c.l.b16 %v2716
        %v2845 = vunpack.c.l.b16 %v2717
        %v2846 = vunpack.c.l.b16 %v2718
        %v2847 = vunpack.c.l.b16 %v2719
        %v2848 = vunpack.c.l.b16 %v2720
        %v2849 = vunpack.c.l.b16 %v2721
        %v2850 = vunpack.c.l.b16 %v2722
        %v2851 = vpack.c.b16 %v2788, %v2787
        %v2852 = vpack.c.b16 %v2790, %v2789
        %v2853 = vpack.c.b16 %v2792, %v2791
        %v2854 = vpack.c.b16 %v2794, %v2793
        %v2855 = vpack.c.b16 %v2796, %v2795
        %v2856 = vpack.c.b16 %v2798, %v2797
        %v2857 = vpack.c.b16 %v2800, %v2799
        %v2858 = vpack.c.b16 %v2802, %v2801
        %v2859 = vpack.c.b16 %v2804, %v2803
        %v2860 = vpack.c.b16 %v2806, %v2805
        %v2861 = vpack.c.b16 %v2808, %v2807
        %v2862 = vpack.c.b16 %v2810, %v2809
        %v2863 = vpack.c.b16 %v2812, %v2811
        %v2864 = vpack.c.b16 %v2814, %v2813
        %v2865 = vpack.c.b16 %v2816, %v2815
        %v2866 = vpack.c.b16 %v2818, %v2817
        %v2867 = vpack.c.b16 %v2820, %v2819
        %v2868 = vpack.c.b16 %v2822, %v2821
        %v2869 = vpack.c.b16 %v2824, %v2823
        %v2870 = vpack.c.b16 %v2826, %v2825
        %v2871 = vpack.c.b16 %v2828, %v2827
        %v2872 = vpack.c.b16 %v2830, %v2829
        %v2873 = vpack.c.b16 %v2832, %v2831
        %v2874 = vpack.c.b16 %v2834, %v2833
        %v2875 = vpack.c.b16 %v2836, %v2835
        %v2876 = vpack.c.b16 %v2838, %v2837
        %v2877 = vpack.c.b16 %v2840, %v2839
        %v2878 = vpack.c.b16 %v2842, %v2841
        %v2879 = vpack.c.b16 %v2844, %v2843
        %v2880 = vpack.c.b16 %v2846, %v2845
        %v2881 = vpack.c.b16 %v2848, %v2847
        %v2882 = vpack.c.b16 %v2850, %v2849
        %2915 = vmatprep.subr.bf16.mxu0 0
        %2916 = vmatpush1.bf16.msra.mxu0 %v2851
        %2917 = vmatprep.subr.bf16.mxu0 0
        %2918 = vmatpush1.bf16.msra.mxu0 %v2852
        %2919 = vmatprep.subr.bf16.mxu0 0
        %2920 = vmatpush1.bf16.msra.mxu0 %v2853
        %2921 = vmatprep.subr.bf16.mxu0 0
        %2922 = vmatpush1.bf16.msra.mxu0 %v2854
        %2923 = vmatprep.subr.bf16.mxu0 0
        %2924 = vmatpush1.bf16.msra.mxu0 %v2855
        %2925 = vmatprep.subr.bf16.mxu0 0
        %2926 = vmatpush1.bf16.msra.mxu0 %v2856
        %2927 = vmatprep.subr.bf16.mxu0 0
        %2928 = vmatpush1.bf16.msra.mxu0 %v2857
        %2929 = vmatprep.subr.bf16.mxu0 0
        %2930 = vmatpush1.bf16.msra.mxu0 %v2858
        %2931 = vmatprep.subr.bf16.mxu0 0
        %2932 = vmatpush1.bf16.msra.mxu0 %v2859
        %2933 = vmatprep.subr.bf16.mxu0 0
        %2934 = vmatpush1.bf16.msra.mxu0 %v2860
        %2935 = vmatprep.subr.bf16.mxu0 0
        %2936 = vmatpush1.bf16.msra.mxu0 %v2861
        %2937 = vmatprep.subr.bf16.mxu0 0
        %2938 = vmatpush1.bf16.msra.mxu0 %v2862
        %2939 = vmatprep.subr.bf16.mxu0 0
        %2940 = vmatpush1.bf16.msra.mxu0 %v2863
        %2941 = vmatprep.subr.bf16.mxu0 0
        %2942 = vmatpush1.bf16.msra.mxu0 %v2864
        %2943 = vmatprep.subr.bf16.mxu0 0
        %2944 = vmatpush1.bf16.msra.mxu0 %v2865
        %2945 = vmatprep.subr.bf16.mxu0 0
        %2946 = vmatpush1.bf16.msra.mxu0 %v2866
        %2947 = vmatprep.mubr.bf16.mxu0 %v1982
        %2948 = vmatmul.mubr.bf16.gmra.mrb[0].mxu0 %v1981
        %v2949 = vpop.f32.mrb[0].mxu0
        %v2950 = vadd.f32 0.0, %v2949
        %v2951 = vpop.f32.mrb[0].mxu0
        %v2952 = vpop.f32.mrb[0].mxu0
        %v2953 = vpop.f32.mrb[0].mxu0
        %2954 = vdwg.mxu0
        %2955 = vmatprep.subr.bf16.mxu0 0
        %2956 = vmatpush1.bf16.msra.mxu0 %v2867
        %2957 = vmatprep.subr.bf16.mxu0 0
        %2958 = vmatpush1.bf16.msra.mxu0 %v2868
        %2959 = vmatprep.subr.bf16.mxu0 0
        %2960 = vmatpush1.bf16.msra.mxu0 %v2869
        %2961 = vmatprep.subr.bf16.mxu0 0
        %2962 = vmatpush1.bf16.msra.mxu0 %v2870
        %2963 = vmatprep.subr.bf16.mxu0 0
        %2964 = vmatpush1.bf16.msra.mxu0 %v2871
        %2965 = vmatprep.subr.bf16.mxu0 0
        %2966 = vmatpush1.bf16.msra.mxu0 %v2872
        %2967 = vmatprep.subr.bf16.mxu0 0
        %2968 = vmatpush1.bf16.msra.mxu0 %v2873
        %2969 = vmatprep.subr.bf16.mxu0 0
        %2970 = vmatpush1.bf16.msra.mxu0 %v2874
        %2971 = vmatprep.subr.bf16.mxu0 0
        %2972 = vmatpush1.bf16.msra.mxu0 %v2875
        %2973 = vmatprep.subr.bf16.mxu0 0
        %2974 = vmatpush1.bf16.msra.mxu0 %v2876
        %2975 = vmatprep.subr.bf16.mxu0 0
        %2976 = vmatpush1.bf16.msra.mxu0 %v2877
        %2977 = vmatprep.subr.bf16.mxu0 0
        %2978 = vmatpush1.bf16.msra.mxu0 %v2878
        %2979 = vmatprep.subr.bf16.mxu0 0
        %2980 = vmatpush1.bf16.msra.mxu0 %v2879
        %2981 = vmatprep.subr.bf16.mxu0 0
        %2982 = vmatpush1.bf16.msra.mxu0 %v2880
        %2983 = vmatprep.subr.bf16.mxu0 0
        %2984 = vmatpush1.bf16.msra.mxu0 %v2881
        %2985 = vmatprep.subr.bf16.mxu0 0
        %2986 = vmatpush1.bf16.msra.mxu0 %v2882
        %2987 = vmatprep.mubr.bf16.mxu0 %v1984
        %2988 = vmatmul.mubr.bf16.gmra.mrb[0].mxu0 %v1983
        %v2989 = vpop.f32.mrb[0].mxu0
        %v2990 = vadd.f32 %v2950, %v2989
        %v2991 = vpop.f32.mrb[0].mxu0
        %v2992 = vpop.f32.mrb[0].mxu0
        %v2993 = vpop.f32.mrb[0].mxu0
        %2994 = vdwg.mxu0
        %s2995 = scalar_lea.vmem [#allocation4], 768
        %v2996 = vld [vmem:[%s2995] sm:$0xf]
        %v2997 = vld [vmem:[%s2995 + $0x4] sm:$0xf]
        %v2998 = vld [vmem:[%s2995 + $0x8] sm:$0xf]
        %v2999 = vld [vmem:[%s2995 + $0xc] sm:$0xf]
        %v3000 = vld [vmem:[%s2995 + $0x10] sm:$0xf]
        %v3001 = vld [vmem:[%s2995 + $0x14] sm:$0xf]
        %v3002 = vld [vmem:[%s2995 + $0x18] sm:$0xf]
        %v3003 = vld [vmem:[%s2995 + $0x1c] sm:$0xf]
        %v3004 = vld [vmem:[%s2995 + $0x20] sm:$0xf]
        %v3005 = vld [vmem:[%s2995 + $0x24] sm:$0xf]
        %v3006 = vld [vmem:[%s2995 + $0x28] sm:$0xf]
        %v3007 = vld [vmem:[%s2995 + $0x2c] sm:$0xf]
        %v3008 = vld [vmem:[%s2995 + $0x30] sm:$0xf]
        %v3009 = vld [vmem:[%s2995 + $0x34] sm:$0xf]
        %v3010 = vld [vmem:[%s2995 + $0x38] sm:$0xf]
        %v3011 = vld [vmem:[%s2995 + $0x3c] sm:$0xf]
        %v3012 = vld [vmem:[%s2995 + $0x40] sm:$0xf]
        %v3013 = vld [vmem:[%s2995 + $0x44] sm:$0xf]
        %v3014 = vld [vmem:[%s2995 + $0x48] sm:$0xf]
        %v3015 = vld [vmem:[%s2995 + $0x4c] sm:$0xf]
        %v3016 = vld [vmem:[%s2995 + $0x50] sm:$0xf]
        %v3017 = vld [vmem:[%s2995 + $0x54] sm:$0xf]
        %v3018 = vld [vmem:[%s2995 + $0x58] sm:$0xf]
        %v3019 = vld [vmem:[%s2995 + $0x5c] sm:$0xf]
        %v3020 = vld [vmem:[%s2995 + $0x60] sm:$0xf]
        %v3021 = vld [vmem:[%s2995 + $0x64] sm:$0xf]
        %v3022 = vld [vmem:[%s2995 + $0x68] sm:$0xf]
        %v3023 = vld [vmem:[%s2995 + $0x6c] sm:$0xf]
        %v3024 = vld [vmem:[%s2995 + $0x70] sm:$0xf]
        %v3025 = vld [vmem:[%s2995 + $0x74] sm:$0xf]
        %v3026 = vld [vmem:[%s2995 + $0x78] sm:$0xf]
        %v3027 = vld [vmem:[%s2995 + $0x7c] sm:$0xf]
        %v3028 = vld [vmem:[%s2995 + $0x80] sm:$0xf]
        %v3029 = vld [vmem:[%s2995 + $0x84] sm:$0xf]
        %v3030 = vld [vmem:[%s2995 + $0x88] sm:$0xf]
        %v3031 = vld [vmem:[%s2995 + $0x8c] sm:$0xf]
        %v3032 = vld [vmem:[%s2995 + $0x90] sm:$0xf]
        %v3033 = vld [vmem:[%s2995 + $0x94] sm:$0xf]
        %v3034 = vld [vmem:[%s2995 + $0x98] sm:$0xf]
        %v3035 = vld [vmem:[%s2995 + $0x9c] sm:$0xf]
        %v3036 = vld [vmem:[%s2995 + $0xa0] sm:$0xf]
        %v3037 = vld [vmem:[%s2995 + $0xa4] sm:$0xf]
        %v3038 = vld [vmem:[%s2995 + $0xa8] sm:$0xf]
        %v3039 = vld [vmem:[%s2995 + $0xac] sm:$0xf]
        %v3040 = vld [vmem:[%s2995 + $0xb0] sm:$0xf]
        %v3041 = vld [vmem:[%s2995 + $0xb4] sm:$0xf]
        %v3042 = vld [vmem:[%s2995 + $0xb8] sm:$0xf]
        %v3043 = vld [vmem:[%s2995 + $0xbc] sm:$0xf]
        %v3044 = vld [vmem:[%s2995 + $0xc0] sm:$0xf]
        %v3045 = vld [vmem:[%s2995 + $0xc4] sm:$0xf]
        %v3046 = vld [vmem:[%s2995 + $0xc8] sm:$0xf]
        %v3047 = vld [vmem:[%s2995 + $0xcc] sm:$0xf]
        %v3048 = vld [vmem:[%s2995 + $0xd0] sm:$0xf]
        %v3049 = vld [vmem:[%s2995 + $0xd4] sm:$0xf]
        %v3050 = vld [vmem:[%s2995 + $0xd8] sm:$0xf]
        %v3051 = vld [vmem:[%s2995 + $0xdc] sm:$0xf]
        %v3052 = vld [vmem:[%s2995 + $0xe0] sm:$0xf]
        %v3053 = vld [vmem:[%s2995 + $0xe4] sm:$0xf]
        %v3054 = vld [vmem:[%s2995 + $0xe8] sm:$0xf]
        %v3055 = vld [vmem:[%s2995 + $0xec] sm:$0xf]
        %v3056 = vld [vmem:[%s2995 + $0xf0] sm:$0xf]
        %v3057 = vld [vmem:[%s2995 + $0xf4] sm:$0xf]
        %v3058 = vld [vmem:[%s2995 + $0xf8] sm:$0xf]
        %v3059 = vld [vmem:[%s2995 + $0xfc] sm:$0xf]
        %v3124 = vunpack.c.l.b16 %v2996
        %v3125 = vunpack.c.l.b16 %v2997
        %v3126 = vunpack.c.l.b16 %v2998
        %v3127 = vunpack.c.l.b16 %v2999
        %v3128 = vunpack.c.l.b16 %v3000
        %v3129 = vunpack.c.l.b16 %v3001
        %v3130 = vunpack.c.l.b16 %v3002
        %v3131 = vunpack.c.l.b16 %v3003
        %v3132 = vunpack.c.l.b16 %v3004
        %v3133 = vunpack.c.l.b16 %v3005
        %v3134 = vunpack.c.l.b16 %v3006
        %v3135 = vunpack.c.l.b16 %v3007
        %v3136 = vunpack.c.l.b16 %v3008
        %v3137 = vunpack.c.l.b16 %v3009
        %v3138 = vunpack.c.l.b16 %v3010
        %v3139 = vunpack.c.l.b16 %v3011
        %v3140 = vunpack.c.l.b16 %v3012
        %v3141 = vunpack.c.l.b16 %v3013
        %v3142 = vunpack.c.l.b16 %v3014
        %v3143 = vunpack.c.l.b16 %v3015
        %v3144 = vunpack.c.l.b16 %v3016
        %v3145 = vunpack.c.l.b16 %v3017
        %v3146 = vunpack.c.l.b16 %v3018
        %v3147 = vunpack.c.l.b16 %v3019
        %v3148 = vunpack.c.l.b16 %v3020
        %v3149 = vunpack.c.l.b16 %v3021
        %v3150 = vunpack.c.l.b16 %v3022
        %v3151 = vunpack.c.l.b16 %v3023
        %v3152 = vunpack.c.l.b16 %v3024
        %v3153 = vunpack.c.l.b16 %v3025
        %v3154 = vunpack.c.l.b16 %v3026
        %v3155 = vunpack.c.l.b16 %v3027
        %v3156 = vunpack.c.l.b16 %v3028
        %v3157 = vunpack.c.l.b16 %v3029
        %v3158 = vunpack.c.l.b16 %v3030
        %v3159 = vunpack.c.l.b16 %v3031
        %v3160 = vunpack.c.l.b16 %v3032
        %v3161 = vunpack.c.l.b16 %v3033
        %v3162 = vunpack.c.l.b16 %v3034
        %v3163 = vunpack.c.l.b16 %v3035
        %v3164 = vunpack.c.l.b16 %v3036
        %v3165 = vunpack.c.l.b16 %v3037
        %v3166 = vunpack.c.l.b16 %v3038
        %v3167 = vunpack.c.l.b16 %v3039
        %v3168 = vunpack.c.l.b16 %v3040
        %v3169 = vunpack.c.l.b16 %v3041
        %v3170 = vunpack.c.l.b16 %v3042
        %v3171 = vunpack.c.l.b16 %v3043
        %v3172 = vunpack.c.l.b16 %v3044
        %v3173 = vunpack.c.l.b16 %v3045
        %v3174 = vunpack.c.l.b16 %v3046
        %v3175 = vunpack.c.l.b16 %v3047
        %v3176 = vunpack.c.l.b16 %v3048
        %v3177 = vunpack.c.l.b16 %v3049
        %v3178 = vunpack.c.l.b16 %v3050
        %v3179 = vunpack.c.l.b16 %v3051
        %v3180 = vunpack.c.l.b16 %v3052
        %v3181 = vunpack.c.l.b16 %v3053
        %v3182 = vunpack.c.l.b16 %v3054
        %v3183 = vunpack.c.l.b16 %v3055
        %v3184 = vunpack.c.l.b16 %v3056
        %v3185 = vunpack.c.l.b16 %v3057
        %v3186 = vunpack.c.l.b16 %v3058
        %v3187 = vunpack.c.l.b16 %v3059
        %v3188 = vpack.c.b16 %v3125, %v3124
        %v3189 = vpack.c.b16 %v3127, %v3126
        %v3190 = vpack.c.b16 %v3129, %v3128
        %v3191 = vpack.c.b16 %v3131, %v3130
        %v3192 = vpack.c.b16 %v3133, %v3132
        %v3193 = vpack.c.b16 %v3135, %v3134
        %v3194 = vpack.c.b16 %v3137, %v3136
        %v3195 = vpack.c.b16 %v3139, %v3138
        %v3196 = vpack.c.b16 %v3141, %v3140
        %v3197 = vpack.c.b16 %v3143, %v3142
        %v3198 = vpack.c.b16 %v3145, %v3144
        %v3199 = vpack.c.b16 %v3147, %v3146
        %v3200 = vpack.c.b16 %v3149, %v3148
        %v3201 = vpack.c.b16 %v3151, %v3150
        %v3202 = vpack.c.b16 %v3153, %v3152
        %v3203 = vpack.c.b16 %v3155, %v3154
        %v3204 = vpack.c.b16 %v3157, %v3156
        %v3205 = vpack.c.b16 %v3159, %v3158
        %v3206 = vpack.c.b16 %v3161, %v3160
        %v3207 = vpack.c.b16 %v3163, %v3162
        %v3208 = vpack.c.b16 %v3165, %v3164
        %v3209 = vpack.c.b16 %v3167, %v3166
        %v3210 = vpack.c.b16 %v3169, %v3168
        %v3211 = vpack.c.b16 %v3171, %v3170
        %v3212 = vpack.c.b16 %v3173, %v3172
        %v3213 = vpack.c.b16 %v3175, %v3174
        %v3214 = vpack.c.b16 %v3177, %v3176
        %v3215 = vpack.c.b16 %v3179, %v3178
        %v3216 = vpack.c.b16 %v3181, %v3180
        %v3217 = vpack.c.b16 %v3183, %v3182
        %v3218 = vpack.c.b16 %v3185, %v3184
        %v3219 = vpack.c.b16 %v3187, %v3186
        %3252 = vmatprep.subr.bf16.mxu0 0
        %3253 = vmatpush1.bf16.msra.mxu0 %v3188
        %3254 = vmatprep.subr.bf16.mxu0 0
        %3255 = vmatpush1.bf16.msra.mxu0 %v3189
        %3256 = vmatprep.subr.bf16.mxu0 0
        %3257 = vmatpush1.bf16.msra.mxu0 %v3190
        %3258 = vmatprep.subr.bf16.mxu0 0
        %3259 = vmatpush1.bf16.msra.mxu0 %v3191
        %3260 = vmatprep.subr.bf16.mxu0 0
        %3261 = vmatpush1.bf16.msra.mxu0 %v3192
        %3262 = vmatprep.subr.bf16.mxu0 0
        %3263 = vmatpush1.bf16.msra.mxu0 %v3193
        %3264 = vmatprep.subr.bf16.mxu0 0
        %3265 = vmatpush1.bf16.msra.mxu0 %v3194
        %3266 = vmatprep.subr.bf16.mxu0 0
        %3267 = vmatpush1.bf16.msra.mxu0 %v3195
        %3268 = vmatprep.subr.bf16.mxu0 0
        %3269 = vmatpush1.bf16.msra.mxu0 %v3196
        %3270 = vmatprep.subr.bf16.mxu0 0
        %3271 = vmatpush1.bf16.msra.mxu0 %v3197
        %3272 = vmatprep.subr.bf16.mxu0 0
        %3273 = vmatpush1.bf16.msra.mxu0 %v3198
        %3274 = vmatprep.subr.bf16.mxu0 0
        %3275 = vmatpush1.bf16.msra.mxu0 %v3199
        %3276 = vmatprep.subr.bf16.mxu0 0
        %3277 = vmatpush1.bf16.msra.mxu0 %v3200
        %3278 = vmatprep.subr.bf16.mxu0 0
        %3279 = vmatpush1.bf16.msra.mxu0 %v3201
        %3280 = vmatprep.subr.bf16.mxu0 0
        %3281 = vmatpush1.bf16.msra.mxu0 %v3202
        %3282 = vmatprep.subr.bf16.mxu0 0
        %3283 = vmatpush1.bf16.msra.mxu0 %v3203
        %3284 = vmatprep.mubr.bf16.mxu0 %v1982
        %3285 = vmatmul.mubr.bf16.gmra.mrb[0].mxu0 %v1981
        %v3286 = vpop.f32.mrb[0].mxu0
        %v3287 = vadd.f32 0.0, %v3286
        %v3288 = vpop.f32.mrb[0].mxu0
        %v3289 = vpop.f32.mrb[0].mxu0
        %v3290 = vpop.f32.mrb[0].mxu0
        %3291 = vdwg.mxu0
        %3292 = vmatprep.subr.bf16.mxu0 0
        %3293 = vmatpush1.bf16.msra.mxu0 %v3204
        %3294 = vmatprep.subr.bf16.mxu0 0
        %3295 = vmatpush1.bf16.msra.mxu0 %v3205
        %3296 = vmatprep.subr.bf16.mxu0 0
        %3297 = vmatpush1.bf16.msra.mxu0 %v3206
        %3298 = vmatprep.subr.bf16.mxu0 0
        %3299 = vmatpush1.bf16.msra.mxu0 %v3207
        %3300 = vmatprep.subr.bf16.mxu0 0
        %3301 = vmatpush1.bf16.msra.mxu0 %v3208
        %3302 = vmatprep.subr.bf16.mxu0 0
        %3303 = vmatpush1.bf16.msra.mxu0 %v3209
        %3304 = vmatprep.subr.bf16.mxu0 0
        %3305 = vmatpush1.bf16.msra.mxu0 %v3210
        %3306 = vmatprep.subr.bf16.mxu0 0
        %3307 = vmatpush1.bf16.msra.mxu0 %v3211
        %3308 = vmatprep.subr.bf16.mxu0 0
        %3309 = vmatpush1.bf16.msra.mxu0 %v3212
        %3310 = vmatprep.subr.bf16.mxu0 0
        %3311 = vmatpush1.bf16.msra.mxu0 %v3213
        %3312 = vmatprep.subr.bf16.mxu0 0
        %3313 = vmatpush1.bf16.msra.mxu0 %v3214
        %3314 = vmatprep.subr.bf16.mxu0 0
        %3315 = vmatpush1.bf16.msra.mxu0 %v3215
        %3316 = vmatprep.subr.bf16.mxu0 0
        %3317 = vmatpush1.bf16.msra.mxu0 %v3216
        %3318 = vmatprep.subr.bf16.mxu0 0
        %3319 = vmatpush1.bf16.msra.mxu0 %v3217
        %3320 = vmatprep.subr.bf16.mxu0 0
        %3321 = vmatpush1.bf16.msra.mxu0 %v3218
        %3322 = vmatprep.subr.bf16.mxu0 0
        %3323 = vmatpush1.bf16.msra.mxu0 %v3219
        %3324 = vmatprep.mubr.bf16.mxu0 %v1984
        %3325 = vmatmul.mubr.bf16.gmra.mrb[0].mxu0 %v1983
        %v3326 = vpop.f32.mrb[0].mxu0
        %v3327 = vadd.f32 %v3287, %v3326
        %v3328 = vpop.f32.mrb[0].mxu0
        %v3329 = vpop.f32.mrb[0].mxu0
        %v3330 = vpop.f32.mrb[0].mxu0
        %3331 = vdwg.mxu0
        %s3332 = scalar_lea.vmem [#allocation4], 1024
        %v3333 = vld [vmem:[%s3332] sm:$0xf]
        %v3334 = vld [vmem:[%s3332 + $0x4] sm:$0xf]
        %v3335 = vld [vmem:[%s3332 + $0x8] sm:$0xf]
        %v3336 = vld [vmem:[%s3332 + $0xc] sm:$0xf]
        %v3337 = vld [vmem:[%s3332 + $0x10] sm:$0xf]
        %v3338 = vld [vmem:[%s3332 + $0x14] sm:$0xf]
        %v3339 = vld [vmem:[%s3332 + $0x18] sm:$0xf]
        %v3340 = vld [vmem:[%s3332 + $0x1c] sm:$0xf]
        %v3341 = vld [vmem:[%s3332 + $0x20] sm:$0xf]
        %v3342 = vld [vmem:[%s3332 + $0x24] sm:$0xf]
        %v3343 = vld [vmem:[%s3332 + $0x28] sm:$0xf]
        %v3344 = vld [vmem:[%s3332 + $0x2c] sm:$0xf]
        %v3345 = vld [vmem:[%s3332 + $0x30] sm:$0xf]
        %v3346 = vld [vmem:[%s3332 + $0x34] sm:$0xf]
        %v3347 = vld [vmem:[%s3332 + $0x38] sm:$0xf]
        %v3348 = vld [vmem:[%s3332 + $0x3c] sm:$0xf]
        %v3349 = vld [vmem:[%s3332 + $0x40] sm:$0xf]
        %v3350 = vld [vmem:[%s3332 + $0x44] sm:$0xf]
        %v3351 = vld [vmem:[%s3332 + $0x48] sm:$0xf]
        %v3352 = vld [vmem:[%s3332 + $0x4c] sm:$0xf]
        %v3353 = vld [vmem:[%s3332 + $0x50] sm:$0xf]
        %v3354 = vld [vmem:[%s3332 + $0x54] sm:$0xf]
        %v3355 = vld [vmem:[%s3332 + $0x58] sm:$0xf]
        %v3356 = vld [vmem:[%s3332 + $0x5c] sm:$0xf]
        %v3357 = vld [vmem:[%s3332 + $0x60] sm:$0xf]
        %v3358 = vld [vmem:[%s3332 + $0x64] sm:$0xf]
        %v3359 = vld [vmem:[%s3332 + $0x68] sm:$0xf]
        %v3360 = vld [vmem:[%s3332 + $0x6c] sm:$0xf]
        %v3361 = vld [vmem:[%s3332 + $0x70] sm:$0xf]
        %v3362 = vld [vmem:[%s3332 + $0x74] sm:$0xf]
        %v3363 = vld [vmem:[%s3332 + $0x78] sm:$0xf]
        %v3364 = vld [vmem:[%s3332 + $0x7c] sm:$0xf]
        %v3365 = vld [vmem:[%s3332 + $0x80] sm:$0xf]
        %v3366 = vld [vmem:[%s3332 + $0x84] sm:$0xf]
        %v3367 = vld [vmem:[%s3332 + $0x88] sm:$0xf]
        %v3368 = vld [vmem:[%s3332 + $0x8c] sm:$0xf]
        %v3369 = vld [vmem:[%s3332 + $0x90] sm:$0xf]
        %v3370 = vld [vmem:[%s3332 + $0x94] sm:$0xf]
        %v3371 = vld [vmem:[%s3332 + $0x98] sm:$0xf]
        %v3372 = vld [vmem:[%s3332 + $0x9c] sm:$0xf]
        %v3373 = vld [vmem:[%s3332 + $0xa0] sm:$0xf]
        %v3374 = vld [vmem:[%s3332 + $0xa4] sm:$0xf]
        %v3375 = vld [vmem:[%s3332 + $0xa8] sm:$0xf]
        %v3376 = vld [vmem:[%s3332 + $0xac] sm:$0xf]
        %v3377 = vld [vmem:[%s3332 + $0xb0] sm:$0xf]
        %v3378 = vld [vmem:[%s3332 + $0xb4] sm:$0xf]
        %v3379 = vld [vmem:[%s3332 + $0xb8] sm:$0xf]
        %v3380 = vld [vmem:[%s3332 + $0xbc] sm:$0xf]
        %v3381 = vld [vmem:[%s3332 + $0xc0] sm:$0xf]
        %v3382 = vld [vmem:[%s3332 + $0xc4] sm:$0xf]
        %v3383 = vld [vmem:[%s3332 + $0xc8] sm:$0xf]
        %v3384 = vld [vmem:[%s3332 + $0xcc] sm:$0xf]
        %v3385 = vld [vmem:[%s3332 + $0xd0] sm:$0xf]
        %v3386 = vld [vmem:[%s3332 + $0xd4] sm:$0xf]
        %v3387 = vld [vmem:[%s3332 + $0xd8] sm:$0xf]
        %v3388 = vld [vmem:[%s3332 + $0xdc] sm:$0xf]
        %v3389 = vld [vmem:[%s3332 + $0xe0] sm:$0xf]
        %v3390 = vld [vmem:[%s3332 + $0xe4] sm:$0xf]
        %v3391 = vld [vmem:[%s3332 + $0xe8] sm:$0xf]
        %v3392 = vld [vmem:[%s3332 + $0xec] sm:$0xf]
        %v3393 = vld [vmem:[%s3332 + $0xf0] sm:$0xf]
        %v3394 = vld [vmem:[%s3332 + $0xf4] sm:$0xf]
        %v3395 = vld [vmem:[%s3332 + $0xf8] sm:$0xf]
        %v3396 = vld [vmem:[%s3332 + $0xfc] sm:$0xf]
        %v3461 = vunpack.c.l.b16 %v3333
        %v3462 = vunpack.c.l.b16 %v3334
        %v3463 = vunpack.c.l.b16 %v3335
        %v3464 = vunpack.c.l.b16 %v3336
        %v3465 = vunpack.c.l.b16 %v3337
        %v3466 = vunpack.c.l.b16 %v3338
        %v3467 = vunpack.c.l.b16 %v3339
        %v3468 = vunpack.c.l.b16 %v3340
        %v3469 = vunpack.c.l.b16 %v3341
        %v3470 = vunpack.c.l.b16 %v3342
        %v3471 = vunpack.c.l.b16 %v3343
        %v3472 = vunpack.c.l.b16 %v3344
        %v3473 = vunpack.c.l.b16 %v3345
        %v3474 = vunpack.c.l.b16 %v3346
        %v3475 = vunpack.c.l.b16 %v3347
        %v3476 = vunpack.c.l.b16 %v3348
        %v3477 = vunpack.c.l.b16 %v3349
        %v3478 = vunpack.c.l.b16 %v3350
        %v3479 = vunpack.c.l.b16 %v3351
        %v3480 = vunpack.c.l.b16 %v3352
        %v3481 = vunpack.c.l.b16 %v3353
        %v3482 = vunpack.c.l.b16 %v3354
        %v3483 = vunpack.c.l.b16 %v3355
        %v3484 = vunpack.c.l.b16 %v3356
        %v3485 = vunpack.c.l.b16 %v3357
        %v3486 = vunpack.c.l.b16 %v3358
        %v3487 = vunpack.c.l.b16 %v3359
        %v3488 = vunpack.c.l.b16 %v3360
        %v3489 = vunpack.c.l.b16 %v3361
        %v3490 = vunpack.c.l.b16 %v3362
        %v3491 = vunpack.c.l.b16 %v3363
        %v3492 = vunpack.c.l.b16 %v3364
        %v3493 = vunpack.c.l.b16 %v3365
        %v3494 = vunpack.c.l.b16 %v3366
        %v3495 = vunpack.c.l.b16 %v3367
        %v3496 = vunpack.c.l.b16 %v3368
        %v3497 = vunpack.c.l.b16 %v3369
        %v3498 = vunpack.c.l.b16 %v3370
        %v3499 = vunpack.c.l.b16 %v3371
        %v3500 = vunpack.c.l.b16 %v3372
        %v3501 = vunpack.c.l.b16 %v3373
        %v3502 = vunpack.c.l.b16 %v3374
        %v3503 = vunpack.c.l.b16 %v3375
        %v3504 = vunpack.c.l.b16 %v3376
        %v3505 = vunpack.c.l.b16 %v3377
        %v3506 = vunpack.c.l.b16 %v3378
        %v3507 = vunpack.c.l.b16 %v3379
        %v3508 = vunpack.c.l.b16 %v3380
        %v3509 = vunpack.c.l.b16 %v3381
        %v3510 = vunpack.c.l.b16 %v3382
        %v3511 = vunpack.c.l.b16 %v3383
        %v3512 = vunpack.c.l.b16 %v3384
        %v3513 = vunpack.c.l.b16 %v3385
        %v3514 = vunpack.c.l.b16 %v3386
        %v3515 = vunpack.c.l.b16 %v3387
        %v3516 = vunpack.c.l.b16 %v3388
        %v3517 = vunpack.c.l.b16 %v3389
        %v3518 = vunpack.c.l.b16 %v3390
        %v3519 = vunpack.c.l.b16 %v3391
        %v3520 = vunpack.c.l.b16 %v3392
        %v3521 = vunpack.c.l.b16 %v3393
        %v3522 = vunpack.c.l.b16 %v3394
        %v3523 = vunpack.c.l.b16 %v3395
        %v3524 = vunpack.c.l.b16 %v3396
        %v3525 = vpack.c.b16 %v3462, %v3461
        %v3526 = vpack.c.b16 %v3464, %v3463
        %v3527 = vpack.c.b16 %v3466, %v3465
        %v3528 = vpack.c.b16 %v3468, %v3467
        %v3529 = vpack.c.b16 %v3470, %v3469
        %v3530 = vpack.c.b16 %v3472, %v3471
        %v3531 = vpack.c.b16 %v3474, %v3473
        %v3532 = vpack.c.b16 %v3476, %v3475
        %v3533 = vpack.c.b16 %v3478, %v3477
        %v3534 = vpack.c.b16 %v3480, %v3479
        %v3535 = vpack.c.b16 %v3482, %v3481
        %v3536 = vpack.c.b16 %v3484, %v3483
        %v3537 = vpack.c.b16 %v3486, %v3485
        %v3538 = vpack.c.b16 %v3488, %v3487
        %v3539 = vpack.c.b16 %v3490, %v3489
        %v3540 = vpack.c.b16 %v3492, %v3491
        %v3541 = vpack.c.b16 %v3494, %v3493
        %v3542 = vpack.c.b16 %v3496, %v3495
        %v3543 = vpack.c.b16 %v3498, %v3497
        %v3544 = vpack.c.b16 %v3500, %v3499
        %v3545 = vpack.c.b16 %v3502, %v3501
        %v3546 = vpack.c.b16 %v3504, %v3503
        %v3547 = vpack.c.b16 %v3506, %v3505
        %v3548 = vpack.c.b16 %v3508, %v3507
        %v3549 = vpack.c.b16 %v3510, %v3509
        %v3550 = vpack.c.b16 %v3512, %v3511
        %v3551 = vpack.c.b16 %v3514, %v3513
        %v3552 = vpack.c.b16 %v3516, %v3515
        %v3553 = vpack.c.b16 %v3518, %v3517
        %v3554 = vpack.c.b16 %v3520, %v3519
        %v3555 = vpack.c.b16 %v3522, %v3521
        %v3556 = vpack.c.b16 %v3524, %v3523
        %3589 = vmatprep.subr.bf16.mxu0 0
        %3590 = vmatpush1.bf16.msra.mxu0 %v3525
        %3591 = vmatprep.subr.bf16.mxu0 0
        %3592 = vmatpush1.bf16.msra.mxu0 %v3526
        %3593 = vmatprep.subr.bf16.mxu0 0
        %3594 = vmatpush1.bf16.msra.mxu0 %v3527
        %3595 = vmatprep.subr.bf16.mxu0 0
        %3596 = vmatpush1.bf16.msra.mxu0 %v3528
        %3597 = vmatprep.subr.bf16.mxu0 0
        %3598 = vmatpush1.bf16.msra.mxu0 %v3529
        %3599 = vmatprep.subr.bf16.mxu0 0
        %3600 = vmatpush1.bf16.msra.mxu0 %v3530
        %3601 = vmatprep.subr.bf16.mxu0 0
        %3602 = vmatpush1.bf16.msra.mxu0 %v3531
        %3603 = vmatprep.subr.bf16.mxu0 0
        %3604 = vmatpush1.bf16.msra.mxu0 %v3532
        %3605 = vmatprep.subr.bf16.mxu0 0
        %3606 = vmatpush1.bf16.msra.mxu0 %v3533
        %3607 = vmatprep.subr.bf16.mxu0 0
        %3608 = vmatpush1.bf16.msra.mxu0 %v3534
        %3609 = vmatprep.subr.bf16.mxu0 0
        %3610 = vmatpush1.bf16.msra.mxu0 %v3535
        %3611 = vmatprep.subr.bf16.mxu0 0
        %3612 = vmatpush1.bf16.msra.mxu0 %v3536
        %3613 = vmatprep.subr.bf16.mxu0 0
        %3614 = vmatpush1.bf16.msra.mxu0 %v3537
        %3615 = vmatprep.subr.bf16.mxu0 0
        %3616 = vmatpush1.bf16.msra.mxu0 %v3538
        %3617 = vmatprep.subr.bf16.mxu0 0
        %3618 = vmatpush1.bf16.msra.mxu0 %v3539
        %3619 = vmatprep.subr.bf16.mxu0 0
        %3620 = vmatpush1.bf16.msra.mxu0 %v3540
        %3621 = vmatprep.mubr.bf16.mxu0 %v1982
        %3622 = vmatmul.mubr.bf16.gmra.mrb[0].mxu0 %v1981
        %v3623 = vpop.f32.mrb[0].mxu0
        %v3624 = vadd.f32 0.0, %v3623
        %v3625 = vpop.f32.mrb[0].mxu0
        %v3626 = vpop.f32.mrb[0].mxu0
        %v3627 = vpop.f32.mrb[0].mxu0
        %3628 = vdwg.mxu0
        %3629 = vmatprep.subr.bf16.mxu0 0
        %3630 = vmatpush1.bf16.msra.mxu0 %v3541
        %3631 = vmatprep.subr.bf16.mxu0 0
        %3632 = vmatpush1.bf16.msra.mxu0 %v3542
        %3633 = vmatprep.subr.bf16.mxu0 0
        %3634 = vmatpush1.bf16.msra.mxu0 %v3543
        %3635 = vmatprep.subr.bf16.mxu0 0
        %3636 = vmatpush1.bf16.msra.mxu0 %v3544
        %3637 = vmatprep.subr.bf16.mxu0 0
        %3638 = vmatpush1.bf16.msra.mxu0 %v3545
        %3639 = vmatprep.subr.bf16.mxu0 0
        %3640 = vmatpush1.bf16.msra.mxu0 %v3546
        %3641 = vmatprep.subr.bf16.mxu0 0
        %3642 = vmatpush1.bf16.msra.mxu0 %v3547
        %3643 = vmatprep.subr.bf16.mxu0 0
        %3644 = vmatpush1.bf16.msra.mxu0 %v3548
        %3645 = vmatprep.subr.bf16.mxu0 0
        %3646 = vmatpush1.bf16.msra.mxu0 %v3549
        %3647 = vmatprep.subr.bf16.mxu0 0
        %3648 = vmatpush1.bf16.msra.mxu0 %v3550
        %3649 = vmatprep.subr.bf16.mxu0 0
        %3650 = vmatpush1.bf16.msra.mxu0 %v3551
        %3651 = vmatprep.subr.bf16.mxu0 0
        %3652 = vmatpush1.bf16.msra.mxu0 %v3552
        %3653 = vmatprep.subr.bf16.mxu0 0
        %3654 = vmatpush1.bf16.msra.mxu0 %v3553
        %3655 = vmatprep.subr.bf16.mxu0 0
        %3656 = vmatpush1.bf16.msra.mxu0 %v3554
        %3657 = vmatprep.subr.bf16.mxu0 0
        %3658 = vmatpush1.bf16.msra.mxu0 %v3555
        %3659 = vmatprep.subr.bf16.mxu0 0
        %3660 = vmatpush1.bf16.msra.mxu0 %v3556
        %3661 = vmatprep.mubr.bf16.mxu0 %v1984
        %3662 = vmatmul.mubr.bf16.gmra.mrb[0].mxu0 %v1983
        %v3663 = vpop.f32.mrb[0].mxu0
        %v3664 = vadd.f32 %v3624, %v3663
        %v3665 = vpop.f32.mrb[0].mxu0
        %v3666 = vpop.f32.mrb[0].mxu0
        %v3667 = vpop.f32.mrb[0].mxu0
        %3668 = vdwg.mxu0
        %s3669 = scalar_lea.vmem [#allocation4], 1280
        %v3670 = vld [vmem:[%s3669] sm:$0xf]
        %v3671 = vld [vmem:[%s3669 + $0x4] sm:$0xf]
        %v3672 = vld [vmem:[%s3669 + $0x8] sm:$0xf]
        %v3673 = vld [vmem:[%s3669 + $0xc] sm:$0xf]
        %v3674 = vld [vmem:[%s3669 + $0x10] sm:$0xf]
        %v3675 = vld [vmem:[%s3669 + $0x14] sm:$0xf]
        %v3676 = vld [vmem:[%s3669 + $0x18] sm:$0xf]
        %v3677 = vld [vmem:[%s3669 + $0x1c] sm:$0xf]
        %v3678 = vld [vmem:[%s3669 + $0x20] sm:$0xf]
        %v3679 = vld [vmem:[%s3669 + $0x24] sm:$0xf]
        %v3680 = vld [vmem:[%s3669 + $0x28] sm:$0xf]
        %v3681 = vld [vmem:[%s3669 + $0x2c] sm:$0xf]
        %v3682 = vld [vmem:[%s3669 + $0x30] sm:$0xf]
        %v3683 = vld [vmem:[%s3669 + $0x34] sm:$0xf]
        %v3684 = vld [vmem:[%s3669 + $0x38] sm:$0xf]
        %v3685 = vld [vmem:[%s3669 + $0x3c] sm:$0xf]
        %v3686 = vld [vmem:[%s3669 + $0x40] sm:$0xf]
        %v3687 = vld [vmem:[%s3669 + $0x44] sm:$0xf]
        %v3688 = vld [vmem:[%s3669 + $0x48] sm:$0xf]
        %v3689 = vld [vmem:[%s3669 + $0x4c] sm:$0xf]
        %v3690 = vld [vmem:[%s3669 + $0x50] sm:$0xf]
        %v3691 = vld [vmem:[%s3669 + $0x54] sm:$0xf]
        %v3692 = vld [vmem:[%s3669 + $0x58] sm:$0xf]
        %v3693 = vld [vmem:[%s3669 + $0x5c] sm:$0xf]
        %v3694 = vld [vmem:[%s3669 + $0x60] sm:$0xf]
        %v3695 = vld [vmem:[%s3669 + $0x64] sm:$0xf]
        %v3696 = vld [vmem:[%s3669 + $0x68] sm:$0xf]
        %v3697 = vld [vmem:[%s3669 + $0x6c] sm:$0xf]
        %v3698 = vld [vmem:[%s3669 + $0x70] sm:$0xf]
        %v3699 = vld [vmem:[%s3669 + $0x74] sm:$0xf]
        %v3700 = vld [vmem:[%s3669 + $0x78] sm:$0xf]
        %v3701 = vld [vmem:[%s3669 + $0x7c] sm:$0xf]
        %v3702 = vld [vmem:[%s3669 + $0x80] sm:$0xf]
        %v3703 = vld [vmem:[%s3669 + $0x84] sm:$0xf]
        %v3704 = vld [vmem:[%s3669 + $0x88] sm:$0xf]
        %v3705 = vld [vmem:[%s3669 + $0x8c] sm:$0xf]
        %v3706 = vld [vmem:[%s3669 + $0x90] sm:$0xf]
        %v3707 = vld [vmem:[%s3669 + $0x94] sm:$0xf]
        %v3708 = vld [vmem:[%s3669 + $0x98] sm:$0xf]
        %v3709 = vld [vmem:[%s3669 + $0x9c] sm:$0xf]
        %v3710 = vld [vmem:[%s3669 + $0xa0] sm:$0xf]
        %v3711 = vld [vmem:[%s3669 + $0xa4] sm:$0xf]
        %v3712 = vld [vmem:[%s3669 + $0xa8] sm:$0xf]
        %v3713 = vld [vmem:[%s3669 + $0xac] sm:$0xf]
        %v3714 = vld [vmem:[%s3669 + $0xb0] sm:$0xf]
        %v3715 = vld [vmem:[%s3669 + $0xb4] sm:$0xf]
        %v3716 = vld [vmem:[%s3669 + $0xb8] sm:$0xf]
        %v3717 = vld [vmem:[%s3669 + $0xbc] sm:$0xf]
        %v3718 = vld [vmem:[%s3669 + $0xc0] sm:$0xf]
        %v3719 = vld [vmem:[%s3669 + $0xc4] sm:$0xf]
        %v3720 = vld [vmem:[%s3669 + $0xc8] sm:$0xf]
        %v3721 = vld [vmem:[%s3669 + $0xcc] sm:$0xf]
        %v3722 = vld [vmem:[%s3669 + $0xd0] sm:$0xf]
        %v3723 = vld [vmem:[%s3669 + $0xd4] sm:$0xf]
        %v3724 = vld [vmem:[%s3669 + $0xd8] sm:$0xf]
        %v3725 = vld [vmem:[%s3669 + $0xdc] sm:$0xf]
        %v3726 = vld [vmem:[%s3669 + $0xe0] sm:$0xf]
        %v3727 = vld [vmem:[%s3669 + $0xe4] sm:$0xf]
        %v3728 = vld [vmem:[%s3669 + $0xe8] sm:$0xf]
        %v3729 = vld [vmem:[%s3669 + $0xec] sm:$0xf]
        %v3730 = vld [vmem:[%s3669 + $0xf0] sm:$0xf]
        %v3731 = vld [vmem:[%s3669 + $0xf4] sm:$0xf]
        %v3732 = vld [vmem:[%s3669 + $0xf8] sm:$0xf]
        %v3733 = vld [vmem:[%s3669 + $0xfc] sm:$0xf]
        %v3798 = vunpack.c.l.b16 %v3670
        %v3799 = vunpack.c.l.b16 %v3671
        %v3800 = vunpack.c.l.b16 %v3672
        %v3801 = vunpack.c.l.b16 %v3673
        %v3802 = vunpack.c.l.b16 %v3674
        %v3803 = vunpack.c.l.b16 %v3675
        %v3804 = vunpack.c.l.b16 %v3676
        %v3805 = vunpack.c.l.b16 %v3677
        %v3806 = vunpack.c.l.b16 %v3678
        %v3807 = vunpack.c.l.b16 %v3679
        %v3808 = vunpack.c.l.b16 %v3680
        %v3809 = vunpack.c.l.b16 %v3681
        %v3810 = vunpack.c.l.b16 %v3682
        %v3811 = vunpack.c.l.b16 %v3683
        %v3812 = vunpack.c.l.b16 %v3684
        %v3813 = vunpack.c.l.b16 %v3685
        %v3814 = vunpack.c.l.b16 %v3686
        %v3815 = vunpack.c.l.b16 %v3687
        %v3816 = vunpack.c.l.b16 %v3688
        %v3817 = vunpack.c.l.b16 %v3689
        %v3818 = vunpack.c.l.b16 %v3690
        %v3819 = vunpack.c.l.b16 %v3691
        %v3820 = vunpack.c.l.b16 %v3692
        %v3821 = vunpack.c.l.b16 %v3693
        %v3822 = vunpack.c.l.b16 %v3694
        %v3823 = vunpack.c.l.b16 %v3695
        %v3824 = vunpack.c.l.b16 %v3696
        %v3825 = vunpack.c.l.b16 %v3697
        %v3826 = vunpack.c.l.b16 %v3698
        %v3827 = vunpack.c.l.b16 %v3699
        %v3828 = vunpack.c.l.b16 %v3700
        %v3829 = vunpack.c.l.b16 %v3701
        %v3830 = vunpack.c.l.b16 %v3702
        %v3831 = vunpack.c.l.b16 %v3703
        %v3832 = vunpack.c.l.b16 %v3704
        %v3833 = vunpack.c.l.b16 %v3705
        %v3834 = vunpack.c.l.b16 %v3706
        %v3835 = vunpack.c.l.b16 %v3707
        %v3836 = vunpack.c.l.b16 %v3708
        %v3837 = vunpack.c.l.b16 %v3709
        %v3838 = vunpack.c.l.b16 %v3710
        %v3839 = vunpack.c.l.b16 %v3711
        %v3840 = vunpack.c.l.b16 %v3712
        %v3841 = vunpack.c.l.b16 %v3713
        %v3842 = vunpack.c.l.b16 %v3714
        %v3843 = vunpack.c.l.b16 %v3715
        %v3844 = vunpack.c.l.b16 %v3716
        %v3845 = vunpack.c.l.b16 %v3717
        %v3846 = vunpack.c.l.b16 %v3718
        %v3847 = vunpack.c.l.b16 %v3719
        %v3848 = vunpack.c.l.b16 %v3720
        %v3849 = vunpack.c.l.b16 %v3721
        %v3850 = vunpack.c.l.b16 %v3722
        %v3851 = vunpack.c.l.b16 %v3723
        %v3852 = vunpack.c.l.b16 %v3724
        %v3853 = vunpack.c.l.b16 %v3725
        %v3854 = vunpack.c.l.b16 %v3726
        %v3855 = vunpack.c.l.b16 %v3727
        %v3856 = vunpack.c.l.b16 %v3728
        %v3857 = vunpack.c.l.b16 %v3729
        %v3858 = vunpack.c.l.b16 %v3730
        %v3859 = vunpack.c.l.b16 %v3731
        %v3860 = vunpack.c.l.b16 %v3732
        %v3861 = vunpack.c.l.b16 %v3733
        %v3862 = vpack.c.b16 %v3799, %v3798
        %v3863 = vpack.c.b16 %v3801, %v3800
        %v3864 = vpack.c.b16 %v3803, %v3802
        %v3865 = vpack.c.b16 %v3805, %v3804
        %v3866 = vpack.c.b16 %v3807, %v3806
        %v3867 = vpack.c.b16 %v3809, %v3808
        %v3868 = vpack.c.b16 %v3811, %v3810
        %v3869 = vpack.c.b16 %v3813, %v3812
        %v3870 = vpack.c.b16 %v3815, %v3814
        %v3871 = vpack.c.b16 %v3817, %v3816
        %v3872 = vpack.c.b16 %v3819, %v3818
        %v3873 = vpack.c.b16 %v3821, %v3820
        %v3874 = vpack.c.b16 %v3823, %v3822
        %v3875 = vpack.c.b16 %v3825, %v3824
        %v3876 = vpack.c.b16 %v3827, %v3826
        %v3877 = vpack.c.b16 %v3829, %v3828
        %v3878 = vpack.c.b16 %v3831, %v3830
        %v3879 = vpack.c.b16 %v3833, %v3832
        %v3880 = vpack.c.b16 %v3835, %v3834
        %v3881 = vpack.c.b16 %v3837, %v3836
        %v3882 = vpack.c.b16 %v3839, %v3838
        %v3883 = vpack.c.b16 %v3841, %v3840
        %v3884 = vpack.c.b16 %v3843, %v3842
        %v3885 = vpack.c.b16 %v3845, %v3844
        %v3886 = vpack.c.b16 %v3847, %v3846
        %v3887 = vpack.c.b16 %v3849, %v3848
        %v3888 = vpack.c.b16 %v3851, %v3850
        %v3889 = vpack.c.b16 %v3853, %v3852
        %v3890 = vpack.c.b16 %v3855, %v3854
        %v3891 = vpack.c.b16 %v3857, %v3856
        %v3892 = vpack.c.b16 %v3859, %v3858
        %v3893 = vpack.c.b16 %v3861, %v3860
        %3926 = vmatprep.subr.bf16.mxu0 0
        %3927 = vmatpush1.bf16.msra.mxu0 %v3862
        %3928 = vmatprep.subr.bf16.mxu0 0
        %3929 = vmatpush1.bf16.msra.mxu0 %v3863
        %3930 = vmatprep.subr.bf16.mxu0 0
        %3931 = vmatpush1.bf16.msra.mxu0 %v3864
        %3932 = vmatprep.subr.bf16.mxu0 0
        %3933 = vmatpush1.bf16.msra.mxu0 %v3865
        %3934 = vmatprep.subr.bf16.mxu0 0
        %3935 = vmatpush1.bf16.msra.mxu0 %v3866
        %3936 = vmatprep.subr.bf16.mxu0 0
        %3937 = vmatpush1.bf16.msra.mxu0 %v3867
        %3938 = vmatprep.subr.bf16.mxu0 0
        %3939 = vmatpush1.bf16.msra.mxu0 %v3868
        %3940 = vmatprep.subr.bf16.mxu0 0
        %3941 = vmatpush1.bf16.msra.mxu0 %v3869
        %3942 = vmatprep.subr.bf16.mxu0 0
        %3943 = vmatpush1.bf16.msra.mxu0 %v3870
        %3944 = vmatprep.subr.bf16.mxu0 0
        %3945 = vmatpush1.bf16.msra.mxu0 %v3871
        %3946 = vmatprep.subr.bf16.mxu0 0
        %3947 = vmatpush1.bf16.msra.mxu0 %v3872
        %3948 = vmatprep.subr.bf16.mxu0 0
        %3949 = vmatpush1.bf16.msra.mxu0 %v3873
        %3950 = vmatprep.subr.bf16.mxu0 0
        %3951 = vmatpush1.bf16.msra.mxu0 %v3874
        %3952 = vmatprep.subr.bf16.mxu0 0
        %3953 = vmatpush1.bf16.msra.mxu0 %v3875
        %3954 = vmatprep.subr.bf16.mxu0 0
        %3955 = vmatpush1.bf16.msra.mxu0 %v3876
        %3956 = vmatprep.subr.bf16.mxu0 0
        %3957 = vmatpush1.bf16.msra.mxu0 %v3877
        %3958 = vmatprep.mubr.bf16.mxu0 %v1982
        %3959 = vmatmul.mubr.bf16.gmra.mrb[0].mxu0 %v1981
        %v3960 = vpop.f32.mrb[0].mxu0
        %v3961 = vadd.f32 0.0, %v3960
        %v3962 = vpop.f32.mrb[0].mxu0
        %v3963 = vpop.f32.mrb[0].mxu0
        %v3964 = vpop.f32.mrb[0].mxu0
        %3965 = vdwg.mxu0
        %3966 = vmatprep.subr.bf16.mxu0 0
        %3967 = vmatpush1.bf16.msra.mxu0 %v3878
        %3968 = vmatprep.subr.bf16.mxu0 0
        %3969 = vmatpush1.bf16.msra.mxu0 %v3879
        %3970 = vmatprep.subr.bf16.mxu0 0
        %3971 = vmatpush1.bf16.msra.mxu0 %v3880
        %3972 = vmatprep.subr.bf16.mxu0 0
        %3973 = vmatpush1.bf16.msra.mxu0 %v3881
        %3974 = vmatprep.subr.bf16.mxu0 0
        %3975 = vmatpush1.bf16.msra.mxu0 %v3882
        %3976 = vmatprep.subr.bf16.mxu0 0
        %3977 = vmatpush1.bf16.msra.mxu0 %v3883
        %3978 = vmatprep.subr.bf16.mxu0 0
        %3979 = vmatpush1.bf16.msra.mxu0 %v3884
        %3980 = vmatprep.subr.bf16.mxu0 0
        %3981 = vmatpush1.bf16.msra.mxu0 %v3885
        %3982 = vmatprep.subr.bf16.mxu0 0
        %3983 = vmatpush1.bf16.msra.mxu0 %v3886
        %3984 = vmatprep.subr.bf16.mxu0 0
        %3985 = vmatpush1.bf16.msra.mxu0 %v3887
        %3986 = vmatprep.subr.bf16.mxu0 0
        %3987 = vmatpush1.bf16.msra.mxu0 %v3888
        %3988 = vmatprep.subr.bf16.mxu0 0
        %3989 = vmatpush1.bf16.msra.mxu0 %v3889
        %3990 = vmatprep.subr.bf16.mxu0 0
        %3991 = vmatpush1.bf16.msra.mxu0 %v3890
        %3992 = vmatprep.subr.bf16.mxu0 0
        %3993 = vmatpush1.bf16.msra.mxu0 %v3891
        %3994 = vmatprep.subr.bf16.mxu0 0
        %3995 = vmatpush1.bf16.msra.mxu0 %v3892
        %3996 = vmatprep.subr.bf16.mxu0 0
        %3997 = vmatpush1.bf16.msra.mxu0 %v3893
        %3998 = vmatprep.mubr.bf16.mxu0 %v1984
        %3999 = vmatmul.mubr.bf16.gmra.mrb[0].mxu0 %v1983
        %v4000 = vpop.f32.mrb[0].mxu0
        %v4001 = vadd.f32 %v3961, %v4000
        %v4002 = vpop.f32.mrb[0].mxu0
        %v4003 = vpop.f32.mrb[0].mxu0
        %v4004 = vpop.f32.mrb[0].mxu0
        %4005 = vdwg.mxu0
        %s4006 = scalar_lea.vmem [#allocation4], 1536
        %v4007 = vld [vmem:[%s4006] sm:$0xf]
        %v4008 = vld [vmem:[%s4006 + $0x4] sm:$0xf]
        %v4009 = vld [vmem:[%s4006 + $0x8] sm:$0xf]
        %v4010 = vld [vmem:[%s4006 + $0xc] sm:$0xf]
        %v4011 = vld [vmem:[%s4006 + $0x10] sm:$0xf]
        %v4012 = vld [vmem:[%s4006 + $0x14] sm:$0xf]
        %v4013 = vld [vmem:[%s4006 + $0x18] sm:$0xf]
        %v4014 = vld [vmem:[%s4006 + $0x1c] sm:$0xf]
        %v4015 = vld [vmem:[%s4006 + $0x20] sm:$0xf]
        %v4016 = vld [vmem:[%s4006 + $0x24] sm:$0xf]
        %v4017 = vld [vmem:[%s4006 + $0x28] sm:$0xf]
        %v4018 = vld [vmem:[%s4006 + $0x2c] sm:$0xf]
        %v4019 = vld [vmem:[%s4006 + $0x30] sm:$0xf]
        %v4020 = vld [vmem:[%s4006 + $0x34] sm:$0xf]
        %v4021 = vld [vmem:[%s4006 + $0x38] sm:$0xf]
        %v4022 = vld [vmem:[%s4006 + $0x3c] sm:$0xf]
        %v4023 = vld [vmem:[%s4006 + $0x40] sm:$0xf]
        %v4024 = vld [vmem:[%s4006 + $0x44] sm:$0xf]
        %v4025 = vld [vmem:[%s4006 + $0x48] sm:$0xf]
        %v4026 = vld [vmem:[%s4006 + $0x4c] sm:$0xf]
        %v4027 = vld [vmem:[%s4006 + $0x50] sm:$0xf]
        %v4028 = vld [vmem:[%s4006 + $0x54] sm:$0xf]
        %v4029 = vld [vmem:[%s4006 + $0x58] sm:$0xf]
        %v4030 = vld [vmem:[%s4006 + $0x5c] sm:$0xf]
        %v4031 = vld [vmem:[%s4006 + $0x60] sm:$0xf]
        %v4032 = vld [vmem:[%s4006 + $0x64] sm:$0xf]
        %v4033 = vld [vmem:[%s4006 + $0x68] sm:$0xf]
        %v4034 = vld [vmem:[%s4006 + $0x6c] sm:$0xf]
        %v4035 = vld [vmem:[%s4006 + $0x70] sm:$0xf]
        %v4036 = vld [vmem:[%s4006 + $0x74] sm:$0xf]
        %v4037 = vld [vmem:[%s4006 + $0x78] sm:$0xf]
        %v4038 = vld [vmem:[%s4006 + $0x7c] sm:$0xf]
        %v4039 = vld [vmem:[%s4006 + $0x80] sm:$0xf]
        %v4040 = vld [vmem:[%s4006 + $0x84] sm:$0xf]
        %v4041 = vld [vmem:[%s4006 + $0x88] sm:$0xf]
        %v4042 = vld [vmem:[%s4006 + $0x8c] sm:$0xf]
        %v4043 = vld [vmem:[%s4006 + $0x90] sm:$0xf]
        %v4044 = vld [vmem:[%s4006 + $0x94] sm:$0xf]
        %v4045 = vld [vmem:[%s4006 + $0x98] sm:$0xf]
        %v4046 = vld [vmem:[%s4006 + $0x9c] sm:$0xf]
        %v4047 = vld [vmem:[%s4006 + $0xa0] sm:$0xf]
        %v4048 = vld [vmem:[%s4006 + $0xa4] sm:$0xf]
        %v4049 = vld [vmem:[%s4006 + $0xa8] sm:$0xf]
        %v4050 = vld [vmem:[%s4006 + $0xac] sm:$0xf]
        %v4051 = vld [vmem:[%s4006 + $0xb0] sm:$0xf]
        %v4052 = vld [vmem:[%s4006 + $0xb4] sm:$0xf]
        %v4053 = vld [vmem:[%s4006 + $0xb8] sm:$0xf]
        %v4054 = vld [vmem:[%s4006 + $0xbc] sm:$0xf]
        %v4055 = vld [vmem:[%s4006 + $0xc0] sm:$0xf]
        %v4056 = vld [vmem:[%s4006 + $0xc4] sm:$0xf]
        %v4057 = vld [vmem:[%s4006 + $0xc8] sm:$0xf]
        %v4058 = vld [vmem:[%s4006 + $0xcc] sm:$0xf]
        %v4059 = vld [vmem:[%s4006 + $0xd0] sm:$0xf]
        %v4060 = vld [vmem:[%s4006 + $0xd4] sm:$0xf]
        %v4061 = vld [vmem:[%s4006 + $0xd8] sm:$0xf]
        %v4062 = vld [vmem:[%s4006 + $0xdc] sm:$0xf]
        %v4063 = vld [vmem:[%s4006 + $0xe0] sm:$0xf]
        %v4064 = vld [vmem:[%s4006 + $0xe4] sm:$0xf]
        %v4065 = vld [vmem:[%s4006 + $0xe8] sm:$0xf]
        %v4066 = vld [vmem:[%s4006 + $0xec] sm:$0xf]
        %v4067 = vld [vmem:[%s4006 + $0xf0] sm:$0xf]
        %v4068 = vld [vmem:[%s4006 + $0xf4] sm:$0xf]
        %v4069 = vld [vmem:[%s4006 + $0xf8] sm:$0xf]
        %v4070 = vld [vmem:[%s4006 + $0xfc] sm:$0xf]
        %v4135 = vunpack.c.l.b16 %v4007
        %v4136 = vunpack.c.l.b16 %v4008
        %v4137 = vunpack.c.l.b16 %v4009
        %v4138 = vunpack.c.l.b16 %v4010
        %v4139 = vunpack.c.l.b16 %v4011
        %v4140 = vunpack.c.l.b16 %v4012
        %v4141 = vunpack.c.l.b16 %v4013
        %v4142 = vunpack.c.l.b16 %v4014
        %v4143 = vunpack.c.l.b16 %v4015
        %v4144 = vunpack.c.l.b16 %v4016
        %v4145 = vunpack.c.l.b16 %v4017
        %v4146 = vunpack.c.l.b16 %v4018
        %v4147 = vunpack.c.l.b16 %v4019
        %v4148 = vunpack.c.l.b16 %v4020
        %v4149 = vunpack.c.l.b16 %v4021
        %v4150 = vunpack.c.l.b16 %v4022
        %v4151 = vunpack.c.l.b16 %v4023
        %v4152 = vunpack.c.l.b16 %v4024
        %v4153 = vunpack.c.l.b16 %v4025
        %v4154 = vunpack.c.l.b16 %v4026
        %v4155 = vunpack.c.l.b16 %v4027
        %v4156 = vunpack.c.l.b16 %v4028
        %v4157 = vunpack.c.l.b16 %v4029
        %v4158 = vunpack.c.l.b16 %v4030
        %v4159 = vunpack.c.l.b16 %v4031
        %v4160 = vunpack.c.l.b16 %v4032
        %v4161 = vunpack.c.l.b16 %v4033
        %v4162 = vunpack.c.l.b16 %v4034
        %v4163 = vunpack.c.l.b16 %v4035
        %v4164 = vunpack.c.l.b16 %v4036
        %v4165 = vunpack.c.l.b16 %v4037
        %v4166 = vunpack.c.l.b16 %v4038
        %v4167 = vunpack.c.l.b16 %v4039
        %v4168 = vunpack.c.l.b16 %v4040
        %v4169 = vunpack.c.l.b16 %v4041
        %v4170 = vunpack.c.l.b16 %v4042
        %v4171 = vunpack.c.l.b16 %v4043
        %v4172 = vunpack.c.l.b16 %v4044
        %v4173 = vunpack.c.l.b16 %v4045
        %v4174 = vunpack.c.l.b16 %v4046
        %v4175 = vunpack.c.l.b16 %v4047
        %v4176 = vunpack.c.l.b16 %v4048
        %v4177 = vunpack.c.l.b16 %v4049
        %v4178 = vunpack.c.l.b16 %v4050
        %v4179 = vunpack.c.l.b16 %v4051
        %v4180 = vunpack.c.l.b16 %v4052
        %v4181 = vunpack.c.l.b16 %v4053
        %v4182 = vunpack.c.l.b16 %v4054
        %v4183 = vunpack.c.l.b16 %v4055
        %v4184 = vunpack.c.l.b16 %v4056
        %v4185 = vunpack.c.l.b16 %v4057
        %v4186 = vunpack.c.l.b16 %v4058
        %v4187 = vunpack.c.l.b16 %v4059
        %v4188 = vunpack.c.l.b16 %v4060
        %v4189 = vunpack.c.l.b16 %v4061
        %v4190 = vunpack.c.l.b16 %v4062
        %v4191 = vunpack.c.l.b16 %v4063
        %v4192 = vunpack.c.l.b16 %v4064
        %v4193 = vunpack.c.l.b16 %v4065
        %v4194 = vunpack.c.l.b16 %v4066
        %v4195 = vunpack.c.l.b16 %v4067
        %v4196 = vunpack.c.l.b16 %v4068
        %v4197 = vunpack.c.l.b16 %v4069
        %v4198 = vunpack.c.l.b16 %v4070
        %v4199 = vpack.c.b16 %v4136, %v4135
        %v4200 = vpack.c.b16 %v4138, %v4137
        %v4201 = vpack.c.b16 %v4140, %v4139
        %v4202 = vpack.c.b16 %v4142, %v4141
        %v4203 = vpack.c.b16 %v4144, %v4143
        %v4204 = vpack.c.b16 %v4146, %v4145
        %v4205 = vpack.c.b16 %v4148, %v4147
        %v4206 = vpack.c.b16 %v4150, %v4149
        %v4207 = vpack.c.b16 %v4152, %v4151
        %v4208 = vpack.c.b16 %v4154, %v4153
        %v4209 = vpack.c.b16 %v4156, %v4155
        %v4210 = vpack.c.b16 %v4158, %v4157
        %v4211 = vpack.c.b16 %v4160, %v4159
        %v4212 = vpack.c.b16 %v4162, %v4161
        %v4213 = vpack.c.b16 %v4164, %v4163
        %v4214 = vpack.c.b16 %v4166, %v4165
        %v4215 = vpack.c.b16 %v4168, %v4167
        %v4216 = vpack.c.b16 %v4170, %v4169
        %v4217 = vpack.c.b16 %v4172, %v4171
        %v4218 = vpack.c.b16 %v4174, %v4173
        %v4219 = vpack.c.b16 %v4176, %v4175
        %v4220 = vpack.c.b16 %v4178, %v4177
        %v4221 = vpack.c.b16 %v4180, %v4179
        %v4222 = vpack.c.b16 %v4182, %v4181
        %v4223 = vpack.c.b16 %v4184, %v4183
        %v4224 = vpack.c.b16 %v4186, %v4185
        %v4225 = vpack.c.b16 %v4188, %v4187
        %v4226 = vpack.c.b16 %v4190, %v4189
        %v4227 = vpack.c.b16 %v4192, %v4191
        %v4228 = vpack.c.b16 %v4194, %v4193
        %v4229 = vpack.c.b16 %v4196, %v4195
        %v4230 = vpack.c.b16 %v4198, %v4197
        %4263 = vmatprep.subr.bf16.mxu0 0
        %4264 = vmatpush1.bf16.msra.mxu0 %v4199
        %4265 = vmatprep.subr.bf16.mxu0 0
        %4266 = vmatpush1.bf16.msra.mxu0 %v4200
        %4267 = vmatprep.subr.bf16.mxu0 0
        %4268 = vmatpush1.bf16.msra.mxu0 %v4201
        %4269 = vmatprep.subr.bf16.mxu0 0
        %4270 = vmatpush1.bf16.msra.mxu0 %v4202
        %4271 = vmatprep.subr.bf16.mxu0 0
        %4272 = vmatpush1.bf16.msra.mxu0 %v4203
        %4273 = vmatprep.subr.bf16.mxu0 0
        %4274 = vmatpush1.bf16.msra.mxu0 %v4204
        %4275 = vmatprep.subr.bf16.mxu0 0
        %4276 = vmatpush1.bf16.msra.mxu0 %v4205
        %4277 = vmatprep.subr.bf16.mxu0 0
        %4278 = vmatpush1.bf16.msra.mxu0 %v4206
        %4279 = vmatprep.subr.bf16.mxu0 0
        %4280 = vmatpush1.bf16.msra.mxu0 %v4207
        %4281 = vmatprep.subr.bf16.mxu0 0
        %4282 = vmatpush1.bf16.msra.mxu0 %v4208
        %4283 = vmatprep.subr.bf16.mxu0 0
        %4284 = vmatpush1.bf16.msra.mxu0 %v4209
        %4285 = vmatprep.subr.bf16.mxu0 0
        %4286 = vmatpush1.bf16.msra.mxu0 %v4210
        %4287 = vmatprep.subr.bf16.mxu0 0
        %4288 = vmatpush1.bf16.msra.mxu0 %v4211
        %4289 = vmatprep.subr.bf16.mxu0 0
        %4290 = vmatpush1.bf16.msra.mxu0 %v4212
        %4291 = vmatprep.subr.bf16.mxu0 0
        %4292 = vmatpush1.bf16.msra.mxu0 %v4213
        %4293 = vmatprep.subr.bf16.mxu0 0
        %4294 = vmatpush1.bf16.msra.mxu0 %v4214
        %4295 = vmatprep.mubr.bf16.mxu0 %v1982
        %4296 = vmatmul.mubr.bf16.gmra.mrb[0].mxu0 %v1981
        %v4297 = vpop.f32.mrb[0].mxu0
        %v4298 = vadd.f32 0.0, %v4297
        %v4299 = vpop.f32.mrb[0].mxu0
        %v4300 = vpop.f32.mrb[0].mxu0
        %v4301 = vpop.f32.mrb[0].mxu0
        %4302 = vdwg.mxu0
        %4303 = vmatprep.subr.bf16.mxu0 0
        %4304 = vmatpush1.bf16.msra.mxu0 %v4215
        %4305 = vmatprep.subr.bf16.mxu0 0
        %4306 = vmatpush1.bf16.msra.mxu0 %v4216
        %4307 = vmatprep.subr.bf16.mxu0 0
        %4308 = vmatpush1.bf16.msra.mxu0 %v4217
        %4309 = vmatprep.subr.bf16.mxu0 0
        %4310 = vmatpush1.bf16.msra.mxu0 %v4218
        %4311 = vmatprep.subr.bf16.mxu0 0
        %4312 = vmatpush1.bf16.msra.mxu0 %v4219
        %4313 = vmatprep.subr.bf16.mxu0 0
        %4314 = vmatpush1.bf16.msra.mxu0 %v4220
        %4315 = vmatprep.subr.bf16.mxu0 0
        %4316 = vmatpush1.bf16.msra.mxu0 %v4221
        %4317 = vmatprep.subr.bf16.mxu0 0
        %4318 = vmatpush1.bf16.msra.mxu0 %v4222
        %4319 = vmatprep.subr.bf16.mxu0 0
        %4320 = vmatpush1.bf16.msra.mxu0 %v4223
        %4321 = vmatprep.subr.bf16.mxu0 0
        %4322 = vmatpush1.bf16.msra.mxu0 %v4224
        %4323 = vmatprep.subr.bf16.mxu0 0
        %4324 = vmatpush1.bf16.msra.mxu0 %v4225
        %4325 = vmatprep.subr.bf16.mxu0 0
        %4326 = vmatpush1.bf16.msra.mxu0 %v4226
        %4327 = vmatprep.subr.bf16.mxu0 0
        %4328 = vmatpush1.bf16.msra.mxu0 %v4227
        %4329 = vmatprep.subr.bf16.mxu0 0
        %4330 = vmatpush1.bf16.msra.mxu0 %v4228
        %4331 = vmatprep.subr.bf16.mxu0 0
        %4332 = vmatpush1.bf16.msra.mxu0 %v4229
        %4333 = vmatprep.subr.bf16.mxu0 0
        %4334 = vmatpush1.bf16.msra.mxu0 %v4230
        %4335 = vmatprep.mubr.bf16.mxu0 %v1984
        %4336 = vmatmul.mubr.bf16.gmra.mrb[0].mxu0 %v1983
        %v4337 = vpop.f32.mrb[0].mxu0
        %v4338 = vadd.f32 %v4298, %v4337
        %v4339 = vpop.f32.mrb[0].mxu0
        %v4340 = vpop.f32.mrb[0].mxu0
        %v4341 = vpop.f32.mrb[0].mxu0
        %4342 = vdwg.mxu0
        %s4343 = scalar_lea.vmem [#allocation4], 1792
        %v4344 = vld [vmem:[%s4343] sm:$0xf]
        %v4345 = vld [vmem:[%s4343 + $0x4] sm:$0xf]
        %v4346 = vld [vmem:[%s4343 + $0x8] sm:$0xf]
        %v4347 = vld [vmem:[%s4343 + $0xc] sm:$0xf]
        %v4348 = vld [vmem:[%s4343 + $0x10] sm:$0xf]
        %v4349 = vld [vmem:[%s4343 + $0x14] sm:$0xf]
        %v4350 = vld [vmem:[%s4343 + $0x18] sm:$0xf]
        %v4351 = vld [vmem:[%s4343 + $0x1c] sm:$0xf]
        %v4352 = vld [vmem:[%s4343 + $0x20] sm:$0xf]
        %v4353 = vld [vmem:[%s4343 + $0x24] sm:$0xf]
        %v4354 = vld [vmem:[%s4343 + $0x28] sm:$0xf]
        %v4355 = vld [vmem:[%s4343 + $0x2c] sm:$0xf]
        %v4356 = vld [vmem:[%s4343 + $0x30] sm:$0xf]
        %v4357 = vld [vmem:[%s4343 + $0x34] sm:$0xf]
        %v4358 = vld [vmem:[%s4343 + $0x38] sm:$0xf]
        %v4359 = vld [vmem:[%s4343 + $0x3c] sm:$0xf]
        %v4360 = vld [vmem:[%s4343 + $0x40] sm:$0xf]
        %v4361 = vld [vmem:[%s4343 + $0x44] sm:$0xf]
        %v4362 = vld [vmem:[%s4343 + $0x48] sm:$0xf]
        %v4363 = vld [vmem:[%s4343 + $0x4c] sm:$0xf]
        %v4364 = vld [vmem:[%s4343 + $0x50] sm:$0xf]
        %v4365 = vld [vmem:[%s4343 + $0x54] sm:$0xf]
        %v4366 = vld [vmem:[%s4343 + $0x58] sm:$0xf]
        %v4367 = vld [vmem:[%s4343 + $0x5c] sm:$0xf]
        %v4368 = vld [vmem:[%s4343 + $0x60] sm:$0xf]
        %v4369 = vld [vmem:[%s4343 + $0x64] sm:$0xf]
        %v4370 = vld [vmem:[%s4343 + $0x68] sm:$0xf]
        %v4371 = vld [vmem:[%s4343 + $0x6c] sm:$0xf]
        %v4372 = vld [vmem:[%s4343 + $0x70] sm:$0xf]
        %v4373 = vld [vmem:[%s4343 + $0x74] sm:$0xf]
        %v4374 = vld [vmem:[%s4343 + $0x78] sm:$0xf]
        %v4375 = vld [vmem:[%s4343 + $0x7c] sm:$0xf]
        %v4376 = vld [vmem:[%s4343 + $0x80] sm:$0xf]
        %v4377 = vld [vmem:[%s4343 + $0x84] sm:$0xf]
        %v4378 = vld [vmem:[%s4343 + $0x88] sm:$0xf]
        %v4379 = vld [vmem:[%s4343 + $0x8c] sm:$0xf]
        %v4380 = vld [vmem:[%s4343 + $0x90] sm:$0xf]
        %v4381 = vld [vmem:[%s4343 + $0x94] sm:$0xf]
        %v4382 = vld [vmem:[%s4343 + $0x98] sm:$0xf]
        %v4383 = vld [vmem:[%s4343 + $0x9c] sm:$0xf]
        %v4384 = vld [vmem:[%s4343 + $0xa0] sm:$0xf]
        %v4385 = vld [vmem:[%s4343 + $0xa4] sm:$0xf]
        %v4386 = vld [vmem:[%s4343 + $0xa8] sm:$0xf]
        %v4387 = vld [vmem:[%s4343 + $0xac] sm:$0xf]
        %v4388 = vld [vmem:[%s4343 + $0xb0] sm:$0xf]
        %v4389 = vld [vmem:[%s4343 + $0xb4] sm:$0xf]
        %v4390 = vld [vmem:[%s4343 + $0xb8] sm:$0xf]
        %v4391 = vld [vmem:[%s4343 + $0xbc] sm:$0xf]
        %v4392 = vld [vmem:[%s4343 + $0xc0] sm:$0xf]
        %v4393 = vld [vmem:[%s4343 + $0xc4] sm:$0xf]
        %v4394 = vld [vmem:[%s4343 + $0xc8] sm:$0xf]
        %v4395 = vld [vmem:[%s4343 + $0xcc] sm:$0xf]
        %v4396 = vld [vmem:[%s4343 + $0xd0] sm:$0xf]
        %v4397 = vld [vmem:[%s4343 + $0xd4] sm:$0xf]
        %v4398 = vld [vmem:[%s4343 + $0xd8] sm:$0xf]
        %v4399 = vld [vmem:[%s4343 + $0xdc] sm:$0xf]
        %v4400 = vld [vmem:[%s4343 + $0xe0] sm:$0xf]
        %v4401 = vld [vmem:[%s4343 + $0xe4] sm:$0xf]
        %v4402 = vld [vmem:[%s4343 + $0xe8] sm:$0xf]
        %v4403 = vld [vmem:[%s4343 + $0xec] sm:$0xf]
        %v4404 = vld [vmem:[%s4343 + $0xf0] sm:$0xf]
        %v4405 = vld [vmem:[%s4343 + $0xf4] sm:$0xf]
        %v4406 = vld [vmem:[%s4343 + $0xf8] sm:$0xf]
        %v4407 = vld [vmem:[%s4343 + $0xfc] sm:$0xf]
        %v4472 = vunpack.c.l.b16 %v4344
        %v4473 = vunpack.c.l.b16 %v4345
        %v4474 = vunpack.c.l.b16 %v4346
        %v4475 = vunpack.c.l.b16 %v4347
        %v4476 = vunpack.c.l.b16 %v4348
        %v4477 = vunpack.c.l.b16 %v4349
        %v4478 = vunpack.c.l.b16 %v4350
        %v4479 = vunpack.c.l.b16 %v4351
        %v4480 = vunpack.c.l.b16 %v4352
        %v4481 = vunpack.c.l.b16 %v4353
        %v4482 = vunpack.c.l.b16 %v4354
        %v4483 = vunpack.c.l.b16 %v4355
        %v4484 = vunpack.c.l.b16 %v4356
        %v4485 = vunpack.c.l.b16 %v4357
        %v4486 = vunpack.c.l.b16 %v4358
        %v4487 = vunpack.c.l.b16 %v4359
        %v4488 = vunpack.c.l.b16 %v4360
        %v4489 = vunpack.c.l.b16 %v4361
        %v4490 = vunpack.c.l.b16 %v4362
        %v4491 = vunpack.c.l.b16 %v4363
        %v4492 = vunpack.c.l.b16 %v4364
        %v4493 = vunpack.c.l.b16 %v4365
        %v4494 = vunpack.c.l.b16 %v4366
        %v4495 = vunpack.c.l.b16 %v4367
        %v4496 = vunpack.c.l.b16 %v4368
        %v4497 = vunpack.c.l.b16 %v4369
        %v4498 = vunpack.c.l.b16 %v4370
        %v4499 = vunpack.c.l.b16 %v4371
        %v4500 = vunpack.c.l.b16 %v4372
        %v4501 = vunpack.c.l.b16 %v4373
        %v4502 = vunpack.c.l.b16 %v4374
        %v4503 = vunpack.c.l.b16 %v4375
        %v4504 = vunpack.c.l.b16 %v4376
        %v4505 = vunpack.c.l.b16 %v4377
        %v4506 = vunpack.c.l.b16 %v4378
        %v4507 = vunpack.c.l.b16 %v4379
        %v4508 = vunpack.c.l.b16 %v4380
        %v4509 = vunpack.c.l.b16 %v4381
        %v4510 = vunpack.c.l.b16 %v4382
        %v4511 = vunpack.c.l.b16 %v4383
        %v4512 = vunpack.c.l.b16 %v4384
        %v4513 = vunpack.c.l.b16 %v4385
        %v4514 = vunpack.c.l.b16 %v4386
        %v4515 = vunpack.c.l.b16 %v4387
        %v4516 = vunpack.c.l.b16 %v4388
        %v4517 = vunpack.c.l.b16 %v4389
        %v4518 = vunpack.c.l.b16 %v4390
        %v4519 = vunpack.c.l.b16 %v4391
        %v4520 = vunpack.c.l.b16 %v4392
        %v4521 = vunpack.c.l.b16 %v4393
        %v4522 = vunpack.c.l.b16 %v4394
        %v4523 = vunpack.c.l.b16 %v4395
        %v4524 = vunpack.c.l.b16 %v4396
        %v4525 = vunpack.c.l.b16 %v4397
        %v4526 = vunpack.c.l.b16 %v4398
        %v4527 = vunpack.c.l.b16 %v4399
        %v4528 = vunpack.c.l.b16 %v4400
        %v4529 = vunpack.c.l.b16 %v4401
        %v4530 = vunpack.c.l.b16 %v4402
        %v4531 = vunpack.c.l.b16 %v4403
        %v4532 = vunpack.c.l.b16 %v4404
        %v4533 = vunpack.c.l.b16 %v4405
        %v4534 = vunpack.c.l.b16 %v4406
        %v4535 = vunpack.c.l.b16 %v4407
        %v4536 = vpack.c.b16 %v4473, %v4472
        %v4537 = vpack.c.b16 %v4475, %v4474
        %v4538 = vpack.c.b16 %v4477, %v4476
        %v4539 = vpack.c.b16 %v4479, %v4478
        %v4540 = vpack.c.b16 %v4481, %v4480
        %v4541 = vpack.c.b16 %v4483, %v4482
        %v4542 = vpack.c.b16 %v4485, %v4484
        %v4543 = vpack.c.b16 %v4487, %v4486
        %v4544 = vpack.c.b16 %v4489, %v4488
        %v4545 = vpack.c.b16 %v4491, %v4490
        %v4546 = vpack.c.b16 %v4493, %v4492
        %v4547 = vpack.c.b16 %v4495, %v4494
        %v4548 = vpack.c.b16 %v4497, %v4496
        %v4549 = vpack.c.b16 %v4499, %v4498
        %v4550 = vpack.c.b16 %v4501, %v4500
        %v4551 = vpack.c.b16 %v4503, %v4502
        %v4552 = vpack.c.b16 %v4505, %v4504
        %v4553 = vpack.c.b16 %v4507, %v4506
        %v4554 = vpack.c.b16 %v4509, %v4508
        %v4555 = vpack.c.b16 %v4511, %v4510
        %v4556 = vpack.c.b16 %v4513, %v4512
        %v4557 = vpack.c.b16 %v4515, %v4514
        %v4558 = vpack.c.b16 %v4517, %v4516
        %v4559 = vpack.c.b16 %v4519, %v4518
        %v4560 = vpack.c.b16 %v4521, %v4520
        %v4561 = vpack.c.b16 %v4523, %v4522
        %v4562 = vpack.c.b16 %v4525, %v4524
        %v4563 = vpack.c.b16 %v4527, %v4526
        %v4564 = vpack.c.b16 %v4529, %v4528
        %v4565 = vpack.c.b16 %v4531, %v4530
        %v4566 = vpack.c.b16 %v4533, %v4532
        %v4567 = vpack.c.b16 %v4535, %v4534
        %4600 = vmatprep.subr.bf16.mxu0 0
        %4601 = vmatpush1.bf16.msra.mxu0 %v4536
        %4602 = vmatprep.subr.bf16.mxu0 0
        %4603 = vmatpush1.bf16.msra.mxu0 %v4537
        %4604 = vmatprep.subr.bf16.mxu0 0
        %4605 = vmatpush1.bf16.msra.mxu0 %v4538
        %4606 = vmatprep.subr.bf16.mxu0 0
        %4607 = vmatpush1.bf16.msra.mxu0 %v4539
        %4608 = vmatprep.subr.bf16.mxu0 0
        %4609 = vmatpush1.bf16.msra.mxu0 %v4540
        %4610 = vmatprep.subr.bf16.mxu0 0
        %4611 = vmatpush1.bf16.msra.mxu0 %v4541
        %4612 = vmatprep.subr.bf16.mxu0 0
        %4613 = vmatpush1.bf16.msra.mxu0 %v4542
        %4614 = vmatprep.subr.bf16.mxu0 0
        %4615 = vmatpush1.bf16.msra.mxu0 %v4543
        %4616 = vmatprep.subr.bf16.mxu0 0
        %4617 = vmatpush1.bf16.msra.mxu0 %v4544
        %4618 = vmatprep.subr.bf16.mxu0 0
        %4619 = vmatpush1.bf16.msra.mxu0 %v4545
        %4620 = vmatprep.subr.bf16.mxu0 0
        %4621 = vmatpush1.bf16.msra.mxu0 %v4546
        %4622 = vmatprep.subr.bf16.mxu0 0
        %4623 = vmatpush1.bf16.msra.mxu0 %v4547
        %4624 = vmatprep.subr.bf16.mxu0 0
        %4625 = vmatpush1.bf16.msra.mxu0 %v4548
        %4626 = vmatprep.subr.bf16.mxu0 0
        %4627 = vmatpush1.bf16.msra.mxu0 %v4549
        %4628 = vmatprep.subr.bf16.mxu0 0
        %4629 = vmatpush1.bf16.msra.mxu0 %v4550
        %4630 = vmatprep.subr.bf16.mxu0 0
        %4631 = vmatpush1.bf16.msra.mxu0 %v4551
        %4632 = vmatprep.mubr.bf16.mxu0 %v1982
        %4633 = vmatmul.mubr.bf16.gmra.mrb[0].mxu0 %v1981
        %v4634 = vpop.f32.mrb[0].mxu0
        %v4635 = vadd.f32 0.0, %v4634
        %v4636 = vpop.f32.mrb[0].mxu0
        %v4637 = vpop.f32.mrb[0].mxu0
        %v4638 = vpop.f32.mrb[0].mxu0
        %4639 = vdwg.mxu0
        %4640 = vmatprep.subr.bf16.mxu0 0
        %4641 = vmatpush1.bf16.msra.mxu0 %v4552
        %4642 = vmatprep.subr.bf16.mxu0 0
        %4643 = vmatpush1.bf16.msra.mxu0 %v4553
        %4644 = vmatprep.subr.bf16.mxu0 0
        %4645 = vmatpush1.bf16.msra.mxu0 %v4554
        %4646 = vmatprep.subr.bf16.mxu0 0
        %4647 = vmatpush1.bf16.msra.mxu0 %v4555
        %4648 = vmatprep.subr.bf16.mxu0 0
        %4649 = vmatpush1.bf16.msra.mxu0 %v4556
        %4650 = vmatprep.subr.bf16.mxu0 0
        %4651 = vmatpush1.bf16.msra.mxu0 %v4557
        %4652 = vmatprep.subr.bf16.mxu0 0
        %4653 = vmatpush1.bf16.msra.mxu0 %v4558
        %4654 = vmatprep.subr.bf16.mxu0 0
        %4655 = vmatpush1.bf16.msra.mxu0 %v4559
        %4656 = vmatprep.subr.bf16.mxu0 0
        %4657 = vmatpush1.bf16.msra.mxu0 %v4560
        %4658 = vmatprep.subr.bf16.mxu0 0
        %4659 = vmatpush1.bf16.msra.mxu0 %v4561
        %4660 = vmatprep.subr.bf16.mxu0 0
        %4661 = vmatpush1.bf16.msra.mxu0 %v4562
        %4662 = vmatprep.subr.bf16.mxu0 0
        %4663 = vmatpush1.bf16.msra.mxu0 %v4563
        %4664 = vmatprep.subr.bf16.mxu0 0
        %4665 = vmatpush1.bf16.msra.mxu0 %v4564
        %4666 = vmatprep.subr.bf16.mxu0 0
        %4667 = vmatpush1.bf16.msra.mxu0 %v4565
        %4668 = vmatprep.subr.bf16.mxu0 0
        %4669 = vmatpush1.bf16.msra.mxu0 %v4566
        %4670 = vmatprep.subr.bf16.mxu0 0
        %4671 = vmatpush1.bf16.msra.mxu0 %v4567
        %4672 = vmatprep.mubr.bf16.mxu0 %v1984
        %4673 = vmatmul.mubr.bf16.gmra.mrb[0].mxu0 %v1983
        %v4674 = vpop.f32.mrb[0].mxu0
        %v4675 = vadd.f32 %v4635, %v4674
        %v4676 = vpop.f32.mrb[0].mxu0
        %v4677 = vpop.f32.mrb[0].mxu0
        %v4678 = vpop.f32.mrb[0].mxu0
        %4679 = vdwg.mxu0
        %s4680 = scalar_lea.vmem [#allocation4], 2048
        %v4681 = vld [vmem:[%s4680] sm:$0xf]
        %v4682 = vld [vmem:[%s4680 + $0x4] sm:$0xf]
        %v4683 = vld [vmem:[%s4680 + $0x8] sm:$0xf]
        %v4684 = vld [vmem:[%s4680 + $0xc] sm:$0xf]
        %v4685 = vld [vmem:[%s4680 + $0x10] sm:$0xf]
        %v4686 = vld [vmem:[%s4680 + $0x14] sm:$0xf]
        %v4687 = vld [vmem:[%s4680 + $0x18] sm:$0xf]
        %v4688 = vld [vmem:[%s4680 + $0x1c] sm:$0xf]
        %v4689 = vld [vmem:[%s4680 + $0x20] sm:$0xf]
        %v4690 = vld [vmem:[%s4680 + $0x24] sm:$0xf]
        %v4691 = vld [vmem:[%s4680 + $0x28] sm:$0xf]
        %v4692 = vld [vmem:[%s4680 + $0x2c] sm:$0xf]
        %v4693 = vld [vmem:[%s4680 + $0x30] sm:$0xf]
        %v4694 = vld [vmem:[%s4680 + $0x34] sm:$0xf]
        %v4695 = vld [vmem:[%s4680 + $0x38] sm:$0xf]
        %v4696 = vld [vmem:[%s4680 + $0x3c] sm:$0xf]
        %v4697 = vld [vmem:[%s4680 + $0x40] sm:$0xf]
        %v4698 = vld [vmem:[%s4680 + $0x44] sm:$0xf]
        %v4699 = vld [vmem:[%s4680 + $0x48] sm:$0xf]
        %v4700 = vld [vmem:[%s4680 + $0x4c] sm:$0xf]
        %v4701 = vld [vmem:[%s4680 + $0x50] sm:$0xf]
        %v4702 = vld [vmem:[%s4680 + $0x54] sm:$0xf]
        %v4703 = vld [vmem:[%s4680 + $0x58] sm:$0xf]
        %v4704 = vld [vmem:[%s4680 + $0x5c] sm:$0xf]
        %v4705 = vld [vmem:[%s4680 + $0x60] sm:$0xf]
        %v4706 = vld [vmem:[%s4680 + $0x64] sm:$0xf]
        %v4707 = vld [vmem:[%s4680 + $0x68] sm:$0xf]
        %v4708 = vld [vmem:[%s4680 + $0x6c] sm:$0xf]
        %v4709 = vld [vmem:[%s4680 + $0x70] sm:$0xf]
        %v4710 = vld [vmem:[%s4680 + $0x74] sm:$0xf]
        %v4711 = vld [vmem:[%s4680 + $0x78] sm:$0xf]
        %v4712 = vld [vmem:[%s4680 + $0x7c] sm:$0xf]
        %v4713 = vld [vmem:[%s4680 + $0x80] sm:$0xf]
        %v4714 = vld [vmem:[%s4680 + $0x84] sm:$0xf]
        %v4715 = vld [vmem:[%s4680 + $0x88] sm:$0xf]
        %v4716 = vld [vmem:[%s4680 + $0x8c] sm:$0xf]
        %v4717 = vld [vmem:[%s4680 + $0x90] sm:$0xf]
        %v4718 = vld [vmem:[%s4680 + $0x94] sm:$0xf]
        %v4719 = vld [vmem:[%s4680 + $0x98] sm:$0xf]
        %v4720 = vld [vmem:[%s4680 + $0x9c] sm:$0xf]
        %v4721 = vld [vmem:[%s4680 + $0xa0] sm:$0xf]
        %v4722 = vld [vmem:[%s4680 + $0xa4] sm:$0xf]
        %v4723 = vld [vmem:[%s4680 + $0xa8] sm:$0xf]
        %v4724 = vld [vmem:[%s4680 + $0xac] sm:$0xf]
        %v4725 = vld [vmem:[%s4680 + $0xb0] sm:$0xf]
        %v4726 = vld [vmem:[%s4680 + $0xb4] sm:$0xf]
        %v4727 = vld [vmem:[%s4680 + $0xb8] sm:$0xf]
        %v4728 = vld [vmem:[%s4680 + $0xbc] sm:$0xf]
        %v4729 = vld [vmem:[%s4680 + $0xc0] sm:$0xf]
        %v4730 = vld [vmem:[%s4680 + $0xc4] sm:$0xf]
        %v4731 = vld [vmem:[%s4680 + $0xc8] sm:$0xf]
        %v4732 = vld [vmem:[%s4680 + $0xcc] sm:$0xf]
        %v4733 = vld [vmem:[%s4680 + $0xd0] sm:$0xf]
        %v4734 = vld [vmem:[%s4680 + $0xd4] sm:$0xf]
        %v4735 = vld [vmem:[%s4680 + $0xd8] sm:$0xf]
        %v4736 = vld [vmem:[%s4680 + $0xdc] sm:$0xf]
        %v4737 = vld [vmem:[%s4680 + $0xe0] sm:$0xf]
        %v4738 = vld [vmem:[%s4680 + $0xe4] sm:$0xf]
        %v4739 = vld [vmem:[%s4680 + $0xe8] sm:$0xf]
        %v4740 = vld [vmem:[%s4680 + $0xec] sm:$0xf]
        %v4741 = vld [vmem:[%s4680 + $0xf0] sm:$0xf]
        %v4742 = vld [vmem:[%s4680 + $0xf4] sm:$0xf]
        %v4743 = vld [vmem:[%s4680 + $0xf8] sm:$0xf]
        %v4744 = vld [vmem:[%s4680 + $0xfc] sm:$0xf]
        %v4809 = vunpack.c.l.b16 %v4681
        %v4810 = vunpack.c.l.b16 %v4682
        %v4811 = vunpack.c.l.b16 %v4683
        %v4812 = vunpack.c.l.b16 %v4684
        %v4813 = vunpack.c.l.b16 %v4685
        %v4814 = vunpack.c.l.b16 %v4686
        %v4815 = vunpack.c.l.b16 %v4687
        %v4816 = vunpack.c.l.b16 %v4688
        %v4817 = vunpack.c.l.b16 %v4689
        %v4818 = vunpack.c.l.b16 %v4690
        %v4819 = vunpack.c.l.b16 %v4691
        %v4820 = vunpack.c.l.b16 %v4692
        %v4821 = vunpack.c.l.b16 %v4693
        %v4822 = vunpack.c.l.b16 %v4694
        %v4823 = vunpack.c.l.b16 %v4695
        %v4824 = vunpack.c.l.b16 %v4696
        %v4825 = vunpack.c.l.b16 %v4697
        %v4826 = vunpack.c.l.b16 %v4698
        %v4827 = vunpack.c.l.b16 %v4699
        %v4828 = vunpack.c.l.b16 %v4700
        %v4829 = vunpack.c.l.b16 %v4701
        %v4830 = vunpack.c.l.b16 %v4702
        %v4831 = vunpack.c.l.b16 %v4703
        %v4832 = vunpack.c.l.b16 %v4704
        %v4833 = vunpack.c.l.b16 %v4705
        %v4834 = vunpack.c.l.b16 %v4706
        %v4835 = vunpack.c.l.b16 %v4707
        %v4836 = vunpack.c.l.b16 %v4708
        %v4837 = vunpack.c.l.b16 %v4709
        %v4838 = vunpack.c.l.b16 %v4710
        %v4839 = vunpack.c.l.b16 %v4711
        %v4840 = vunpack.c.l.b16 %v4712
        %v4841 = vunpack.c.l.b16 %v4713
        %v4842 = vunpack.c.l.b16 %v4714
        %v4843 = vunpack.c.l.b16 %v4715
        %v4844 = vunpack.c.l.b16 %v4716
        %v4845 = vunpack.c.l.b16 %v4717
        %v4846 = vunpack.c.l.b16 %v4718
        %v4847 = vunpack.c.l.b16 %v4719
        %v4848 = vunpack.c.l.b16 %v4720
        %v4849 = vunpack.c.l.b16 %v4721
        %v4850 = vunpack.c.l.b16 %v4722
        %v4851 = vunpack.c.l.b16 %v4723
        %v4852 = vunpack.c.l.b16 %v4724
        %v4853 = vunpack.c.l.b16 %v4725
        %v4854 = vunpack.c.l.b16 %v4726
        %v4855 = vunpack.c.l.b16 %v4727
        %v4856 = vunpack.c.l.b16 %v4728
        %v4857 = vunpack.c.l.b16 %v4729
        %v4858 = vunpack.c.l.b16 %v4730
        %v4859 = vunpack.c.l.b16 %v4731
        %v4860 = vunpack.c.l.b16 %v4732
        %v4861 = vunpack.c.l.b16 %v4733
        %v4862 = vunpack.c.l.b16 %v4734
        %v4863 = vunpack.c.l.b16 %v4735
        %v4864 = vunpack.c.l.b16 %v4736
        %v4865 = vunpack.c.l.b16 %v4737
        %v4866 = vunpack.c.l.b16 %v4738
        %v4867 = vunpack.c.l.b16 %v4739
        %v4868 = vunpack.c.l.b16 %v4740
        %v4869 = vunpack.c.l.b16 %v4741
        %v4870 = vunpack.c.l.b16 %v4742
        %v4871 = vunpack.c.l.b16 %v4743
        %v4872 = vunpack.c.l.b16 %v4744
        %v4873 = vpack.c.b16 %v4810, %v4809
        %v4874 = vpack.c.b16 %v4812, %v4811
        %v4875 = vpack.c.b16 %v4814, %v4813
        %v4876 = vpack.c.b16 %v4816, %v4815
        %v4877 = vpack.c.b16 %v4818, %v4817
        %v4878 = vpack.c.b16 %v4820, %v4819
        %v4879 = vpack.c.b16 %v4822, %v4821
        %v4880 = vpack.c.b16 %v4824, %v4823
        %v4881 = vpack.c.b16 %v4826, %v4825
        %v4882 = vpack.c.b16 %v4828, %v4827
        %v4883 = vpack.c.b16 %v4830, %v4829
        %v4884 = vpack.c.b16 %v4832, %v4831
        %v4885 = vpack.c.b16 %v4834, %v4833
        %v4886 = vpack.c.b16 %v4836, %v4835
        %v4887 = vpack.c.b16 %v4838, %v4837
        %v4888 = vpack.c.b16 %v4840, %v4839
        %v4889 = vpack.c.b16 %v4842, %v4841
        %v4890 = vpack.c.b16 %v4844, %v4843
        %v4891 = vpack.c.b16 %v4846, %v4845
        %v4892 = vpack.c.b16 %v4848, %v4847
        %v4893 = vpack.c.b16 %v4850, %v4849
        %v4894 = vpack.c.b16 %v4852, %v4851
        %v4895 = vpack.c.b16 %v4854, %v4853
        %v4896 = vpack.c.b16 %v4856, %v4855
        %v4897 = vpack.c.b16 %v4858, %v4857
        %v4898 = vpack.c.b16 %v4860, %v4859
        %v4899 = vpack.c.b16 %v4862, %v4861
        %v4900 = vpack.c.b16 %v4864, %v4863
        %v4901 = vpack.c.b16 %v4866, %v4865
        %v4902 = vpack.c.b16 %v4868, %v4867
        %v4903 = vpack.c.b16 %v4870, %v4869
        %v4904 = vpack.c.b16 %v4872, %v4871
        %4937 = vmatprep.subr.bf16.mxu0 0
        %4938 = vmatpush1.bf16.msra.mxu0 %v4873
        %4939 = vmatprep.subr.bf16.mxu0 0
        %4940 = vmatpush1.bf16.msra.mxu0 %v4874
        %4941 = vmatprep.subr.bf16.mxu0 0
        %4942 = vmatpush1.bf16.msra.mxu0 %v4875
        %4943 = vmatprep.subr.bf16.mxu0 0
        %4944 = vmatpush1.bf16.msra.mxu0 %v4876
        %4945 = vmatprep.subr.bf16.mxu0 0
        %4946 = vmatpush1.bf16.msra.mxu0 %v4877
        %4947 = vmatprep.subr.bf16.mxu0 0
        %4948 = vmatpush1.bf16.msra.mxu0 %v4878
        %4949 = vmatprep.subr.bf16.mxu0 0
        %4950 = vmatpush1.bf16.msra.mxu0 %v4879
        %4951 = vmatprep.subr.bf16.mxu0 0
        %4952 = vmatpush1.bf16.msra.mxu0 %v4880
        %4953 = vmatprep.subr.bf16.mxu0 0
        %4954 = vmatpush1.bf16.msra.mxu0 %v4881
        %4955 = vmatprep.subr.bf16.mxu0 0
        %4956 = vmatpush1.bf16.msra.mxu0 %v4882
        %4957 = vmatprep.subr.bf16.mxu0 0
        %4958 = vmatpush1.bf16.msra.mxu0 %v4883
        %4959 = vmatprep.subr.bf16.mxu0 0
        %4960 = vmatpush1.bf16.msra.mxu0 %v4884
        %4961 = vmatprep.subr.bf16.mxu0 0
        %4962 = vmatpush1.bf16.msra.mxu0 %v4885
        %4963 = vmatprep.subr.bf16.mxu0 0
        %4964 = vmatpush1.bf16.msra.mxu0 %v4886
        %4965 = vmatprep.subr.bf16.mxu0 0
        %4966 = vmatpush1.bf16.msra.mxu0 %v4887
        %4967 = vmatprep.subr.bf16.mxu0 0
        %4968 = vmatpush1.bf16.msra.mxu0 %v4888
        %4969 = vmatprep.mubr.bf16.mxu0 %v1982
        %4970 = vmatmul.mubr.bf16.gmra.mrb[0].mxu0 %v1981
        %v4971 = vpop.f32.mrb[0].mxu0
        %v4972 = vadd.f32 0.0, %v4971
        %v4973 = vpop.f32.mrb[0].mxu0
        %v4974 = vpop.f32.mrb[0].mxu0
        %v4975 = vpop.f32.mrb[0].mxu0
        %4976 = vdwg.mxu0
        %4977 = vmatprep.subr.bf16.mxu0 0
        %4978 = vmatpush1.bf16.msra.mxu0 %v4889
        %4979 = vmatprep.subr.bf16.mxu0 0
        %4980 = vmatpush1.bf16.msra.mxu0 %v4890
        %4981 = vmatprep.subr.bf16.mxu0 0
        %4982 = vmatpush1.bf16.msra.mxu0 %v4891
        %4983 = vmatprep.subr.bf16.mxu0 0
        %4984 = vmatpush1.bf16.msra.mxu0 %v4892
        %4985 = vmatprep.subr.bf16.mxu0 0
        %4986 = vmatpush1.bf16.msra.mxu0 %v4893
        %4987 = vmatprep.subr.bf16.mxu0 0
        %4988 = vmatpush1.bf16.msra.mxu0 %v4894
        %4989 = vmatprep.subr.bf16.mxu0 0
        %4990 = vmatpush1.bf16.msra.mxu0 %v4895
        %4991 = vmatprep.subr.bf16.mxu0 0
        %4992 = vmatpush1.bf16.msra.mxu0 %v4896
        %4993 = vmatprep.subr.bf16.mxu0 0
        %4994 = vmatpush1.bf16.msra.mxu0 %v4897
        %4995 = vmatprep.subr.bf16.mxu0 0
        %4996 = vmatpush1.bf16.msra.mxu0 %v4898
        %4997 = vmatprep.subr.bf16.mxu0 0
        %4998 = vmatpush1.bf16.msra.mxu0 %v4899
        %4999 = vmatprep.subr.bf16.mxu0 0
        %5000 = vmatpush1.bf16.msra.mxu0 %v4900
        %5001 = vmatprep.subr.bf16.mxu0 0
        %5002 = vmatpush1.bf16.msra.mxu0 %v4901
        %5003 = vmatprep.subr.bf16.mxu0 0
        %5004 = vmatpush1.bf16.msra.mxu0 %v4902
        %5005 = vmatprep.subr.bf16.mxu0 0
        %5006 = vmatpush1.bf16.msra.mxu0 %v4903
        %5007 = vmatprep.subr.bf16.mxu0 0
        %5008 = vmatpush1.bf16.msra.mxu0 %v4904
        %5009 = vmatprep.mubr.bf16.mxu0 %v1984
        %5010 = vmatmul.mubr.bf16.gmra.mrb[0].mxu0 %v1983
        %v5011 = vpop.f32.mrb[0].mxu0
        %v5012 = vadd.f32 %v4972, %v5011
        %v5013 = vpop.f32.mrb[0].mxu0
        %v5014 = vpop.f32.mrb[0].mxu0
        %v5015 = vpop.f32.mrb[0].mxu0
        %5016 = vdwg.mxu0
        %v5017 = vpack.c.bf16 %v2653, %v2316
        %v5018 = vpack.c.bf16 %v3327, %v2990
        %v5019 = vpack.c.bf16 %v4001, %v3664
        %v5020 = vpack.c.bf16 %v4675, %v4338
        %v5021 = vpack.c.bf16 %v5012, %v5012
        %5023 = vset.pattern.permute.xlu0 0
        %5024 = vperm.xlu0 %5023, %v401
        %v5025 = vpop.permute.xlu0 %5024
        %5028 = vset.pattern.permute.xlu0 0
        %5029 = vperm.xlu0 %5028, %v402
        %v5030 = vpop.permute.xlu0 %5029
        %v5034 = vunpack.c.l.b16 %v393
        %v5035 = vunpack.c.l.b16 %v394
        %v5036 = vpack.c.b16 %v5035, %v5034
        %v5038 = vsel %vm799, %v5036, 0
        %v5041 = vsel %vm803, %v5021, 0
        %5043 = vmatprep.subr.bf16.mxu0 0
        %5044 = vmatpush1.bf16.msra.mxu0 %v5017
        %5045 = vmatprep.subr.bf16.mxu0 0
        %5046 = vmatpush1.bf16.msra.mxu0 %v5018
        %5047 = vmatprep.subr.bf16.mxu0 0
        %5048 = vmatpush1.bf16.msra.mxu0 %v5019
        %5049 = vmatprep.subr.bf16.mxu0 0
        %5050 = vmatpush1.bf16.msra.mxu0 %v5020
        %5051 = vmatprep.subr.bf16.mxu0 0
        %5052 = vmatpush1.bf16.msra.mxu0 %v5041
        %5053 = vmatprep.subr.bf16.mxu0 0
        %5054 = vmatpush1.bf16.msra.mxu0 0
        %5055 = vmatprep.subr.bf16.mxu0 0
        %5056 = vmatpush1.bf16.msra.mxu0 0
        %5057 = vmatprep.subr.bf16.mxu0 0
        %5058 = vmatpush1.bf16.msra.mxu0 0
        %5059 = vmatprep.subr.bf16.mxu0 0
        %5060 = vmatpush1.bf16.msra.mxu0 0
        %5061 = vmatprep.subr.bf16.mxu0 0
        %5062 = vmatpush1.bf16.msra.mxu0 0
        %5063 = vmatprep.subr.bf16.mxu0 0
        %5064 = vmatpush1.bf16.msra.mxu0 0
        %5065 = vmatprep.subr.bf16.mxu0 0
        %5066 = vmatpush1.bf16.msra.mxu0 0
        %5067 = vmatprep.subr.bf16.mxu0 0
        %5068 = vmatpush1.bf16.msra.mxu0 0
        %5069 = vmatprep.subr.bf16.mxu0 0
        %5070 = vmatpush1.bf16.msra.mxu0 0
        %5071 = vmatprep.subr.bf16.mxu0 0
        %5072 = vmatpush1.bf16.msra.mxu0 0
        %5073 = vmatprep.subr.bf16.mxu0 0
        %5074 = vmatpush1.bf16.msra.mxu0 0
        %5075 = vmatprep.mubr.bf16.mxu0 0
        %5076 = vmatmul.mubr.bf16.gmra.mrb[0].mxu0 %v5038
        %v5077 = vpop.f32.mrb[0].mxu0
        %v5078 = vadd.f32 %v5025, %v5077
        %v5079 = vpop.f32.mrb[0].mxu0
        %v5080 = vpop.f32.mrb[0].mxu0
        %v5081 = vadd.f32 %v5030, %v5080
        %v5082 = vpop.f32.mrb[0].mxu0
        %5083 = vdwg.mxu0
        %5084 = vmatprep.subr.mxu0 0.0
        %5085 = vmatpush1.msra.mxu0 %v478
        %5086 = vmatprep.subr.mxu0 0.0
        %5087 = vmatpush1.msra.mxu0 %v479
        %5088 = vmatprep.subr.mxu0 0.0
        %5089 = vmatpush1.msra.mxu0 %v480
        %5090 = vmatprep.subr.mxu0 0.0
        %5091 = vmatpush1.msra.mxu0 %v481
        %5092 = vmatprep.subr.mxu0 0.0
        %5093 = vmatpush1.msra.mxu0 %v482
        %5094 = vmatprep.subr.mxu0 0.0
        %5095 = vmatpush1.msra.mxu0 %v483
        %5096 = vmatprep.subr.mxu0 0.0
        %5097 = vmatpush1.msra.mxu0 %v484
        %5098 = vmatprep.subr.mxu0 0.0
        %5099 = vmatpush1.msra.mxu0 %v485
        %5100 = vmatprep.subr.mxu0 0.0
        %5101 = vmatpush1.msra.mxu0 %v486
        %5102 = vmatprep.subr.mxu0 0.0
        %5103 = vmatpush1.msra.mxu0 %v487
        %5104 = vmatprep.subr.mxu0 0.0
        %5105 = vmatpush1.msra.mxu0 %v488
        %5106 = vmatprep.subr.mxu0 0.0
        %5107 = vmatpush1.msra.mxu0 %v489
        %5108 = vmatprep.subr.mxu0 0.0
        %5109 = vmatpush1.msra.mxu0 %v490
        %5110 = vmatprep.subr.mxu0 0.0
        %5111 = vmatpush1.msra.mxu0 %v491
        %5112 = vmatprep.subr.mxu0 0.0
        %5113 = vmatpush1.msra.mxu0 %v492
        %5114 = vmatprep.subr.mxu0 0.0
        %5115 = vmatpush1.msra.mxu0 %v493
        %5116 = vmatprep.subr.mxu0 0.0
        %5117 = vmatpush1.msra.mxu0 0.0
        %5118 = vmatprep.subr.mxu0 0.0
        %5119 = vmatpush1.msra.mxu0 0.0
        %5120 = vmatprep.subr.mxu0 0.0
        %5121 = vmatpush1.msra.mxu0 0.0
        %5122 = vmatprep.subr.mxu0 0.0
        %5123 = vmatpush1.msra.mxu0 0.0
        %5124 = vmatprep.subr.mxu0 0.0
        %5125 = vmatpush1.msra.mxu0 0.0
        %5126 = vmatprep.subr.mxu0 0.0
        %5127 = vmatpush1.msra.mxu0 0.0
        %5128 = vmatprep.subr.mxu0 0.0
        %5129 = vmatpush1.msra.mxu0 0.0
        %5130 = vmatprep.subr.mxu0 0.0
        %5131 = vmatpush1.msra.mxu0 0.0
        %5132 = vmatprep.subr.mxu0 0.0
        %5133 = vmatpush1.msra.mxu0 0.0
        %5134 = vmatprep.subr.mxu0 0.0
        %5135 = vmatpush1.msra.mxu0 0.0
        %5136 = vmatprep.subr.mxu0 0.0
        %5137 = vmatpush1.msra.mxu0 0.0
        %5138 = vmatprep.subr.mxu0 0.0
        %5139 = vmatpush1.msra.mxu0 0.0
        %5140 = vmatprep.subr.mxu0 0.0
        %5141 = vmatpush1.msra.mxu0 0.0
        %5142 = vmatprep.subr.mxu0 0.0
        %5143 = vmatpush1.msra.mxu0 0.0
        %5144 = vmatprep.subr.mxu0 0.0
        %5145 = vmatpush1.msra.mxu0 0.0
        %5146 = vmatprep.subr.mxu0 0.0
        %5147 = vmatpush1.msra.mxu0 0.0
        %5148 = vmatprep.mubr.f32.mxu0 0.0
        %5149 = vmatmul.mubr.f32.gmra.mrb[0].mxu0 %v5078
        %v5150 = vpop.f32.mrb[0].mxu0
        %v5151 = vadd.f32 0.0, %v5150
        %v5152 = vpop.f32.mrb[0].mxu0
        %5153 = vmatprep.mubr.f32.mxu0 0.0
        %5154 = vmatmul.mubr.f32.gmra.mrb[0].mxu0 %v5081
        %v5155 = vpop.f32.mrb[0].mxu0
        %v5156 = vadd.f32 0.0, %v5155
        %v5157 = vpop.f32.mrb[0].mxu0
        %5158 = vdwg.mxu0
        %v5159 = vmul.f32 %v5078, %v5078
        %v5160 = vmul.f32 %v5081, %v5081
        %5161 = vmatprep.subr.mxu0 0.0
        %5162 = vmatpush1.msra.mxu0 %v478
        %5163 = vmatprep.subr.mxu0 0.0
        %5164 = vmatpush1.msra.mxu0 %v479
        %5165 = vmatprep.subr.mxu0 0.0
        %5166 = vmatpush1.msra.mxu0 %v480
        %5167 = vmatprep.subr.mxu0 0.0
        %5168 = vmatpush1.msra.mxu0 %v481
        %5169 = vmatprep.subr.mxu0 0.0
        %5170 = vmatpush1.msra.mxu0 %v482
        %5171 = vmatprep.subr.mxu0 0.0
        %5172 = vmatpush1.msra.mxu0 %v483
        %5173 = vmatprep.subr.mxu0 0.0
        %5174 = vmatpush1.msra.mxu0 %v484
        %5175 = vmatprep.subr.mxu0 0.0
        %5176 = vmatpush1.msra.mxu0 %v485
        %5177 = vmatprep.subr.mxu0 0.0
        %5178 = vmatpush1.msra.mxu0 %v486
        %5179 = vmatprep.subr.mxu0 0.0
        %5180 = vmatpush1.msra.mxu0 %v487
        %5181 = vmatprep.subr.mxu0 0.0
        %5182 = vmatpush1.msra.mxu0 %v488
        %5183 = vmatprep.subr.mxu0 0.0
        %5184 = vmatpush1.msra.mxu0 %v489
        %5185 = vmatprep.subr.mxu0 0.0
        %5186 = vmatpush1.msra.mxu0 %v490
        %5187 = vmatprep.subr.mxu0 0.0
        %5188 = vmatpush1.msra.mxu0 %v491
        %5189 = vmatprep.subr.mxu0 0.0
        %5190 = vmatpush1.msra.mxu0 %v492
        %5191 = vmatprep.subr.mxu0 0.0
        %5192 = vmatpush1.msra.mxu0 %v493
        %5193 = vmatprep.subr.mxu0 0.0
        %5194 = vmatpush1.msra.mxu0 0.0
        %5195 = vmatprep.subr.mxu0 0.0
        %5196 = vmatpush1.msra.mxu0 0.0
        %5197 = vmatprep.subr.mxu0 0.0
        %5198 = vmatpush1.msra.mxu0 0.0
        %5199 = vmatprep.subr.mxu0 0.0
        %5200 = vmatpush1.msra.mxu0 0.0
        %5201 = vmatprep.subr.mxu0 0.0
        %5202 = vmatpush1.msra.mxu0 0.0
        %5203 = vmatprep.subr.mxu0 0.0
        %5204 = vmatpush1.msra.mxu0 0.0
        %5205 = vmatprep.subr.mxu0 0.0
        %5206 = vmatpush1.msra.mxu0 0.0
        %5207 = vmatprep.subr.mxu0 0.0
        %5208 = vmatpush1.msra.mxu0 0.0
        %5209 = vmatprep.subr.mxu0 0.0
        %5210 = vmatpush1.msra.mxu0 0.0
        %5211 = vmatprep.subr.mxu0 0.0
        %5212 = vmatpush1.msra.mxu0 0.0
        %5213 = vmatprep.subr.mxu0 0.0
        %5214 = vmatpush1.msra.mxu0 0.0
        %5215 = vmatprep.subr.mxu0 0.0
        %5216 = vmatpush1.msra.mxu0 0.0
        %5217 = vmatprep.subr.mxu0 0.0
        %5218 = vmatpush1.msra.mxu0 0.0
        %5219 = vmatprep.subr.mxu0 0.0
        %5220 = vmatpush1.msra.mxu0 0.0
        %5221 = vmatprep.subr.mxu0 0.0
        %5222 = vmatpush1.msra.mxu0 0.0
        %5223 = vmatprep.subr.mxu0 0.0
        %5224 = vmatpush1.msra.mxu0 0.0
        %5225 = vmatprep.mubr.f32.mxu0 0.0
        %5226 = vmatmul.mubr.f32.gmra.mrb[0].mxu0 %v5159
        %v5227 = vpop.f32.mrb[0].mxu0
        %v5228 = vadd.f32 0.0, %v5227
        %v5229 = vpop.f32.mrb[0].mxu0
        %5230 = vmatprep.mubr.f32.mxu0 0.0
        %5231 = vmatmul.mubr.f32.gmra.mrb[0].mxu0 %v5160
        %v5232 = vpop.f32.mrb[0].mxu0
        %v5233 = vadd.f32 0.0, %v5232
        %v5234 = vpop.f32.mrb[0].mxu0
        %5235 = vdwg.mxu0
        %vm5236 = vcmask 130048
        %v5238 = vsel %vm5236, %v412, 0
        %v5241 = vsel %vm5236, %v413, 0
        %5243 = vmatprep.subr.mxu0 0.0
        %5244 = vmatpush1.msra.mxu0 %v5151
        %5245 = vmatprep.subr.mxu0 0.0
        %5246 = vmatpush1.msra.mxu0 %v5156
        %5247 = vmatprep.subr.mxu0 0.0
        %5248 = vmatpush1.msra.mxu0 0.0
        %5249 = vmatprep.subr.mxu0 0.0
        %5250 = vmatpush1.msra.mxu0 0.0
        %5251 = vmatprep.subr.mxu0 0.0
        %5252 = vmatpush1.msra.mxu0 0.0
        %5253 = vmatprep.subr.mxu0 0.0
        %5254 = vmatpush1.msra.mxu0 0.0
        %5255 = vmatprep.subr.mxu0 0.0
        %5256 = vmatpush1.msra.mxu0 0.0
        %5257 = vmatprep.subr.mxu0 0.0
        %5258 = vmatpush1.msra.mxu0 0.0
        %5259 = vmatprep.subr.mxu0 0.0
        %5260 = vmatpush1.msra.mxu0 0.0
        %5261 = vmatprep.subr.mxu0 0.0
        %5262 = vmatpush1.msra.mxu0 0.0
        %5263 = vmatprep.subr.mxu0 0.0
        %5264 = vmatpush1.msra.mxu0 0.0
        %5265 = vmatprep.subr.mxu0 0.0
        %5266 = vmatpush1.msra.mxu0 0.0
        %5267 = vmatprep.subr.mxu0 0.0
        %5268 = vmatpush1.msra.mxu0 0.0
        %5269 = vmatprep.subr.mxu0 0.0
        %5270 = vmatpush1.msra.mxu0 0.0
        %5271 = vmatprep.subr.mxu0 0.0
        %5272 = vmatpush1.msra.mxu0 0.0
        %5273 = vmatprep.subr.mxu0 0.0
        %5274 = vmatpush1.msra.mxu0 0.0
        %5275 = vmatprep.subr.mxu0 0.0
        %5276 = vmatpush1.msra.mxu0 0.0
        %5277 = vmatprep.subr.mxu0 0.0
        %5278 = vmatpush1.msra.mxu0 0.0
        %5279 = vmatprep.subr.mxu0 0.0
        %5280 = vmatpush1.msra.mxu0 0.0
        %5281 = vmatprep.subr.mxu0 0.0
        %5282 = vmatpush1.msra.mxu0 0.0
        %5283 = vmatprep.subr.mxu0 0.0
        %5284 = vmatpush1.msra.mxu0 0.0
        %5285 = vmatprep.subr.mxu0 0.0
        %5286 = vmatpush1.msra.mxu0 0.0
        %5287 = vmatprep.subr.mxu0 0.0
        %5288 = vmatpush1.msra.mxu0 0.0
        %5289 = vmatprep.subr.mxu0 0.0
        %5290 = vmatpush1.msra.mxu0 0.0
        %5291 = vmatprep.subr.mxu0 0.0
        %5292 = vmatpush1.msra.mxu0 0.0
        %5293 = vmatprep.subr.mxu0 0.0
        %5294 = vmatpush1.msra.mxu0 0.0
        %5295 = vmatprep.subr.mxu0 0.0
        %5296 = vmatpush1.msra.mxu0 0.0
        %5297 = vmatprep.subr.mxu0 0.0
        %5298 = vmatpush1.msra.mxu0 0.0
        %5299 = vmatprep.subr.mxu0 0.0
        %5300 = vmatpush1.msra.mxu0 0.0
        %5301 = vmatprep.subr.mxu0 0.0
        %5302 = vmatpush1.msra.mxu0 0.0
        %5303 = vmatprep.subr.mxu0 0.0
        %5304 = vmatpush1.msra.mxu0 0.0
        %5305 = vmatprep.subr.mxu0 0.0
        %5306 = vmatpush1.msra.mxu0 0.0
        %5307 = vmatprep.mubr.f32.mxu0 0.0
        %5308 = vmatmul.mubr.f32.gmra.mrb[0].mxu0 %v5238
        %v5309 = vpop.f32.mrb[0].mxu0
        %v5310 = vadd.f32 0.0, %v5309
        %v5311 = vpop.f32.mrb[0].mxu0
        %5312 = vmatprep.mubr.f32.mxu0 0.0
        %5313 = vmatmul.mubr.f32.gmra.mrb[0].mxu0 %v5241
        %v5314 = vpop.f32.mrb[0].mxu0
        %v5315 = vadd.f32 0.0, %v5314
        %v5316 = vpop.f32.mrb[0].mxu0
        %5317 = vdwg.mxu0
        %v5318 = vmul.f32 %v5310, 0.00390625
        %v5319 = vmul.f32 %v5315, 0.00390625
        %5320 = vmatprep.subr.mxu0 0.0
        %5321 = vmatpush1.msra.mxu0 %v5228
        %5322 = vmatprep.subr.mxu0 0.0
        %5323 = vmatpush1.msra.mxu0 %v5233
        %5324 = vmatprep.subr.mxu0 0.0
        %5325 = vmatpush1.msra.mxu0 0.0
        %5326 = vmatprep.subr.mxu0 0.0
        %5327 = vmatpush1.msra.mxu0 0.0
        %5328 = vmatprep.subr.mxu0 0.0
        %5329 = vmatpush1.msra.mxu0 0.0
        %5330 = vmatprep.subr.mxu0 0.0
        %5331 = vmatpush1.msra.mxu0 0.0
        %5332 = vmatprep.subr.mxu0 0.0
        %5333 = vmatpush1.msra.mxu0 0.0
        %5334 = vmatprep.subr.mxu0 0.0
        %5335 = vmatpush1.msra.mxu0 0.0
        %5336 = vmatprep.subr.mxu0 0.0
        %5337 = vmatpush1.msra.mxu0 0.0
        %5338 = vmatprep.subr.mxu0 0.0
        %5339 = vmatpush1.msra.mxu0 0.0
        %5340 = vmatprep.subr.mxu0 0.0
        %5341 = vmatpush1.msra.mxu0 0.0
        %5342 = vmatprep.subr.mxu0 0.0
        %5343 = vmatpush1.msra.mxu0 0.0
        %5344 = vmatprep.subr.mxu0 0.0
        %5345 = vmatpush1.msra.mxu0 0.0
        %5346 = vmatprep.subr.mxu0 0.0
        %5347 = vmatpush1.msra.mxu0 0.0
        %5348 = vmatprep.subr.mxu0 0.0
        %5349 = vmatpush1.msra.mxu0 0.0
        %5350 = vmatprep.subr.mxu0 0.0
        %5351 = vmatpush1.msra.mxu0 0.0
        %5352 = vmatprep.subr.mxu0 0.0
        %5353 = vmatpush1.msra.mxu0 0.0
        %5354 = vmatprep.subr.mxu0 0.0
        %5355 = vmatpush1.msra.mxu0 0.0
        %5356 = vmatprep.subr.mxu0 0.0
        %5357 = vmatpush1.msra.mxu0 0.0
        %5358 = vmatprep.subr.mxu0 0.0
        %5359 = vmatpush1.msra.mxu0 0.0
        %5360 = vmatprep.subr.mxu0 0.0
        %5361 = vmatpush1.msra.mxu0 0.0
        %5362 = vmatprep.subr.mxu0 0.0
        %5363 = vmatpush1.msra.mxu0 0.0
        %5364 = vmatprep.subr.mxu0 0.0
        %5365 = vmatpush1.msra.mxu0 0.0
        %5366 = vmatprep.subr.mxu0 0.0
        %5367 = vmatpush1.msra.mxu0 0.0
        %5368 = vmatprep.subr.mxu0 0.0
        %5369 = vmatpush1.msra.mxu0 0.0
        %5370 = vmatprep.subr.mxu0 0.0
        %5371 = vmatpush1.msra.mxu0 0.0
        %5372 = vmatprep.subr.mxu0 0.0
        %5373 = vmatpush1.msra.mxu0 0.0
        %5374 = vmatprep.subr.mxu0 0.0
        %5375 = vmatpush1.msra.mxu0 0.0
        %5376 = vmatprep.subr.mxu0 0.0
        %5377 = vmatpush1.msra.mxu0 0.0
        %5378 = vmatprep.subr.mxu0 0.0
        %5379 = vmatpush1.msra.mxu0 0.0
        %5380 = vmatprep.subr.mxu0 0.0
        %5381 = vmatpush1.msra.mxu0 0.0
        %5382 = vmatprep.subr.mxu0 0.0
        %5383 = vmatpush1.msra.mxu0 0.0
        %5384 = vmatprep.mubr.f32.mxu0 0.0
        %5385 = vmatmul.mubr.f32.gmra.mrb[0].mxu0 %v5238
        %v5386 = vpop.f32.mrb[0].mxu0
        %v5387 = vadd.f32 0.0, %v5386
        %v5388 = vpop.f32.mrb[0].mxu0
        %5389 = vmatprep.mubr.f32.mxu0 0.0
        %5390 = vmatmul.mubr.f32.gmra.mrb[0].mxu0 %v5241
        %v5391 = vpop.f32.mrb[0].mxu0
        %v5392 = vadd.f32 0.0, %v5391
        %v5393 = vpop.f32.mrb[0].mxu0
        %5394 = vdwg.mxu0
        %v5395 = vmul.f32 %v5387, 0.00390625
        %v5396 = vmul.f32 %v5392, 0.00390625
        %v5397 = vmul.f32 %v5318, %v5318
        %v5398 = vmul.f32 %v5319, %v5319
        %v5399 = vsub.f32 %v5395, %v5397
        %v5400 = vsub.f32 %v5396, %v5398
        %v5401 = vadd.f32 %v5399, 1e-05
        %v5402 = vadd.f32 %v5400, 1e-05
        %v5403 = vrsqrt.pop %v5401
        %v5404 = vrsqrt.pop %v5402
        %5406 = vset.pattern.permute.xlu0 0
        %5407 = vperm.xlu0 %5406, %v403
        %v5408 = vpop.permute.xlu0 %5407
        %5411 = vset.pattern.permute.xlu0 0
        %5412 = vperm.xlu0 %5411, %v404
        %v5413 = vpop.permute.xlu0 %5412
        %v5415 = vmul.f32 %v5408, %v5403
        %v5416 = vmul.f32 %v5413, %v5404
        %v5417 = vmul.f32 %v5318, %v5415
        %v5418 = vmul.f32 %v5319, %v5416
        %5420 = vset.pattern.permute.xlu0 0
        %5421 = vperm.xlu0 %5420, %v405
        %v5422 = vpop.permute.xlu0 %5421
        %5425 = vset.pattern.permute.xlu0 0
        %5426 = vperm.xlu0 %5425, %v406
        %v5427 = vpop.permute.xlu0 %5426
        %v5429 = vsub.f32 %v5422, %v5417
        %v5430 = vsub.f32 %v5427, %v5418
        %v5432 = vsel %vm1613, %v5415, 0
        %v5435 = vsel %vm1613, %v5416, 0
        %v5438 = vsel %vm1617, %v495, 0
        %5440 = vmatprep.subr.mxu0 0.0
        %5441 = vmatpush1.msra.mxu0 %v5438
        %5442 = vmatprep.subr.mxu0 0.0
        %5443 = vmatpush1.msra.mxu0 0.0
        %5444 = vmatprep.subr.mxu0 0.0
        %5445 = vmatpush1.msra.mxu0 0.0
        %5446 = vmatprep.subr.mxu0 0.0
        %5447 = vmatpush1.msra.mxu0 0.0
        %5448 = vmatprep.subr.mxu0 0.0
        %5449 = vmatpush1.msra.mxu0 0.0
        %5450 = vmatprep.subr.mxu0 0.0
        %5451 = vmatpush1.msra.mxu0 0.0
        %5452 = vmatprep.subr.mxu0 0.0
        %5453 = vmatpush1.msra.mxu0 0.0
        %5454 = vmatprep.subr.mxu0 0.0
        %5455 = vmatpush1.msra.mxu0 0.0
        %5456 = vmatprep.subr.mxu0 0.0
        %5457 = vmatpush1.msra.mxu0 0.0
        %5458 = vmatprep.subr.mxu0 0.0
        %5459 = vmatpush1.msra.mxu0 0.0
        %5460 = vmatprep.subr.mxu0 0.0
        %5461 = vmatpush1.msra.mxu0 0.0
        %5462 = vmatprep.subr.mxu0 0.0
        %5463 = vmatpush1.msra.mxu0 0.0
        %5464 = vmatprep.subr.mxu0 0.0
        %5465 = vmatpush1.msra.mxu0 0.0
        %5466 = vmatprep.subr.mxu0 0.0
        %5467 = vmatpush1.msra.mxu0 0.0
        %5468 = vmatprep.subr.mxu0 0.0
        %5469 = vmatpush1.msra.mxu0 0.0
        %5470 = vmatprep.subr.mxu0 0.0
        %5471 = vmatpush1.msra.mxu0 0.0
        %5472 = vmatprep.subr.mxu0 0.0
        %5473 = vmatpush1.msra.mxu0 0.0
        %5474 = vmatprep.subr.mxu0 0.0
        %5475 = vmatpush1.msra.mxu0 0.0
        %5476 = vmatprep.subr.mxu0 0.0
        %5477 = vmatpush1.msra.mxu0 0.0
        %5478 = vmatprep.subr.mxu0 0.0
        %5479 = vmatpush1.msra.mxu0 0.0
        %5480 = vmatprep.subr.mxu0 0.0
        %5481 = vmatpush1.msra.mxu0 0.0
        %5482 = vmatprep.subr.mxu0 0.0
        %5483 = vmatpush1.msra.mxu0 0.0
        %5484 = vmatprep.subr.mxu0 0.0
        %5485 = vmatpush1.msra.mxu0 0.0
        %5486 = vmatprep.subr.mxu0 0.0
        %5487 = vmatpush1.msra.mxu0 0.0
        %5488 = vmatprep.subr.mxu0 0.0
        %5489 = vmatpush1.msra.mxu0 0.0
        %5490 = vmatprep.subr.mxu0 0.0
        %5491 = vmatpush1.msra.mxu0 0.0
        %5492 = vmatprep.subr.mxu0 0.0
        %5493 = vmatpush1.msra.mxu0 0.0
        %5494 = vmatprep.subr.mxu0 0.0
        %5495 = vmatpush1.msra.mxu0 0.0
        %5496 = vmatprep.subr.mxu0 0.0
        %5497 = vmatpush1.msra.mxu0 0.0
        %5498 = vmatprep.subr.mxu0 0.0
        %5499 = vmatpush1.msra.mxu0 0.0
        %5500 = vmatprep.subr.mxu0 0.0
        %5501 = vmatpush1.msra.mxu0 0.0
        %5502 = vmatprep.subr.mxu0 0.0
        %5503 = vmatpush1.msra.mxu0 0.0
        %5504 = vmatprep.mubr.f32.mxu0 0.0
        %5505 = vmatmul.mubr.f32.gmra.mrb[0].mxu0 %v5432
        %v5506 = vpop.f32.mrb[0].mxu0
        %v5507 = vadd.f32 0.0, %v5506
        %v5508 = vpop.f32.mrb[0].mxu0
        %5509 = vmatprep.mubr.f32.mxu0 0.0
        %5510 = vmatmul.mubr.f32.gmra.mrb[0].mxu0 %v5435
        %v5511 = vpop.f32.mrb[0].mxu0
        %v5512 = vadd.f32 0.0, %v5511
        %v5513 = vpop.f32.mrb[0].mxu0
        %5514 = vdwg.mxu0
        %v5515 = vmul.f32 %v5078, %v5507
        %v5516 = vmul.f32 %v5081, %v5512
        %v5518 = vsel %vm1613, %v5429, 0
        %v5521 = vsel %vm1613, %v5430, 0
        %5523 = vmatprep.subr.mxu0 0.0
        %5524 = vmatpush1.msra.mxu0 %v5438
        %5525 = vmatprep.subr.mxu0 0.0
        %5526 = vmatpush1.msra.mxu0 0.0
        %5527 = vmatprep.subr.mxu0 0.0
        %5528 = vmatpush1.msra.mxu0 0.0
        %5529 = vmatprep.subr.mxu0 0.0
        %5530 = vmatpush1.msra.mxu0 0.0
        %5531 = vmatprep.subr.mxu0 0.0
        %5532 = vmatpush1.msra.mxu0 0.0
        %5533 = vmatprep.subr.mxu0 0.0
        %5534 = vmatpush1.msra.mxu0 0.0
        %5535 = vmatprep.subr.mxu0 0.0
        %5536 = vmatpush1.msra.mxu0 0.0
        %5537 = vmatprep.subr.mxu0 0.0
        %5538 = vmatpush1.msra.mxu0 0.0
        %5539 = vmatprep.subr.mxu0 0.0
        %5540 = vmatpush1.msra.mxu0 0.0
        %5541 = vmatprep.subr.mxu0 0.0
        %5542 = vmatpush1.msra.mxu0 0.0
        %5543 = vmatprep.subr.mxu0 0.0
        %5544 = vmatpush1.msra.mxu0 0.0
        %5545 = vmatprep.subr.mxu0 0.0
        %5546 = vmatpush1.msra.mxu0 0.0
        %5547 = vmatprep.subr.mxu0 0.0
        %5548 = vmatpush1.msra.mxu0 0.0
        %5549 = vmatprep.subr.mxu0 0.0
        %5550 = vmatpush1.msra.mxu0 0.0
        %5551 = vmatprep.subr.mxu0 0.0
        %5552 = vmatpush1.msra.mxu0 0.0
        %5553 = vmatprep.subr.mxu0 0.0
        %5554 = vmatpush1.msra.mxu0 0.0
        %5555 = vmatprep.subr.mxu0 0.0
        %5556 = vmatpush1.msra.mxu0 0.0
        %5557 = vmatprep.subr.mxu0 0.0
        %5558 = vmatpush1.msra.mxu0 0.0
        %5559 = vmatprep.subr.mxu0 0.0
        %5560 = vmatpush1.msra.mxu0 0.0
        %5561 = vmatprep.subr.mxu0 0.0
        %5562 = vmatpush1.msra.mxu0 0.0
        %5563 = vmatprep.subr.mxu0 0.0
        %5564 = vmatpush1.msra.mxu0 0.0
        %5565 = vmatprep.subr.mxu0 0.0
        %5566 = vmatpush1.msra.mxu0 0.0
        %5567 = vmatprep.subr.mxu0 0.0
        %5568 = vmatpush1.msra.mxu0 0.0
        %5569 = vmatprep.subr.mxu0 0.0
        %5570 = vmatpush1.msra.mxu0 0.0
        %5571 = vmatprep.subr.mxu0 0.0
        %5572 = vmatpush1.msra.mxu0 0.0
        %5573 = vmatprep.subr.mxu0 0.0
        %5574 = vmatpush1.msra.mxu0 0.0
        %5575 = vmatprep.subr.mxu0 0.0
        %5576 = vmatpush1.msra.mxu0 0.0
        %5577 = vmatprep.subr.mxu0 0.0
        %5578 = vmatpush1.msra.mxu0 0.0
        %5579 = vmatprep.subr.mxu0 0.0
        %5580 = vmatpush1.msra.mxu0 0.0
        %5581 = vmatprep.subr.mxu0 0.0
        %5582 = vmatpush1.msra.mxu0 0.0
        %5583 = vmatprep.subr.mxu0 0.0
        %5584 = vmatpush1.msra.mxu0 0.0
        %5585 = vmatprep.subr.mxu0 0.0
        %5586 = vmatpush1.msra.mxu0 0.0
        %5587 = vmatprep.mubr.f32.mxu0 0.0
        %5588 = vmatmul.mubr.f32.gmra.mrb[0].mxu0 %v5518
        %v5589 = vpop.f32.mrb[0].mxu0
        %v5590 = vadd.f32 0.0, %v5589
        %v5591 = vpop.f32.mrb[0].mxu0
        %5592 = vmatprep.mubr.f32.mxu0 0.0
        %5593 = vmatmul.mubr.f32.gmra.mrb[0].mxu0 %v5521
        %v5594 = vpop.f32.mrb[0].mxu0
        %v5595 = vadd.f32 0.0, %v5594
        %v5596 = vpop.f32.mrb[0].mxu0
        %5597 = vdwg.mxu0
        %v5598 = vadd.f32 %v5515, %v5590
        %v5599 = vadd.f32 %v5516, %v5595
        %vm5600 = vcmp.ge.f32.partialorder %v5598, 0.0
        %vm5601 = vcmp.ge.f32.partialorder %v5599, 0.0
        %v5602 = vmul.f32 %v5598, 0.1
        %v5603 = vmul.f32 %v5599, 0.1
        %v5604 = vsel %vm5600, %v5598, %v5602
        %v5605 = vsel %vm5601, %v5599, %v5603
        %v5606 = vpack.c.bf16 %v5605, %v5604
        %v5607 = vld [vmem:[%s5] sm:$0xff]
        %v5608 = vld [vmem:[%s5 + $0x8] sm:$0xff]
        %v5609 = vld [vmem:[%s5 + $0x10] sm:$0xff]
        %v5610 = vld [vmem:[%s5 + $0x18] sm:$0xff]
        %v5611 = vld [vmem:[%s5 + $0x20] sm:$0xff]
        %v5612 = vld [vmem:[%s5 + $0x28] sm:$0xff]
        %v5613 = vld [vmem:[%s5 + $0x30] sm:$0xff]
        %v5614 = vld [vmem:[%s5 + $0x38] sm:$0xff]
        %v5615 = vld [vmem:[%s5 + $0x40] sm:$0xff]
        %v5616 = vld [vmem:[%s5 + $0x48] sm:$0xff]
        %v5617 = vld [vmem:[%s5 + $0x50] sm:$0xff]
        %v5618 = vld [vmem:[%s5 + $0x58] sm:$0xff]
        %v5619 = vld [vmem:[%s5 + $0x60] sm:$0xff]
        %v5620 = vld [vmem:[%s5 + $0x68] sm:$0xff]
        %v5621 = vld [vmem:[%s5 + $0x70] sm:$0xff]
        %v5622 = vld [vmem:[%s5 + $0x78] sm:$0xff]
        %v5623 = vld [vmem:[%s5 + $0x80] sm:$0xff]
        %v5624 = vld [vmem:[%s5 + $0x88] sm:$0xff]
        %v5625 = vld [vmem:[%s5 + $0x90] sm:$0xff]
        %v5626 = vld [vmem:[%s5 + $0x98] sm:$0xff]
        %v5627 = vld [vmem:[%s5 + $0xa0] sm:$0xff]
        %v5628 = vld [vmem:[%s5 + $0xa8] sm:$0xff]
        %v5629 = vld [vmem:[%s5 + $0xb0] sm:$0xff]
        %v5630 = vld [vmem:[%s5 + $0xb8] sm:$0xff]
        %v5631 = vld [vmem:[%s5 + $0xc0] sm:$0xff]
        %v5632 = vld [vmem:[%s5 + $0xc8] sm:$0xff]
        %v5633 = vld [vmem:[%s5 + $0xd0] sm:$0xff]
        %v5634 = vld [vmem:[%s5 + $0xd8] sm:$0xff]
        %v5635 = vld [vmem:[%s5 + $0xe0] sm:$0xff]
        %v5636 = vld [vmem:[%s5 + $0xe8] sm:$0xff]
        %v5637 = vld [vmem:[%s5 + $0xf0] sm:$0xff]
        %v5638 = vld [vmem:[%s5 + $0xf8] sm:$0xff]
        %v5671 = vunpack.c.l.b16 %v5607
        %v5672 = vunpack.c.h.b16 %v5607
        %v5673 = vunpack.c.l.b16 %v5608
        %v5674 = vunpack.c.h.b16 %v5608
        %v5675 = vunpack.c.l.b16 %v5609
        %v5676 = vunpack.c.h.b16 %v5609
        %v5677 = vunpack.c.l.b16 %v5610
        %v5678 = vunpack.c.h.b16 %v5610
        %v5679 = vunpack.c.l.b16 %v5611
        %v5680 = vunpack.c.h.b16 %v5611
        %v5681 = vunpack.c.l.b16 %v5612
        %v5682 = vunpack.c.h.b16 %v5612
        %v5683 = vunpack.c.l.b16 %v5613
        %v5684 = vunpack.c.h.b16 %v5613
        %v5685 = vunpack.c.l.b16 %v5614
        %v5686 = vunpack.c.h.b16 %v5614
        %v5687 = vunpack.c.l.b16 %v5615
        %v5688 = vunpack.c.h.b16 %v5615
        %v5689 = vunpack.c.l.b16 %v5616
        %v5690 = vunpack.c.h.b16 %v5616
        %v5691 = vunpack.c.l.b16 %v5617
        %v5692 = vunpack.c.h.b16 %v5617
        %v5693 = vunpack.c.l.b16 %v5618
        %v5694 = vunpack.c.h.b16 %v5618
        %v5695 = vunpack.c.l.b16 %v5619
        %v5696 = vunpack.c.h.b16 %v5619
        %v5697 = vunpack.c.l.b16 %v5620
        %v5698 = vunpack.c.h.b16 %v5620
        %v5699 = vunpack.c.l.b16 %v5621
        %v5700 = vunpack.c.h.b16 %v5621
        %v5701 = vunpack.c.l.b16 %v5622
        %v5702 = vunpack.c.h.b16 %v5622
        %v5703 = vunpack.c.l.b16 %v5623
        %v5704 = vunpack.c.h.b16 %v5623
        %v5705 = vunpack.c.l.b16 %v5624
        %v5706 = vunpack.c.h.b16 %v5624
        %v5707 = vunpack.c.l.b16 %v5625
        %v5708 = vunpack.c.h.b16 %v5625
        %v5709 = vunpack.c.l.b16 %v5626
        %v5710 = vunpack.c.h.b16 %v5626
        %v5711 = vunpack.c.l.b16 %v5627
        %v5712 = vunpack.c.h.b16 %v5627
        %v5713 = vunpack.c.l.b16 %v5628
        %v5714 = vunpack.c.h.b16 %v5628
        %v5715 = vunpack.c.l.b16 %v5629
        %v5716 = vunpack.c.h.b16 %v5629
        %v5717 = vunpack.c.l.b16 %v5630
        %v5718 = vunpack.c.h.b16 %v5630
        %v5719 = vunpack.c.l.b16 %v5631
        %v5720 = vunpack.c.h.b16 %v5631
        %v5721 = vunpack.c.l.b16 %v5632
        %v5722 = vunpack.c.h.b16 %v5632
        %v5723 = vunpack.c.l.b16 %v5633
        %v5724 = vunpack.c.h.b16 %v5633
        %v5725 = vunpack.c.l.b16 %v5634
        %v5726 = vunpack.c.h.b16 %v5634
        %v5727 = vunpack.c.l.b16 %v5635
        %v5728 = vunpack.c.h.b16 %v5635
        %v5729 = vunpack.c.l.b16 %v5636
        %v5730 = vunpack.c.h.b16 %v5636
        %v5731 = vunpack.c.l.b16 %v5637
        %v5732 = vunpack.c.h.b16 %v5637
        %v5733 = vunpack.c.l.b16 %v5638
        %v5734 = vunpack.c.h.b16 %v5638
        %v5735 = vpack.c.b16 %v5675, %v5671
        %v5736 = vpack.c.b16 %v5676, %v5672
        %v5737 = vpack.c.b16 %v5677, %v5673
        %v5738 = vpack.c.b16 %v5678, %v5674
        %v5739 = vpack.c.b16 %v5683, %v5679
        %v5740 = vpack.c.b16 %v5684, %v5680
        %v5741 = vpack.c.b16 %v5685, %v5681
        %v5742 = vpack.c.b16 %v5686, %v5682
        %v5743 = vpack.c.b16 %v5691, %v5687
        %v5744 = vpack.c.b16 %v5692, %v5688
        %v5745 = vpack.c.b16 %v5693, %v5689
        %v5746 = vpack.c.b16 %v5694, %v5690
        %v5747 = vpack.c.b16 %v5699, %v5695
        %v5748 = vpack.c.b16 %v5700, %v5696
        %v5749 = vpack.c.b16 %v5701, %v5697
        %v5750 = vpack.c.b16 %v5702, %v5698
        %v5751 = vpack.c.b16 %v5707, %v5703
        %v5752 = vpack.c.b16 %v5708, %v5704
        %v5753 = vpack.c.b16 %v5709, %v5705
        %v5754 = vpack.c.b16 %v5710, %v5706
        %v5755 = vpack.c.b16 %v5715, %v5711
        %v5756 = vpack.c.b16 %v5716, %v5712
        %v5757 = vpack.c.b16 %v5717, %v5713
        %v5758 = vpack.c.b16 %v5718, %v5714
        %v5759 = vpack.c.b16 %v5723, %v5719
        %v5760 = vpack.c.b16 %v5724, %v5720
        %v5761 = vpack.c.b16 %v5725, %v5721
        %v5762 = vpack.c.b16 %v5726, %v5722
        %v5763 = vpack.c.b16 %v5731, %v5727
        %v5764 = vpack.c.b16 %v5732, %v5728
        %v5765 = vpack.c.b16 %v5733, %v5729
        %v5766 = vpack.c.b16 %v5734, %v5730
        %5799 = vmatprep.subr.bf16.mxu0 %v5736
        %5800 = vmatpush1.bf16.msra.mxu0 %v5735
        %5801 = vmatprep.subr.bf16.mxu0 %v5740
        %5802 = vmatpush1.bf16.msra.mxu0 %v5739
        %5803 = vmatprep.subr.bf16.mxu0 %v5744
        %5804 = vmatpush1.bf16.msra.mxu0 %v5743
        %5805 = vmatprep.subr.bf16.mxu0 %v5748
        %5806 = vmatpush1.bf16.msra.mxu0 %v5747
        %5807 = vmatprep.subr.bf16.mxu0 %v5752
        %5808 = vmatpush1.bf16.msra.mxu0 %v5751
        %5809 = vmatprep.subr.bf16.mxu0 %v5756
        %5810 = vmatpush1.bf16.msra.mxu0 %v5755
        %5811 = vmatprep.subr.bf16.mxu0 %v5760
        %5812 = vmatpush1.bf16.msra.mxu0 %v5759
        %5813 = vmatprep.subr.bf16.mxu0 %v5764
        %5814 = vmatpush1.bf16.msra.mxu0 %v5763
        %5815 = vmatprep.subr.bf16.mxu0 0
        %5816 = vmatpush1.bf16.msra.mxu0 0
        %5817 = vmatprep.subr.bf16.mxu0 0
        %5818 = vmatpush1.bf16.msra.mxu0 0
        %5819 = vmatprep.subr.bf16.mxu0 0
        %5820 = vmatpush1.bf16.msra.mxu0 0
        %5821 = vmatprep.subr.bf16.mxu0 0
        %5822 = vmatpush1.bf16.msra.mxu0 0
        %5823 = vmatprep.subr.bf16.mxu0 0
        %5824 = vmatpush1.bf16.msra.mxu0 0
        %5825 = vmatprep.subr.bf16.mxu0 0
        %5826 = vmatpush1.bf16.msra.mxu0 0
        %5827 = vmatprep.subr.bf16.mxu0 0
        %5828 = vmatpush1.bf16.msra.mxu0 0
        %5829 = vmatprep.subr.bf16.mxu0 0
        %5830 = vmatpush1.bf16.msra.mxu0 0
        %5831 = vmatprep.mubr.bf16.mxu0 0
        %5832 = vmatmul.mubr.bf16.gmra.mrb[0].mxu0 %v5606
        %v5833 = vpop.f32.mrb[0].mxu0
        %v5834 = vadd.f32 0.0, %v5833
        %v5835 = vpop.f32.mrb[0].mxu0
        %v5836 = vadd.f32 0.0, %v5835
        %v5837 = vpop.f32.mrb[0].mxu0
        %v5838 = vadd.f32 0.0, %v5837
        %v5839 = vpop.f32.mrb[0].mxu0
        %v5840 = vadd.f32 0.0, %v5839
        %5841 = vdwg.mxu0
        %5842 = vmatprep.subr.bf16.mxu0 %v5738
        %5843 = vmatpush1.bf16.msra.mxu0 %v5737
        %5844 = vmatprep.subr.bf16.mxu0 %v5742
        %5845 = vmatpush1.bf16.msra.mxu0 %v5741
        %5846 = vmatprep.subr.bf16.mxu0 %v5746
        %5847 = vmatpush1.bf16.msra.mxu0 %v5745
        %5848 = vmatprep.subr.bf16.mxu0 %v5750
        %5849 = vmatpush1.bf16.msra.mxu0 %v5749
        %5850 = vmatprep.subr.bf16.mxu0 %v5754
        %5851 = vmatpush1.bf16.msra.mxu0 %v5753
        %5852 = vmatprep.subr.bf16.mxu0 %v5758
        %5853 = vmatpush1.bf16.msra.mxu0 %v5757
        %5854 = vmatprep.subr.bf16.mxu0 %v5762
        %5855 = vmatpush1.bf16.msra.mxu0 %v5761
        %5856 = vmatprep.subr.bf16.mxu0 %v5766
        %5857 = vmatpush1.bf16.msra.mxu0 %v5765
        %5858 = vmatprep.subr.bf16.mxu0 0
        %5859 = vmatpush1.bf16.msra.mxu0 0
        %5860 = vmatprep.subr.bf16.mxu0 0
        %5861 = vmatpush1.bf16.msra.mxu0 0
        %5862 = vmatprep.subr.bf16.mxu0 0
        %5863 = vmatpush1.bf16.msra.mxu0 0
        %5864 = vmatprep.subr.bf16.mxu0 0
        %5865 = vmatpush1.bf16.msra.mxu0 0
        %5866 = vmatprep.subr.bf16.mxu0 0
        %5867 = vmatpush1.bf16.msra.mxu0 0
        %5868 = vmatprep.subr.bf16.mxu0 0
        %5869 = vmatpush1.bf16.msra.mxu0 0
        %5870 = vmatprep.subr.bf16.mxu0 0
        %5871 = vmatpush1.bf16.msra.mxu0 0
        %5872 = vmatprep.subr.bf16.mxu0 0
        %5873 = vmatpush1.bf16.msra.mxu0 0
        %5874 = vmatprep.mubr.bf16.mxu0 0
        %5875 = vmatmul.mubr.bf16.gmra.mrb[0].mxu0 %v5606
        %v5876 = vpop.f32.mrb[0].mxu0
        %v5877 = vadd.f32 0.0, %v5876
        %v5878 = vpop.f32.mrb[0].mxu0
        %v5879 = vadd.f32 0.0, %v5878
        %v5880 = vpop.f32.mrb[0].mxu0
        %v5881 = vadd.f32 0.0, %v5880
        %v5882 = vpop.f32.mrb[0].mxu0
        %v5883 = vadd.f32 0.0, %v5882
        %5884 = vdwg.mxu0
        %5885 = vrot.lane.b32.xlu0 %v5834, 17
        %v5886 = vpop.permute.xlu0 %5885
        %5887 = vrot.lane.b32.xlu0 %v5838, 17
        %v5888 = vpop.permute.xlu0 %5887
        %5889 = vrot.lane.b32.xlu0 %v1929, 17
        %v5890 = vpop.permute.xlu0 %5889
        %5891 = vrot.lane.b32.xlu0 %v5836, 17
        %v5892 = vpop.permute.xlu0 %5891
        %5893 = vrot.lane.b32.xlu0 %v5840, 17
        %v5894 = vpop.permute.xlu0 %5893
        %5895 = vrot.lane.b32.xlu0 %v1930, 17
        %v5896 = vpop.permute.xlu0 %5895
        %5897 = vrot.lane.b32.xlu0 %v5877, 17
        %v5898 = vpop.permute.xlu0 %5897
        %5899 = vrot.lane.b32.xlu0 %v5881, 17
        %v5900 = vpop.permute.xlu0 %5899
        %5901 = vrot.lane.b32.xlu0 %v1931, 17
        %v5902 = vpop.permute.xlu0 %5901
        %5903 = vrot.lane.b32.xlu0 %v5879, 17
        %v5904 = vpop.permute.xlu0 %5903
        %5905 = vrot.lane.b32.xlu0 %v5883, 17
        %v5906 = vpop.permute.xlu0 %5905
        %5907 = vrot.lane.b32.xlu0 %v1932, 17
        %v5908 = vpop.permute.xlu0 %5907
        %v5909 = vsel %vm518, %v5898, %v5904
        %v5910 = vsel %vm518, %v5900, %v5906
        %v5911 = vsel %vm518, %v5902, %v5908
        %v5912 = vsel %vm518, %v5892, %v5898
        %v5913 = vsel %vm518, %v5894, %v5900
        %v5914 = vsel %vm518, %v5896, %v5902
        %v5915 = vsel %vm518, %v5886, %v5892
        %v5916 = vsel %vm518, %v5888, %v5894
        %v5917 = vsel %vm518, %v5890, %v5896
        %v5918 = vsel %vm518, %v5904, %v5886
        %v5919 = vsel %vm518, %v5906, %v5888
        %v5920 = vsel %vm518, %v5908, %v5890
        %v5921 = vmul.f32 %v5918, %v526
        %v5922 = vmul.f32 %v5915, %v530
        %v5923 = vmul.f32 %v5912, %v534
        %v5924 = vmul.f32 %v5909, %v538
        %v5925 = vmul.f32 %v5919, %v526
        %v5926 = vmul.f32 %v5916, %v530
        %v5927 = vmul.f32 %v5913, %v534
        %v5928 = vmul.f32 %v5910, %v538
        %v5929 = vmul.f32 %v5920, %v526
        %v5930 = vmul.f32 %v5917, %v530
        %v5931 = vmul.f32 %v5914, %v534
        %v5932 = vmul.f32 %v5911, %v538
        %5933 = vrot.lane.b32.xlu0 %v5834, 16
        %v5934 = vpop.permute.xlu0 %5933
        %5935 = vrot.lane.b32.xlu0 %v5838, 16
        %v5936 = vpop.permute.xlu0 %5935
        %5937 = vrot.lane.b32.xlu0 %v1929, 16
        %v5938 = vpop.permute.xlu0 %5937
        %5939 = vrot.lane.b32.xlu0 %v5836, 16
        %v5940 = vpop.permute.xlu0 %5939
        %5941 = vrot.lane.b32.xlu0 %v5840, 16
        %v5942 = vpop.permute.xlu0 %5941
        %5943 = vrot.lane.b32.xlu0 %v1930, 16
        %v5944 = vpop.permute.xlu0 %5943
        %5945 = vrot.lane.b32.xlu0 %v5877, 16
        %v5946 = vpop.permute.xlu0 %5945
        %5947 = vrot.lane.b32.xlu0 %v5881, 16
        %v5948 = vpop.permute.xlu0 %5947
        %5949 = vrot.lane.b32.xlu0 %v1931, 16
        %v5950 = vpop.permute.xlu0 %5949
        %5951 = vrot.lane.b32.xlu0 %v5879, 16
        %v5952 = vpop.permute.xlu0 %5951
        %5953 = vrot.lane.b32.xlu0 %v5883, 16
        %v5954 = vpop.permute.xlu0 %5953
        %5955 = vrot.lane.b32.xlu0 %v1932, 16
        %v5956 = vpop.permute.xlu0 %5955
        %v5957 = vsel %vm551, %v5946, %v5952
        %v5958 = vsel %vm551, %v5948, %v5954
        %v5959 = vsel %vm551, %v5950, %v5956
        %v5960 = vsel %vm551, %v5940, %v5946
        %v5961 = vsel %vm551, %v5942, %v5948
        %v5962 = vsel %vm551, %v5944, %v5950
        %v5963 = vsel %vm551, %v5934, %v5940
        %v5964 = vsel %vm551, %v5936, %v5942
        %v5965 = vsel %vm551, %v5938, %v5944
        %v5966 = vsel %vm551, %v5952, %v5934
        %v5967 = vsel %vm551, %v5954, %v5936
        %v5968 = vsel %vm551, %v5956, %v5938
        %v5969 = vmul.f32 %v5966, %v559
        %v5970 = vmul.f32 %v5963, %v563
        %v5971 = vmul.f32 %v5960, %v567
        %v5972 = vmul.f32 %v5957, %v571
        %v5973 = vmul.f32 %v5967, %v559
        %v5974 = vmul.f32 %v5964, %v563
        %v5975 = vmul.f32 %v5961, %v567
        %v5976 = vmul.f32 %v5958, %v571
        %v5977 = vmul.f32 %v5968, %v559
        %v5978 = vmul.f32 %v5965, %v563
        %v5979 = vmul.f32 %v5962, %v567
        %v5980 = vmul.f32 %v5959, %v571
        %5981 = vrot.lane.b32.xlu0 %v5834, 15
        %v5982 = vpop.permute.xlu0 %5981
        %5983 = vrot.lane.b32.xlu0 %v5838, 15
        %v5984 = vpop.permute.xlu0 %5983
        %5985 = vrot.lane.b32.xlu0 %v1929, 15
        %v5986 = vpop.permute.xlu0 %5985
        %5987 = vrot.lane.b32.xlu0 %v5836, 15
        %v5988 = vpop.permute.xlu0 %5987
        %5989 = vrot.lane.b32.xlu0 %v5840, 15
        %v5990 = vpop.permute.xlu0 %5989
        %5991 = vrot.lane.b32.xlu0 %v1930, 15
        %v5992 = vpop.permute.xlu0 %5991
        %5993 = vrot.lane.b32.xlu0 %v5877, 15
        %v5994 = vpop.permute.xlu0 %5993
        %5995 = vrot.lane.b32.xlu0 %v5881, 15
        %v5996 = vpop.permute.xlu0 %5995
        %5997 = vrot.lane.b32.xlu0 %v1931, 15
        %v5998 = vpop.permute.xlu0 %5997
        %5999 = vrot.lane.b32.xlu0 %v5879, 15
        %v6000 = vpop.permute.xlu0 %5999
        %6001 = vrot.lane.b32.xlu0 %v5883, 15
        %v6002 = vpop.permute.xlu0 %6001
        %6003 = vrot.lane.b32.xlu0 %v1932, 15
        %v6004 = vpop.permute.xlu0 %6003
        %v6005 = vsel %vm584, %v5994, %v6000
        %v6006 = vsel %vm584, %v5996, %v6002
        %v6007 = vsel %vm584, %v5998, %v6004
        %v6008 = vsel %vm584, %v5988, %v5994
        %v6009 = vsel %vm584, %v5990, %v5996
        %v6010 = vsel %vm584, %v5992, %v5998
        %v6011 = vsel %vm584, %v5982, %v5988
        %v6012 = vsel %vm584, %v5984, %v5990
        %v6013 = vsel %vm584, %v5986, %v5992
        %v6014 = vsel %vm584, %v6000, %v5982
        %v6015 = vsel %vm584, %v6002, %v5984
        %v6016 = vsel %vm584, %v6004, %v5986
        %v6017 = vmul.f32 %v6014, %v592
        %v6018 = vmul.f32 %v6011, %v596
        %v6019 = vmul.f32 %v6008, %v600
        %v6020 = vmul.f32 %v6005, %v604
        %v6021 = vmul.f32 %v6015, %v592
        %v6022 = vmul.f32 %v6012, %v596
        %v6023 = vmul.f32 %v6009, %v600
        %v6024 = vmul.f32 %v6006, %v604
        %v6025 = vmul.f32 %v6016, %v592
        %v6026 = vmul.f32 %v6013, %v596
        %v6027 = vmul.f32 %v6010, %v600
        %v6028 = vmul.f32 %v6007, %v604
        %6029 = vrot.lane.b32.xlu0 %v5834, 1
        %v6030 = vpop.permute.xlu0 %6029
        %6031 = vrot.lane.b32.xlu0 %v5838, 1
        %v6032 = vpop.permute.xlu0 %6031
        %6033 = vrot.lane.b32.xlu0 %v1929, 1
        %v6034 = vpop.permute.xlu0 %6033
        %6035 = vrot.lane.b32.xlu0 %v5836, 1
        %v6036 = vpop.permute.xlu0 %6035
        %6037 = vrot.lane.b32.xlu0 %v5840, 1
        %v6038 = vpop.permute.xlu0 %6037
        %6039 = vrot.lane.b32.xlu0 %v1930, 1
        %v6040 = vpop.permute.xlu0 %6039
        %6041 = vrot.lane.b32.xlu0 %v5877, 1
        %v6042 = vpop.permute.xlu0 %6041
        %6043 = vrot.lane.b32.xlu0 %v5881, 1
        %v6044 = vpop.permute.xlu0 %6043
        %6045 = vrot.lane.b32.xlu0 %v1931, 1
        %v6046 = vpop.permute.xlu0 %6045
        %6047 = vrot.lane.b32.xlu0 %v5879, 1
        %v6048 = vpop.permute.xlu0 %6047
        %6049 = vrot.lane.b32.xlu0 %v5883, 1
        %v6050 = vpop.permute.xlu0 %6049
        %6051 = vrot.lane.b32.xlu0 %v1932, 1
        %v6052 = vpop.permute.xlu0 %6051
        %v6053 = vsel %vm617, %v6042, %v6048
        %v6054 = vsel %vm617, %v6044, %v6050
        %v6055 = vsel %vm617, %v6046, %v6052
        %v6056 = vsel %vm617, %v6036, %v6042
        %v6057 = vsel %vm617, %v6038, %v6044
        %v6058 = vsel %vm617, %v6040, %v6046
        %v6059 = vsel %vm617, %v6030, %v6036
        %v6060 = vsel %vm617, %v6032, %v6038
        %v6061 = vsel %vm617, %v6034, %v6040
        %v6062 = vsel %vm617, %v6048, %v6030
        %v6063 = vsel %vm617, %v6050, %v6032
        %v6064 = vsel %vm617, %v6052, %v6034
        %v6065 = vmul.f32 %v6062, %v625
        %v6066 = vmul.f32 %v6059, %v629
        %v6067 = vmul.f32 %v6056, %v633
        %v6068 = vmul.f32 %v6053, %v637
        %v6069 = vmul.f32 %v6063, %v625
        %v6070 = vmul.f32 %v6060, %v629
        %v6071 = vmul.f32 %v6057, %v633
        %v6072 = vmul.f32 %v6054, %v637
        %v6073 = vmul.f32 %v6064, %v625
        %v6074 = vmul.f32 %v6061, %v629
        %v6075 = vmul.f32 %v6058, %v633
        %v6076 = vmul.f32 %v6055, %v637
        %6077 = vrot.lane.b32.xlu0 %v5834, 127
        %v6078 = vpop.permute.xlu0 %6077
        %6079 = vrot.lane.b32.xlu0 %v5838, 127
        %v6080 = vpop.permute.xlu0 %6079
        %6081 = vrot.lane.b32.xlu0 %v5836, 127
        %v6082 = vpop.permute.xlu0 %6081
        %6083 = vrot.lane.b32.xlu0 %v5840, 127
        %v6084 = vpop.permute.xlu0 %6083
        %6085 = vrot.lane.b32.xlu0 %v5877, 127
        %v6086 = vpop.permute.xlu0 %6085
        %6087 = vrot.lane.b32.xlu0 %v5881, 127
        %v6088 = vpop.permute.xlu0 %6087
        %6089 = vrot.lane.b32.xlu0 %v5879, 127
        %v6090 = vpop.permute.xlu0 %6089
        %6091 = vrot.lane.b32.xlu0 %v5883, 127
        %v6092 = vpop.permute.xlu0 %6091
        %v6093 = vsel %vm650, %v6086, %v6090
        %v6094 = vsel %vm650, %v6088, %v6092
        %v6095 = vsel %vm650, %v6082, %v6086
        %v6096 = vsel %vm650, %v6084, %v6088
        %v6097 = vsel %vm650, %v6078, %v6082
        %v6098 = vsel %vm650, %v6080, %v6084
        %v6099 = vsel %vm650, %v6090, %v6078
        %v6100 = vsel %vm650, %v6092, %v6080
        %v6101 = vmul.f32 %v6097, %v658
        %v6102 = vmul.f32 %v6095, %v662
        %v6103 = vmul.f32 %v6093, %v666
        %v6104 = vmul.f32 %v6099, %v670
        %v6105 = vmul.f32 %v6098, %v658
        %v6106 = vmul.f32 %v6096, %v662
        %v6107 = vmul.f32 %v6094, %v666
        %v6108 = vmul.f32 %v6100, %v670
        %v6109 = vmul.f32 %v1943, %v658
        %v6110 = vmul.f32 %v1942, %v662
        %v6111 = vmul.f32 %v1941, %v666
        %v6112 = vmul.f32 %v1944, %v670
        %6113 = vrot.lane.b32.xlu0 %v5834, 113
        %v6114 = vpop.permute.xlu0 %6113
        %6115 = vrot.lane.b32.xlu0 %v5838, 113
        %v6116 = vpop.permute.xlu0 %6115
        %6117 = vrot.lane.b32.xlu0 %v1929, 113
        %v6118 = vpop.permute.xlu0 %6117
        %6119 = vrot.lane.b32.xlu0 %v5836, 113
        %v6120 = vpop.permute.xlu0 %6119
        %6121 = vrot.lane.b32.xlu0 %v5840, 113
        %v6122 = vpop.permute.xlu0 %6121
        %6123 = vrot.lane.b32.xlu0 %v1930, 113
        %v6124 = vpop.permute.xlu0 %6123
        %6125 = vrot.lane.b32.xlu0 %v5877, 113
        %v6126 = vpop.permute.xlu0 %6125
        %6127 = vrot.lane.b32.xlu0 %v5881, 113
        %v6128 = vpop.permute.xlu0 %6127
        %6129 = vrot.lane.b32.xlu0 %v1931, 113
        %v6130 = vpop.permute.xlu0 %6129
        %6131 = vrot.lane.b32.xlu0 %v5879, 113
        %v6132 = vpop.permute.xlu0 %6131
        %6133 = vrot.lane.b32.xlu0 %v5883, 113
        %v6134 = vpop.permute.xlu0 %6133
        %6135 = vrot.lane.b32.xlu0 %v1932, 113
        %v6136 = vpop.permute.xlu0 %6135
        %v6137 = vsel %vm683, %v6126, %v6132
        %v6138 = vsel %vm683, %v6128, %v6134
        %v6139 = vsel %vm683, %v6130, %v6136
        %v6140 = vsel %vm683, %v6120, %v6126
        %v6141 = vsel %vm683, %v6122, %v6128
        %v6142 = vsel %vm683, %v6124, %v6130
        %v6143 = vsel %vm683, %v6114, %v6120
        %v6144 = vsel %vm683, %v6116, %v6122
        %v6145 = vsel %vm683, %v6118, %v6124
        %v6146 = vsel %vm683, %v6132, %v6114
        %v6147 = vsel %vm683, %v6134, %v6116
        %v6148 = vsel %vm683, %v6136, %v6118
        %v6149 = vmul.f32 %v6143, %v691
        %v6150 = vmul.f32 %v6140, %v695
        %v6151 = vmul.f32 %v6137, %v699
        %v6152 = vmul.f32 %v6146, %v703
        %v6153 = vmul.f32 %v6144, %v691
        %v6154 = vmul.f32 %v6141, %v695
        %v6155 = vmul.f32 %v6138, %v699
        %v6156 = vmul.f32 %v6147, %v703
        %v6157 = vmul.f32 %v6145, %v691
        %v6158 = vmul.f32 %v6142, %v695
        %v6159 = vmul.f32 %v6139, %v699
        %v6160 = vmul.f32 %v6148, %v703
        %6161 = vrot.lane.b32.xlu0 %v5834, 112
        %v6162 = vpop.permute.xlu0 %6161
        %6163 = vrot.lane.b32.xlu0 %v5838, 112
        %v6164 = vpop.permute.xlu0 %6163
        %6165 = vrot.lane.b32.xlu0 %v5836, 112
        %v6166 = vpop.permute.xlu0 %6165
        %6167 = vrot.lane.b32.xlu0 %v5840, 112
        %v6168 = vpop.permute.xlu0 %6167
        %6169 = vrot.lane.b32.xlu0 %v5877, 112
        %v6170 = vpop.permute.xlu0 %6169
        %6171 = vrot.lane.b32.xlu0 %v5881, 112
        %v6172 = vpop.permute.xlu0 %6171
        %6173 = vrot.lane.b32.xlu0 %v5879, 112
        %v6174 = vpop.permute.xlu0 %6173
        %6175 = vrot.lane.b32.xlu0 %v5883, 112
        %v6176 = vpop.permute.xlu0 %6175
        %v6177 = vsel %vm716, %v6170, %v6174
        %v6178 = vsel %vm716, %v6172, %v6176
        %v6179 = vsel %vm716, %v6166, %v6170
        %v6180 = vsel %vm716, %v6168, %v6172
        %v6181 = vsel %vm716, %v6162, %v6166
        %v6182 = vsel %vm716, %v6164, %v6168
        %v6183 = vsel %vm716, %v6174, %v6162
        %v6184 = vsel %vm716, %v6176, %v6164
        %v6185 = vmul.f32 %v6181, %v724
        %v6186 = vmul.f32 %v6179, %v728
        %v6187 = vmul.f32 %v6177, %v732
        %v6188 = vmul.f32 %v6183, %v736
        %v6189 = vmul.f32 %v6182, %v724
        %v6190 = vmul.f32 %v6180, %v728
        %v6191 = vmul.f32 %v6178, %v732
        %v6192 = vmul.f32 %v6184, %v736
        %v6193 = vmul.f32 %v1959, %v724
        %v6194 = vmul.f32 %v1958, %v728
        %v6195 = vmul.f32 %v1957, %v732
        %v6196 = vmul.f32 %v1960, %v736
        %6197 = vrot.lane.b32.xlu0 %v5834, 111
        %v6198 = vpop.permute.xlu0 %6197
        %6199 = vrot.lane.b32.xlu0 %v5838, 111
        %v6200 = vpop.permute.xlu0 %6199
        %6201 = vrot.lane.b32.xlu0 %v5836, 111
        %v6202 = vpop.permute.xlu0 %6201
        %6203 = vrot.lane.b32.xlu0 %v5840, 111
        %v6204 = vpop.permute.xlu0 %6203
        %6205 = vrot.lane.b32.xlu0 %v5877, 111
        %v6206 = vpop.permute.xlu0 %6205
        %6207 = vrot.lane.b32.xlu0 %v5881, 111
        %v6208 = vpop.permute.xlu0 %6207
        %6209 = vrot.lane.b32.xlu0 %v5879, 111
        %v6210 = vpop.permute.xlu0 %6209
        %6211 = vrot.lane.b32.xlu0 %v5883, 111
        %v6212 = vpop.permute.xlu0 %6211
        %v6213 = vsel %vm749, %v6206, %v6210
        %v6214 = vsel %vm749, %v6208, %v6212
        %v6215 = vsel %vm749, %v6202, %v6206
        %v6216 = vsel %vm749, %v6204, %v6208
        %v6217 = vsel %vm749, %v6198, %v6202
        %v6218 = vsel %vm749, %v6200, %v6204
        %v6219 = vsel %vm749, %v6210, %v6198
        %v6220 = vsel %vm749, %v6212, %v6200
        %v6221 = vmul.f32 %v6217, %v757
        %v6222 = vmul.f32 %v6215, %v761
        %v6223 = vmul.f32 %v6213, %v765
        %v6224 = vmul.f32 %v6219, %v769
        %v6225 = vmul.f32 %v6218, %v757
        %v6226 = vmul.f32 %v6216, %v761
        %v6227 = vmul.f32 %v6214, %v765
        %v6228 = vmul.f32 %v6220, %v769
        %v6229 = vmul.f32 %v1971, %v757
        %v6230 = vmul.f32 %v1970, %v761
        %v6231 = vmul.f32 %v1969, %v765
        %v6232 = vmul.f32 %v1972, %v769
        %v6233 = vpack.c.bf16 %v5925, %v5921
        %v6234 = vpack.c.bf16 %v5926, %v5922
        %v6235 = vpack.c.bf16 %v5927, %v5923
        %v6236 = vpack.c.bf16 %v5928, %v5924
        %v6237 = vpack.c.bf16 %v5969, %v5929
        %v6238 = vpack.c.bf16 %v5970, %v5930
        %v6239 = vpack.c.bf16 %v5971, %v5931
        %v6240 = vpack.c.bf16 %v5972, %v5932
        %v6241 = vpack.c.bf16 %v5977, %v5973
        %v6242 = vpack.c.bf16 %v5978, %v5974
        %v6243 = vpack.c.bf16 %v5979, %v5975
        %v6244 = vpack.c.bf16 %v5980, %v5976
        %v6245 = vpack.c.bf16 %v6021, %v6017
        %v6246 = vpack.c.bf16 %v6022, %v6018
        %v6247 = vpack.c.bf16 %v6023, %v6019
        %v6248 = vpack.c.bf16 %v6024, %v6020
        %v6249 = vpack.c.bf16 %v6065, %v6025
        %v6250 = vpack.c.bf16 %v6066, %v6026
        %v6251 = vpack.c.bf16 %v6067, %v6027
        %v6252 = vpack.c.bf16 %v6068, %v6028
        %v6253 = vpack.c.bf16 %v6073, %v6069
        %v6254 = vpack.c.bf16 %v6074, %v6070
        %v6255 = vpack.c.bf16 %v6075, %v6071
        %v6256 = vpack.c.bf16 %v6076, %v6072
        %v6257 = vpack.c.bf16 %v5838, %v5834
        %v6258 = vpack.c.bf16 %v5840, %v5836
        %v6259 = vpack.c.bf16 %v5881, %v5877
        %v6260 = vpack.c.bf16 %v5883, %v5879
        %v6261 = vpack.c.bf16 %v6101, %v1929
        %v6262 = vpack.c.bf16 %v6102, %v1930
        %v6263 = vpack.c.bf16 %v6103, %v1931
        %v6264 = vpack.c.bf16 %v6104, %v1932
        %v6265 = vpack.c.bf16 %v6109, %v6105
        %v6266 = vpack.c.bf16 %v6110, %v6106
        %v6267 = vpack.c.bf16 %v6111, %v6107
        %v6268 = vpack.c.bf16 %v6112, %v6108
        %v6269 = vpack.c.bf16 %v6153, %v6149
        %v6270 = vpack.c.bf16 %v6154, %v6150
        %v6271 = vpack.c.bf16 %v6155, %v6151
        %v6272 = vpack.c.bf16 %v6156, %v6152
        %v6273 = vpack.c.bf16 %v6185, %v6157
        %v6274 = vpack.c.bf16 %v6186, %v6158
        %v6275 = vpack.c.bf16 %v6187, %v6159
        %v6276 = vpack.c.bf16 %v6188, %v6160
        %v6277 = vpack.c.bf16 %v6193, %v6189
        %v6278 = vpack.c.bf16 %v6194, %v6190
        %v6279 = vpack.c.bf16 %v6195, %v6191
        %v6280 = vpack.c.bf16 %v6196, %v6192
        %v6281 = vpack.c.bf16 %v6225, %v6221
        %v6282 = vpack.c.bf16 %v6226, %v6222
        %v6283 = vpack.c.bf16 %v6227, %v6223
        %v6284 = vpack.c.bf16 %v6228, %v6224
        %v6285 = vpack.c.bf16 %v6229, %v6229
        %v6286 = vpack.c.bf16 %v6230, %v6230
        %v6287 = vpack.c.bf16 %v6231, %v6231
        %v6288 = vpack.c.bf16 %v6232, %v6232
        %6290 = vset.pattern.permute.xlu0 0
        %6291 = vperm.xlu0 %6290, %v407
        %v6292 = vpop.permute.xlu0 %6291
        %v6295 = vunpack.c.l.b16 %v395
        %v6296 = vunpack.c.h.b16 %v395
        %v6297 = vpack.c.b16 %v6295, %v6295
        %v6298 = vpack.c.b16 %v6296, %v6296
        %vm6300 = vcmask 719872
        %v6302 = vsel %vm6300, %v6298, 0
        %v6305 = vsel %vm803, %v6285, 0
        %v6308 = vsel %vm803, %v6286, 0
        %v6311 = vsel %vm803, %v6287, 0
        %v6314 = vsel %vm803, %v6288, 0
        %6316 = vmatprep.subr.bf16.mxu0 %v6234
        %6317 = vmatpush1.bf16.msra.mxu0 %v6233
        %6318 = vmatprep.subr.bf16.mxu0 %v6238
        %6319 = vmatpush1.bf16.msra.mxu0 %v6237
        %6320 = vmatprep.subr.bf16.mxu0 %v6242
        %6321 = vmatpush1.bf16.msra.mxu0 %v6241
        %6322 = vmatprep.subr.bf16.mxu0 %v6246
        %6323 = vmatpush1.bf16.msra.mxu0 %v6245
        %6324 = vmatprep.subr.bf16.mxu0 %v6250
        %6325 = vmatpush1.bf16.msra.mxu0 %v6249
        %6326 = vmatprep.subr.bf16.mxu0 %v6254
        %6327 = vmatpush1.bf16.msra.mxu0 %v6253
        %6328 = vmatprep.subr.bf16.mxu0 %v6258
        %6329 = vmatpush1.bf16.msra.mxu0 %v6257
        %6330 = vmatprep.subr.bf16.mxu0 %v6262
        %6331 = vmatpush1.bf16.msra.mxu0 %v6261
        %6332 = vmatprep.subr.bf16.mxu0 %v6266
        %6333 = vmatpush1.bf16.msra.mxu0 %v6265
        %6334 = vmatprep.subr.bf16.mxu0 %v6270
        %6335 = vmatpush1.bf16.msra.mxu0 %v6269
        %6336 = vmatprep.subr.bf16.mxu0 %v6274
        %6337 = vmatpush1.bf16.msra.mxu0 %v6273
        %6338 = vmatprep.subr.bf16.mxu0 %v6278
        %6339 = vmatpush1.bf16.msra.mxu0 %v6277
        %6340 = vmatprep.subr.bf16.mxu0 %v6282
        %6341 = vmatpush1.bf16.msra.mxu0 %v6281
        %6342 = vmatprep.subr.bf16.mxu0 %v6308
        %6343 = vmatpush1.bf16.msra.mxu0 %v6305
        %6344 = vmatprep.subr.bf16.mxu0 0
        %6345 = vmatpush1.bf16.msra.mxu0 0
        %6346 = vmatprep.subr.bf16.mxu0 0
        %6347 = vmatpush1.bf16.msra.mxu0 0
        %6348 = vmatprep.mubr.bf16.mxu0 %v6302
        %6349 = vmatmul.mubr.bf16.gmra.mrb[0].mxu0 %v6297
        %v6350 = vpop.f32.mrb[0].mxu0
        %v6351 = vadd.f32 %v6292, %v6350
        %v6352 = vpop.f32.mrb[0].mxu0
        %v6353 = vadd.f32 %v6292, %v6352
        %v6354 = vpop.f32.mrb[0].mxu0
        %v6355 = vpop.f32.mrb[0].mxu0
        %6356 = vdwg.mxu0
        %6357 = vmatprep.subr.bf16.mxu0 %v6236
        %6358 = vmatpush1.bf16.msra.mxu0 %v6235
        %6359 = vmatprep.subr.bf16.mxu0 %v6240
        %6360 = vmatpush1.bf16.msra.mxu0 %v6239
        %6361 = vmatprep.subr.bf16.mxu0 %v6244
        %6362 = vmatpush1.bf16.msra.mxu0 %v6243
        %6363 = vmatprep.subr.bf16.mxu0 %v6248
        %6364 = vmatpush1.bf16.msra.mxu0 %v6247
        %6365 = vmatprep.subr.bf16.mxu0 %v6252
        %6366 = vmatpush1.bf16.msra.mxu0 %v6251
        %6367 = vmatprep.subr.bf16.mxu0 %v6256
        %6368 = vmatpush1.bf16.msra.mxu0 %v6255
        %6369 = vmatprep.subr.bf16.mxu0 %v6260
        %6370 = vmatpush1.bf16.msra.mxu0 %v6259
        %6371 = vmatprep.subr.bf16.mxu0 %v6264
        %6372 = vmatpush1.bf16.msra.mxu0 %v6263
        %6373 = vmatprep.subr.bf16.mxu0 %v6268
        %6374 = vmatpush1.bf16.msra.mxu0 %v6267
        %6375 = vmatprep.subr.bf16.mxu0 %v6272
        %6376 = vmatpush1.bf16.msra.mxu0 %v6271
        %6377 = vmatprep.subr.bf16.mxu0 %v6276
        %6378 = vmatpush1.bf16.msra.mxu0 %v6275
        %6379 = vmatprep.subr.bf16.mxu0 %v6280
        %6380 = vmatpush1.bf16.msra.mxu0 %v6279
        %6381 = vmatprep.subr.bf16.mxu0 %v6284
        %6382 = vmatpush1.bf16.msra.mxu0 %v6283
        %6383 = vmatprep.subr.bf16.mxu0 %v6314
        %6384 = vmatpush1.bf16.msra.mxu0 %v6311
        %6385 = vmatprep.subr.bf16.mxu0 0
        %6386 = vmatpush1.bf16.msra.mxu0 0
        %6387 = vmatprep.subr.bf16.mxu0 0
        %6388 = vmatpush1.bf16.msra.mxu0 0
        %6389 = vmatprep.mubr.bf16.mxu0 %v6302
        %6390 = vmatmul.mubr.bf16.gmra.mrb[0].mxu0 %v6297
        %v6391 = vpop.f32.mrb[0].mxu0
        %v6392 = vadd.f32 %v6292, %v6391
        %v6393 = vpop.f32.mrb[0].mxu0
        %v6394 = vadd.f32 %v6292, %v6393
        %v6395 = vpop.f32.mrb[0].mxu0
        %v6396 = vpop.f32.mrb[0].mxu0
        %6397 = vdwg.mxu0
        %6398 = vmatprep.subr.mxu0 0.0
        %6399 = vmatpush1.msra.mxu0 %v414
        %6400 = vmatprep.subr.mxu0 0.0
        %6401 = vmatpush1.msra.mxu0 %v415
        %6402 = vmatprep.subr.mxu0 0.0
        %6403 = vmatpush1.msra.mxu0 %v416
        %6404 = vmatprep.subr.mxu0 0.0
        %6405 = vmatpush1.msra.mxu0 %v417
        %6406 = vmatprep.subr.mxu0 0.0
        %6407 = vmatpush1.msra.mxu0 %v418
        %6408 = vmatprep.subr.mxu0 0.0
        %6409 = vmatpush1.msra.mxu0 %v419
        %6410 = vmatprep.subr.mxu0 0.0
        %6411 = vmatpush1.msra.mxu0 %v420
        %6412 = vmatprep.subr.mxu0 0.0
        %6413 = vmatpush1.msra.mxu0 %v421
        %6414 = vmatprep.subr.mxu0 0.0
        %6415 = vmatpush1.msra.mxu0 %v422
        %6416 = vmatprep.subr.mxu0 0.0
        %6417 = vmatpush1.msra.mxu0 %v423
        %6418 = vmatprep.subr.mxu0 0.0
        %6419 = vmatpush1.msra.mxu0 %v424
        %6420 = vmatprep.subr.mxu0 0.0
        %6421 = vmatpush1.msra.mxu0 %v425
        %6422 = vmatprep.subr.mxu0 0.0
        %6423 = vmatpush1.msra.mxu0 %v426
        %6424 = vmatprep.subr.mxu0 0.0
        %6425 = vmatpush1.msra.mxu0 %v427
        %6426 = vmatprep.subr.mxu0 0.0
        %6427 = vmatpush1.msra.mxu0 %v428
        %6428 = vmatprep.subr.mxu0 0.0
        %6429 = vmatpush1.msra.mxu0 %v429
        %6430 = vmatprep.subr.mxu0 0.0
        %6431 = vmatpush1.msra.mxu0 %v430
        %6432 = vmatprep.subr.mxu0 0.0
        %6433 = vmatpush1.msra.mxu0 %v431
        %6434 = vmatprep.subr.mxu0 0.0
        %6435 = vmatpush1.msra.mxu0 %v432
        %6436 = vmatprep.subr.mxu0 0.0
        %6437 = vmatpush1.msra.mxu0 %v433
        %6438 = vmatprep.subr.mxu0 0.0
        %6439 = vmatpush1.msra.mxu0 %v434
        %6440 = vmatprep.subr.mxu0 0.0
        %6441 = vmatpush1.msra.mxu0 %v435
        %6442 = vmatprep.subr.mxu0 0.0
        %6443 = vmatpush1.msra.mxu0 %v436
        %6444 = vmatprep.subr.mxu0 0.0
        %6445 = vmatpush1.msra.mxu0 %v437
        %6446 = vmatprep.subr.mxu0 0.0
        %6447 = vmatpush1.msra.mxu0 %v438
        %6448 = vmatprep.subr.mxu0 0.0
        %6449 = vmatpush1.msra.mxu0 %v439
        %6450 = vmatprep.subr.mxu0 0.0
        %6451 = vmatpush1.msra.mxu0 %v440
        %6452 = vmatprep.subr.mxu0 0.0
        %6453 = vmatpush1.msra.mxu0 %v441
        %6454 = vmatprep.subr.mxu0 0.0
        %6455 = vmatpush1.msra.mxu0 %v442
        %6456 = vmatprep.subr.mxu0 0.0
        %6457 = vmatpush1.msra.mxu0 %v443
        %6458 = vmatprep.subr.mxu0 0.0
        %6459 = vmatpush1.msra.mxu0 %v444
        %6460 = vmatprep.subr.mxu0 0.0
        %6461 = vmatpush1.msra.mxu0 %v445
        %6462 = vmatprep.mubr.f32.mxu0 %v6353
        %6463 = vmatmul.mubr.f32.gmra.mrb[0].mxu0 %v6351
        %v6464 = vpop.f32.mrb[0].mxu0
        %v6465 = vadd.f32 0.0, %v6464
        %v6466 = vpop.f32.mrb[0].mxu0
        %6467 = vdwg.mxu0
        %6468 = vmatprep.subr.mxu0 0.0
        %6469 = vmatpush1.msra.mxu0 %v446
        %6470 = vmatprep.subr.mxu0 0.0
        %6471 = vmatpush1.msra.mxu0 %v447
        %6472 = vmatprep.subr.mxu0 0.0
        %6473 = vmatpush1.msra.mxu0 %v448
        %6474 = vmatprep.subr.mxu0 0.0
        %6475 = vmatpush1.msra.mxu0 %v449
        %6476 = vmatprep.subr.mxu0 0.0
        %6477 = vmatpush1.msra.mxu0 %v450
        %6478 = vmatprep.subr.mxu0 0.0
        %6479 = vmatpush1.msra.mxu0 %v451
        %6480 = vmatprep.subr.mxu0 0.0
        %6481 = vmatpush1.msra.mxu0 %v452
        %6482 = vmatprep.subr.mxu0 0.0
        %6483 = vmatpush1.msra.mxu0 %v453
        %6484 = vmatprep.subr.mxu0 0.0
        %6485 = vmatpush1.msra.mxu0 %v454
        %6486 = vmatprep.subr.mxu0 0.0
        %6487 = vmatpush1.msra.mxu0 %v455
        %6488 = vmatprep.subr.mxu0 0.0
        %6489 = vmatpush1.msra.mxu0 %v456
        %6490 = vmatprep.subr.mxu0 0.0
        %6491 = vmatpush1.msra.mxu0 %v457
        %6492 = vmatprep.subr.mxu0 0.0
        %6493 = vmatpush1.msra.mxu0 %v458
        %6494 = vmatprep.subr.mxu0 0.0
        %6495 = vmatpush1.msra.mxu0 %v459
        %6496 = vmatprep.subr.mxu0 0.0
        %6497 = vmatpush1.msra.mxu0 %v460
        %6498 = vmatprep.subr.mxu0 0.0
        %6499 = vmatpush1.msra.mxu0 %v461
        %6500 = vmatprep.subr.mxu0 0.0
        %6501 = vmatpush1.msra.mxu0 %v462
        %6502 = vmatprep.subr.mxu0 0.0
        %6503 = vmatpush1.msra.mxu0 %v463
        %6504 = vmatprep.subr.mxu0 0.0
        %6505 = vmatpush1.msra.mxu0 %v464
        %6506 = vmatprep.subr.mxu0 0.0
        %6507 = vmatpush1.msra.mxu0 %v465
        %6508 = vmatprep.subr.mxu0 0.0
        %6509 = vmatpush1.msra.mxu0 %v466
        %6510 = vmatprep.subr.mxu0 0.0
        %6511 = vmatpush1.msra.mxu0 %v467
        %6512 = vmatprep.subr.mxu0 0.0
        %6513 = vmatpush1.msra.mxu0 %v468
        %6514 = vmatprep.subr.mxu0 0.0
        %6515 = vmatpush1.msra.mxu0 %v469
        %6516 = vmatprep.subr.mxu0 0.0
        %6517 = vmatpush1.msra.mxu0 %v470
        %6518 = vmatprep.subr.mxu0 0.0
        %6519 = vmatpush1.msra.mxu0 %v471
        %6520 = vmatprep.subr.mxu0 0.0
        %6521 = vmatpush1.msra.mxu0 %v472
        %6522 = vmatprep.subr.mxu0 0.0
        %6523 = vmatpush1.msra.mxu0 %v473
        %6524 = vmatprep.subr.mxu0 0.0
        %6525 = vmatpush1.msra.mxu0 %v474
        %6526 = vmatprep.subr.mxu0 0.0
        %6527 = vmatpush1.msra.mxu0 %v475
        %6528 = vmatprep.subr.mxu0 0.0
        %6529 = vmatpush1.msra.mxu0 %v476
        %6530 = vmatprep.subr.mxu0 0.0
        %6531 = vmatpush1.msra.mxu0 %v477
        %6532 = vmatprep.mubr.f32.mxu0 %v6394
        %6533 = vmatmul.mubr.f32.gmra.mrb[0].mxu0 %v6392
        %v6534 = vpop.f32.mrb[0].mxu0
        %v6535 = vadd.f32 %v6465, %v6534
        %v6536 = vpop.f32.mrb[0].mxu0
        %6537 = vdwg.mxu0
        %v6538 = vmul.f32 %v6351, %v6351
        %v6539 = vmul.f32 %v6353, %v6353
        %v6540 = vmul.f32 %v6392, %v6392
        %v6541 = vmul.f32 %v6394, %v6394
        %6542 = vmatprep.subr.mxu0 0.0
        %6543 = vmatpush1.msra.mxu0 %v414
        %6544 = vmatprep.subr.mxu0 0.0
        %6545 = vmatpush1.msra.mxu0 %v415
        %6546 = vmatprep.subr.mxu0 0.0
        %6547 = vmatpush1.msra.mxu0 %v416
        %6548 = vmatprep.subr.mxu0 0.0
        %6549 = vmatpush1.msra.mxu0 %v417
        %6550 = vmatprep.subr.mxu0 0.0
        %6551 = vmatpush1.msra.mxu0 %v418
        %6552 = vmatprep.subr.mxu0 0.0
        %6553 = vmatpush1.msra.mxu0 %v419
        %6554 = vmatprep.subr.mxu0 0.0
        %6555 = vmatpush1.msra.mxu0 %v420
        %6556 = vmatprep.subr.mxu0 0.0
        %6557 = vmatpush1.msra.mxu0 %v421
        %6558 = vmatprep.subr.mxu0 0.0
        %6559 = vmatpush1.msra.mxu0 %v422
        %6560 = vmatprep.subr.mxu0 0.0
        %6561 = vmatpush1.msra.mxu0 %v423
        %6562 = vmatprep.subr.mxu0 0.0
        %6563 = vmatpush1.msra.mxu0 %v424
        %6564 = vmatprep.subr.mxu0 0.0
        %6565 = vmatpush1.msra.mxu0 %v425
        %6566 = vmatprep.subr.mxu0 0.0
        %6567 = vmatpush1.msra.mxu0 %v426
        %6568 = vmatprep.subr.mxu0 0.0
        %6569 = vmatpush1.msra.mxu0 %v427
        %6570 = vmatprep.subr.mxu0 0.0
        %6571 = vmatpush1.msra.mxu0 %v428
        %6572 = vmatprep.subr.mxu0 0.0
        %6573 = vmatpush1.msra.mxu0 %v429
        %6574 = vmatprep.subr.mxu0 0.0
        %6575 = vmatpush1.msra.mxu0 %v430
        %6576 = vmatprep.subr.mxu0 0.0
        %6577 = vmatpush1.msra.mxu0 %v431
        %6578 = vmatprep.subr.mxu0 0.0
        %6579 = vmatpush1.msra.mxu0 %v432
        %6580 = vmatprep.subr.mxu0 0.0
        %6581 = vmatpush1.msra.mxu0 %v433
        %6582 = vmatprep.subr.mxu0 0.0
        %6583 = vmatpush1.msra.mxu0 %v434
        %6584 = vmatprep.subr.mxu0 0.0
        %6585 = vmatpush1.msra.mxu0 %v435
        %6586 = vmatprep.subr.mxu0 0.0
        %6587 = vmatpush1.msra.mxu0 %v436
        %6588 = vmatprep.subr.mxu0 0.0
        %6589 = vmatpush1.msra.mxu0 %v437
        %6590 = vmatprep.subr.mxu0 0.0
        %6591 = vmatpush1.msra.mxu0 %v438
        %6592 = vmatprep.subr.mxu0 0.0
        %6593 = vmatpush1.msra.mxu0 %v439
        %6594 = vmatprep.subr.mxu0 0.0
        %6595 = vmatpush1.msra.mxu0 %v440
        %6596 = vmatprep.subr.mxu0 0.0
        %6597 = vmatpush1.msra.mxu0 %v441
        %6598 = vmatprep.subr.mxu0 0.0
        %6599 = vmatpush1.msra.mxu0 %v442
        %6600 = vmatprep.subr.mxu0 0.0
        %6601 = vmatpush1.msra.mxu0 %v443
        %6602 = vmatprep.subr.mxu0 0.0
        %6603 = vmatpush1.msra.mxu0 %v444
        %6604 = vmatprep.subr.mxu0 0.0
        %6605 = vmatpush1.msra.mxu0 %v445
        %6606 = vmatprep.mubr.f32.mxu0 %v6539
        %6607 = vmatmul.mubr.f32.gmra.mrb[0].mxu0 %v6538
        %v6608 = vpop.f32.mrb[0].mxu0
        %v6609 = vadd.f32 0.0, %v6608
        %v6610 = vpop.f32.mrb[0].mxu0
        %6611 = vdwg.mxu0
        %6612 = vmatprep.subr.mxu0 0.0
        %6613 = vmatpush1.msra.mxu0 %v446
        %6614 = vmatprep.subr.mxu0 0.0
        %6615 = vmatpush1.msra.mxu0 %v447
        %6616 = vmatprep.subr.mxu0 0.0
        %6617 = vmatpush1.msra.mxu0 %v448
        %6618 = vmatprep.subr.mxu0 0.0
        %6619 = vmatpush1.msra.mxu0 %v449
        %6620 = vmatprep.subr.mxu0 0.0
        %6621 = vmatpush1.msra.mxu0 %v450
        %6622 = vmatprep.subr.mxu0 0.0
        %6623 = vmatpush1.msra.mxu0 %v451
        %6624 = vmatprep.subr.mxu0 0.0
        %6625 = vmatpush1.msra.mxu0 %v452
        %6626 = vmatprep.subr.mxu0 0.0
        %6627 = vmatpush1.msra.mxu0 %v453
        %6628 = vmatprep.subr.mxu0 0.0
        %6629 = vmatpush1.msra.mxu0 %v454
        %6630 = vmatprep.subr.mxu0 0.0
        %6631 = vmatpush1.msra.mxu0 %v455
        %6632 = vmatprep.subr.mxu0 0.0
        %6633 = vmatpush1.msra.mxu0 %v456
        %6634 = vmatprep.subr.mxu0 0.0
        %6635 = vmatpush1.msra.mxu0 %v457
        %6636 = vmatprep.subr.mxu0 0.0
        %6637 = vmatpush1.msra.mxu0 %v458
        %6638 = vmatprep.subr.mxu0 0.0
        %6639 = vmatpush1.msra.mxu0 %v459
        %6640 = vmatprep.subr.mxu0 0.0
        %6641 = vmatpush1.msra.mxu0 %v460
        %6642 = vmatprep.subr.mxu0 0.0
        %6643 = vmatpush1.msra.mxu0 %v461
        %6644 = vmatprep.subr.mxu0 0.0
        %6645 = vmatpush1.msra.mxu0 %v462
        %6646 = vmatprep.subr.mxu0 0.0
        %6647 = vmatpush1.msra.mxu0 %v463
        %6648 = vmatprep.subr.mxu0 0.0
        %6649 = vmatpush1.msra.mxu0 %v464
        %6650 = vmatprep.subr.mxu0 0.0
        %6651 = vmatpush1.msra.mxu0 %v465
        %6652 = vmatprep.subr.mxu0 0.0
        %6653 = vmatpush1.msra.mxu0 %v466
        %6654 = vmatprep.subr.mxu0 0.0
        %6655 = vmatpush1.msra.mxu0 %v467
        %6656 = vmatprep.subr.mxu0 0.0
        %6657 = vmatpush1.msra.mxu0 %v468
        %6658 = vmatprep.subr.mxu0 0.0
        %6659 = vmatpush1.msra.mxu0 %v469
        %6660 = vmatprep.subr.mxu0 0.0
        %6661 = vmatpush1.msra.mxu0 %v470
        %6662 = vmatprep.subr.mxu0 0.0
        %6663 = vmatpush1.msra.mxu0 %v471
        %6664 = vmatprep.subr.mxu0 0.0
        %6665 = vmatpush1.msra.mxu0 %v472
        %6666 = vmatprep.subr.mxu0 0.0
        %6667 = vmatpush1.msra.mxu0 %v473
        %6668 = vmatprep.subr.mxu0 0.0
        %6669 = vmatpush1.msra.mxu0 %v474
        %6670 = vmatprep.subr.mxu0 0.0
        %6671 = vmatpush1.msra.mxu0 %v475
        %6672 = vmatprep.subr.mxu0 0.0
        %6673 = vmatpush1.msra.mxu0 %v476
        %6674 = vmatprep.subr.mxu0 0.0
        %6675 = vmatpush1.msra.mxu0 %v477
        %6676 = vmatprep.mubr.f32.mxu0 %v6541
        %6677 = vmatmul.mubr.f32.gmra.mrb[0].mxu0 %v6540
        %v6678 = vpop.f32.mrb[0].mxu0
        %v6679 = vadd.f32 %v6609, %v6678
        %v6680 = vpop.f32.mrb[0].mxu0
        %6681 = vdwg.mxu0
        %6682 = vmatprep.subr.mxu0 0.0
        %6683 = vmatpush1.msra.mxu0 %v6535
        %6684 = vmatprep.subr.mxu0 0.0
        %6685 = vmatpush1.msra.mxu0 0.0
        %6686 = vmatprep.subr.mxu0 0.0
        %6687 = vmatpush1.msra.mxu0 0.0
        %6688 = vmatprep.subr.mxu0 0.0
        %6689 = vmatpush1.msra.mxu0 0.0
        %6690 = vmatprep.subr.mxu0 0.0
        %6691 = vmatpush1.msra.mxu0 0.0
        %6692 = vmatprep.subr.mxu0 0.0
        %6693 = vmatpush1.msra.mxu0 0.0
        %6694 = vmatprep.subr.mxu0 0.0
        %6695 = vmatpush1.msra.mxu0 0.0
        %6696 = vmatprep.subr.mxu0 0.0
        %6697 = vmatpush1.msra.mxu0 0.0
        %6698 = vmatprep.subr.mxu0 0.0
        %6699 = vmatpush1.msra.mxu0 0.0
        %6700 = vmatprep.subr.mxu0 0.0
        %6701 = vmatpush1.msra.mxu0 0.0
        %6702 = vmatprep.subr.mxu0 0.0
        %6703 = vmatpush1.msra.mxu0 0.0
        %6704 = vmatprep.subr.mxu0 0.0
        %6705 = vmatpush1.msra.mxu0 0.0
        %6706 = vmatprep.subr.mxu0 0.0
        %6707 = vmatpush1.msra.mxu0 0.0
        %6708 = vmatprep.subr.mxu0 0.0
        %6709 = vmatpush1.msra.mxu0 0.0
        %6710 = vmatprep.subr.mxu0 0.0
        %6711 = vmatpush1.msra.mxu0 0.0
        %6712 = vmatprep.subr.mxu0 0.0
        %6713 = vmatpush1.msra.mxu0 0.0
        %6714 = vmatprep.subr.mxu0 0.0
        %6715 = vmatpush1.msra.mxu0 0.0
        %6716 = vmatprep.subr.mxu0 0.0
        %6717 = vmatpush1.msra.mxu0 0.0
        %6718 = vmatprep.subr.mxu0 0.0
        %6719 = vmatpush1.msra.mxu0 0.0
        %6720 = vmatprep.subr.mxu0 0.0
        %6721 = vmatpush1.msra.mxu0 0.0
        %6722 = vmatprep.subr.mxu0 0.0
        %6723 = vmatpush1.msra.mxu0 0.0
        %6724 = vmatprep.subr.mxu0 0.0
        %6725 = vmatpush1.msra.mxu0 0.0
        %6726 = vmatprep.subr.mxu0 0.0
        %6727 = vmatpush1.msra.mxu0 0.0
        %6728 = vmatprep.subr.mxu0 0.0
        %6729 = vmatpush1.msra.mxu0 0.0
        %6730 = vmatprep.subr.mxu0 0.0
        %6731 = vmatpush1.msra.mxu0 0.0
        %6732 = vmatprep.subr.mxu0 0.0
        %6733 = vmatpush1.msra.mxu0 0.0
        %6734 = vmatprep.subr.mxu0 0.0
        %6735 = vmatpush1.msra.mxu0 0.0
        %6736 = vmatprep.subr.mxu0 0.0
        %6737 = vmatpush1.msra.mxu0 0.0
        %6738 = vmatprep.subr.mxu0 0.0
        %6739 = vmatpush1.msra.mxu0 0.0
        %6740 = vmatprep.subr.mxu0 0.0
        %6741 = vmatpush1.msra.mxu0 0.0
        %6742 = vmatprep.subr.mxu0 0.0
        %6743 = vmatpush1.msra.mxu0 0.0
        %6744 = vmatprep.subr.mxu0 0.0
        %6745 = vmatpush1.msra.mxu0 0.0
        %6746 = vmatprep.mubr.f32.mxu0 0.0
        %6747 = vmatmul.mubr.f32.gmra.mrb[0].mxu0 %v1434
        %v6748 = vpop.f32.mrb[0].mxu0
        %v6749 = vadd.f32 0.0, %v6748
        %v6750 = vpop.f32.mrb[0].mxu0
        %6751 = vdwg.mxu0
        %v6752 = vmul.f32 %v6749, 0.001953125
        %6753 = vmatprep.subr.mxu0 0.0
        %6754 = vmatpush1.msra.mxu0 %v6679
        %6755 = vmatprep.subr.mxu0 0.0
        %6756 = vmatpush1.msra.mxu0 0.0
        %6757 = vmatprep.subr.mxu0 0.0
        %6758 = vmatpush1.msra.mxu0 0.0
        %6759 = vmatprep.subr.mxu0 0.0
        %6760 = vmatpush1.msra.mxu0 0.0
        %6761 = vmatprep.subr.mxu0 0.0
        %6762 = vmatpush1.msra.mxu0 0.0
        %6763 = vmatprep.subr.mxu0 0.0
        %6764 = vmatpush1.msra.mxu0 0.0
        %6765 = vmatprep.subr.mxu0 0.0
        %6766 = vmatpush1.msra.mxu0 0.0
        %6767 = vmatprep.subr.mxu0 0.0
        %6768 = vmatpush1.msra.mxu0 0.0
        %6769 = vmatprep.subr.mxu0 0.0
        %6770 = vmatpush1.msra.mxu0 0.0
        %6771 = vmatprep.subr.mxu0 0.0
        %6772 = vmatpush1.msra.mxu0 0.0
        %6773 = vmatprep.subr.mxu0 0.0
        %6774 = vmatpush1.msra.mxu0 0.0
        %6775 = vmatprep.subr.mxu0 0.0
        %6776 = vmatpush1.msra.mxu0 0.0
        %6777 = vmatprep.subr.mxu0 0.0
        %6778 = vmatpush1.msra.mxu0 0.0
        %6779 = vmatprep.subr.mxu0 0.0
        %6780 = vmatpush1.msra.mxu0 0.0
        %6781 = vmatprep.subr.mxu0 0.0
        %6782 = vmatpush1.msra.mxu0 0.0
        %6783 = vmatprep.subr.mxu0 0.0
        %6784 = vmatpush1.msra.mxu0 0.0
        %6785 = vmatprep.subr.mxu0 0.0
        %6786 = vmatpush1.msra.mxu0 0.0
        %6787 = vmatprep.subr.mxu0 0.0
        %6788 = vmatpush1.msra.mxu0 0.0
        %6789 = vmatprep.subr.mxu0 0.0
        %6790 = vmatpush1.msra.mxu0 0.0
        %6791 = vmatprep.subr.mxu0 0.0
        %6792 = vmatpush1.msra.mxu0 0.0
        %6793 = vmatprep.subr.mxu0 0.0
        %6794 = vmatpush1.msra.mxu0 0.0
        %6795 = vmatprep.subr.mxu0 0.0
        %6796 = vmatpush1.msra.mxu0 0.0
        %6797 = vmatprep.subr.mxu0 0.0
        %6798 = vmatpush1.msra.mxu0 0.0
        %6799 = vmatprep.subr.mxu0 0.0
        %6800 = vmatpush1.msra.mxu0 0.0
        %6801 = vmatprep.subr.mxu0 0.0
        %6802 = vmatpush1.msra.mxu0 0.0
        %6803 = vmatprep.subr.mxu0 0.0
        %6804 = vmatpush1.msra.mxu0 0.0
        %6805 = vmatprep.subr.mxu0 0.0
        %6806 = vmatpush1.msra.mxu0 0.0
        %6807 = vmatprep.subr.mxu0 0.0
        %6808 = vmatpush1.msra.mxu0 0.0
        %6809 = vmatprep.subr.mxu0 0.0
        %6810 = vmatpush1.msra.mxu0 0.0
        %6811 = vmatprep.subr.mxu0 0.0
        %6812 = vmatpush1.msra.mxu0 0.0
        %6813 = vmatprep.subr.mxu0 0.0
        %6814 = vmatpush1.msra.mxu0 0.0
        %6815 = vmatprep.subr.mxu0 0.0
        %6816 = vmatpush1.msra.mxu0 0.0
        %6817 = vmatprep.mubr.f32.mxu0 0.0
        %6818 = vmatmul.mubr.f32.gmra.mrb[0].mxu0 %v1434
        %v6819 = vpop.f32.mrb[0].mxu0
        %v6820 = vadd.f32 0.0, %v6819
        %v6821 = vpop.f32.mrb[0].mxu0
        %6822 = vdwg.mxu0
        %v6823 = vmul.f32 %v6820, 0.001953125
        %v6824 = vmul.f32 %v6752, %v6752
        %v6825 = vsub.f32 %v6823, %v6824
        %v6826 = vadd.f32 %v6825, 1e-05
        %v6827 = vrsqrt.pop %v6826
        %6829 = vset.pattern.permute.xlu0 0
        %6830 = vperm.xlu0 %6829, %v408
        %v6831 = vpop.permute.xlu0 %6830
        %v6833 = vmul.f32 %v6831, %v6827
        %v6834 = vmul.f32 %v6752, %v6833
        %6836 = vset.pattern.permute.xlu0 0
        %6837 = vperm.xlu0 %6836, %v409
        %v6838 = vpop.permute.xlu0 %6837
        %v6840 = vsub.f32 %v6838, %v6834
        %v6842 = vsel %vm1613, %v6833, 0
        %6844 = vmatprep.subr.mxu0 %v1620
        %6845 = vmatpush1.msra.mxu0 %v1618
        %6846 = vmatprep.subr.mxu0 0.0
        %6847 = vmatpush1.msra.mxu0 0.0
        %6848 = vmatprep.subr.mxu0 0.0
        %6849 = vmatpush1.msra.mxu0 0.0
        %6850 = vmatprep.subr.mxu0 0.0
        %6851 = vmatpush1.msra.mxu0 0.0
        %6852 = vmatprep.subr.mxu0 0.0
        %6853 = vmatpush1.msra.mxu0 0.0
        %6854 = vmatprep.subr.mxu0 0.0
        %6855 = vmatpush1.msra.mxu0 0.0
        %6856 = vmatprep.subr.mxu0 0.0
        %6857 = vmatpush1.msra.mxu0 0.0
        %6858 = vmatprep.subr.mxu0 0.0
        %6859 = vmatpush1.msra.mxu0 0.0
        %6860 = vmatprep.subr.mxu0 0.0
        %6861 = vmatpush1.msra.mxu0 0.0
        %6862 = vmatprep.subr.mxu0 0.0
        %6863 = vmatpush1.msra.mxu0 0.0
        %6864 = vmatprep.subr.mxu0 0.0
        %6865 = vmatpush1.msra.mxu0 0.0
        %6866 = vmatprep.subr.mxu0 0.0
        %6867 = vmatpush1.msra.mxu0 0.0
        %6868 = vmatprep.subr.mxu0 0.0
        %6869 = vmatpush1.msra.mxu0 0.0
        %6870 = vmatprep.subr.mxu0 0.0
        %6871 = vmatpush1.msra.mxu0 0.0
        %6872 = vmatprep.subr.mxu0 0.0
        %6873 = vmatpush1.msra.mxu0 0.0
        %6874 = vmatprep.subr.mxu0 0.0
        %6875 = vmatpush1.msra.mxu0 0.0
        %6876 = vmatprep.subr.mxu0 0.0
        %6877 = vmatpush1.msra.mxu0 0.0
        %6878 = vmatprep.subr.mxu0 0.0
        %6879 = vmatpush1.msra.mxu0 0.0
        %6880 = vmatprep.subr.mxu0 0.0
        %6881 = vmatpush1.msra.mxu0 0.0
        %6882 = vmatprep.subr.mxu0 0.0
        %6883 = vmatpush1.msra.mxu0 0.0
        %6884 = vmatprep.subr.mxu0 0.0
        %6885 = vmatpush1.msra.mxu0 0.0
        %6886 = vmatprep.subr.mxu0 0.0
        %6887 = vmatpush1.msra.mxu0 0.0
        %6888 = vmatprep.subr.mxu0 0.0
        %6889 = vmatpush1.msra.mxu0 0.0
        %6890 = vmatprep.subr.mxu0 0.0
        %6891 = vmatpush1.msra.mxu0 0.0
        %6892 = vmatprep.subr.mxu0 0.0
        %6893 = vmatpush1.msra.mxu0 0.0
        %6894 = vmatprep.subr.mxu0 0.0
        %6895 = vmatpush1.msra.mxu0 0.0
        %6896 = vmatprep.subr.mxu0 0.0
        %6897 = vmatpush1.msra.mxu0 0.0
        %6898 = vmatprep.subr.mxu0 0.0
        %6899 = vmatpush1.msra.mxu0 0.0
        %6900 = vmatprep.subr.mxu0 0.0
        %6901 = vmatpush1.msra.mxu0 0.0
        %6902 = vmatprep.subr.mxu0 0.0
        %6903 = vmatpush1.msra.mxu0 0.0
        %6904 = vmatprep.subr.mxu0 0.0
        %6905 = vmatpush1.msra.mxu0 0.0
        %6906 = vmatprep.subr.mxu0 0.0
        %6907 = vmatpush1.msra.mxu0 0.0
        %6908 = vmatprep.mubr.f32.mxu0 0.0
        %6909 = vmatmul.mubr.f32.gmra.mrb[0].mxu0 %v6842
        %v6910 = vpop.f32.mrb[0].mxu0
        %v6911 = vadd.f32 0.0, %v6910
        %v6912 = vpop.f32.mrb[0].mxu0
        %v6913 = vadd.f32 0.0, %v6912
        %6914 = vdwg.mxu0
        %6915 = vmatprep.subr.mxu0 %v1624
        %6916 = vmatpush1.msra.mxu0 %v1622
        %6917 = vmatprep.subr.mxu0 0.0
        %6918 = vmatpush1.msra.mxu0 0.0
        %6919 = vmatprep.subr.mxu0 0.0
        %6920 = vmatpush1.msra.mxu0 0.0
        %6921 = vmatprep.subr.mxu0 0.0
        %6922 = vmatpush1.msra.mxu0 0.0
        %6923 = vmatprep.subr.mxu0 0.0
        %6924 = vmatpush1.msra.mxu0 0.0
        %6925 = vmatprep.subr.mxu0 0.0
        %6926 = vmatpush1.msra.mxu0 0.0
        %6927 = vmatprep.subr.mxu0 0.0
        %6928 = vmatpush1.msra.mxu0 0.0
        %6929 = vmatprep.subr.mxu0 0.0
        %6930 = vmatpush1.msra.mxu0 0.0
        %6931 = vmatprep.subr.mxu0 0.0
        %6932 = vmatpush1.msra.mxu0 0.0
        %6933 = vmatprep.subr.mxu0 0.0
        %6934 = vmatpush1.msra.mxu0 0.0
        %6935 = vmatprep.subr.mxu0 0.0
        %6936 = vmatpush1.msra.mxu0 0.0
        %6937 = vmatprep.subr.mxu0 0.0
        %6938 = vmatpush1.msra.mxu0 0.0
        %6939 = vmatprep.subr.mxu0 0.0
        %6940 = vmatpush1.msra.mxu0 0.0
        %6941 = vmatprep.subr.mxu0 0.0
        %6942 = vmatpush1.msra.mxu0 0.0
        %6943 = vmatprep.subr.mxu0 0.0
        %6944 = vmatpush1.msra.mxu0 0.0
        %6945 = vmatprep.subr.mxu0 0.0
        %6946 = vmatpush1.msra.mxu0 0.0
        %6947 = vmatprep.subr.mxu0 0.0
        %6948 = vmatpush1.msra.mxu0 0.0
        %6949 = vmatprep.subr.mxu0 0.0
        %6950 = vmatpush1.msra.mxu0 0.0
        %6951 = vmatprep.subr.mxu0 0.0
        %6952 = vmatpush1.msra.mxu0 0.0
        %6953 = vmatprep.subr.mxu0 0.0
        %6954 = vmatpush1.msra.mxu0 0.0
        %6955 = vmatprep.subr.mxu0 0.0
        %6956 = vmatpush1.msra.mxu0 0.0
        %6957 = vmatprep.subr.mxu0 0.0
        %6958 = vmatpush1.msra.mxu0 0.0
        %6959 = vmatprep.subr.mxu0 0.0
        %6960 = vmatpush1.msra.mxu0 0.0
        %6961 = vmatprep.subr.mxu0 0.0
        %6962 = vmatpush1.msra.mxu0 0.0
        %6963 = vmatprep.subr.mxu0 0.0
        %6964 = vmatpush1.msra.mxu0 0.0
        %6965 = vmatprep.subr.mxu0 0.0
        %6966 = vmatpush1.msra.mxu0 0.0
        %6967 = vmatprep.subr.mxu0 0.0
        %6968 = vmatpush1.msra.mxu0 0.0
        %6969 = vmatprep.subr.mxu0 0.0
        %6970 = vmatpush1.msra.mxu0 0.0
        %6971 = vmatprep.subr.mxu0 0.0
        %6972 = vmatpush1.msra.mxu0 0.0
        %6973 = vmatprep.subr.mxu0 0.0
        %6974 = vmatpush1.msra.mxu0 0.0
        %6975 = vmatprep.subr.mxu0 0.0
        %6976 = vmatpush1.msra.mxu0 0.0
        %6977 = vmatprep.subr.mxu0 0.0
        %6978 = vmatpush1.msra.mxu0 0.0
        %6979 = vmatprep.mubr.f32.mxu0 0.0
        %6980 = vmatmul.mubr.f32.gmra.mrb[0].mxu0 %v6842
        %v6981 = vpop.f32.mrb[0].mxu0
        %v6982 = vadd.f32 0.0, %v6981
        %v6983 = vpop.f32.mrb[0].mxu0
        %v6984 = vadd.f32 0.0, %v6983
        %6985 = vdwg.mxu0
        %v6986 = vmul.f32 %v6351, %v6911
        %v6987 = vmul.f32 %v6353, %v6913
        %v6988 = vmul.f32 %v6392, %v6982
        %v6989 = vmul.f32 %v6394, %v6984
        %v6991 = vsel %vm1613, %v6840, 0
        %6993 = vmatprep.subr.mxu0 %v1620
        %6994 = vmatpush1.msra.mxu0 %v1618
        %6995 = vmatprep.subr.mxu0 0.0
        %6996 = vmatpush1.msra.mxu0 0.0
        %6997 = vmatprep.subr.mxu0 0.0
        %6998 = vmatpush1.msra.mxu0 0.0
        %6999 = vmatprep.subr.mxu0 0.0
        %7000 = vmatpush1.msra.mxu0 0.0
        %7001 = vmatprep.subr.mxu0 0.0
        %7002 = vmatpush1.msra.mxu0 0.0
        %7003 = vmatprep.subr.mxu0 0.0
        %7004 = vmatpush1.msra.mxu0 0.0
        %7005 = vmatprep.subr.mxu0 0.0
        %7006 = vmatpush1.msra.mxu0 0.0
        %7007 = vmatprep.subr.mxu0 0.0
        %7008 = vmatpush1.msra.mxu0 0.0
        %7009 = vmatprep.subr.mxu0 0.0
        %7010 = vmatpush1.msra.mxu0 0.0
        %7011 = vmatprep.subr.mxu0 0.0
        %7012 = vmatpush1.msra.mxu0 0.0
        %7013 = vmatprep.subr.mxu0 0.0
        %7014 = vmatpush1.msra.mxu0 0.0
        %7015 = vmatprep.subr.mxu0 0.0
        %7016 = vmatpush1.msra.mxu0 0.0
        %7017 = vmatprep.subr.mxu0 0.0
        %7018 = vmatpush1.msra.mxu0 0.0
        %7019 = vmatprep.subr.mxu0 0.0
        %7020 = vmatpush1.msra.mxu0 0.0
        %7021 = vmatprep.subr.mxu0 0.0
        %7022 = vmatpush1.msra.mxu0 0.0
        %7023 = vmatprep.subr.mxu0 0.0
        %7024 = vmatpush1.msra.mxu0 0.0
        %7025 = vmatprep.subr.mxu0 0.0
        %7026 = vmatpush1.msra.mxu0 0.0
        %7027 = vmatprep.subr.mxu0 0.0
        %7028 = vmatpush1.msra.mxu0 0.0
        %7029 = vmatprep.subr.mxu0 0.0
        %7030 = vmatpush1.msra.mxu0 0.0
        %7031 = vmatprep.subr.mxu0 0.0
        %7032 = vmatpush1.msra.mxu0 0.0
        %7033 = vmatprep.subr.mxu0 0.0
        %7034 = vmatpush1.msra.mxu0 0.0
        %7035 = vmatprep.subr.mxu0 0.0
        %7036 = vmatpush1.msra.mxu0 0.0
        %7037 = vmatprep.subr.mxu0 0.0
        %7038 = vmatpush1.msra.mxu0 0.0
        %7039 = vmatprep.subr.mxu0 0.0
        %7040 = vmatpush1.msra.mxu0 0.0
        %7041 = vmatprep.subr.mxu0 0.0
        %7042 = vmatpush1.msra.mxu0 0.0
        %7043 = vmatprep.subr.mxu0 0.0
        %7044 = vmatpush1.msra.mxu0 0.0
        %7045 = vmatprep.subr.mxu0 0.0
        %7046 = vmatpush1.msra.mxu0 0.0
        %7047 = vmatprep.subr.mxu0 0.0
        %7048 = vmatpush1.msra.mxu0 0.0
        %7049 = vmatprep.subr.mxu0 0.0
        %7050 = vmatpush1.msra.mxu0 0.0
        %7051 = vmatprep.subr.mxu0 0.0
        %7052 = vmatpush1.msra.mxu0 0.0
        %7053 = vmatprep.subr.mxu0 0.0
        %7054 = vmatpush1.msra.mxu0 0.0
        %7055 = vmatprep.subr.mxu0 0.0
        %7056 = vmatpush1.msra.mxu0 0.0
        %7057 = vmatprep.mubr.f32.mxu0 0.0
        %7058 = vmatmul.mubr.f32.gmra.mrb[0].mxu0 %v6991
        %v7059 = vpop.f32.mrb[0].mxu0
        %v7060 = vadd.f32 0.0, %v7059
        %v7061 = vpop.f32.mrb[0].mxu0
        %v7062 = vadd.f32 0.0, %v7061
        %7063 = vdwg.mxu0
        %7064 = vmatprep.subr.mxu0 %v1624
        %7065 = vmatpush1.msra.mxu0 %v1622
        %7066 = vmatprep.subr.mxu0 0.0
        %7067 = vmatpush1.msra.mxu0 0.0
        %7068 = vmatprep.subr.mxu0 0.0
        %7069 = vmatpush1.msra.mxu0 0.0
        %7070 = vmatprep.subr.mxu0 0.0
        %7071 = vmatpush1.msra.mxu0 0.0
        %7072 = vmatprep.subr.mxu0 0.0
        %7073 = vmatpush1.msra.mxu0 0.0
        %7074 = vmatprep.subr.mxu0 0.0
        %7075 = vmatpush1.msra.mxu0 0.0
        %7076 = vmatprep.subr.mxu0 0.0
        %7077 = vmatpush1.msra.mxu0 0.0
        %7078 = vmatprep.subr.mxu0 0.0
        %7079 = vmatpush1.msra.mxu0 0.0
        %7080 = vmatprep.subr.mxu0 0.0
        %7081 = vmatpush1.msra.mxu0 0.0
        %7082 = vmatprep.subr.mxu0 0.0
        %7083 = vmatpush1.msra.mxu0 0.0
        %7084 = vmatprep.subr.mxu0 0.0
        %7085 = vmatpush1.msra.mxu0 0.0
        %7086 = vmatprep.subr.mxu0 0.0
        %7087 = vmatpush1.msra.mxu0 0.0
        %7088 = vmatprep.subr.mxu0 0.0
        %7089 = vmatpush1.msra.mxu0 0.0
        %7090 = vmatprep.subr.mxu0 0.0
        %7091 = vmatpush1.msra.mxu0 0.0
        %7092 = vmatprep.subr.mxu0 0.0
        %7093 = vmatpush1.msra.mxu0 0.0
        %7094 = vmatprep.subr.mxu0 0.0
        %7095 = vmatpush1.msra.mxu0 0.0
        %7096 = vmatprep.subr.mxu0 0.0
        %7097 = vmatpush1.msra.mxu0 0.0
        %7098 = vmatprep.subr.mxu0 0.0
        %7099 = vmatpush1.msra.mxu0 0.0
        %7100 = vmatprep.subr.mxu0 0.0
        %7101 = vmatpush1.msra.mxu0 0.0
        %7102 = vmatprep.subr.mxu0 0.0
        %7103 = vmatpush1.msra.mxu0 0.0
        %7104 = vmatprep.subr.mxu0 0.0
        %7105 = vmatpush1.msra.mxu0 0.0
        %7106 = vmatprep.subr.mxu0 0.0
        %7107 = vmatpush1.msra.mxu0 0.0
        %7108 = vmatprep.subr.mxu0 0.0
        %7109 = vmatpush1.msra.mxu0 0.0
        %7110 = vmatprep.subr.mxu0 0.0
        %7111 = vmatpush1.msra.mxu0 0.0
        %7112 = vmatprep.subr.mxu0 0.0
        %7113 = vmatpush1.msra.mxu0 0.0
        %7114 = vmatprep.subr.mxu0 0.0
        %7115 = vmatpush1.msra.mxu0 0.0
        %7116 = vmatprep.subr.mxu0 0.0
        %7117 = vmatpush1.msra.mxu0 0.0
        %7118 = vmatprep.subr.mxu0 0.0
        %7119 = vmatpush1.msra.mxu0 0.0
        %7120 = vmatprep.subr.mxu0 0.0
        %7121 = vmatpush1.msra.mxu0 0.0
        %7122 = vmatprep.subr.mxu0 0.0
        %7123 = vmatpush1.msra.mxu0 0.0
        %7124 = vmatprep.subr.mxu0 0.0
        %7125 = vmatpush1.msra.mxu0 0.0
        %7126 = vmatprep.subr.mxu0 0.0
        %7127 = vmatpush1.msra.mxu0 0.0
        %7128 = vmatprep.mubr.f32.mxu0 0.0
        %7129 = vmatmul.mubr.f32.gmra.mrb[0].mxu0 %v6991
        %v7130 = vpop.f32.mrb[0].mxu0
        %v7131 = vadd.f32 0.0, %v7130
        %v7132 = vpop.f32.mrb[0].mxu0
        %v7133 = vadd.f32 0.0, %v7132
        %7134 = vdwg.mxu0
        %v7135 = vadd.f32 %v6986, %v7060
        %v7136 = vadd.f32 %v6987, %v7062
        %v7137 = vadd.f32 %v6988, %v7131
        %v7138 = vadd.f32 %v6989, %v7133
        %vm7139 = vcmp.ge.f32.partialorder %v7135, 0.0
        %vm7140 = vcmp.ge.f32.partialorder %v7136, 0.0
        %vm7141 = vcmp.ge.f32.partialorder %v7137, 0.0
        %vm7142 = vcmp.ge.f32.partialorder %v7138, 0.0
        %v7143 = vmul.f32 %v7135, 0.1
        %v7144 = vmul.f32 %v7136, 0.1
        %v7145 = vmul.f32 %v7137, 0.1
        %v7146 = vmul.f32 %v7138, 0.1
        %v7147 = vsel %vm7139, %v7135, %v7143
        %v7148 = vsel %vm7140, %v7136, %v7144
        %v7149 = vsel %vm7141, %v7137, %v7145
        %v7150 = vsel %vm7142, %v7138, %v7146
        %v7151 = vpack.c.bf16 %v7147, %v7147
        %v7152 = vpack.c.bf16 %v7148, %v7148
        %v7153 = vpack.c.bf16 %v7149, %v7149
        %v7154 = vpack.c.bf16 %v7150, %v7150
        %7156 = vset.pattern.permute.xlu0 0
        %7157 = vperm.xlu0 %7156, %v410
        %v7158 = vpop.permute.xlu0 %7157
        %v7161 = vsel %vm1432, %v396, 0
        %v7164 = vsel %vm803, %v7151, 0
        %v7167 = vsel %vm803, %v7152, 0
        %v7170 = vsel %vm803, %v7153, 0
        %v7173 = vsel %vm803, %v7154, 0
        %7175 = vmatprep.subr.bf16.mxu0 %v7167
        %7176 = vmatpush1.bf16.msra.mxu0 %v7164
        %7177 = vmatprep.subr.bf16.mxu0 0
        %7178 = vmatpush1.bf16.msra.mxu0 0
        %7179 = vmatprep.subr.bf16.mxu0 0
        %7180 = vmatpush1.bf16.msra.mxu0 0
        %7181 = vmatprep.subr.bf16.mxu0 0
        %7182 = vmatpush1.bf16.msra.mxu0 0
        %7183 = vmatprep.subr.bf16.mxu0 0
        %7184 = vmatpush1.bf16.msra.mxu0 0
        %7185 = vmatprep.subr.bf16.mxu0 0
        %7186 = vmatpush1.bf16.msra.mxu0 0
        %7187 = vmatprep.subr.bf16.mxu0 0
        %7188 = vmatpush1.bf16.msra.mxu0 0
        %7189 = vmatprep.subr.bf16.mxu0 0
        %7190 = vmatpush1.bf16.msra.mxu0 0
        %7191 = vmatprep.subr.bf16.mxu0 0
        %7192 = vmatpush1.bf16.msra.mxu0 0
        %7193 = vmatprep.subr.bf16.mxu0 0
        %7194 = vmatpush1.bf16.msra.mxu0 0
        %7195 = vmatprep.subr.bf16.mxu0 0
        %7196 = vmatpush1.bf16.msra.mxu0 0
        %7197 = vmatprep.subr.bf16.mxu0 0
        %7198 = vmatpush1.bf16.msra.mxu0 0
        %7199 = vmatprep.subr.bf16.mxu0 0
        %7200 = vmatpush1.bf16.msra.mxu0 0
        %7201 = vmatprep.subr.bf16.mxu0 0
        %7202 = vmatpush1.bf16.msra.mxu0 0
        %7203 = vmatprep.subr.bf16.mxu0 0
        %7204 = vmatpush1.bf16.msra.mxu0 0
        %7205 = vmatprep.subr.bf16.mxu0 0
        %7206 = vmatpush1.bf16.msra.mxu0 0
        %7207 = vmatprep.mubr.bf16.mxu0 0
        %7208 = vmatmul.mubr.bf16.gmra.mrb[0].mxu0 %v7161
        %v7209 = vpop.f32.mrb[0].mxu0
        %v7210 = vadd.f32 %v7158, %v7209
        %v7211 = vpop.f32.mrb[0].mxu0
        %v7212 = vadd.f32 %v7158, %v7211
        %v7213 = vpop.f32.mrb[0].mxu0
        %v7214 = vpop.f32.mrb[0].mxu0
        %7215 = vdwg.mxu0
        %7216 = vmatprep.subr.bf16.mxu0 %v7173
        %7217 = vmatpush1.bf16.msra.mxu0 %v7170
        %7218 = vmatprep.subr.bf16.mxu0 0
        %7219 = vmatpush1.bf16.msra.mxu0 0
        %7220 = vmatprep.subr.bf16.mxu0 0
        %7221 = vmatpush1.bf16.msra.mxu0 0
        %7222 = vmatprep.subr.bf16.mxu0 0
        %7223 = vmatpush1.bf16.msra.mxu0 0
        %7224 = vmatprep.subr.bf16.mxu0 0
        %7225 = vmatpush1.bf16.msra.mxu0 0
        %7226 = vmatprep.subr.bf16.mxu0 0
        %7227 = vmatpush1.bf16.msra.mxu0 0
        %7228 = vmatprep.subr.bf16.mxu0 0
        %7229 = vmatpush1.bf16.msra.mxu0 0
        %7230 = vmatprep.subr.bf16.mxu0 0
        %7231 = vmatpush1.bf16.msra.mxu0 0
        %7232 = vmatprep.subr.bf16.mxu0 0
        %7233 = vmatpush1.bf16.msra.mxu0 0
        %7234 = vmatprep.subr.bf16.mxu0 0
        %7235 = vmatpush1.bf16.msra.mxu0 0
        %7236 = vmatprep.subr.bf16.mxu0 0
        %7237 = vmatpush1.bf16.msra.mxu0 0
        %7238 = vmatprep.subr.bf16.mxu0 0
        %7239 = vmatpush1.bf16.msra.mxu0 0
        %7240 = vmatprep.subr.bf16.mxu0 0
        %7241 = vmatpush1.bf16.msra.mxu0 0
        %7242 = vmatprep.subr.bf16.mxu0 0
        %7243 = vmatpush1.bf16.msra.mxu0 0
        %7244 = vmatprep.subr.bf16.mxu0 0
        %7245 = vmatpush1.bf16.msra.mxu0 0
        %7246 = vmatprep.subr.bf16.mxu0 0
        %7247 = vmatpush1.bf16.msra.mxu0 0
        %7248 = vmatprep.mubr.bf16.mxu0 0
        %7249 = vmatmul.mubr.bf16.gmra.mrb[0].mxu0 %v7161
        %v7250 = vpop.f32.mrb[0].mxu0
        %v7251 = vadd.f32 %v7158, %v7250
        %v7252 = vpop.f32.mrb[0].mxu0
        %v7253 = vadd.f32 %v7158, %v7252
        %v7254 = vpop.f32.mrb[0].mxu0
        %v7255 = vpop.f32.mrb[0].mxu0
        %7256 = vdwg.mxu0
        %v7261 = vcombine.low %v7210, %v7212
        %v7262 = vcombine.low %v7251, %v7253
        %7265 = vst [vmem:[%s389] sm:$0xff] %v7261
        %7266 = vst [vmem:[%s389 + $0x8] sm:$0xff] %v7262
        %p7267 = scmp.lt.s32.totalorder %s23, 1
        %s7268 = scalar_select %p7267, %s23, 1
        %s7269 = smul.addr %s7268, 4
        %s7270 = smul.addr %s7269, 4
        %s7271 = scalar_lea.vmem %s9, %s7270
        // Predicated region
        $region73: #{unet_forward.1} parent=55 // pred_check
          %p7272 = pneg %p235
        $region74: #{unet_forward.1} parent=55 // pred_check_branch
          %7274 = sbr.rel (%p7272) target = $region76
        $region75: #{unet_forward.1} parent=55 // pred_region
          _
        $region76: #{unet_forward.1} parent=55 // pred_fallthru
          _
      $region56: #{unet_forward.1} parent=5 // pred_fallthru
        _
      %p7275 = scmp.le.s32.totalorder 2, %s18
      // Predicated region
      $region77: #{unet_forward.1} parent=5 // pred_check
        %p7276 = pneg %p7275
      $region78: #{unet_forward.1} parent=5 // pred_check_branch
        %7278 = sbr.rel (%p7276) target = $region80
      $region79: #{unet_forward.1} parent=5 // pred_region
        %s7279 = ssub.s32 %s18, 2
        // Predicated region
        $region81: #{unet_forward.1} parent=79 // pred_check
          %p7280 = pneg %p241
        $region82: #{unet_forward.1} parent=79 // pred_check_branch
          %7282 = sbr.rel (%p7280) target = $region84
        $region83: #{unet_forward.1} parent=79 // pred_region
          %p7283 = scmp.lt.s32.totalorder %s24, 1
          %s7284 = scalar_select %p7283, %s24, 1
          %s7285 = smul.addr %s7284, 4
          %s7286 = smul.addr %s7285, 4
          %s7287 = scalar_lea.vmem %s9, %s7286
        $region84: #{unet_forward.1} parent=79 // pred_fallthru
          _
      $region80: #{unet_forward.1} parent=5 // pred_fallthru
        _
    $region6: #{unet_forward.1} parent=1 // loop_footer
      %s22 = sadd.s32 1, %s18
    $region7: #{unet_forward.1} parent=1 // loop_footer_branch
      %17 = sbr.rel target = $region3
    $region8: #{unet_forward.1} parent=1 // loop_exit
      _
    %7288 = vsyncpa [#allocation3], 1
    %s7289 = scalar_lea.sflag [#allocation3], 1
    %7290 = vsyncpa %s7289, 1
    %7291 = vsyncpa [#allocation5], 1
    %7292 = vsyncpa [#allocation8], 1

</llo_original>
